<compile_context>
chip_gen: v5e
topology: v5e:2x2
jax: 0.10.0
libtpu: 0.0.40
codegen_flags: <defaults>
</compile_context>

<pallas_src>
import functools

import jax
import jax.numpy as jnp
import numpy as np
from jax import lax
from jax.experimental import pallas as pl
from jax.experimental.pallas import tpu as pltpu

EPS = 1e-5
LPAD = 8  # left margin so the interior store is sublane aligned


def _round_up(x, m):
    return (x + m - 1) // m * m


def _pick_tile_rows(H, Wp, C):
    # keep the per-tile f32 accumulator around <=128 KiB (~32 vregs)
    target_flat_rows = max(8, (128 * 1024) // (C * 4))
    return max(1, min(H, target_flat_rows // Wp))


def _residual_block_kernel(x_ref, w1_ref, w2_ref, o_ref, pad_ref, conv_ref,
                           *, H, W, C, Wp, TH, mm_dtype):
    """One batch element per grid step; everything stays resident in VMEM.

    pad_ref  : ((H+3)*Wp, C) mm_dtype flattened reflect-padded slab.
               Padded row pr lives at flat rows [pr*Wp, (pr+1)*Wp); interior
               column w sits at padded column LPAD + w, left reflect at LPAD-1,
               right reflect at LPAD+W.  Row H+2 is a zero guard row.
    conv_ref : (H*Wp, C) f32 raw conv output (written once per row tile; only
               the first W columns of each Wp-wide row are valid -> masked
               statistics / deferred crop).
    """
    inv_n = 1.0 / float(H * W)

    # Zero the guard row once per invocation (it only feeds cropped columns,
    # but keep invalid lanes finite).
    pad_ref[(H + 2) * Wp:(H + 3) * Wp, :] = jnp.zeros((Wp, C), mm_dtype)

    def write_padded(a_f32):
        # a_f32: (H, W, C).  Build each padded row fully in registers (margin,
        # reflect columns, zero tail) and store the whole interior block with a
        # single sublane-aligned store; then copy the two reflect rows.
        a = a_f32.astype(mm_dtype)
        pieces = [jnp.zeros((H, LPAD - 1, C), mm_dtype),   # margin cols 0..6
                  a[:, 1:2, :],                            # left reflect col
                  a,                                       # interior
                  a[:, W - 2:W - 1, :]]                    # right reflect col
        tail = Wp - (W + LPAD + 1)
        if tail > 0:
            pieces.append(jnp.zeros((H, tail, C), mm_dtype))
        rows = jnp.concatenate(pieces, axis=1).reshape(H * Wp, C)
        pad_ref[Wp:(H + 1) * Wp, :] = rows                       # aligned store
        pad_ref[0:Wp, :] = pad_ref[2 * Wp:3 * Wp, :]             # top reflect row
        pad_ref[(H + 1) * Wp:(H + 2) * Wp, :] = pad_ref[(H - 1) * Wp:H * Wp, :]

    def conv_pass(w_ref):
        # 3x3 conv as 9 shifted matmuls over the flattened padded slab.
        # Tap (kh, kw) for output flat row r reads pad flat row
        #   r + kh*Wp + kw + (LPAD - 1).
        # All 9 taps for a row tile are accumulated in a jnp value and written
        # once; IN sum / sum-of-squares are accumulated on the fly (masked to
        # the W valid columns of each Wp-wide row).
        sum_c = jnp.zeros((1, C), jnp.float32)
        ssq_c = jnp.zeros((1, C), jnp.float32)
        for h0 in range(0, H, TH):
            th = min(TH, H - h0)
            rows = th * Wp
            base = h0 * Wp
            acc = None
            for kh in range(3):
                for kw in range(3):
                    off = base + kh * Wp + kw + (LPAD - 1)
                    part = jnp.dot(pad_ref[off:off + rows, :],
                                   w_ref[kh * 3 + kw],
                                   preferred_element_type=jnp.float32)
                    acc = part if acc is None else acc + part
            col = lax.broadcasted_iota(jnp.int32, (rows, 1), 0) % Wp
            valid = col < W
            sum_c = sum_c + jnp.sum(jnp.where(valid, acc, 0.0),
                                    axis=0, keepdims=True)
            ssq_c = ssq_c + jnp.sum(jnp.where(valid, acc * acc, 0.0),
                                    axis=0, keepdims=True)
            conv_ref[base:base + rows, :] = acc          # single aligned store
        mean = sum_c * inv_n
        var = ssq_c * inv_n - mean * mean
        inv_std = lax.rsqrt(var + EPS)
        return mean, inv_std

    x = x_ref[0]                                          # (H, W, C) f32

    # conv1 -> instance norm -> relu   (conv bias omitted: IN cancels it)
    write_padded(x)
    m1, s1 = conv_pass(w1_ref)
    y = jnp.maximum((conv_ref[...] - m1) * s1, 0.0)       # (H*Wp, C) f32

    # conv2 -> instance norm -> residual add
    write_padded(y.reshape(H, Wp, C)[:, :W, :])
    m2, s2 = conv_pass(w2_ref)
    y2 = (conv_ref[...] - m2) * s2
    out = y2.reshape(H, Wp, C)[:, :W, :] + x              # crop only at the end
    o_ref[0] = out.astype(o_ref.dtype)


def _vmem_limit_bytes(H, W, C, Wp, matmul_dtype):
    f32 = 4
    mm = np.dtype(matmul_dtype).itemsize
    io = 2 * 2 * H * W * C * f32                 # x + out blocks, double-buffered
    wts = 2 * 2 * 9 * C * C * mm                 # w1 + w2 taps, double-buffered
    slab = (H + 3) * Wp * C * mm                 # padded slab scratch
    conv = H * Wp * C * f32                      # conv output scratch
    temps = 4 * H * Wp * C * f32                 # live values / headroom
    total = io + wts + slab + conv + temps
    return int(min(max(2 * total, 16 * 2**20), 48 * 2**20))   # v7x-safe cap


def residual_block_nhwc(x_nhwc, w1, w2, *, matmul_dtype=jnp.bfloat16):
    """NHWC-native entry point.  x_nhwc: (N,H,W,C) f32; w1,w2: (C,C,3,3) OIHW.

    Conv biases are intentionally omitted: a per-channel bias followed by an
    affine-free InstanceNorm is a mathematical no-op.
    """
    N, H, W, C = x_nhwc.shape
    assert H >= 2 and W >= 2, "reflect padding needs spatial dims >= 2"
    Wp = _round_up(W + LPAD + 1, 8)
    TH = _pick_tile_rows(H, Wp, C)

    # (Cout, Cin, kh, kw) -> (9, Cin, Cout): each tap is a (Cin, Cout) rhs.
    w1t = jnp.transpose(w1, (2, 3, 1, 0)).reshape(9, C, C).astype(matmul_dtype)
    w2t = jnp.transpose(w2, (2, 3, 1, 0)).reshape(9, C, C).astype(matmul_dtype)
    x = x_nhwc.astype(jnp.float32)

    kernel = functools.partial(_residual_block_kernel, H=H, W=W, C=C, Wp=Wp,
                               TH=TH, mm_dtype=matmul_dtype)

    grid_spec = pltpu.PrefetchScalarGridSpec(
        num_scalar_prefetch=0,
        grid=(N,),
        in_specs=[
            pl.BlockSpec((1, H, W, C), lambda n: (n, 0, 0, 0)),   # x
            pl.BlockSpec((9, C, C), lambda n: (0, 0, 0)),         # conv1 taps
            pl.BlockSpec((9, C, C), lambda n: (0, 0, 0)),         # conv2 taps
        ],
        out_specs=pl.BlockSpec((1, H, W, C), lambda n: (n, 0, 0, 0)),
        scratch_shapes=[
            pltpu.VMEM(((H + 3) * Wp, C), matmul_dtype),  # flattened padded slab
            pltpu.VMEM((H * Wp, C), jnp.float32),         # conv output
        ],
    )

    mm_bytes = np.dtype(matmul_dtype).itemsize
    cost = pl.CostEstimate(
        flops=int(N * 2 * 2 * H * W * 9 * C * C),
        transcendentals=int(N * 2 * C),
        bytes_accessed=int(2 * N * H * W * C * 4 + 2 * 9 * C * C * mm_bytes),
    )

    return pl.pallas_call(
        kernel,
        out_shape=jax.ShapeDtypeStruct((N, H, W, C), jnp.float32),
        grid_spec=grid_spec,
        compiler_params=pltpu.CompilerParams(
            dimension_semantics=("parallel",),   # batch elems independent
            vmem_limit_bytes=_vmem_limit_bytes(H, W, C, Wp, matmul_dtype),
        ),
        cost_estimate=cost,
    )(x, w1t, w2t)


def residual_block(x_nchw, w1, b1, w2, b2, *, matmul_dtype=jnp.bfloat16):
    """PyTorch-parity wrapper: NCHW in/out, accepts (and ignores) conv biases.

    b1/b2 are unused because bias followed by affine-free InstanceNorm cancels
    exactly (verified against the biased reference below)."""
    del b1, b2
    x = jnp.transpose(x_nchw, (0, 2, 3, 1))                  # NCHW -> NHWC
    out = residual_block_nhwc(x, w1, w2, matmul_dtype=matmul_dtype)
    return jnp.transpose(out, (0, 3, 1, 2))                  # NHWC -> NCHW


def reference(x, w1, b1, w2, b2, conv_dtype=jnp.float32):
    # Pure-JAX reference matching PyTorch semantics (NCHW).
    def conv(x, w, b):
        xp = jnp.pad(x, ((0, 0), (0, 0), (1, 1), (1, 1)), mode="reflect")
        y = lax.conv_general_dilated(
            xp.astype(conv_dtype), w.astype(conv_dtype), (1, 1), "VALID",
            dimension_numbers=("NCHW", "OIHW", "NCHW"),
            preferred_element_type=jnp.float32)
        return y + b.reshape(1, -1, 1, 1)

    def inorm(y):
        mean = jnp.mean(y, axis=(2, 3), keepdims=True)
        var = jnp.mean((y - mean) ** 2, axis=(2, 3), keepdims=True)
        return (y - mean) / jnp.sqrt(var + EPS)

    y = jax.nn.relu(inorm(conv(x, w1, b1)))
    y = inorm(conv(y, w2, b2))
    return y + x


if __name__ == "__main__":
    N, C, H, W = 2, 4, 16, 16
    key = jax.random.PRNGKey(0)
    kx, kw1, kb1, kw2, kb2 = jax.random.split(key, 5)

    x = jax.random.normal(kx, (N, C, H, W), jnp.float32)
    w1 = jax.random.normal(kw1, (C, C, 3, 3), jnp.float32) * 0.1
    b1 = jax.random.normal(kb1, (C,), jnp.float32) * 0.1
    w2 = jax.random.normal(kw2, (C, C, 3, 3), jnp.float32) * 0.1
    b2 = jax.random.normal(kb2, (C,), jnp.float32) * 0.1

    # 1) f32 matmul path: exact forward semantics of the PyTorch module
    #    (also proves the bias drop is a no-op: the reference applies biases).
    out_f32 = jax.block_until_ready(
        residual_block(x, w1, b1, w2, b2, matmul_dtype=jnp.float32))
    ref_f32 = jax.block_until_ready(reference(x, w1, b1, w2, b2))
    assert out_f32.shape == (N, C, H, W)
    assert np.allclose(np.asarray(out_f32), np.asarray(ref_f32),
                       rtol=5e-4, atol=5e-4), "f32 path mismatch vs reference"

    # 2) bf16 MXU path (default / production): compare against a reference that
    #    also feeds bf16 into the convolutions with f32 accumulation.
    out_bf16 = jax.block_until_ready(residual_block(x, w1, b1, w2, b2))
    ref_bf16 = jax.block_until_ready(
        reference(x, w1, b1, w2, b2, conv_dtype=jnp.bfloat16))
    assert np.allclose(np.asarray(out_bf16), np.asarray(ref_bf16),
                       rtol=2e-2, atol=2e-2), "bf16 path mismatch vs reference"

    print("KERNEL_OK")
</pallas_src>

<mosaic_0001>
module attributes {stable_mosaic.version = 11 : i64} {
  func.func @_residual_block_kernel(%arg0: i32, %arg1: memref<1x16x16x4xf32, #tpu.memory_space<vmem>>, %arg2: memref<9x4x4xf32, #tpu.memory_space<vmem>>, %arg3: memref<9x4x4xf32, #tpu.memory_space<vmem>>, %arg4: memref<1x16x16x4xf32, #tpu.memory_space<vmem>>, %arg5: memref<608x4xf32, #tpu.memory_space<vmem>>, %arg6: memref<512x4xf32, #tpu.memory_space<vmem>>) attributes {dimension_semantics = [#tpu.dimension_semantics<parallel>], iteration_bounds = array<i64: 2>, scalar_prefetch = 0 : i64, scratch_operands = 2 : i64, tpu.core_type = #tpu.core_type<tc>, window_params = [{transform_indices = @transform_0, window_bounds = array<i64: 1, 16, 16, 4>}, {pipeline_mode = #tpu.pipeline_mode<synchronous>, transform_indices = @transform_1, window_bounds = array<i64: 9, 4, 4>}, {pipeline_mode = #tpu.pipeline_mode<synchronous>, transform_indices = @transform_2, window_bounds = array<i64: 9, 4, 4>}, {transform_indices = @transform_3, window_bounds = array<i64: 1, 16, 16, 4>}]} {
    %cst = arith.constant 0.000000e+00 : f32
    %0 = vector.broadcast %cst : f32 to vector<32x4xf32>
    %c576 = arith.constant 576 : index
    %c0 = arith.constant 0 : index
    %1 = vector.load %arg5[%c576, %c0] : memref<608x4xf32, #tpu.memory_space<vmem>>, vector<32x4xf32>
    tpu.vector_store %arg5[%c576, %c0], %0 {strides = array<i32>} : memref<608x4xf32, #tpu.memory_space<vmem>>, vector<32x4xf32>,
    %c0_0 = arith.constant 0 : index
    %c0_1 = arith.constant 0 : index
    %c0_2 = arith.constant 0 : index
    %c0_3 = arith.constant 0 : index
    %2 = vector.load %arg1[%c0_0, %c0_1, %c0_2, %c0_3] : memref<1x16x16x4xf32, #tpu.memory_space<vmem>>, vector<1x16x16x4xf32>
    %3 = vector.shape_cast %2 : vector<1x16x16x4xf32> to vector<16x16x4xf32>
    %cst_4 = arith.constant 0.000000e+00 : f32
    %4 = vector.broadcast %cst_4 : f32 to vector<16x7x4xf32>
    %5 = vector.extract_strided_slice %3 {offsets = [0, 1, 0], sizes = [16, 1, 4], strides = [1, 1, 1]} : vector<16x16x4xf32> to vector<16x1x4xf32>
    %6 = vector.extract_strided_slice %3 {offsets = [0, 14, 0], sizes = [16, 1, 4], strides = [1, 1, 1]} : vector<16x16x4xf32> to vector<16x1x4xf32>
    %cst_5 = arith.constant 0.000000e+00 : f32
    %7 = vector.broadcast %cst_5 : f32 to vector<16x7x4xf32>
    %8 = tpu.concatenate %4, %5, %3, %6, %7 in 1 : vector<16x7x4xf32>, vector<16x1x4xf32>, vector<16x16x4xf32>, vector<16x1x4xf32>, vector<16x7x4xf32> -> vector<16x32x4xf32>
    %9 = vector.shape_cast %8 : vector<16x32x4xf32> to vector<512x4xf32>
    %c32 = arith.constant 32 : index
    %c0_6 = arith.constant 0 : index
    %10 = vector.load %arg5[%c32, %c0_6] : memref<608x4xf32, #tpu.memory_space<vmem>>, vector<512x4xf32>
    tpu.vector_store %arg5[%c32, %c0_6], %9 {strides = array<i32>} : memref<608x4xf32, #tpu.memory_space<vmem>>, vector<512x4xf32>,
    %c64 = arith.constant 64 : index
    %c0_7 = arith.constant 0 : index
    %11 = vector.load %arg5[%c64, %c0_7] : memref<608x4xf32, #tpu.memory_space<vmem>>, vector<32x4xf32>
    %c0_8 = arith.constant 0 : index
    %c0_9 = arith.constant 0 : index
    %12 = vector.load %arg5[%c0_8, %c0_9] : memref<608x4xf32, #tpu.memory_space<vmem>>, vector<32x4xf32>
    tpu.vector_store %arg5[%c0_8, %c0_9], %11 {strides = array<i32>} : memref<608x4xf32, #tpu.memory_space<vmem>>, vector<32x4xf32>,
    %c480 = arith.constant 480 : index
    %c0_10 = arith.constant 0 : index
    %13 = vector.load %arg5[%c480, %c0_10] : memref<608x4xf32, #tpu.memory_space<vmem>>, vector<32x4xf32>
    %c544 = arith.constant 544 : index
    %c0_11 = arith.constant 0 : index
    %14 = vector.load %arg5[%c544, %c0_11] : memref<608x4xf32, #tpu.memory_space<vmem>>, vector<32x4xf32>
    tpu.vector_store %arg5[%c544, %c0_11], %13 {strides = array<i32>} : memref<608x4xf32, #tpu.memory_space<vmem>>, vector<32x4xf32>,
    %cst_12 = arith.constant 0.000000e+00 : f32
    %15 = vector.broadcast %cst_12 : f32 to vector<1x4xf32>
    %cst_13 = arith.constant 0.000000e+00 : f32
    %16 = vector.broadcast %cst_13 : f32 to vector<1x4xf32>
    %c7 = arith.constant 7 : index
    %c0_14 = arith.constant 0 : index
    %17 = vector.load %arg5[%c7, %c0_14] : memref<608x4xf32, #tpu.memory_space<vmem>>, vector<512x4xf32>
    %c0_15 = arith.constant 0 : index
    %c0_16 = arith.constant 0 : index
    %c0_17 = arith.constant 0 : index
    %18 = vector.load %arg2[%c0_15, %c0_16, %c0_17] : memref<9x4x4xf32, #tpu.memory_space<vmem>>, vector<1x4x4xf32>
    %19 = vector.shape_cast %18 : vector<1x4x4xf32> to vector<4x4xf32>
    %cst_18 = arith.constant dense<0.000000e+00> : vector<512x4xf32>
    %20 = tpu.matmul %17, %19, %cst_18 {dimension_numbers = #tpu.dot_dimension_numbers<[1], [0], [0], [1], [0, 0, 1, 1], [], []>} : vector<512x4xf32>, vector<4x4xf32>, vector<512x4xf32> -> vector<512x4xf32>
    %c8 = arith.constant 8 : index
    %c0_19 = arith.constant 0 : index
    %21 = vector.load %arg5[%c8, %c0_19] : memref<608x4xf32, #tpu.memory_space<vmem>>, vector<512x4xf32>
    %c1 = arith.constant 1 : index
    %c0_20 = arith.constant 0 : index
    %c0_21 = arith.constant 0 : index
    %22 = vector.load %arg2[%c1, %c0_20, %c0_21] : memref<9x4x4xf32, #tpu.memory_space<vmem>>, vector<1x4x4xf32>
    %23 = vector.shape_cast %22 : vector<1x4x4xf32> to vector<4x4xf32>
    %cst_22 = arith.constant dense<0.000000e+00> : vector<512x4xf32>
    %24 = tpu.matmul %21, %23, %cst_22 {dimension_numbers = #tpu.dot_dimension_numbers<[1], [0], [0], [1], [0, 0, 1, 1], [], []>} : vector<512x4xf32>, vector<4x4xf32>, vector<512x4xf32> -> vector<512x4xf32>
    %25 = arith.addf %20, %24 : vector<512x4xf32>
    %c9 = arith.constant 9 : index
    %c0_23 = arith.constant 0 : index
    %26 = vector.load %arg5[%c9, %c0_23] : memref<608x4xf32, #tpu.memory_space<vmem>>, vector<512x4xf32>
    %c2 = arith.constant 2 : index
    %c0_24 = arith.constant 0 : index
    %c0_25 = arith.constant 0 : index
    %27 = vector.load %arg2[%c2, %c0_24, %c0_25] : memref<9x4x4xf32, #tpu.memory_space<vmem>>, vector<1x4x4xf32>
    %28 = vector.shape_cast %27 : vector<1x4x4xf32> to vector<4x4xf32>
    %cst_26 = arith.constant dense<0.000000e+00> : vector<512x4xf32>
    %29 = tpu.matmul %26, %28, %cst_26 {dimension_numbers = #tpu.dot_dimension_numbers<[1], [0], [0], [1], [0, 0, 1, 1], [], []>} : vector<512x4xf32>, vector<4x4xf32>, vector<512x4xf32> -> vector<512x4xf32>
    %30 = arith.addf %25, %29 : vector<512x4xf32>
    %c39 = arith.constant 39 : index
    %c0_27 = arith.constant 0 : index
    %31 = vector.load %arg5[%c39, %c0_27] : memref<608x4xf32, #tpu.memory_space<vmem>>, vector<512x4xf32>
    %c3 = arith.constant 3 : index
    %c0_28 = arith.constant 0 : index
    %c0_29 = arith.constant 0 : index
    %32 = vector.load %arg2[%c3, %c0_28, %c0_29] : memref<9x4x4xf32, #tpu.memory_space<vmem>>, vector<1x4x4xf32>
    %33 = vector.shape_cast %32 : vector<1x4x4xf32> to vector<4x4xf32>
    %cst_30 = arith.constant dense<0.000000e+00> : vector<512x4xf32>
    %34 = tpu.matmul %31, %33, %cst_30 {dimension_numbers = #tpu.dot_dimension_numbers<[1], [0], [0], [1], [0, 0, 1, 1], [], []>} : vector<512x4xf32>, vector<4x4xf32>, vector<512x4xf32> -> vector<512x4xf32>
    %35 = arith.addf %30, %34 : vector<512x4xf32>
    %c40 = arith.constant 40 : index
    %c0_31 = arith.constant 0 : index
    %36 = vector.load %arg5[%c40, %c0_31] : memref<608x4xf32, #tpu.memory_space<vmem>>, vector<512x4xf32>
    %c4 = arith.constant 4 : index
    %c0_32 = arith.constant 0 : index
    %c0_33 = arith.constant 0 : index
    %37 = vector.load %arg2[%c4, %c0_32, %c0_33] : memref<9x4x4xf32, #tpu.memory_space<vmem>>, vector<1x4x4xf32>
    %38 = vector.shape_cast %37 : vector<1x4x4xf32> to vector<4x4xf32>
    %cst_34 = arith.constant dense<0.000000e+00> : vector<512x4xf32>
    %39 = tpu.matmul %36, %38, %cst_34 {dimension_numbers = #tpu.dot_dimension_numbers<[1], [0], [0], [1], [0, 0, 1, 1], [], []>} : vector<512x4xf32>, vector<4x4xf32>, vector<512x4xf32> -> vector<512x4xf32>
    %40 = arith.addf %35, %39 : vector<512x4xf32>
    %c41 = arith.constant 41 : index
    %c0_35 = arith.constant 0 : index
    %41 = vector.load %arg5[%c41, %c0_35] : memref<608x4xf32, #tpu.memory_space<vmem>>, vector<512x4xf32>
    %c5 = arith.constant 5 : index
    %c0_36 = arith.constant 0 : index
    %c0_37 = arith.constant 0 : index
    %42 = vector.load %arg2[%c5, %c0_36, %c0_37] : memref<9x4x4xf32, #tpu.memory_space<vmem>>, vector<1x4x4xf32>
    %43 = vector.shape_cast %42 : vector<1x4x4xf32> to vector<4x4xf32>
    %cst_38 = arith.constant dense<0.000000e+00> : vector<512x4xf32>
    %44 = tpu.matmul %41, %43, %cst_38 {dimension_numbers = #tpu.dot_dimension_numbers<[1], [0], [0], [1], [0, 0, 1, 1], [], []>} : vector<512x4xf32>, vector<4x4xf32>, vector<512x4xf32> -> vector<512x4xf32>
    %45 = arith.addf %40, %44 : vector<512x4xf32>
    %c71 = arith.constant 71 : index
    %c0_39 = arith.constant 0 : index
    %46 = vector.load %arg5[%c71, %c0_39] : memref<608x4xf32, #tpu.memory_space<vmem>>, vector<512x4xf32>
    %c6 = arith.constant 6 : index
    %c0_40 = arith.constant 0 : index
    %c0_41 = arith.constant 0 : index
    %47 = vector.load %arg2[%c6, %c0_40, %c0_41] : memref<9x4x4xf32, #tpu.memory_space<vmem>>, vector<1x4x4xf32>
    %48 = vector.shape_cast %47 : vector<1x4x4xf32> to vector<4x4xf32>
    %cst_42 = arith.constant dense<0.000000e+00> : vector<512x4xf32>
    %49 = tpu.matmul %46, %48, %cst_42 {dimension_numbers = #tpu.dot_dimension_numbers<[1], [0], [0], [1], [0, 0, 1, 1], [], []>} : vector<512x4xf32>, vector<4x4xf32>, vector<512x4xf32> -> vector<512x4xf32>
    %50 = arith.addf %45, %49 : vector<512x4xf32>
    %c72 = arith.constant 72 : index
    %c0_43 = arith.constant 0 : index
    %51 = vector.load %arg5[%c72, %c0_43] : memref<608x4xf32, #tpu.memory_space<vmem>>, vector<512x4xf32>
    %c7_44 = arith.constant 7 : index
    %c0_45 = arith.constant 0 : index
    %c0_46 = arith.constant 0 : index
    %52 = vector.load %arg2[%c7_44, %c0_45, %c0_46] : memref<9x4x4xf32, #tpu.memory_space<vmem>>, vector<1x4x4xf32>
    %53 = vector.shape_cast %52 : vector<1x4x4xf32> to vector<4x4xf32>
    %cst_47 = arith.constant dense<0.000000e+00> : vector<512x4xf32>
    %54 = tpu.matmul %51, %53, %cst_47 {dimension_numbers = #tpu.dot_dimension_numbers<[1], [0], [0], [1], [0, 0, 1, 1], [], []>} : vector<512x4xf32>, vector<4x4xf32>, vector<512x4xf32> -> vector<512x4xf32>
    %55 = arith.addf %50, %54 : vector<512x4xf32>
    %c73 = arith.constant 73 : index
    %c0_48 = arith.constant 0 : index
    %56 = vector.load %arg5[%c73, %c0_48] : memref<608x4xf32, #tpu.memory_space<vmem>>, vector<512x4xf32>
    %c8_49 = arith.constant 8 : index
    %c0_50 = arith.constant 0 : index
    %c0_51 = arith.constant 0 : index
    %57 = vector.load %arg2[%c8_49, %c0_50, %c0_51] : memref<9x4x4xf32, #tpu.memory_space<vmem>>, vector<1x4x4xf32>
    %58 = vector.shape_cast %57 : vector<1x4x4xf32> to vector<4x4xf32>
    %cst_52 = arith.constant dense<0.000000e+00> : vector<512x4xf32>
    %59 = tpu.matmul %56, %58, %cst_52 {dimension_numbers = #tpu.dot_dimension_numbers<[1], [0], [0], [1], [0, 0, 1, 1], [], []>} : vector<512x4xf32>, vector<4x4xf32>, vector<512x4xf32> -> vector<512x4xf32>
    %60 = arith.addf %55, %59 : vector<512x4xf32>
    %61 = tpu.iota {dimensions = array<i32: 0>} : vector<512x1xi32>
    %c32_i32 = arith.constant 32 : i32
    %c0_i32 = arith.constant 0 : i32
    %62 = arith.cmpi eq, %c32_i32, %c0_i32 : i32
    %c1_i32 = arith.constant 1 : i32
    %63 = arith.select %62, %c1_i32, %c32_i32 : i32
    %64 = vector.broadcast %63 : i32 to vector<512x1xi32>
    %65 = arith.remsi %61, %64 : vector<512x1xi32>
    %c0_i32_53 = arith.constant 0 : i32
    %66 = vector.broadcast %c0_i32_53 : i32 to vector<512x1xi32>
    %67 = arith.cmpi ne, %65, %66 : vector<512x1xi32>
    %c0_i32_54 = arith.constant 0 : i32
    %68 = vector.broadcast %c0_i32_54 : i32 to vector<512x1xi32>
    %69 = arith.cmpi slt, %65, %68 : vector<512x1xi32>
    %c0_i32_55 = arith.constant 0 : i32
    %70 = arith.cmpi slt, %63, %c0_i32_55 : i32
    %71 = vector.broadcast %70 : i1 to vector<512x1xi1>
    %72 = vector.broadcast %71 : vector<512x1xi1> to vector<512x1xi1>
    %73 = arith.xori %69, %72 : vector<512x1xi1>
    %74 = arith.andi %73, %67 : vector<512x1xi1>
    %75 = vector.broadcast %63 : i32 to vector<512x1xi32>
    %76 = arith.addi %65, %75 : vector<512x1xi32>
    %77 = arith.select %74, %76, %65 : vector<512x1xi1>, vector<512x1xi32>
    %c16_i32 = arith.constant 16 : i32
    %78 = vector.broadcast %c16_i32 : i32 to vector<512x1xi32>
    %79 = arith.cmpi slt, %77, %78 : vector<512x1xi32>
    %cst_56 = arith.constant 0.000000e+00 : f32
    %80 = vector.shape_cast %79 : vector<512x1xi1> to vector<512x1xi1>
    %81 = vector.broadcast %80 : vector<512x1xi1> to vector<512x4xi1>
    %82 = vector.broadcast %cst_56 : f32 to vector<512x4xf32>
    %83 = arith.select %81, %60, %82 : vector<512x4xi1>, vector<512x4xf32>
    %cst_57 = arith.constant dense<0.000000e+00> : vector<4xf32>
    %84 = vector.multi_reduction <add>, %83, %cst_57 [0] : vector<512x4xf32> to vector<4xf32>
    %85 = vector.shape_cast %84 : vector<4xf32> to vector<1x4xf32>
    %86 = arith.addf %15, %85 : vector<1x4xf32>
    %87 = arith.mulf %60, %60 : vector<512x4xf32>
    %cst_58 = arith.constant 0.000000e+00 : f32
    %88 = vector.shape_cast %79 : vector<512x1xi1> to vector<512x1xi1>
    %89 = vector.broadcast %88 : vector<512x1xi1> to vector<512x4xi1>
    %90 = vector.broadcast %cst_58 : f32 to vector<512x4xf32>
    %91 = arith.select %89, %87, %90 : vector<512x4xi1>, vector<512x4xf32>
    %cst_59 = arith.constant dense<0.000000e+00> : vector<4xf32>
    %92 = vector.multi_reduction <add>, %91, %cst_59 [0] : vector<512x4xf32> to vector<4xf32>
    %93 = vector.shape_cast %92 : vector<4xf32> to vector<1x4xf32>
    %94 = arith.addf %16, %93 : vector<1x4xf32>
    %c0_60 = arith.constant 0 : index
    %c0_61 = arith.constant 0 : index
    %95 = vector.load %arg6[%c0_60, %c0_61] : memref<512x4xf32, #tpu.memory_space<vmem>>, vector<512x4xf32>
    tpu.vector_store %arg6[%c0_60, %c0_61], %60 {strides = array<i32>} : memref<512x4xf32, #tpu.memory_space<vmem>>, vector<512x4xf32>,
    %cst_62 = arith.constant 3.906250e-03 : f32
    %96 = vector.broadcast %cst_62 : f32 to vector<1x4xf32>
    %97 = arith.mulf %86, %96 : vector<1x4xf32>
    %cst_63 = arith.constant 3.906250e-03 : f32
    %98 = vector.broadcast %cst_63 : f32 to vector<1x4xf32>
    %99 = arith.mulf %94, %98 : vector<1x4xf32>
    %100 = arith.mulf %97, %97 : vector<1x4xf32>
    %101 = arith.subf %99, %100 : vector<1x4xf32>
    %cst_64 = arith.constant 9.99999974E-6 : f32
    %102 = vector.broadcast %cst_64 : f32 to vector<1x4xf32>
    %103 = arith.addf %101, %102 : vector<1x4xf32>
    %104 = math.rsqrt %103 : vector<1x4xf32>
    %c0_65 = arith.constant 0 : index
    %c0_66 = arith.constant 0 : index
    %105 = vector.load %arg6[%c0_65, %c0_66] : memref<512x4xf32, #tpu.memory_space<vmem>>, vector<512x4xf32>
    %106 = vector.broadcast %97 : vector<1x4xf32> to vector<512x4xf32>
    %107 = arith.subf %105, %106 : vector<512x4xf32>
    %108 = vector.broadcast %104 : vector<1x4xf32> to vector<512x4xf32>
    %109 = arith.mulf %107, %108 : vector<512x4xf32>
    %cst_67 = arith.constant 0.000000e+00 : f32
    %110 = vector.broadcast %cst_67 : f32 to vector<512x4xf32>
    %111 = arith.maximumf %109, %110 : vector<512x4xf32>
    %112 = vector.shape_cast %111 : vector<512x4xf32> to vector<16x32x4xf32>
    %113 = vector.extract_strided_slice %112 {offsets = [0, 0, 0], sizes = [16, 16, 4], strides = [1, 1, 1]} : vector<16x32x4xf32> to vector<16x16x4xf32>
    %cst_68 = arith.constant 0.000000e+00 : f32
    %114 = vector.broadcast %cst_68 : f32 to vector<16x7x4xf32>
    %115 = vector.extract_strided_slice %113 {offsets = [0, 1, 0], sizes = [16, 1, 4], strides = [1, 1, 1]} : vector<16x16x4xf32> to vector<16x1x4xf32>
    %116 = vector.extract_strided_slice %113 {offsets = [0, 14, 0], sizes = [16, 1, 4], strides = [1, 1, 1]} : vector<16x16x4xf32> to vector<16x1x4xf32>
    %cst_69 = arith.constant 0.000000e+00 : f32
    %117 = vector.broadcast %cst_69 : f32 to vector<16x7x4xf32>
    %118 = tpu.concatenate %114, %115, %113, %116, %117 in 1 : vector<16x7x4xf32>, vector<16x1x4xf32>, vector<16x16x4xf32>, vector<16x1x4xf32>, vector<16x7x4xf32> -> vector<16x32x4xf32>
    %119 = vector.shape_cast %118 : vector<16x32x4xf32> to vector<512x4xf32>
    %c32_70 = arith.constant 32 : index
    %c0_71 = arith.constant 0 : index
    %120 = vector.load %arg5[%c32_70, %c0_71] : memref<608x4xf32, #tpu.memory_space<vmem>>, vector<512x4xf32>
    tpu.vector_store %arg5[%c32_70, %c0_71], %119 {strides = array<i32>} : memref<608x4xf32, #tpu.memory_space<vmem>>, vector<512x4xf32>,
    %c64_72 = arith.constant 64 : index
    %c0_73 = arith.constant 0 : index
    %121 = vector.load %arg5[%c64_72, %c0_73] : memref<608x4xf32, #tpu.memory_space<vmem>>, vector<32x4xf32>
    %c0_74 = arith.constant 0 : index
    %c0_75 = arith.constant 0 : index
    %122 = vector.load %arg5[%c0_74, %c0_75] : memref<608x4xf32, #tpu.memory_space<vmem>>, vector<32x4xf32>
    tpu.vector_store %arg5[%c0_74, %c0_75], %121 {strides = array<i32>} : memref<608x4xf32, #tpu.memory_space<vmem>>, vector<32x4xf32>,
    %c480_76 = arith.constant 480 : index
    %c0_77 = arith.constant 0 : index
    %123 = vector.load %arg5[%c480_76, %c0_77] : memref<608x4xf32, #tpu.memory_space<vmem>>, vector<32x4xf32>
    %c544_78 = arith.constant 544 : index
    %c0_79 = arith.constant 0 : index
    %124 = vector.load %arg5[%c544_78, %c0_79] : memref<608x4xf32, #tpu.memory_space<vmem>>, vector<32x4xf32>
    tpu.vector_store %arg5[%c544_78, %c0_79], %123 {strides = array<i32>} : memref<608x4xf32, #tpu.memory_space<vmem>>, vector<32x4xf32>,
    %cst_80 = arith.constant 0.000000e+00 : f32
    %125 = vector.broadcast %cst_80 : f32 to vector<1x4xf32>
    %cst_81 = arith.constant 0.000000e+00 : f32
    %126 = vector.broadcast %cst_81 : f32 to vector<1x4xf32>
    %c7_82 = arith.constant 7 : index
    %c0_83 = arith.constant 0 : index
    %127 = vector.load %arg5[%c7_82, %c0_83] : memref<608x4xf32, #tpu.memory_space<vmem>>, vector<512x4xf32>
    %c0_84 = arith.constant 0 : index
    %c0_85 = arith.constant 0 : index
    %c0_86 = arith.constant 0 : index
    %128 = vector.load %arg3[%c0_84, %c0_85, %c0_86] : memref<9x4x4xf32, #tpu.memory_space<vmem>>, vector<1x4x4xf32>
    %129 = vector.shape_cast %128 : vector<1x4x4xf32> to vector<4x4xf32>
    %cst_87 = arith.constant dense<0.000000e+00> : vector<512x4xf32>
    %130 = tpu.matmul %127, %129, %cst_87 {dimension_numbers = #tpu.dot_dimension_numbers<[1], [0], [0], [1], [0, 0, 1, 1], [], []>} : vector<512x4xf32>, vector<4x4xf32>, vector<512x4xf32> -> vector<512x4xf32>
    %c8_88 = arith.constant 8 : index
    %c0_89 = arith.constant 0 : index
    %131 = vector.load %arg5[%c8_88, %c0_89] : memref<608x4xf32, #tpu.memory_space<vmem>>, vector<512x4xf32>
    %c1_90 = arith.constant 1 : index
    %c0_91 = arith.constant 0 : index
    %c0_92 = arith.constant 0 : index
    %132 = vector.load %arg3[%c1_90, %c0_91, %c0_92] : memref<9x4x4xf32, #tpu.memory_space<vmem>>, vector<1x4x4xf32>
    %133 = vector.shape_cast %132 : vector<1x4x4xf32> to vector<4x4xf32>
    %cst_93 = arith.constant dense<0.000000e+00> : vector<512x4xf32>
    %134 = tpu.matmul %131, %133, %cst_93 {dimension_numbers = #tpu.dot_dimension_numbers<[1], [0], [0], [1], [0, 0, 1, 1], [], []>} : vector<512x4xf32>, vector<4x4xf32>, vector<512x4xf32> -> vector<512x4xf32>
    %135 = arith.addf %130, %134 : vector<512x4xf32>
    %c9_94 = arith.constant 9 : index
    %c0_95 = arith.constant 0 : index
    %136 = vector.load %arg5[%c9_94, %c0_95] : memref<608x4xf32, #tpu.memory_space<vmem>>, vector<512x4xf32>
    %c2_96 = arith.constant 2 : index
    %c0_97 = arith.constant 0 : index
    %c0_98 = arith.constant 0 : index
    %137 = vector.load %arg3[%c2_96, %c0_97, %c0_98] : memref<9x4x4xf32, #tpu.memory_space<vmem>>, vector<1x4x4xf32>
    %138 = vector.shape_cast %137 : vector<1x4x4xf32> to vector<4x4xf32>
    %cst_99 = arith.constant dense<0.000000e+00> : vector<512x4xf32>
    %139 = tpu.matmul %136, %138, %cst_99 {dimension_numbers = #tpu.dot_dimension_numbers<[1], [0], [0], [1], [0, 0, 1, 1], [], []>} : vector<512x4xf32>, vector<4x4xf32>, vector<512x4xf32> -> vector<512x4xf32>
    %140 = arith.addf %135, %139 : vector<512x4xf32>
    %c39_100 = arith.constant 39 : index
    %c0_101 = arith.constant 0 : index
    %141 = vector.load %arg5[%c39_100, %c0_101] : memref<608x4xf32, #tpu.memory_space<vmem>>, vector<512x4xf32>
    %c3_102 = arith.constant 3 : index
    %c0_103 = arith.constant 0 : index
    %c0_104 = arith.constant 0 : index
    %142 = vector.load %arg3[%c3_102, %c0_103, %c0_104] : memref<9x4x4xf32, #tpu.memory_space<vmem>>, vector<1x4x4xf32>
    %143 = vector.shape_cast %142 : vector<1x4x4xf32> to vector<4x4xf32>
    %cst_105 = arith.constant dense<0.000000e+00> : vector<512x4xf32>
    %144 = tpu.matmul %141, %143, %cst_105 {dimension_numbers = #tpu.dot_dimension_numbers<[1], [0], [0], [1], [0, 0, 1, 1], [], []>} : vector<512x4xf32>, vector<4x4xf32>, vector<512x4xf32> -> vector<512x4xf32>
    %145 = arith.addf %140, %144 : vector<512x4xf32>
    %c40_106 = arith.constant 40 : index
    %c0_107 = arith.constant 0 : index
    %146 = vector.load %arg5[%c40_106, %c0_107] : memref<608x4xf32, #tpu.memory_space<vmem>>, vector<512x4xf32>
    %c4_108 = arith.constant 4 : index
    %c0_109 = arith.constant 0 : index
    %c0_110 = arith.constant 0 : index
    %147 = vector.load %arg3[%c4_108, %c0_109, %c0_110] : memref<9x4x4xf32, #tpu.memory_space<vmem>>, vector<1x4x4xf32>
    %148 = vector.shape_cast %147 : vector<1x4x4xf32> to vector<4x4xf32>
    %cst_111 = arith.constant dense<0.000000e+00> : vector<512x4xf32>
    %149 = tpu.matmul %146, %148, %cst_111 {dimension_numbers = #tpu.dot_dimension_numbers<[1], [0], [0], [1], [0, 0, 1, 1], [], []>} : vector<512x4xf32>, vector<4x4xf32>, vector<512x4xf32> -> vector<512x4xf32>
    %150 = arith.addf %145, %149 : vector<512x4xf32>
    %c41_112 = arith.constant 41 : index
    %c0_113 = arith.constant 0 : index
    %151 = vector.load %arg5[%c41_112, %c0_113] : memref<608x4xf32, #tpu.memory_space<vmem>>, vector<512x4xf32>
    %c5_114 = arith.constant 5 : index
    %c0_115 = arith.constant 0 : index
    %c0_116 = arith.constant 0 : index
    %152 = vector.load %arg3[%c5_114, %c0_115, %c0_116] : memref<9x4x4xf32, #tpu.memory_space<vmem>>, vector<1x4x4xf32>
    %153 = vector.shape_cast %152 : vector<1x4x4xf32> to vector<4x4xf32>
    %cst_117 = arith.constant dense<0.000000e+00> : vector<512x4xf32>
    %154 = tpu.matmul %151, %153, %cst_117 {dimension_numbers = #tpu.dot_dimension_numbers<[1], [0], [0], [1], [0, 0, 1, 1], [], []>} : vector<512x4xf32>, vector<4x4xf32>, vector<512x4xf32> -> vector<512x4xf32>
    %155 = arith.addf %150, %154 : vector<512x4xf32>
    %c71_118 = arith.constant 71 : index
    %c0_119 = arith.constant 0 : index
    %156 = vector.load %arg5[%c71_118, %c0_119] : memref<608x4xf32, #tpu.memory_space<vmem>>, vector<512x4xf32>
    %c6_120 = arith.constant 6 : index
    %c0_121 = arith.constant 0 : index
    %c0_122 = arith.constant 0 : index
    %157 = vector.load %arg3[%c6_120, %c0_121, %c0_122] : memref<9x4x4xf32, #tpu.memory_space<vmem>>, vector<1x4x4xf32>
    %158 = vector.shape_cast %157 : vector<1x4x4xf32> to vector<4x4xf32>
    %cst_123 = arith.constant dense<0.000000e+00> : vector<512x4xf32>
    %159 = tpu.matmul %156, %158, %cst_123 {dimension_numbers = #tpu.dot_dimension_numbers<[1], [0], [0], [1], [0, 0, 1, 1], [], []>} : vector<512x4xf32>, vector<4x4xf32>, vector<512x4xf32> -> vector<512x4xf32>
    %160 = arith.addf %155, %159 : vector<512x4xf32>
    %c72_124 = arith.constant 72 : index
    %c0_125 = arith.constant 0 : index
    %161 = vector.load %arg5[%c72_124, %c0_125] : memref<608x4xf32, #tpu.memory_space<vmem>>, vector<512x4xf32>
    %c7_126 = arith.constant 7 : index
    %c0_127 = arith.constant 0 : index
    %c0_128 = arith.constant 0 : index
    %162 = vector.load %arg3[%c7_126, %c0_127, %c0_128] : memref<9x4x4xf32, #tpu.memory_space<vmem>>, vector<1x4x4xf32>
    %163 = vector.shape_cast %162 : vector<1x4x4xf32> to vector<4x4xf32>
    %cst_129 = arith.constant dense<0.000000e+00> : vector<512x4xf32>
    %164 = tpu.matmul %161, %163, %cst_129 {dimension_numbers = #tpu.dot_dimension_numbers<[1], [0], [0], [1], [0, 0, 1, 1], [], []>} : vector<512x4xf32>, vector<4x4xf32>, vector<512x4xf32> -> vector<512x4xf32>
    %165 = arith.addf %160, %164 : vector<512x4xf32>
    %c73_130 = arith.constant 73 : index
    %c0_131 = arith.constant 0 : index
    %166 = vector.load %arg5[%c73_130, %c0_131] : memref<608x4xf32, #tpu.memory_space<vmem>>, vector<512x4xf32>
    %c8_132 = arith.constant 8 : index
    %c0_133 = arith.constant 0 : index
    %c0_134 = arith.constant 0 : index
    %167 = vector.load %arg3[%c8_132, %c0_133, %c0_134] : memref<9x4x4xf32, #tpu.memory_space<vmem>>, vector<1x4x4xf32>
    %168 = vector.shape_cast %167 : vector<1x4x4xf32> to vector<4x4xf32>
    %cst_135 = arith.constant dense<0.000000e+00> : vector<512x4xf32>
    %169 = tpu.matmul %166, %168, %cst_135 {dimension_numbers = #tpu.dot_dimension_numbers<[1], [0], [0], [1], [0, 0, 1, 1], [], []>} : vector<512x4xf32>, vector<4x4xf32>, vector<512x4xf32> -> vector<512x4xf32>
    %170 = arith.addf %165, %169 : vector<512x4xf32>
    %171 = tpu.iota {dimensions = array<i32: 0>} : vector<512x1xi32>
    %c32_i32_136 = arith.constant 32 : i32
    %c0_i32_137 = arith.constant 0 : i32
    %172 = arith.cmpi eq, %c32_i32_136, %c0_i32_137 : i32
    %c1_i32_138 = arith.constant 1 : i32
    %173 = arith.select %172, %c1_i32_138, %c32_i32_136 : i32
    %174 = vector.broadcast %173 : i32 to vector<512x1xi32>
    %175 = arith.remsi %171, %174 : vector<512x1xi32>
    %c0_i32_139 = arith.constant 0 : i32
    %176 = vector.broadcast %c0_i32_139 : i32 to vector<512x1xi32>
    %177 = arith.cmpi ne, %175, %176 : vector<512x1xi32>
    %c0_i32_140 = arith.constant 0 : i32
    %178 = vector.broadcast %c0_i32_140 : i32 to vector<512x1xi32>
    %179 = arith.cmpi slt, %175, %178 : vector<512x1xi32>
    %c0_i32_141 = arith.constant 0 : i32
    %180 = arith.cmpi slt, %173, %c0_i32_141 : i32
    %181 = vector.broadcast %180 : i1 to vector<512x1xi1>
    %182 = vector.broadcast %181 : vector<512x1xi1> to vector<512x1xi1>
    %183 = arith.xori %179, %182 : vector<512x1xi1>
    %184 = arith.andi %183, %177 : vector<512x1xi1>
    %185 = vector.broadcast %173 : i32 to vector<512x1xi32>
    %186 = arith.addi %175, %185 : vector<512x1xi32>
    %187 = arith.select %184, %186, %175 : vector<512x1xi1>, vector<512x1xi32>
    %c16_i32_142 = arith.constant 16 : i32
    %188 = vector.broadcast %c16_i32_142 : i32 to vector<512x1xi32>
    %189 = arith.cmpi slt, %187, %188 : vector<512x1xi32>
    %cst_143 = arith.constant 0.000000e+00 : f32
    %190 = vector.shape_cast %189 : vector<512x1xi1> to vector<512x1xi1>
    %191 = vector.broadcast %190 : vector<512x1xi1> to vector<512x4xi1>
    %192 = vector.broadcast %cst_143 : f32 to vector<512x4xf32>
    %193 = arith.select %191, %170, %192 : vector<512x4xi1>, vector<512x4xf32>
    %cst_144 = arith.constant dense<0.000000e+00> : vector<4xf32>
    %194 = vector.multi_reduction <add>, %193, %cst_144 [0] : vector<512x4xf32> to vector<4xf32>
    %195 = vector.shape_cast %194 : vector<4xf32> to vector<1x4xf32>
    %196 = arith.addf %125, %195 : vector<1x4xf32>
    %197 = arith.mulf %170, %170 : vector<512x4xf32>
    %cst_145 = arith.constant 0.000000e+00 : f32
    %198 = vector.shape_cast %189 : vector<512x1xi1> to vector<512x1xi1>
    %199 = vector.broadcast %198 : vector<512x1xi1> to vector<512x4xi1>
    %200 = vector.broadcast %cst_145 : f32 to vector<512x4xf32>
    %201 = arith.select %199, %197, %200 : vector<512x4xi1>, vector<512x4xf32>
    %cst_146 = arith.constant dense<0.000000e+00> : vector<4xf32>
    %202 = vector.multi_reduction <add>, %201, %cst_146 [0] : vector<512x4xf32> to vector<4xf32>
    %203 = vector.shape_cast %202 : vector<4xf32> to vector<1x4xf32>
    %204 = arith.addf %126, %203 : vector<1x4xf32>
    %c0_147 = arith.constant 0 : index
    %c0_148 = arith.constant 0 : index
    %205 = vector.load %arg6[%c0_147, %c0_148] : memref<512x4xf32, #tpu.memory_space<vmem>>, vector<512x4xf32>
    tpu.vector_store %arg6[%c0_147, %c0_148], %170 {strides = array<i32>} : memref<512x4xf32, #tpu.memory_space<vmem>>, vector<512x4xf32>,
    %cst_149 = arith.constant 3.906250e-03 : f32
    %206 = vector.broadcast %cst_149 : f32 to vector<1x4xf32>
    %207 = arith.mulf %196, %206 : vector<1x4xf32>
    %cst_150 = arith.constant 3.906250e-03 : f32
    %208 = vector.broadcast %cst_150 : f32 to vector<1x4xf32>
    %209 = arith.mulf %204, %208 : vector<1x4xf32>
    %210 = arith.mulf %207, %207 : vector<1x4xf32>
    %211 = arith.subf %209, %210 : vector<1x4xf32>
    %cst_151 = arith.constant 9.99999974E-6 : f32
    %212 = vector.broadcast %cst_151 : f32 to vector<1x4xf32>
    %213 = arith.addf %211, %212 : vector<1x4xf32>
    %214 = math.rsqrt %213 : vector<1x4xf32>
    %c0_152 = arith.constant 0 : index
    %c0_153 = arith.constant 0 : index
    %215 = vector.load %arg6[%c0_152, %c0_153] : memref<512x4xf32, #tpu.memory_space<vmem>>, vector<512x4xf32>
    %216 = vector.broadcast %207 : vector<1x4xf32> to vector<512x4xf32>
    %217 = arith.subf %215, %216 : vector<512x4xf32>
    %218 = vector.broadcast %214 : vector<1x4xf32> to vector<512x4xf32>
    %219 = arith.mulf %217, %218 : vector<512x4xf32>
    %220 = vector.shape_cast %219 : vector<512x4xf32> to vector<16x32x4xf32>
    %221 = vector.extract_strided_slice %220 {offsets = [0, 0, 0], sizes = [16, 16, 4], strides = [1, 1, 1]} : vector<16x32x4xf32> to vector<16x16x4xf32>
    %222 = arith.addf %221, %3 : vector<16x16x4xf32>
    %c0_154 = arith.constant 0 : index
    %c0_155 = arith.constant 0 : index
    %c0_156 = arith.constant 0 : index
    %c0_157 = arith.constant 0 : index
    %223 = vector.load %arg4[%c0_154, %c0_155, %c0_156, %c0_157] : memref<1x16x16x4xf32, #tpu.memory_space<vmem>>, vector<1x16x16x4xf32>
    %224 = vector.shape_cast %223 : vector<1x16x16x4xf32> to vector<16x16x4xf32>
    %225 = vector.shape_cast %222 : vector<16x16x4xf32> to vector<1x16x16x4xf32>
    tpu.vector_store %arg4[%c0_154, %c0_155, %c0_156, %c0_157], %225 {strides = array<i32>} : memref<1x16x16x4xf32, #tpu.memory_space<vmem>>, vector<1x16x16x4xf32>,
    return
  }
  func.func @transform_0(%arg0: i32) -> (i32, i32, i32, i32) {
    %c0_i32 = arith.constant 0 : i32
    %c0_i32_0 = arith.constant 0 : i32
    %c0_i32_1 = arith.constant 0 : i32
    %c0_i32_2 = arith.constant 0 : i32
    return %arg0, %c0_i32, %c0_i32_0, %c0_i32_1 : i32, i32, i32, i32
  }
  func.func @transform_1(%arg0: i32) -> (i32, i32, i32) {
    %c0_i32 = arith.constant 0 : i32
    %c0_i32_0 = arith.constant 0 : i32
    %c0_i32_1 = arith.constant 0 : i32
    %c0_i32_2 = arith.constant 0 : i32
    return %c0_i32, %c0_i32_0, %c0_i32_1 : i32, i32, i32
  }
  func.func @transform_2(%arg0: i32) -> (i32, i32, i32) {
    %c0_i32 = arith.constant 0 : i32
    %c0_i32_0 = arith.constant 0 : i32
    %c0_i32_1 = arith.constant 0 : i32
    %c0_i32_2 = arith.constant 0 : i32
    return %c0_i32, %c0_i32_0, %c0_i32_1 : i32, i32, i32
  }
  func.func @transform_3(%arg0: i32) -> (i32, i32, i32, i32) {
    %c0_i32 = arith.constant 0 : i32
    %c0_i32_0 = arith.constant 0 : i32
    %c0_i32_1 = arith.constant 0 : i32
    %c0_i32_2 = arith.constant 0 : i32
    return %arg0, %c0_i32, %c0_i32_0, %c0_i32_1 : i32, i32, i32, i32
  }
}

</mosaic_0001>

<llo_original>
// kernel: tpu_custom_call.1
$region0: #{tpu_custom_call.1}
  #allocation0 [shape = 'u32[]', space=smem, size = 0x4, offset = 0x4, fixed_abs, tag = 'smem constant byte address 0x4 - core index']
  #allocation1 [shape = 'u32[72,128]{1,0:T(1,128)}', space=vmem, size = 0x9000, scoped, tag = 'internal scratch']
  #allocation2 [shape = 'f32[608,4]{1,0:T(8,128)}', space=vmem, size = 0x4c000, scoped, tag = 'scratch operand']
  #allocation3 [shape = 'f32[512,4]{1,0:T(8,128)}', space=vmem, size = 0x40000, scoped, tag = 'scratch operand']
  %s0 = inlined_call_operand.vmem [shape: f32[2,16,16,4], index: 0, kind: input, shape index: {}]
  %s1 = inlined_call_operand.vmem [shape: f32[9,4,4], index: 1, kind: input, shape index: {}]
  %s2 = inlined_call_operand.vmem [shape: f32[9,4,4], index: 2, kind: input, shape index: {}]
  %s3 = inlined_call_operand.vmem [shape: f32[2,16,16,4], index: 3, kind: output, shape index: {}]
  %s4 = sld [smem:[#allocation0]]
  $region45: #{tpu_custom_call.1} parent=0
    _
  %s6 = ssub.s32 1, %s4
  %s7 = scalar_select 0, %s6, %s4
  loop: start=0, step=1, limit=4
  $region2: #{tpu_custom_call.1} parent=0 // loop_pre_header
    _
  $region3: #{tpu_custom_call.1} parent=0 // loop_header
    %s9 = sphi 0, %s13
    %p10 = scmp.ge.s32.totalorder %s9, 4
    %s19 = sphi 0, %s21
    %s22 = sphi 0, %s19
    %s23 = sphi 0, %s22
    %s39 = sphi 0, %s23
    %s43 = sphi 0, %s43
    %s45 = sphi 0, %s43
    %s46 = sphi 0, %s45
    %s60 = sphi 0, %s46
    %s64 = sphi 0, %s64
    %s66 = sphi 0, %s64
    %s67 = sphi 0, %s66
    %s81 = sphi 0, %s67
    %s87 = sphi 0, %s89
    %s90 = sphi 0, %s87
    %s91 = sphi 0, %s90
    %s107 = sphi 0, %s91
  $region4: #{tpu_custom_call.1} parent=0 // loop_header_branch
    %12 = sbr.rel (%p10) target = $region8
  $region5: #{tpu_custom_call.1} parent=0 // loop_body
    %s14 = ssub.s32 %s9, 1
    %s15 = ssub.s32 %s9, 2
    %s16 = sadd.s32 %s9, 1
    %s17 = ssub.s32 %s9, %s16
    %p18 = scmp.eq.s32.totalorder %s17, 0
    %s20 = sadd.s32 %s19, 1
    %s21 = scalar_select %p18, %s19, %s20
    %p24 = pneg %p18
    %p25 = scmp.eq.s32.totalorder %s9, 1
    %p26 = por %p24, %p25
    %p27 = scmp.ne.s32.totalorder %s19, %s22
    %p28 = scmp.eq.s32.totalorder %s9, 0
    %p29 = por %p27, %p28
    %p30 = scmp.ne.s32.totalorder %s19, %s22
    %p31 = scmp.eq.s32.totalorder %s14, 1
    %p32 = por %p30, %p31
    %p33 = scmp.ne.s32.totalorder %s22, %s23
    %p34 = scmp.eq.s32.totalorder %s14, 0
    %p35 = por %p33, %p34
    %p36 = scmp.ne.s32.totalorder %s22, %s23
    %p37 = scmp.eq.s32.totalorder %s15, 1
    %p38 = por %p36, %p37
    %p40 = scmp.ne.s32.totalorder %s23, %s39
    %p41 = scmp.eq.s32.totalorder %s15, 0
    %p42 = por %p40, %p41
    %s44 = sadd.s32 %s43, 1
    %p47 = scmp.eq.s32.totalorder %s9, 1
    %p48 = scmp.ne.s32.totalorder %s43, %s45
    %p49 = scmp.eq.s32.totalorder %s9, 0
    %p50 = por %p48, %p49
    %p51 = scmp.ne.s32.totalorder %s43, %s45
    %p52 = scmp.eq.s32.totalorder %s14, 1
    %p53 = por %p51, %p52
    %p54 = scmp.ne.s32.totalorder %s45, %s46
    %p55 = scmp.eq.s32.totalorder %s14, 0
    %p56 = por %p54, %p55
    %p57 = scmp.ne.s32.totalorder %s45, %s46
    %p58 = scmp.eq.s32.totalorder %s15, 1
    %p59 = por %p57, %p58
    %p61 = scmp.ne.s32.totalorder %s46, %s60
    %p62 = scmp.eq.s32.totalorder %s15, 0
    %p63 = por %p61, %p62
    %s65 = sadd.s32 %s64, 1
    %p68 = scmp.eq.s32.totalorder %s9, 1
    %p69 = scmp.ne.s32.totalorder %s64, %s66
    %p70 = scmp.eq.s32.totalorder %s9, 0
    %p71 = por %p69, %p70
    %p72 = scmp.ne.s32.totalorder %s64, %s66
    %p73 = scmp.eq.s32.totalorder %s14, 1
    %p74 = por %p72, %p73
    %p75 = scmp.ne.s32.totalorder %s66, %s67
    %p76 = scmp.eq.s32.totalorder %s14, 0
    %p77 = por %p75, %p76
    %p78 = scmp.ne.s32.totalorder %s66, %s67
    %p79 = scmp.eq.s32.totalorder %s15, 1
    %p80 = por %p78, %p79
    %p82 = scmp.ne.s32.totalorder %s67, %s81
    %p83 = scmp.eq.s32.totalorder %s15, 0
    %p84 = por %p82, %p83
    %s85 = ssub.s32 %s9, %s16
    %p86 = scmp.eq.s32.totalorder %s85, 0
    %s88 = sadd.s32 %s87, 1
    %s89 = scalar_select %p86, %s87, %s88
    %p92 = pneg %p86
    %p93 = scmp.eq.s32.totalorder %s9, 1
    %p94 = por %p92, %p93
    %p95 = scmp.ne.s32.totalorder %s87, %s90
    %p96 = scmp.eq.s32.totalorder %s9, 0
    %p97 = por %p95, %p96
    %p98 = scmp.ne.s32.totalorder %s87, %s90
    %p99 = scmp.eq.s32.totalorder %s14, 1
    %p100 = por %p98, %p99
    %p101 = scmp.ne.s32.totalorder %s90, %s91
    %p102 = scmp.eq.s32.totalorder %s14, 0
    %p103 = por %p101, %p102
    %p104 = scmp.ne.s32.totalorder %s90, %s91
    %p105 = scmp.eq.s32.totalorder %s15, 1
    %p106 = por %p104, %p105
    %p108 = scmp.ne.s32.totalorder %s91, %s107
    %p109 = scmp.eq.s32.totalorder %s15, 0
    %p110 = por %p108, %p109
    %p111 = scmp.le.s32.totalorder 1, %s9
    %p112 = scmp.lt.s32.totalorder %s9, 3
    %p113 = pnand %p111, %p112
    %p114 = pneg %p113
    // Predicated region
    $region9: #{tpu_custom_call.1} parent=5 // pred_check
      _
    $region10: #{tpu_custom_call.1} parent=5 // pred_check_branch
      %116 = sbr.rel (%p113) target = $region12
    $region11: #{tpu_custom_call.1} parent=5 // pred_region
      %s117 = ssub.s32 %s9, 1
      // Predicated region
      $region13: #{tpu_custom_call.1} parent=11 // pred_check
        %p118 = pneg %p56
      $region14: #{tpu_custom_call.1} parent=11 // pred_check_branch
        %120 = sbr.rel (%p118) target = $region16
      $region15: #{tpu_custom_call.1} parent=11 // pred_region
        _
      $region16: #{tpu_custom_call.1} parent=11 // pred_fallthru
        _
      // Predicated region
      $region17: #{tpu_custom_call.1} parent=11 // pred_check
        %p121 = pneg %p77
      $region18: #{tpu_custom_call.1} parent=11 // pred_check_branch
        %123 = sbr.rel (%p121) target = $region20
      $region19: #{tpu_custom_call.1} parent=11 // pred_region
        _
      $region20: #{tpu_custom_call.1} parent=11 // pred_fallthru
        _
    $region12: #{tpu_custom_call.1} parent=5 // pred_fallthru
      _
    %p124 = scmp.lt.s32.totalorder %s9, 2
    // Predicated region
    $region21: #{tpu_custom_call.1} parent=5 // pred_check
      %p125 = pneg %p124
    $region22: #{tpu_custom_call.1} parent=5 // pred_check_branch
      %127 = sbr.rel (%p125) target = $region24
    $region23: #{tpu_custom_call.1} parent=5 // pred_region
      // Predicated region
      $region25: #{tpu_custom_call.1} parent=23 // pred_check
        %p128 = pneg %p29
      $region26: #{tpu_custom_call.1} parent=23 // pred_check_branch
        %130 = sbr.rel (%p128) target = $region28
      $region27: #{tpu_custom_call.1} parent=23 // pred_region
        %p131 = scmp.lt.s32.totalorder %s9, 1
        %s132 = scalar_select %p131, %s9, 1
        %s133 = smul.addr %s132, 32
        %s134 = smul.addr %s133, 8
        %s135 = scalar_lea.vmem %s0, %s134
      $region28: #{tpu_custom_call.1} parent=23 // pred_fallthru
        _
    $region24: #{tpu_custom_call.1} parent=5 // pred_fallthru
      _
    %p136 = scmp.le.s32.totalorder 1, %s9
    %p137 = scmp.lt.s32.totalorder %s9, 3
    %p138 = pnand %p136, %p137
    %p139 = pneg %p138
    // Predicated region
    $region29: #{tpu_custom_call.1} parent=5 // pred_check
      _
    $region30: #{tpu_custom_call.1} parent=5 // pred_check_branch
      %141 = sbr.rel (%p138) target = $region32
    $region31: #{tpu_custom_call.1} parent=5 // pred_region
      %s142 = ssub.s32 %s9, 1
      %p143 = scmp.lt.s32.totalorder %s14, 1
      %s144 = scalar_select %p143, %s14, 1
      %s145 = smul.addr %s144, 32
      %s146 = smul.addr %s145, 8
      %s147 = scalar_lea.vmem %s0, %s146
      %p148 = pneg %p35
      %p149 = pneg %p32
      %p150 = pneg %p56
      %p151 = pneg %p53
      %p152 = pneg %p77
      %p153 = pneg %p74
      %p154 = pneg %p103
      %p155 = pneg %p100
      %p156 = scmp.lt.s32.totalorder %s14, 1
      %s157 = scalar_select %p156, %s14, 1
      %s158 = smul.addr %s157, 32
      %s159 = smul.addr %s158, 8
      %s160 = scalar_lea.vmem %s3, %s159
      %p161 = scmp.lt.s32.totalorder %s14, 1
      %s162 = scalar_select %p161, %s14, 1
      %s163 = smul.addr %s162, 32
      %s164 = smul.addr %s163, 8
      %s165 = scalar_lea.vmem %s0, %s164
      %p166 = scmp.lt.s32.totalorder %s14, 1
      %s167 = scalar_select %p166, %s14, 1
      %s168 = smul.addr %s167, 32
      %s169 = smul.addr %s168, 8
      %s170 = scalar_lea.vmem %s3, %s169
      %vm171 = vcmask 31744
      %172 = vst.msk [vmem:[#allocation2 + $0x240] sm:$0xff] %vm171, 0.0
      %173 = vst.msk [vmem:[#allocation2 + $0x248] sm:$0xff] %vm171, 0.0
      %174 = vst.msk [vmem:[#allocation2 + $0x250] sm:$0xff] %vm171, 0.0
      %175 = vst.msk [vmem:[#allocation2 + $0x258] sm:$0xff] %vm171, 0.0
      %v176 = vld [vmem:[%s165] sm:$0xff]
      %v177 = vld [vmem:[%s165 + $0x8] sm:$0xff]
      %v178 = vld [vmem:[%s165 + $0x10] sm:$0xff]
      %v179 = vld [vmem:[%s165 + $0x18] sm:$0xff]
      %v180 = vld [vmem:[%s165 + $0x20] sm:$0xff]
      %v181 = vld [vmem:[%s165 + $0x28] sm:$0xff]
      %v182 = vld [vmem:[%s165 + $0x30] sm:$0xff]
      %v183 = vld [vmem:[%s165 + $0x38] sm:$0xff]
      %v184 = vld [vmem:[%s165 + $0x40] sm:$0xff]
      %v185 = vld [vmem:[%s165 + $0x48] sm:$0xff]
      %v186 = vld [vmem:[%s165 + $0x50] sm:$0xff]
      %v187 = vld [vmem:[%s165 + $0x58] sm:$0xff]
      %v188 = vld [vmem:[%s165 + $0x60] sm:$0xff]
      %v189 = vld [vmem:[%s165 + $0x68] sm:$0xff]
      %v190 = vld [vmem:[%s165 + $0x70] sm:$0xff]
      %v191 = vld [vmem:[%s165 + $0x78] sm:$0xff]
      %v192 = vld [vmem:[%s165 + $0x80] sm:$0xff]
      %v193 = vld [vmem:[%s165 + $0x88] sm:$0xff]
      %v194 = vld [vmem:[%s165 + $0x90] sm:$0xff]
      %v195 = vld [vmem:[%s165 + $0x98] sm:$0xff]
      %v196 = vld [vmem:[%s165 + $0xa0] sm:$0xff]
      %v197 = vld [vmem:[%s165 + $0xa8] sm:$0xff]
      %v198 = vld [vmem:[%s165 + $0xb0] sm:$0xff]
      %v199 = vld [vmem:[%s165 + $0xb8] sm:$0xff]
      %v200 = vld [vmem:[%s165 + $0xc0] sm:$0xff]
      %v201 = vld [vmem:[%s165 + $0xc8] sm:$0xff]
      %v202 = vld [vmem:[%s165 + $0xd0] sm:$0xff]
      %v203 = vld [vmem:[%s165 + $0xd8] sm:$0xff]
      %v204 = vld [vmem:[%s165 + $0xe0] sm:$0xff]
      %v205 = vld [vmem:[%s165 + $0xe8] sm:$0xff]
      %v206 = vld [vmem:[%s165 + $0xf0] sm:$0xff]
      %v207 = vld [vmem:[%s165 + $0xf8] sm:$0xff]
      %v224 = vrot.slane %v176, 2
      %v225 = vrot.slane %v178, 2
      %v226 = vrot.slane %v180, 2
      %v227 = vrot.slane %v182, 2
      %v228 = vrot.slane %v184, 2
      %v229 = vrot.slane %v186, 2
      %v230 = vrot.slane %v188, 2
      %v231 = vrot.slane %v190, 2
      %v232 = vrot.slane %v192, 2
      %v233 = vrot.slane %v194, 2
      %v234 = vrot.slane %v196, 2
      %v235 = vrot.slane %v198, 2
      %v236 = vrot.slane %v200, 2
      %v237 = vrot.slane %v202, 2
      %v238 = vrot.slane %v204, 2
      %v239 = vrot.slane %v206, 2
      %v272 = vrot.slane %v177, 6
      %v273 = vrot.slane %v179, 6
      %v274 = vrot.slane %v181, 6
      %v275 = vrot.slane %v183, 6
      %v276 = vrot.slane %v185, 6
      %v277 = vrot.slane %v187, 6
      %v278 = vrot.slane %v189, 6
      %v279 = vrot.slane %v191, 6
      %v280 = vrot.slane %v193, 6
      %v281 = vrot.slane %v195, 6
      %v282 = vrot.slane %v197, 6
      %v283 = vrot.slane %v199, 6
      %v284 = vrot.slane %v201, 6
      %v285 = vrot.slane %v203, 6
      %v286 = vrot.slane %v205, 6
      %v287 = vrot.slane %v207, 6
      %vm304 = vcmask 1046528
      %v305 = vsel %vm304, 0.0, %v224
      %v306 = vsel %vm304, 0.0, %v225
      %v307 = vsel %vm304, 0.0, %v226
      %v308 = vsel %vm304, 0.0, %v227
      %v309 = vsel %vm304, 0.0, %v228
      %v310 = vsel %vm304, 0.0, %v229
      %v311 = vsel %vm304, 0.0, %v230
      %v312 = vsel %vm304, 0.0, %v231
      %v313 = vsel %vm304, 0.0, %v232
      %v314 = vsel %vm304, 0.0, %v233
      %v315 = vsel %vm304, 0.0, %v234
      %v316 = vsel %vm304, 0.0, %v235
      %v317 = vsel %vm304, 0.0, %v236
      %v318 = vsel %vm304, 0.0, %v237
      %v319 = vsel %vm304, 0.0, %v238
      %v320 = vsel %vm304, 0.0, %v239
      %vm321 = vcmask 1040384
      %v322 = vsel %vm321, %v272, 0.0
      %v323 = vsel %vm321, %v273, 0.0
      %v324 = vsel %vm321, %v274, 0.0
      %v325 = vsel %vm321, %v275, 0.0
      %v326 = vsel %vm321, %v276, 0.0
      %v327 = vsel %vm321, %v277, 0.0
      %v328 = vsel %vm321, %v278, 0.0
      %v329 = vsel %vm321, %v279, 0.0
      %v330 = vsel %vm321, %v280, 0.0
      %v331 = vsel %vm321, %v281, 0.0
      %v332 = vsel %vm321, %v282, 0.0
      %v333 = vsel %vm321, %v283, 0.0
      %v334 = vsel %vm321, %v284, 0.0
      %v335 = vsel %vm321, %v285, 0.0
      %v336 = vsel %vm321, %v286, 0.0
      %v337 = vsel %vm321, %v287, 0.0
      %338 = vst.msk [vmem:[#allocation2 + $0x20] sm:$0xff] %vm171, %v305
      %339 = vst.msk [vmem:[#allocation2 + $0x28] sm:$0xff] %vm171, %v176
      %340 = vst.msk [vmem:[#allocation2 + $0x30] sm:$0xff] %vm171, %v177
      %341 = vst.msk [vmem:[#allocation2 + $0x38] sm:$0xff] %vm171, %v322
      %342 = vst.msk [vmem:[#allocation2 + $0x40] sm:$0xff] %vm171, %v306
      %343 = vst.msk [vmem:[#allocation2 + $0x48] sm:$0xff] %vm171, %v178
      %344 = vst.msk [vmem:[#allocation2 + $0x50] sm:$0xff] %vm171, %v179
      %345 = vst.msk [vmem:[#allocation2 + $0x58] sm:$0xff] %vm171, %v323
      %346 = vst.msk [vmem:[#allocation2 + $0x60] sm:$0xff] %vm171, %v307
      %347 = vst.msk [vmem:[#allocation2 + $0x68] sm:$0xff] %vm171, %v180
      %348 = vst.msk [vmem:[#allocation2 + $0x70] sm:$0xff] %vm171, %v181
      %349 = vst.msk [vmem:[#allocation2 + $0x78] sm:$0xff] %vm171, %v324
      %350 = vst.msk [vmem:[#allocation2 + $0x80] sm:$0xff] %vm171, %v308
      %351 = vst.msk [vmem:[#allocation2 + $0x88] sm:$0xff] %vm171, %v182
      %352 = vst.msk [vmem:[#allocation2 + $0x90] sm:$0xff] %vm171, %v183
      %353 = vst.msk [vmem:[#allocation2 + $0x98] sm:$0xff] %vm171, %v325
      %354 = vst.msk [vmem:[#allocation2 + $0xa0] sm:$0xff] %vm171, %v309
      %355 = vst.msk [vmem:[#allocation2 + $0xa8] sm:$0xff] %vm171, %v184
      %356 = vst.msk [vmem:[#allocation2 + $0xb0] sm:$0xff] %vm171, %v185
      %357 = vst.msk [vmem:[#allocation2 + $0xb8] sm:$0xff] %vm171, %v326
      %358 = vst.msk [vmem:[#allocation2 + $0xc0] sm:$0xff] %vm171, %v310
      %359 = vst.msk [vmem:[#allocation2 + $0xc8] sm:$0xff] %vm171, %v186
      %360 = vst.msk [vmem:[#allocation2 + $0xd0] sm:$0xff] %vm171, %v187
      %361 = vst.msk [vmem:[#allocation2 + $0xd8] sm:$0xff] %vm171, %v327
      %362 = vst.msk [vmem:[#allocation2 + $0xe0] sm:$0xff] %vm171, %v311
      %363 = vst.msk [vmem:[#allocation2 + $0xe8] sm:$0xff] %vm171, %v188
      %364 = vst.msk [vmem:[#allocation2 + $0xf0] sm:$0xff] %vm171, %v189
      %365 = vst.msk [vmem:[#allocation2 + $0xf8] sm:$0xff] %vm171, %v328
      %366 = vst.msk [vmem:[#allocation2 + $0x100] sm:$0xff] %vm171, %v312
      %367 = vst.msk [vmem:[#allocation2 + $0x108] sm:$0xff] %vm171, %v190
      %368 = vst.msk [vmem:[#allocation2 + $0x110] sm:$0xff] %vm171, %v191
      %369 = vst.msk [vmem:[#allocation2 + $0x118] sm:$0xff] %vm171, %v329
      %370 = vst.msk [vmem:[#allocation2 + $0x120] sm:$0xff] %vm171, %v313
      %371 = vst.msk [vmem:[#allocation2 + $0x128] sm:$0xff] %vm171, %v192
      %372 = vst.msk [vmem:[#allocation2 + $0x130] sm:$0xff] %vm171, %v193
      %373 = vst.msk [vmem:[#allocation2 + $0x138] sm:$0xff] %vm171, %v330
      %374 = vst.msk [vmem:[#allocation2 + $0x140] sm:$0xff] %vm171, %v314
      %375 = vst.msk [vmem:[#allocation2 + $0x148] sm:$0xff] %vm171, %v194
      %376 = vst.msk [vmem:[#allocation2 + $0x150] sm:$0xff] %vm171, %v195
      %377 = vst.msk [vmem:[#allocation2 + $0x158] sm:$0xff] %vm171, %v331
      %378 = vst.msk [vmem:[#allocation2 + $0x160] sm:$0xff] %vm171, %v315
      %379 = vst.msk [vmem:[#allocation2 + $0x168] sm:$0xff] %vm171, %v196
      %380 = vst.msk [vmem:[#allocation2 + $0x170] sm:$0xff] %vm171, %v197
      %381 = vst.msk [vmem:[#allocation2 + $0x178] sm:$0xff] %vm171, %v332
      %382 = vst.msk [vmem:[#allocation2 + $0x180] sm:$0xff] %vm171, %v316
      %383 = vst.msk [vmem:[#allocation2 + $0x188] sm:$0xff] %vm171, %v198
      %384 = vst.msk [vmem:[#allocation2 + $0x190] sm:$0xff] %vm171, %v199
      %385 = vst.msk [vmem:[#allocation2 + $0x198] sm:$0xff] %vm171, %v333
      %386 = vst.msk [vmem:[#allocation2 + $0x1a0] sm:$0xff] %vm171, %v317
      %387 = vst.msk [vmem:[#allocation2 + $0x1a8] sm:$0xff] %vm171, %v200
      %388 = vst.msk [vmem:[#allocation2 + $0x1b0] sm:$0xff] %vm171, %v201
      %389 = vst.msk [vmem:[#allocation2 + $0x1b8] sm:$0xff] %vm171, %v334
      %390 = vst.msk [vmem:[#allocation2 + $0x1c0] sm:$0xff] %vm171, %v318
      %391 = vst.msk [vmem:[#allocation2 + $0x1c8] sm:$0xff] %vm171, %v202
      %392 = vst.msk [vmem:[#allocation2 + $0x1d0] sm:$0xff] %vm171, %v203
      %393 = vst.msk [vmem:[#allocation2 + $0x1d8] sm:$0xff] %vm171, %v335
      %394 = vst.msk [vmem:[#allocation2 + $0x1e0] sm:$0xff] %vm171, %v319
      %395 = vst.msk [vmem:[#allocation2 + $0x1e8] sm:$0xff] %vm171, %v204
      %396 = vst.msk [vmem:[#allocation2 + $0x1f0] sm:$0xff] %vm171, %v205
      %397 = vst.msk [vmem:[#allocation2 + $0x1f8] sm:$0xff] %vm171, %v336
      %398 = vst.msk [vmem:[#allocation2 + $0x200] sm:$0xff] %vm171, %v320
      %399 = vst.msk [vmem:[#allocation2 + $0x208] sm:$0xff] %vm171, %v206
      %400 = vst.msk [vmem:[#allocation2 + $0x210] sm:$0xff] %vm171, %v207
      %401 = vst.msk [vmem:[#allocation2 + $0x218] sm:$0xff] %vm171, %v337
      %v402 = vld [vmem:[#allocation2 + $0x40] sm:$0xff]
      %v403 = vld [vmem:[#allocation2 + $0x48] sm:$0xff]
      %v404 = vld [vmem:[#allocation2 + $0x50] sm:$0xff]
      %v405 = vld [vmem:[#allocation2 + $0x58] sm:$0xff]
      %406 = vst.msk [vmem:[#allocation2] sm:$0xff] %vm171, %v402
      %407 = vst.msk [vmem:[#allocation2 + $0x8] sm:$0xff] %vm171, %v403
      %408 = vst.msk [vmem:[#allocation2 + $0x10] sm:$0xff] %vm171, %v404
      %409 = vst.msk [vmem:[#allocation2 + $0x18] sm:$0xff] %vm171, %v405
      %v410 = vld [vmem:[#allocation2 + $0x1e0] sm:$0xff]
      %v411 = vld [vmem:[#allocation2 + $0x1e8] sm:$0xff]
      %v412 = vld [vmem:[#allocation2 + $0x1f0] sm:$0xff]
      %v413 = vld [vmem:[#allocation2 + $0x1f8] sm:$0xff]
      %414 = vst.msk [vmem:[#allocation2 + $0x220] sm:$0xff] %vm171, %v410
      %415 = vst.msk [vmem:[#allocation2 + $0x228] sm:$0xff] %vm171, %v411
      %416 = vst.msk [vmem:[#allocation2 + $0x230] sm:$0xff] %vm171, %v412
      %417 = vst.msk [vmem:[#allocation2 + $0x238] sm:$0xff] %vm171, %v413
      %v418 = vld [vmem:[#allocation2 + $0x7] sm:$0xff]
      %v419 = vld [vmem:[#allocation2 + $0xf] sm:$0xff]
      %v420 = vld [vmem:[#allocation2 + $0x17] sm:$0xff]
      %v421 = vld [vmem:[#allocation2 + $0x1f] sm:$0xff]
      %v422 = vld [vmem:[#allocation2 + $0x27] sm:$0xff]
      %v423 = vld [vmem:[#allocation2 + $0x2f] sm:$0xff]
      %v424 = vld [vmem:[#allocation2 + $0x37] sm:$0xff]
      %v425 = vld [vmem:[#allocation2 + $0x3f] sm:$0xff]
      %v426 = vld [vmem:[#allocation2 + $0x47] sm:$0xff]
      %v427 = vld [vmem:[#allocation2 + $0x4f] sm:$0xff]
      %v428 = vld [vmem:[#allocation2 + $0x57] sm:$0xff]
      %v429 = vld [vmem:[#allocation2 + $0x5f] sm:$0xff]
      %v430 = vld [vmem:[#allocation2 + $0x67] sm:$0xff]
      %v431 = vld [vmem:[#allocation2 + $0x6f] sm:$0xff]
      %v432 = vld [vmem:[#allocation2 + $0x77] sm:$0xff]
      %v433 = vld [vmem:[#allocation2 + $0x7f] sm:$0xff]
      %v434 = vld [vmem:[#allocation2 + $0x87] sm:$0xff]
      %v435 = vld [vmem:[#allocation2 + $0x8f] sm:$0xff]
      %v436 = vld [vmem:[#allocation2 + $0x97] sm:$0xff]
      %v437 = vld [vmem:[#allocation2 + $0x9f] sm:$0xff]
      %v438 = vld [vmem:[#allocation2 + $0xa7] sm:$0xff]
      %v439 = vld [vmem:[#allocation2 + $0xaf] sm:$0xff]
      %v440 = vld [vmem:[#allocation2 + $0xb7] sm:$0xff]
      %v441 = vld [vmem:[#allocation2 + $0xbf] sm:$0xff]
      %v442 = vld [vmem:[#allocation2 + $0xc7] sm:$0xff]
      %v443 = vld [vmem:[#allocation2 + $0xcf] sm:$0xff]
      %v444 = vld [vmem:[#allocation2 + $0xd7] sm:$0xff]
      %v445 = vld [vmem:[#allocation2 + $0xdf] sm:$0xff]
      %v446 = vld [vmem:[#allocation2 + $0xe7] sm:$0xff]
      %v447 = vld [vmem:[#allocation2 + $0xef] sm:$0xff]
      %v448 = vld [vmem:[#allocation2 + $0xf7] sm:$0xff]
      %v449 = vld [vmem:[#allocation2 + $0xff] sm:$0xff]
      %v450 = vld [vmem:[#allocation2 + $0x107] sm:$0xff]
      %v451 = vld [vmem:[#allocation2 + $0x10f] sm:$0xff]
      %v452 = vld [vmem:[#allocation2 + $0x117] sm:$0xff]
      %v453 = vld [vmem:[#allocation2 + $0x11f] sm:$0xff]
      %v454 = vld [vmem:[#allocation2 + $0x127] sm:$0xff]
      %v455 = vld [vmem:[#allocation2 + $0x12f] sm:$0xff]
      %v456 = vld [vmem:[#allocation2 + $0x137] sm:$0xff]
      %v457 = vld [vmem:[#allocation2 + $0x13f] sm:$0xff]
      %v458 = vld [vmem:[#allocation2 + $0x147] sm:$0xff]
      %v459 = vld [vmem:[#allocation2 + $0x14f] sm:$0xff]
      %v460 = vld [vmem:[#allocation2 + $0x157] sm:$0xff]
      %v461 = vld [vmem:[#allocation2 + $0x15f] sm:$0xff]
      %v462 = vld [vmem:[#allocation2 + $0x167] sm:$0xff]
      %v463 = vld [vmem:[#allocation2 + $0x16f] sm:$0xff]
      %v464 = vld [vmem:[#allocation2 + $0x177] sm:$0xff]
      %v465 = vld [vmem:[#allocation2 + $0x17f] sm:$0xff]
      %v466 = vld [vmem:[#allocation2 + $0x187] sm:$0xff]
      %v467 = vld [vmem:[#allocation2 + $0x18f] sm:$0xff]
      %v468 = vld [vmem:[#allocation2 + $0x197] sm:$0xff]
      %v469 = vld [vmem:[#allocation2 + $0x19f] sm:$0xff]
      %v470 = vld [vmem:[#allocation2 + $0x1a7] sm:$0xff]
      %v471 = vld [vmem:[#allocation2 + $0x1af] sm:$0xff]
      %v472 = vld [vmem:[#allocation2 + $0x1b7] sm:$0xff]
      %v473 = vld [vmem:[#allocation2 + $0x1bf] sm:$0xff]
      %v474 = vld [vmem:[#allocation2 + $0x1c7] sm:$0xff]
      %v475 = vld [vmem:[#allocation2 + $0x1cf] sm:$0xff]
      %v476 = vld [vmem:[#allocation2 + $0x1d7] sm:$0xff]
      %v477 = vld [vmem:[#allocation2 + $0x1df] sm:$0xff]
      %v478 = vld [vmem:[#allocation2 + $0x1e7] sm:$0xff]
      %v479 = vld [vmem:[#allocation2 + $0x1ef] sm:$0xff]
      %v480 = vld [vmem:[#allocation2 + $0x1f7] sm:$0xff]
      %v481 = vld [vmem:[#allocation2 + $0x1ff] sm:$0xff]
      %v482 = vld [vmem:[%s1] sm:$0xf]
      %v483 = vld [vmem:[#allocation2 + $0x8] sm:$0xff]
      %v484 = vld [vmem:[#allocation2 + $0x10] sm:$0xff]
      %v485 = vld [vmem:[#allocation2 + $0x18] sm:$0xff]
      %v486 = vld [vmem:[#allocation2 + $0x20] sm:$0xff]
      %v487 = vld [vmem:[#allocation2 + $0x28] sm:$0xff]
      %v488 = vld [vmem:[#allocation2 + $0x30] sm:$0xff]
      %v489 = vld [vmem:[#allocation2 + $0x38] sm:$0xff]
      %v490 = vld [vmem:[#allocation2 + $0x40] sm:$0xff]
      %v491 = vld [vmem:[#allocation2 + $0x48] sm:$0xff]
      %v492 = vld [vmem:[#allocation2 + $0x50] sm:$0xff]
      %v493 = vld [vmem:[#allocation2 + $0x58] sm:$0xff]
      %v494 = vld [vmem:[#allocation2 + $0x60] sm:$0xff]
      %v495 = vld [vmem:[#allocation2 + $0x68] sm:$0xff]
      %v496 = vld [vmem:[#allocation2 + $0x70] sm:$0xff]
      %v497 = vld [vmem:[#allocation2 + $0x78] sm:$0xff]
      %v498 = vld [vmem:[#allocation2 + $0x80] sm:$0xff]
      %v499 = vld [vmem:[#allocation2 + $0x88] sm:$0xff]
      %v500 = vld [vmem:[#allocation2 + $0x90] sm:$0xff]
      %v501 = vld [vmem:[#allocation2 + $0x98] sm:$0xff]
      %v502 = vld [vmem:[#allocation2 + $0xa0] sm:$0xff]
      %v503 = vld [vmem:[#allocation2 + $0xa8] sm:$0xff]
      %v504 = vld [vmem:[#allocation2 + $0xb0] sm:$0xff]
      %v505 = vld [vmem:[#allocation2 + $0xb8] sm:$0xff]
      %v506 = vld [vmem:[#allocation2 + $0xc0] sm:$0xff]
      %v507 = vld [vmem:[#allocation2 + $0xc8] sm:$0xff]
      %v508 = vld [vmem:[#allocation2 + $0xd0] sm:$0xff]
      %v509 = vld [vmem:[#allocation2 + $0xd8] sm:$0xff]
      %v510 = vld [vmem:[#allocation2 + $0xe0] sm:$0xff]
      %v511 = vld [vmem:[#allocation2 + $0xe8] sm:$0xff]
      %v512 = vld [vmem:[#allocation2 + $0xf0] sm:$0xff]
      %v513 = vld [vmem:[#allocation2 + $0xf8] sm:$0xff]
      %v514 = vld [vmem:[#allocation2 + $0x100] sm:$0xff]
      %v515 = vld [vmem:[#allocation2 + $0x108] sm:$0xff]
      %v516 = vld [vmem:[#allocation2 + $0x110] sm:$0xff]
      %v517 = vld [vmem:[#allocation2 + $0x118] sm:$0xff]
      %v518 = vld [vmem:[#allocation2 + $0x120] sm:$0xff]
      %v519 = vld [vmem:[#allocation2 + $0x128] sm:$0xff]
      %v520 = vld [vmem:[#allocation2 + $0x130] sm:$0xff]
      %v521 = vld [vmem:[#allocation2 + $0x138] sm:$0xff]
      %v522 = vld [vmem:[#allocation2 + $0x140] sm:$0xff]
      %v523 = vld [vmem:[#allocation2 + $0x148] sm:$0xff]
      %v524 = vld [vmem:[#allocation2 + $0x150] sm:$0xff]
      %v525 = vld [vmem:[#allocation2 + $0x158] sm:$0xff]
      %v526 = vld [vmem:[#allocation2 + $0x160] sm:$0xff]
      %v527 = vld [vmem:[#allocation2 + $0x168] sm:$0xff]
      %v528 = vld [vmem:[#allocation2 + $0x170] sm:$0xff]
      %v529 = vld [vmem:[#allocation2 + $0x178] sm:$0xff]
      %v530 = vld [vmem:[#allocation2 + $0x180] sm:$0xff]
      %v531 = vld [vmem:[#allocation2 + $0x188] sm:$0xff]
      %v532 = vld [vmem:[#allocation2 + $0x190] sm:$0xff]
      %v533 = vld [vmem:[#allocation2 + $0x198] sm:$0xff]
      %v534 = vld [vmem:[#allocation2 + $0x1a0] sm:$0xff]
      %v535 = vld [vmem:[#allocation2 + $0x1a8] sm:$0xff]
      %v536 = vld [vmem:[#allocation2 + $0x1b0] sm:$0xff]
      %v537 = vld [vmem:[#allocation2 + $0x1b8] sm:$0xff]
      %v538 = vld [vmem:[#allocation2 + $0x1c0] sm:$0xff]
      %v539 = vld [vmem:[#allocation2 + $0x1c8] sm:$0xff]
      %v540 = vld [vmem:[#allocation2 + $0x1d0] sm:$0xff]
      %v541 = vld [vmem:[#allocation2 + $0x1d8] sm:$0xff]
      %v542 = vld [vmem:[#allocation2 + $0x1e0] sm:$0xff]
      %v543 = vld [vmem:[#allocation2 + $0x1e8] sm:$0xff]
      %v544 = vld [vmem:[#allocation2 + $0x1f0] sm:$0xff]
      %v545 = vld [vmem:[#allocation2 + $0x1f8] sm:$0xff]
      %v546 = vld [vmem:[#allocation2 + $0x200] sm:$0xff]
      %s547 = scalar_lea.vmem %s1, 4
      %v548 = vld [vmem:[%s547] sm:$0xf]
      %v550 = vsel %vm171, %v483, 0
      %v553 = vsel %vm171, %v484, 0
      %v556 = vsel %vm171, %v485, 0
      %v559 = vsel %vm171, %v486, 0
      %v562 = vsel %vm171, %v487, 0
      %v565 = vsel %vm171, %v488, 0
      %v568 = vsel %vm171, %v489, 0
      %v571 = vsel %vm171, %v490, 0
      %v574 = vsel %vm171, %v491, 0
      %v577 = vsel %vm171, %v492, 0
      %v580 = vsel %vm171, %v493, 0
      %v583 = vsel %vm171, %v494, 0
      %v586 = vsel %vm171, %v495, 0
      %v589 = vsel %vm171, %v496, 0
      %v592 = vsel %vm171, %v497, 0
      %v595 = vsel %vm171, %v498, 0
      %v598 = vsel %vm171, %v499, 0
      %v601 = vsel %vm171, %v500, 0
      %v604 = vsel %vm171, %v501, 0
      %v607 = vsel %vm171, %v502, 0
      %v610 = vsel %vm171, %v503, 0
      %v613 = vsel %vm171, %v504, 0
      %v616 = vsel %vm171, %v505, 0
      %v619 = vsel %vm171, %v506, 0
      %v622 = vsel %vm171, %v507, 0
      %v625 = vsel %vm171, %v508, 0
      %v628 = vsel %vm171, %v509, 0
      %v631 = vsel %vm171, %v510, 0
      %v634 = vsel %vm171, %v511, 0
      %v637 = vsel %vm171, %v512, 0
      %v640 = vsel %vm171, %v513, 0
      %v643 = vsel %vm171, %v514, 0
      %v646 = vsel %vm171, %v515, 0
      %v649 = vsel %vm171, %v516, 0
      %v652 = vsel %vm171, %v517, 0
      %v655 = vsel %vm171, %v518, 0
      %v658 = vsel %vm171, %v519, 0
      %v661 = vsel %vm171, %v520, 0
      %v664 = vsel %vm171, %v521, 0
      %v667 = vsel %vm171, %v522, 0
      %v670 = vsel %vm171, %v523, 0
      %v673 = vsel %vm171, %v524, 0
      %v676 = vsel %vm171, %v525, 0
      %v679 = vsel %vm171, %v526, 0
      %v682 = vsel %vm171, %v527, 0
      %v685 = vsel %vm171, %v528, 0
      %v688 = vsel %vm171, %v529, 0
      %v691 = vsel %vm171, %v530, 0
      %v694 = vsel %vm171, %v531, 0
      %v697 = vsel %vm171, %v532, 0
      %v700 = vsel %vm171, %v533, 0
      %v703 = vsel %vm171, %v534, 0
      %v706 = vsel %vm171, %v535, 0
      %v709 = vsel %vm171, %v536, 0
      %v712 = vsel %vm171, %v537, 0
      %v715 = vsel %vm171, %v538, 0
      %v718 = vsel %vm171, %v539, 0
      %v721 = vsel %vm171, %v540, 0
      %v724 = vsel %vm171, %v541, 0
      %v727 = vsel %vm171, %v542, 0
      %v730 = vsel %vm171, %v543, 0
      %v733 = vsel %vm171, %v544, 0
      %v736 = vsel %vm171, %v545, 0
      %v739 = vsel %vm171, %v546, 0
      %vm741 = vcmask 1043456
      %v743 = vsel %vm741, %v548, 0
      %745 = vmatpush.msra.mxu0 0.0
      %746 = vmatpush.msra.mxu0 0.0
      %747 = vmatpush.msra.mxu0 0.0
      %748 = vmatpush.msra.mxu0 0.0
      %749 = vmatpush.msra.mxu0 0.0
      %750 = vmatpush.msra.mxu0 0.0
      %751 = vmatpush.msra.mxu0 0.0
      %752 = vmatpush.msra.mxu0 0.0
      %753 = vmatpush.msra.mxu0 0.0
      %754 = vmatpush.msra.mxu0 0.0
      %755 = vmatpush.msra.mxu0 0.0
      %756 = vmatpush.msra.mxu0 0.0
      %757 = vmatpush.msra.mxu0 0.0
      %758 = vmatpush.msra.mxu0 0.0
      %759 = vmatpush.msra.mxu0 0.0
      %760 = vmatpush.msra.mxu0 %v743
      %761 = vmatmul.f32.gmra.mxu0 %v550
      %v762 = vpop.f32.mrf.mxu0
      %v763 = vadd.f32 0.0, %v762
      %764 = vmatmul.f32.gmra.mxu0 %v553
      %v765 = vpop.f32.mrf.mxu0
      %v766 = vadd.f32 0.0, %v765
      %767 = vmatmul.f32.gmra.mxu0 %v556
      %v768 = vpop.f32.mrf.mxu0
      %v769 = vadd.f32 0.0, %v768
      %770 = vmatmul.f32.gmra.mxu0 %v559
      %v771 = vpop.f32.mrf.mxu0
      %v772 = vadd.f32 0.0, %v771
      %773 = vmatmul.f32.gmra.mxu0 %v562
      %v774 = vpop.f32.mrf.mxu0
      %v775 = vadd.f32 0.0, %v774
      %776 = vmatmul.f32.gmra.mxu0 %v565
      %v777 = vpop.f32.mrf.mxu0
      %v778 = vadd.f32 0.0, %v777
      %779 = vmatmul.f32.gmra.mxu0 %v568
      %v780 = vpop.f32.mrf.mxu0
      %v781 = vadd.f32 0.0, %v780
      %782 = vmatmul.f32.gmra.mxu0 %v571
      %v783 = vpop.f32.mrf.mxu0
      %v784 = vadd.f32 0.0, %v783
      %785 = vmatmul.f32.gmra.mxu0 %v574
      %v786 = vpop.f32.mrf.mxu0
      %v787 = vadd.f32 0.0, %v786
      %788 = vmatmul.f32.gmra.mxu0 %v577
      %v789 = vpop.f32.mrf.mxu0
      %v790 = vadd.f32 0.0, %v789
      %791 = vmatmul.f32.gmra.mxu0 %v580
      %v792 = vpop.f32.mrf.mxu0
      %v793 = vadd.f32 0.0, %v792
      %794 = vmatmul.f32.gmra.mxu0 %v583
      %v795 = vpop.f32.mrf.mxu0
      %v796 = vadd.f32 0.0, %v795
      %797 = vmatmul.f32.gmra.mxu0 %v586
      %v798 = vpop.f32.mrf.mxu0
      %v799 = vadd.f32 0.0, %v798
      %800 = vmatmul.f32.gmra.mxu0 %v589
      %v801 = vpop.f32.mrf.mxu0
      %v802 = vadd.f32 0.0, %v801
      %803 = vmatmul.f32.gmra.mxu0 %v592
      %v804 = vpop.f32.mrf.mxu0
      %v805 = vadd.f32 0.0, %v804
      %806 = vmatmul.f32.gmra.mxu0 %v595
      %v807 = vpop.f32.mrf.mxu0
      %v808 = vadd.f32 0.0, %v807
      %809 = vmatmul.f32.gmra.mxu0 %v598
      %v810 = vpop.f32.mrf.mxu0
      %v811 = vadd.f32 0.0, %v810
      %812 = vmatmul.f32.gmra.mxu0 %v601
      %v813 = vpop.f32.mrf.mxu0
      %v814 = vadd.f32 0.0, %v813
      %815 = vmatmul.f32.gmra.mxu0 %v604
      %v816 = vpop.f32.mrf.mxu0
      %v817 = vadd.f32 0.0, %v816
      %818 = vmatmul.f32.gmra.mxu0 %v607
      %v819 = vpop.f32.mrf.mxu0
      %v820 = vadd.f32 0.0, %v819
      %821 = vmatmul.f32.gmra.mxu0 %v610
      %v822 = vpop.f32.mrf.mxu0
      %v823 = vadd.f32 0.0, %v822
      %824 = vmatmul.f32.gmra.mxu0 %v613
      %v825 = vpop.f32.mrf.mxu0
      %v826 = vadd.f32 0.0, %v825
      %827 = vmatmul.f32.gmra.mxu0 %v616
      %v828 = vpop.f32.mrf.mxu0
      %v829 = vadd.f32 0.0, %v828
      %830 = vmatmul.f32.gmra.mxu0 %v619
      %v831 = vpop.f32.mrf.mxu0
      %v832 = vadd.f32 0.0, %v831
      %833 = vmatmul.f32.gmra.mxu0 %v622
      %v834 = vpop.f32.mrf.mxu0
      %v835 = vadd.f32 0.0, %v834
      %836 = vmatmul.f32.gmra.mxu0 %v625
      %v837 = vpop.f32.mrf.mxu0
      %v838 = vadd.f32 0.0, %v837
      %839 = vmatmul.f32.gmra.mxu0 %v628
      %v840 = vpop.f32.mrf.mxu0
      %v841 = vadd.f32 0.0, %v840
      %842 = vmatmul.f32.gmra.mxu0 %v631
      %v843 = vpop.f32.mrf.mxu0
      %v844 = vadd.f32 0.0, %v843
      %845 = vmatmul.f32.gmra.mxu0 %v634
      %v846 = vpop.f32.mrf.mxu0
      %v847 = vadd.f32 0.0, %v846
      %848 = vmatmul.f32.gmra.mxu0 %v637
      %v849 = vpop.f32.mrf.mxu0
      %v850 = vadd.f32 0.0, %v849
      %851 = vmatmul.f32.gmra.mxu0 %v640
      %v852 = vpop.f32.mrf.mxu0
      %v853 = vadd.f32 0.0, %v852
      %854 = vmatmul.f32.gmra.mxu0 %v643
      %v855 = vpop.f32.mrf.mxu0
      %v856 = vadd.f32 0.0, %v855
      %857 = vmatmul.f32.gmra.mxu0 %v646
      %v858 = vpop.f32.mrf.mxu0
      %v859 = vadd.f32 0.0, %v858
      %860 = vmatmul.f32.gmra.mxu0 %v649
      %v861 = vpop.f32.mrf.mxu0
      %v862 = vadd.f32 0.0, %v861
      %863 = vmatmul.f32.gmra.mxu0 %v652
      %v864 = vpop.f32.mrf.mxu0
      %v865 = vadd.f32 0.0, %v864
      %866 = vmatmul.f32.gmra.mxu0 %v655
      %v867 = vpop.f32.mrf.mxu0
      %v868 = vadd.f32 0.0, %v867
      %869 = vmatmul.f32.gmra.mxu0 %v658
      %v870 = vpop.f32.mrf.mxu0
      %v871 = vadd.f32 0.0, %v870
      %872 = vmatmul.f32.gmra.mxu0 %v661
      %v873 = vpop.f32.mrf.mxu0
      %v874 = vadd.f32 0.0, %v873
      %875 = vmatmul.f32.gmra.mxu0 %v664
      %v876 = vpop.f32.mrf.mxu0
      %v877 = vadd.f32 0.0, %v876
      %878 = vmatmul.f32.gmra.mxu0 %v667
      %v879 = vpop.f32.mrf.mxu0
      %v880 = vadd.f32 0.0, %v879
      %881 = vmatmul.f32.gmra.mxu0 %v670
      %v882 = vpop.f32.mrf.mxu0
      %v883 = vadd.f32 0.0, %v882
      %884 = vmatmul.f32.gmra.mxu0 %v673
      %v885 = vpop.f32.mrf.mxu0
      %v886 = vadd.f32 0.0, %v885
      %887 = vmatmul.f32.gmra.mxu0 %v676
      %v888 = vpop.f32.mrf.mxu0
      %v889 = vadd.f32 0.0, %v888
      %890 = vmatmul.f32.gmra.mxu0 %v679
      %v891 = vpop.f32.mrf.mxu0
      %v892 = vadd.f32 0.0, %v891
      %893 = vmatmul.f32.gmra.mxu0 %v682
      %v894 = vpop.f32.mrf.mxu0
      %v895 = vadd.f32 0.0, %v894
      %896 = vmatmul.f32.gmra.mxu0 %v685
      %v897 = vpop.f32.mrf.mxu0
      %v898 = vadd.f32 0.0, %v897
      %899 = vmatmul.f32.gmra.mxu0 %v688
      %v900 = vpop.f32.mrf.mxu0
      %v901 = vadd.f32 0.0, %v900
      %902 = vmatmul.f32.gmra.mxu0 %v691
      %v903 = vpop.f32.mrf.mxu0
      %v904 = vadd.f32 0.0, %v903
      %905 = vmatmul.f32.gmra.mxu0 %v694
      %v906 = vpop.f32.mrf.mxu0
      %v907 = vadd.f32 0.0, %v906
      %908 = vmatmul.f32.gmra.mxu0 %v697
      %v909 = vpop.f32.mrf.mxu0
      %v910 = vadd.f32 0.0, %v909
      %911 = vmatmul.f32.gmra.mxu0 %v700
      %v912 = vpop.f32.mrf.mxu0
      %v913 = vadd.f32 0.0, %v912
      %914 = vmatmul.f32.gmra.mxu0 %v703
      %v915 = vpop.f32.mrf.mxu0
      %v916 = vadd.f32 0.0, %v915
      %917 = vmatmul.f32.gmra.mxu0 %v706
      %v918 = vpop.f32.mrf.mxu0
      %v919 = vadd.f32 0.0, %v918
      %920 = vmatmul.f32.gmra.mxu0 %v709
      %v921 = vpop.f32.mrf.mxu0
      %v922 = vadd.f32 0.0, %v921
      %923 = vmatmul.f32.gmra.mxu0 %v712
      %v924 = vpop.f32.mrf.mxu0
      %v925 = vadd.f32 0.0, %v924
      %926 = vmatmul.f32.gmra.mxu0 %v715
      %v927 = vpop.f32.mrf.mxu0
      %v928 = vadd.f32 0.0, %v927
      %929 = vmatmul.f32.gmra.mxu0 %v718
      %v930 = vpop.f32.mrf.mxu0
      %v931 = vadd.f32 0.0, %v930
      %932 = vmatmul.f32.gmra.mxu0 %v721
      %v933 = vpop.f32.mrf.mxu0
      %v934 = vadd.f32 0.0, %v933
      %935 = vmatmul.f32.gmra.mxu0 %v724
      %v936 = vpop.f32.mrf.mxu0
      %v937 = vadd.f32 0.0, %v936
      %938 = vmatmul.f32.gmra.mxu0 %v727
      %v939 = vpop.f32.mrf.mxu0
      %v940 = vadd.f32 0.0, %v939
      %941 = vmatmul.f32.gmra.mxu0 %v730
      %v942 = vpop.f32.mrf.mxu0
      %v943 = vadd.f32 0.0, %v942
      %944 = vmatmul.f32.gmra.mxu0 %v733
      %v945 = vpop.f32.mrf.mxu0
      %v946 = vadd.f32 0.0, %v945
      %947 = vmatmul.f32.gmra.mxu0 %v736
      %v948 = vpop.f32.mrf.mxu0
      %v949 = vadd.f32 0.0, %v948
      %950 = vmatmul.f32.gmra.mxu0 %v739
      %v951 = vpop.f32.mrf.mxu0
      %v952 = vadd.f32 0.0, %v951
      %953 = vdwg.mxu0
      %v955 = vsel %vm171, %v418, 0
      %v958 = vsel %vm171, %v419, 0
      %v961 = vsel %vm171, %v420, 0
      %v964 = vsel %vm171, %v421, 0
      %v967 = vsel %vm171, %v422, 0
      %v970 = vsel %vm171, %v423, 0
      %v973 = vsel %vm171, %v424, 0
      %v976 = vsel %vm171, %v425, 0
      %v979 = vsel %vm171, %v426, 0
      %v982 = vsel %vm171, %v427, 0
      %v985 = vsel %vm171, %v428, 0
      %v988 = vsel %vm171, %v429, 0
      %v991 = vsel %vm171, %v430, 0
      %v994 = vsel %vm171, %v431, 0
      %v997 = vsel %vm171, %v432, 0
      %v1000 = vsel %vm171, %v433, 0
      %v1003 = vsel %vm171, %v434, 0
      %v1006 = vsel %vm171, %v435, 0
      %v1009 = vsel %vm171, %v436, 0
      %v1012 = vsel %vm171, %v437, 0
      %v1015 = vsel %vm171, %v438, 0
      %v1018 = vsel %vm171, %v439, 0
      %v1021 = vsel %vm171, %v440, 0
      %v1024 = vsel %vm171, %v441, 0
      %v1027 = vsel %vm171, %v442, 0
      %v1030 = vsel %vm171, %v443, 0
      %v1033 = vsel %vm171, %v444, 0
      %v1036 = vsel %vm171, %v445, 0
      %v1039 = vsel %vm171, %v446, 0
      %v1042 = vsel %vm171, %v447, 0
      %v1045 = vsel %vm171, %v448, 0
      %v1048 = vsel %vm171, %v449, 0
      %v1051 = vsel %vm171, %v450, 0
      %v1054 = vsel %vm171, %v451, 0
      %v1057 = vsel %vm171, %v452, 0
      %v1060 = vsel %vm171, %v453, 0
      %v1063 = vsel %vm171, %v454, 0
      %v1066 = vsel %vm171, %v455, 0
      %v1069 = vsel %vm171, %v456, 0
      %v1072 = vsel %vm171, %v457, 0
      %v1075 = vsel %vm171, %v458, 0
      %v1078 = vsel %vm171, %v459, 0
      %v1081 = vsel %vm171, %v460, 0
      %v1084 = vsel %vm171, %v461, 0
      %v1087 = vsel %vm171, %v462, 0
      %v1090 = vsel %vm171, %v463, 0
      %v1093 = vsel %vm171, %v464, 0
      %v1096 = vsel %vm171, %v465, 0
      %v1099 = vsel %vm171, %v466, 0
      %v1102 = vsel %vm171, %v467, 0
      %v1105 = vsel %vm171, %v468, 0
      %v1108 = vsel %vm171, %v469, 0
      %v1111 = vsel %vm171, %v470, 0
      %v1114 = vsel %vm171, %v471, 0
      %v1117 = vsel %vm171, %v472, 0
      %v1120 = vsel %vm171, %v473, 0
      %v1123 = vsel %vm171, %v474, 0
      %v1126 = vsel %vm171, %v475, 0
      %v1129 = vsel %vm171, %v476, 0
      %v1132 = vsel %vm171, %v477, 0
      %v1135 = vsel %vm171, %v478, 0
      %v1138 = vsel %vm171, %v479, 0
      %v1141 = vsel %vm171, %v480, 0
      %v1144 = vsel %vm171, %v481, 0
      %v1147 = vsel %vm741, %v482, 0
      %1149 = vmatpush.msra.mxu0 0.0
      %1150 = vmatpush.msra.mxu0 0.0
      %1151 = vmatpush.msra.mxu0 0.0
      %1152 = vmatpush.msra.mxu0 0.0
      %1153 = vmatpush.msra.mxu0 0.0
      %1154 = vmatpush.msra.mxu0 0.0
      %1155 = vmatpush.msra.mxu0 0.0
      %1156 = vmatpush.msra.mxu0 0.0
      %1157 = vmatpush.msra.mxu0 0.0
      %1158 = vmatpush.msra.mxu0 0.0
      %1159 = vmatpush.msra.mxu0 0.0
      %1160 = vmatpush.msra.mxu0 0.0
      %1161 = vmatpush.msra.mxu0 0.0
      %1162 = vmatpush.msra.mxu0 0.0
      %1163 = vmatpush.msra.mxu0 0.0
      %1164 = vmatpush.msra.mxu0 %v1147
      %1165 = vmatmul.f32.gmra.mxu0 %v955
      %v1166 = vpop.f32.mrf.mxu0
      %v1167 = vadd.f32 %v763, %v1166
      %1168 = vmatmul.f32.gmra.mxu0 %v958
      %v1169 = vpop.f32.mrf.mxu0
      %v1170 = vadd.f32 %v766, %v1169
      %1171 = vmatmul.f32.gmra.mxu0 %v961
      %v1172 = vpop.f32.mrf.mxu0
      %v1173 = vadd.f32 %v769, %v1172
      %1174 = vmatmul.f32.gmra.mxu0 %v964
      %v1175 = vpop.f32.mrf.mxu0
      %v1176 = vadd.f32 %v772, %v1175
      %1177 = vmatmul.f32.gmra.mxu0 %v967
      %v1178 = vpop.f32.mrf.mxu0
      %v1179 = vadd.f32 %v775, %v1178
      %1180 = vmatmul.f32.gmra.mxu0 %v970
      %v1181 = vpop.f32.mrf.mxu0
      %v1182 = vadd.f32 %v778, %v1181
      %1183 = vmatmul.f32.gmra.mxu0 %v973
      %v1184 = vpop.f32.mrf.mxu0
      %v1185 = vadd.f32 %v781, %v1184
      %1186 = vmatmul.f32.gmra.mxu0 %v976
      %v1187 = vpop.f32.mrf.mxu0
      %v1188 = vadd.f32 %v784, %v1187
      %1189 = vmatmul.f32.gmra.mxu0 %v979
      %v1190 = vpop.f32.mrf.mxu0
      %v1191 = vadd.f32 %v787, %v1190
      %1192 = vmatmul.f32.gmra.mxu0 %v982
      %v1193 = vpop.f32.mrf.mxu0
      %v1194 = vadd.f32 %v790, %v1193
      %1195 = vmatmul.f32.gmra.mxu0 %v985
      %v1196 = vpop.f32.mrf.mxu0
      %v1197 = vadd.f32 %v793, %v1196
      %1198 = vmatmul.f32.gmra.mxu0 %v988
      %v1199 = vpop.f32.mrf.mxu0
      %v1200 = vadd.f32 %v796, %v1199
      %1201 = vmatmul.f32.gmra.mxu0 %v991
      %v1202 = vpop.f32.mrf.mxu0
      %v1203 = vadd.f32 %v799, %v1202
      %1204 = vmatmul.f32.gmra.mxu0 %v994
      %v1205 = vpop.f32.mrf.mxu0
      %v1206 = vadd.f32 %v802, %v1205
      %1207 = vmatmul.f32.gmra.mxu0 %v997
      %v1208 = vpop.f32.mrf.mxu0
      %v1209 = vadd.f32 %v805, %v1208
      %1210 = vmatmul.f32.gmra.mxu0 %v1000
      %v1211 = vpop.f32.mrf.mxu0
      %v1212 = vadd.f32 %v808, %v1211
      %1213 = vmatmul.f32.gmra.mxu0 %v1003
      %v1214 = vpop.f32.mrf.mxu0
      %v1215 = vadd.f32 %v811, %v1214
      %1216 = vmatmul.f32.gmra.mxu0 %v1006
      %v1217 = vpop.f32.mrf.mxu0
      %v1218 = vadd.f32 %v814, %v1217
      %1219 = vmatmul.f32.gmra.mxu0 %v1009
      %v1220 = vpop.f32.mrf.mxu0
      %v1221 = vadd.f32 %v817, %v1220
      %1222 = vmatmul.f32.gmra.mxu0 %v1012
      %v1223 = vpop.f32.mrf.mxu0
      %v1224 = vadd.f32 %v820, %v1223
      %1225 = vmatmul.f32.gmra.mxu0 %v1015
      %v1226 = vpop.f32.mrf.mxu0
      %v1227 = vadd.f32 %v823, %v1226
      %1228 = vmatmul.f32.gmra.mxu0 %v1018
      %v1229 = vpop.f32.mrf.mxu0
      %v1230 = vadd.f32 %v826, %v1229
      %1231 = vmatmul.f32.gmra.mxu0 %v1021
      %v1232 = vpop.f32.mrf.mxu0
      %v1233 = vadd.f32 %v829, %v1232
      %1234 = vmatmul.f32.gmra.mxu0 %v1024
      %v1235 = vpop.f32.mrf.mxu0
      %v1236 = vadd.f32 %v832, %v1235
      %1237 = vmatmul.f32.gmra.mxu0 %v1027
      %v1238 = vpop.f32.mrf.mxu0
      %v1239 = vadd.f32 %v835, %v1238
      %1240 = vmatmul.f32.gmra.mxu0 %v1030
      %v1241 = vpop.f32.mrf.mxu0
      %v1242 = vadd.f32 %v838, %v1241
      %1243 = vmatmul.f32.gmra.mxu0 %v1033
      %v1244 = vpop.f32.mrf.mxu0
      %v1245 = vadd.f32 %v841, %v1244
      %1246 = vmatmul.f32.gmra.mxu0 %v1036
      %v1247 = vpop.f32.mrf.mxu0
      %v1248 = vadd.f32 %v844, %v1247
      %1249 = vmatmul.f32.gmra.mxu0 %v1039
      %v1250 = vpop.f32.mrf.mxu0
      %v1251 = vadd.f32 %v847, %v1250
      %1252 = vmatmul.f32.gmra.mxu0 %v1042
      %v1253 = vpop.f32.mrf.mxu0
      %v1254 = vadd.f32 %v850, %v1253
      %1255 = vmatmul.f32.gmra.mxu0 %v1045
      %v1256 = vpop.f32.mrf.mxu0
      %v1257 = vadd.f32 %v853, %v1256
      %1258 = vmatmul.f32.gmra.mxu0 %v1048
      %v1259 = vpop.f32.mrf.mxu0
      %v1260 = vadd.f32 %v856, %v1259
      %1261 = vmatmul.f32.gmra.mxu0 %v1051
      %v1262 = vpop.f32.mrf.mxu0
      %v1263 = vadd.f32 %v859, %v1262
      %1264 = vmatmul.f32.gmra.mxu0 %v1054
      %v1265 = vpop.f32.mrf.mxu0
      %v1266 = vadd.f32 %v862, %v1265
      %1267 = vmatmul.f32.gmra.mxu0 %v1057
      %v1268 = vpop.f32.mrf.mxu0
      %v1269 = vadd.f32 %v865, %v1268
      %1270 = vmatmul.f32.gmra.mxu0 %v1060
      %v1271 = vpop.f32.mrf.mxu0
      %v1272 = vadd.f32 %v868, %v1271
      %1273 = vmatmul.f32.gmra.mxu0 %v1063
      %v1274 = vpop.f32.mrf.mxu0
      %v1275 = vadd.f32 %v871, %v1274
      %1276 = vmatmul.f32.gmra.mxu0 %v1066
      %v1277 = vpop.f32.mrf.mxu0
      %v1278 = vadd.f32 %v874, %v1277
      %1279 = vmatmul.f32.gmra.mxu0 %v1069
      %v1280 = vpop.f32.mrf.mxu0
      %v1281 = vadd.f32 %v877, %v1280
      %1282 = vmatmul.f32.gmra.mxu0 %v1072
      %v1283 = vpop.f32.mrf.mxu0
      %v1284 = vadd.f32 %v880, %v1283
      %1285 = vmatmul.f32.gmra.mxu0 %v1075
      %v1286 = vpop.f32.mrf.mxu0
      %v1287 = vadd.f32 %v883, %v1286
      %1288 = vmatmul.f32.gmra.mxu0 %v1078
      %v1289 = vpop.f32.mrf.mxu0
      %v1290 = vadd.f32 %v886, %v1289
      %1291 = vmatmul.f32.gmra.mxu0 %v1081
      %v1292 = vpop.f32.mrf.mxu0
      %v1293 = vadd.f32 %v889, %v1292
      %1294 = vmatmul.f32.gmra.mxu0 %v1084
      %v1295 = vpop.f32.mrf.mxu0
      %v1296 = vadd.f32 %v892, %v1295
      %1297 = vmatmul.f32.gmra.mxu0 %v1087
      %v1298 = vpop.f32.mrf.mxu0
      %v1299 = vadd.f32 %v895, %v1298
      %1300 = vmatmul.f32.gmra.mxu0 %v1090
      %v1301 = vpop.f32.mrf.mxu0
      %v1302 = vadd.f32 %v898, %v1301
      %1303 = vmatmul.f32.gmra.mxu0 %v1093
      %v1304 = vpop.f32.mrf.mxu0
      %v1305 = vadd.f32 %v901, %v1304
      %1306 = vmatmul.f32.gmra.mxu0 %v1096
      %v1307 = vpop.f32.mrf.mxu0
      %v1308 = vadd.f32 %v904, %v1307
      %1309 = vmatmul.f32.gmra.mxu0 %v1099
      %v1310 = vpop.f32.mrf.mxu0
      %v1311 = vadd.f32 %v907, %v1310
      %1312 = vmatmul.f32.gmra.mxu0 %v1102
      %v1313 = vpop.f32.mrf.mxu0
      %v1314 = vadd.f32 %v910, %v1313
      %1315 = vmatmul.f32.gmra.mxu0 %v1105
      %v1316 = vpop.f32.mrf.mxu0
      %v1317 = vadd.f32 %v913, %v1316
      %1318 = vmatmul.f32.gmra.mxu0 %v1108
      %v1319 = vpop.f32.mrf.mxu0
      %v1320 = vadd.f32 %v916, %v1319
      %1321 = vmatmul.f32.gmra.mxu0 %v1111
      %v1322 = vpop.f32.mrf.mxu0
      %v1323 = vadd.f32 %v919, %v1322
      %1324 = vmatmul.f32.gmra.mxu0 %v1114
      %v1325 = vpop.f32.mrf.mxu0
      %v1326 = vadd.f32 %v922, %v1325
      %1327 = vmatmul.f32.gmra.mxu0 %v1117
      %v1328 = vpop.f32.mrf.mxu0
      %v1329 = vadd.f32 %v925, %v1328
      %1330 = vmatmul.f32.gmra.mxu0 %v1120
      %v1331 = vpop.f32.mrf.mxu0
      %v1332 = vadd.f32 %v928, %v1331
      %1333 = vmatmul.f32.gmra.mxu0 %v1123
      %v1334 = vpop.f32.mrf.mxu0
      %v1335 = vadd.f32 %v931, %v1334
      %1336 = vmatmul.f32.gmra.mxu0 %v1126
      %v1337 = vpop.f32.mrf.mxu0
      %v1338 = vadd.f32 %v934, %v1337
      %1339 = vmatmul.f32.gmra.mxu0 %v1129
      %v1340 = vpop.f32.mrf.mxu0
      %v1341 = vadd.f32 %v937, %v1340
      %1342 = vmatmul.f32.gmra.mxu0 %v1132
      %v1343 = vpop.f32.mrf.mxu0
      %v1344 = vadd.f32 %v940, %v1343
      %1345 = vmatmul.f32.gmra.mxu0 %v1135
      %v1346 = vpop.f32.mrf.mxu0
      %v1347 = vadd.f32 %v943, %v1346
      %1348 = vmatmul.f32.gmra.mxu0 %v1138
      %v1349 = vpop.f32.mrf.mxu0
      %v1350 = vadd.f32 %v946, %v1349
      %1351 = vmatmul.f32.gmra.mxu0 %v1141
      %v1352 = vpop.f32.mrf.mxu0
      %v1353 = vadd.f32 %v949, %v1352
      %1354 = vmatmul.f32.gmra.mxu0 %v1144
      %v1355 = vpop.f32.mrf.mxu0
      %v1356 = vadd.f32 %v952, %v1355
      %1357 = vdwg.mxu0
      %v1358 = vld [vmem:[#allocation2 + $0x9] sm:$0xff]
      %v1359 = vld [vmem:[#allocation2 + $0x11] sm:$0xff]
      %v1360 = vld [vmem:[#allocation2 + $0x19] sm:$0xff]
      %v1361 = vld [vmem:[#allocation2 + $0x21] sm:$0xff]
      %v1362 = vld [vmem:[#allocation2 + $0x29] sm:$0xff]
      %v1363 = vld [vmem:[#allocation2 + $0x31] sm:$0xff]
      %v1364 = vld [vmem:[#allocation2 + $0x39] sm:$0xff]
      %v1365 = vld [vmem:[#allocation2 + $0x41] sm:$0xff]
      %v1366 = vld [vmem:[#allocation2 + $0x49] sm:$0xff]
      %v1367 = vld [vmem:[#allocation2 + $0x51] sm:$0xff]
      %v1368 = vld [vmem:[#allocation2 + $0x59] sm:$0xff]
      %v1369 = vld [vmem:[#allocation2 + $0x61] sm:$0xff]
      %v1370 = vld [vmem:[#allocation2 + $0x69] sm:$0xff]
      %v1371 = vld [vmem:[#allocation2 + $0x71] sm:$0xff]
      %v1372 = vld [vmem:[#allocation2 + $0x79] sm:$0xff]
      %v1373 = vld [vmem:[#allocation2 + $0x81] sm:$0xff]
      %v1374 = vld [vmem:[#allocation2 + $0x89] sm:$0xff]
      %v1375 = vld [vmem:[#allocation2 + $0x91] sm:$0xff]
      %v1376 = vld [vmem:[#allocation2 + $0x99] sm:$0xff]
      %v1377 = vld [vmem:[#allocation2 + $0xa1] sm:$0xff]
      %v1378 = vld [vmem:[#allocation2 + $0xa9] sm:$0xff]
      %v1379 = vld [vmem:[#allocation2 + $0xb1] sm:$0xff]
      %v1380 = vld [vmem:[#allocation2 + $0xb9] sm:$0xff]
      %v1381 = vld [vmem:[#allocation2 + $0xc1] sm:$0xff]
      %v1382 = vld [vmem:[#allocation2 + $0xc9] sm:$0xff]
      %v1383 = vld [vmem:[#allocation2 + $0xd1] sm:$0xff]
      %v1384 = vld [vmem:[#allocation2 + $0xd9] sm:$0xff]
      %v1385 = vld [vmem:[#allocation2 + $0xe1] sm:$0xff]
      %v1386 = vld [vmem:[#allocation2 + $0xe9] sm:$0xff]
      %v1387 = vld [vmem:[#allocation2 + $0xf1] sm:$0xff]
      %v1388 = vld [vmem:[#allocation2 + $0xf9] sm:$0xff]
      %v1389 = vld [vmem:[#allocation2 + $0x101] sm:$0xff]
      %v1390 = vld [vmem:[#allocation2 + $0x109] sm:$0xff]
      %v1391 = vld [vmem:[#allocation2 + $0x111] sm:$0xff]
      %v1392 = vld [vmem:[#allocation2 + $0x119] sm:$0xff]
      %v1393 = vld [vmem:[#allocation2 + $0x121] sm:$0xff]
      %v1394 = vld [vmem:[#allocation2 + $0x129] sm:$0xff]
      %v1395 = vld [vmem:[#allocation2 + $0x131] sm:$0xff]
      %v1396 = vld [vmem:[#allocation2 + $0x139] sm:$0xff]
      %v1397 = vld [vmem:[#allocation2 + $0x141] sm:$0xff]
      %v1398 = vld [vmem:[#allocation2 + $0x149] sm:$0xff]
      %v1399 = vld [vmem:[#allocation2 + $0x151] sm:$0xff]
      %v1400 = vld [vmem:[#allocation2 + $0x159] sm:$0xff]
      %v1401 = vld [vmem:[#allocation2 + $0x161] sm:$0xff]
      %v1402 = vld [vmem:[#allocation2 + $0x169] sm:$0xff]
      %v1403 = vld [vmem:[#allocation2 + $0x171] sm:$0xff]
      %v1404 = vld [vmem:[#allocation2 + $0x179] sm:$0xff]
      %v1405 = vld [vmem:[#allocation2 + $0x181] sm:$0xff]
      %v1406 = vld [vmem:[#allocation2 + $0x189] sm:$0xff]
      %v1407 = vld [vmem:[#allocation2 + $0x191] sm:$0xff]
      %v1408 = vld [vmem:[#allocation2 + $0x199] sm:$0xff]
      %v1409 = vld [vmem:[#allocation2 + $0x1a1] sm:$0xff]
      %v1410 = vld [vmem:[#allocation2 + $0x1a9] sm:$0xff]
      %v1411 = vld [vmem:[#allocation2 + $0x1b1] sm:$0xff]
      %v1412 = vld [vmem:[#allocation2 + $0x1b9] sm:$0xff]
      %v1413 = vld [vmem:[#allocation2 + $0x1c1] sm:$0xff]
      %v1414 = vld [vmem:[#allocation2 + $0x1c9] sm:$0xff]
      %v1415 = vld [vmem:[#allocation2 + $0x1d1] sm:$0xff]
      %v1416 = vld [vmem:[#allocation2 + $0x1d9] sm:$0xff]
      %v1417 = vld [vmem:[#allocation2 + $0x1e1] sm:$0xff]
      %v1418 = vld [vmem:[#allocation2 + $0x1e9] sm:$0xff]
      %v1419 = vld [vmem:[#allocation2 + $0x1f1] sm:$0xff]
      %v1420 = vld [vmem:[#allocation2 + $0x1f9] sm:$0xff]
      %v1421 = vld [vmem:[#allocation2 + $0x201] sm:$0xff]
      %s1422 = scalar_lea.vmem %s1, 8
      %v1423 = vld [vmem:[%s1422] sm:$0xf]
      %v1425 = vsel %vm171, %v1358, 0
      %v1428 = vsel %vm171, %v1359, 0
      %v1431 = vsel %vm171, %v1360, 0
      %v1434 = vsel %vm171, %v1361, 0
      %v1437 = vsel %vm171, %v1362, 0
      %v1440 = vsel %vm171, %v1363, 0
      %v1443 = vsel %vm171, %v1364, 0
      %v1446 = vsel %vm171, %v1365, 0
      %v1449 = vsel %vm171, %v1366, 0
      %v1452 = vsel %vm171, %v1367, 0
      %v1455 = vsel %vm171, %v1368, 0
      %v1458 = vsel %vm171, %v1369, 0
      %v1461 = vsel %vm171, %v1370, 0
      %v1464 = vsel %vm171, %v1371, 0
      %v1467 = vsel %vm171, %v1372, 0
      %v1470 = vsel %vm171, %v1373, 0
      %v1473 = vsel %vm171, %v1374, 0
      %v1476 = vsel %vm171, %v1375, 0
      %v1479 = vsel %vm171, %v1376, 0
      %v1482 = vsel %vm171, %v1377, 0
      %v1485 = vsel %vm171, %v1378, 0
      %v1488 = vsel %vm171, %v1379, 0
      %v1491 = vsel %vm171, %v1380, 0
      %v1494 = vsel %vm171, %v1381, 0
      %v1497 = vsel %vm171, %v1382, 0
      %v1500 = vsel %vm171, %v1383, 0
      %v1503 = vsel %vm171, %v1384, 0
      %v1506 = vsel %vm171, %v1385, 0
      %v1509 = vsel %vm171, %v1386, 0
      %v1512 = vsel %vm171, %v1387, 0
      %v1515 = vsel %vm171, %v1388, 0
      %v1518 = vsel %vm171, %v1389, 0
      %v1521 = vsel %vm171, %v1390, 0
      %v1524 = vsel %vm171, %v1391, 0
      %v1527 = vsel %vm171, %v1392, 0
      %v1530 = vsel %vm171, %v1393, 0
      %v1533 = vsel %vm171, %v1394, 0
      %v1536 = vsel %vm171, %v1395, 0
      %v1539 = vsel %vm171, %v1396, 0
      %v1542 = vsel %vm171, %v1397, 0
      %v1545 = vsel %vm171, %v1398, 0
      %v1548 = vsel %vm171, %v1399, 0
      %v1551 = vsel %vm171, %v1400, 0
      %v1554 = vsel %vm171, %v1401, 0
      %v1557 = vsel %vm171, %v1402, 0
      %v1560 = vsel %vm171, %v1403, 0
      %v1563 = vsel %vm171, %v1404, 0
      %v1566 = vsel %vm171, %v1405, 0
      %v1569 = vsel %vm171, %v1406, 0
      %v1572 = vsel %vm171, %v1407, 0
      %v1575 = vsel %vm171, %v1408, 0
      %v1578 = vsel %vm171, %v1409, 0
      %v1581 = vsel %vm171, %v1410, 0
      %v1584 = vsel %vm171, %v1411, 0
      %v1587 = vsel %vm171, %v1412, 0
      %v1590 = vsel %vm171, %v1413, 0
      %v1593 = vsel %vm171, %v1414, 0
      %v1596 = vsel %vm171, %v1415, 0
      %v1599 = vsel %vm171, %v1416, 0
      %v1602 = vsel %vm171, %v1417, 0
      %v1605 = vsel %vm171, %v1418, 0
      %v1608 = vsel %vm171, %v1419, 0
      %v1611 = vsel %vm171, %v1420, 0
      %v1614 = vsel %vm171, %v1421, 0
      %v1617 = vsel %vm741, %v1423, 0
      %1619 = vmatpush.msra.mxu0 0.0
      %1620 = vmatpush.msra.mxu0 0.0
      %1621 = vmatpush.msra.mxu0 0.0
      %1622 = vmatpush.msra.mxu0 0.0
      %1623 = vmatpush.msra.mxu0 0.0
      %1624 = vmatpush.msra.mxu0 0.0
      %1625 = vmatpush.msra.mxu0 0.0
      %1626 = vmatpush.msra.mxu0 0.0
      %1627 = vmatpush.msra.mxu0 0.0
      %1628 = vmatpush.msra.mxu0 0.0
      %1629 = vmatpush.msra.mxu0 0.0
      %1630 = vmatpush.msra.mxu0 0.0
      %1631 = vmatpush.msra.mxu0 0.0
      %1632 = vmatpush.msra.mxu0 0.0
      %1633 = vmatpush.msra.mxu0 0.0
      %1634 = vmatpush.msra.mxu0 %v1617
      %1635 = vmatmul.f32.gmra.mxu0 %v1425
      %v1636 = vpop.f32.mrf.mxu0
      %v1637 = vadd.f32 0.0, %v1636
      %1638 = vmatmul.f32.gmra.mxu0 %v1428
      %v1639 = vpop.f32.mrf.mxu0
      %v1640 = vadd.f32 0.0, %v1639
      %1641 = vmatmul.f32.gmra.mxu0 %v1431
      %v1642 = vpop.f32.mrf.mxu0
      %v1643 = vadd.f32 0.0, %v1642
      %1644 = vmatmul.f32.gmra.mxu0 %v1434
      %v1645 = vpop.f32.mrf.mxu0
      %v1646 = vadd.f32 0.0, %v1645
      %1647 = vmatmul.f32.gmra.mxu0 %v1437
      %v1648 = vpop.f32.mrf.mxu0
      %v1649 = vadd.f32 0.0, %v1648
      %1650 = vmatmul.f32.gmra.mxu0 %v1440
      %v1651 = vpop.f32.mrf.mxu0
      %v1652 = vadd.f32 0.0, %v1651
      %1653 = vmatmul.f32.gmra.mxu0 %v1443
      %v1654 = vpop.f32.mrf.mxu0
      %v1655 = vadd.f32 0.0, %v1654
      %1656 = vmatmul.f32.gmra.mxu0 %v1446
      %v1657 = vpop.f32.mrf.mxu0
      %v1658 = vadd.f32 0.0, %v1657
      %1659 = vmatmul.f32.gmra.mxu0 %v1449
      %v1660 = vpop.f32.mrf.mxu0
      %v1661 = vadd.f32 0.0, %v1660
      %1662 = vmatmul.f32.gmra.mxu0 %v1452
      %v1663 = vpop.f32.mrf.mxu0
      %v1664 = vadd.f32 0.0, %v1663
      %1665 = vmatmul.f32.gmra.mxu0 %v1455
      %v1666 = vpop.f32.mrf.mxu0
      %v1667 = vadd.f32 0.0, %v1666
      %1668 = vmatmul.f32.gmra.mxu0 %v1458
      %v1669 = vpop.f32.mrf.mxu0
      %v1670 = vadd.f32 0.0, %v1669
      %1671 = vmatmul.f32.gmra.mxu0 %v1461
      %v1672 = vpop.f32.mrf.mxu0
      %v1673 = vadd.f32 0.0, %v1672
      %1674 = vmatmul.f32.gmra.mxu0 %v1464
      %v1675 = vpop.f32.mrf.mxu0
      %v1676 = vadd.f32 0.0, %v1675
      %1677 = vmatmul.f32.gmra.mxu0 %v1467
      %v1678 = vpop.f32.mrf.mxu0
      %v1679 = vadd.f32 0.0, %v1678
      %1680 = vmatmul.f32.gmra.mxu0 %v1470
      %v1681 = vpop.f32.mrf.mxu0
      %v1682 = vadd.f32 0.0, %v1681
      %1683 = vmatmul.f32.gmra.mxu0 %v1473
      %v1684 = vpop.f32.mrf.mxu0
      %v1685 = vadd.f32 0.0, %v1684
      %1686 = vmatmul.f32.gmra.mxu0 %v1476
      %v1687 = vpop.f32.mrf.mxu0
      %v1688 = vadd.f32 0.0, %v1687
      %1689 = vmatmul.f32.gmra.mxu0 %v1479
      %v1690 = vpop.f32.mrf.mxu0
      %v1691 = vadd.f32 0.0, %v1690
      %1692 = vmatmul.f32.gmra.mxu0 %v1482
      %v1693 = vpop.f32.mrf.mxu0
      %v1694 = vadd.f32 0.0, %v1693
      %1695 = vmatmul.f32.gmra.mxu0 %v1485
      %v1696 = vpop.f32.mrf.mxu0
      %v1697 = vadd.f32 0.0, %v1696
      %1698 = vmatmul.f32.gmra.mxu0 %v1488
      %v1699 = vpop.f32.mrf.mxu0
      %v1700 = vadd.f32 0.0, %v1699
      %1701 = vmatmul.f32.gmra.mxu0 %v1491
      %v1702 = vpop.f32.mrf.mxu0
      %v1703 = vadd.f32 0.0, %v1702
      %1704 = vmatmul.f32.gmra.mxu0 %v1494
      %v1705 = vpop.f32.mrf.mxu0
      %v1706 = vadd.f32 0.0, %v1705
      %1707 = vmatmul.f32.gmra.mxu0 %v1497
      %v1708 = vpop.f32.mrf.mxu0
      %v1709 = vadd.f32 0.0, %v1708
      %1710 = vmatmul.f32.gmra.mxu0 %v1500
      %v1711 = vpop.f32.mrf.mxu0
      %v1712 = vadd.f32 0.0, %v1711
      %1713 = vmatmul.f32.gmra.mxu0 %v1503
      %v1714 = vpop.f32.mrf.mxu0
      %v1715 = vadd.f32 0.0, %v1714
      %1716 = vmatmul.f32.gmra.mxu0 %v1506
      %v1717 = vpop.f32.mrf.mxu0
      %v1718 = vadd.f32 0.0, %v1717
      %1719 = vmatmul.f32.gmra.mxu0 %v1509
      %v1720 = vpop.f32.mrf.mxu0
      %v1721 = vadd.f32 0.0, %v1720
      %1722 = vmatmul.f32.gmra.mxu0 %v1512
      %v1723 = vpop.f32.mrf.mxu0
      %v1724 = vadd.f32 0.0, %v1723
      %1725 = vmatmul.f32.gmra.mxu0 %v1515
      %v1726 = vpop.f32.mrf.mxu0
      %v1727 = vadd.f32 0.0, %v1726
      %1728 = vmatmul.f32.gmra.mxu0 %v1518
      %v1729 = vpop.f32.mrf.mxu0
      %v1730 = vadd.f32 0.0, %v1729
      %1731 = vmatmul.f32.gmra.mxu0 %v1521
      %v1732 = vpop.f32.mrf.mxu0
      %v1733 = vadd.f32 0.0, %v1732
      %1734 = vmatmul.f32.gmra.mxu0 %v1524
      %v1735 = vpop.f32.mrf.mxu0
      %v1736 = vadd.f32 0.0, %v1735
      %1737 = vmatmul.f32.gmra.mxu0 %v1527
      %v1738 = vpop.f32.mrf.mxu0
      %v1739 = vadd.f32 0.0, %v1738
      %1740 = vmatmul.f32.gmra.mxu0 %v1530
      %v1741 = vpop.f32.mrf.mxu0
      %v1742 = vadd.f32 0.0, %v1741
      %1743 = vmatmul.f32.gmra.mxu0 %v1533
      %v1744 = vpop.f32.mrf.mxu0
      %v1745 = vadd.f32 0.0, %v1744
      %1746 = vmatmul.f32.gmra.mxu0 %v1536
      %v1747 = vpop.f32.mrf.mxu0
      %v1748 = vadd.f32 0.0, %v1747
      %1749 = vmatmul.f32.gmra.mxu0 %v1539
      %v1750 = vpop.f32.mrf.mxu0
      %v1751 = vadd.f32 0.0, %v1750
      %1752 = vmatmul.f32.gmra.mxu0 %v1542
      %v1753 = vpop.f32.mrf.mxu0
      %v1754 = vadd.f32 0.0, %v1753
      %1755 = vmatmul.f32.gmra.mxu0 %v1545
      %v1756 = vpop.f32.mrf.mxu0
      %v1757 = vadd.f32 0.0, %v1756
      %1758 = vmatmul.f32.gmra.mxu0 %v1548
      %v1759 = vpop.f32.mrf.mxu0
      %v1760 = vadd.f32 0.0, %v1759
      %1761 = vmatmul.f32.gmra.mxu0 %v1551
      %v1762 = vpop.f32.mrf.mxu0
      %v1763 = vadd.f32 0.0, %v1762
      %1764 = vmatmul.f32.gmra.mxu0 %v1554
      %v1765 = vpop.f32.mrf.mxu0
      %v1766 = vadd.f32 0.0, %v1765
      %1767 = vmatmul.f32.gmra.mxu0 %v1557
      %v1768 = vpop.f32.mrf.mxu0
      %v1769 = vadd.f32 0.0, %v1768
      %1770 = vmatmul.f32.gmra.mxu0 %v1560
      %v1771 = vpop.f32.mrf.mxu0
      %v1772 = vadd.f32 0.0, %v1771
      %1773 = vmatmul.f32.gmra.mxu0 %v1563
      %v1774 = vpop.f32.mrf.mxu0
      %v1775 = vadd.f32 0.0, %v1774
      %1776 = vmatmul.f32.gmra.mxu0 %v1566
      %v1777 = vpop.f32.mrf.mxu0
      %v1778 = vadd.f32 0.0, %v1777
      %1779 = vmatmul.f32.gmra.mxu0 %v1569
      %v1780 = vpop.f32.mrf.mxu0
      %v1781 = vadd.f32 0.0, %v1780
      %1782 = vmatmul.f32.gmra.mxu0 %v1572
      %v1783 = vpop.f32.mrf.mxu0
      %v1784 = vadd.f32 0.0, %v1783
      %1785 = vmatmul.f32.gmra.mxu0 %v1575
      %v1786 = vpop.f32.mrf.mxu0
      %v1787 = vadd.f32 0.0, %v1786
      %1788 = vmatmul.f32.gmra.mxu0 %v1578
      %v1789 = vpop.f32.mrf.mxu0
      %v1790 = vadd.f32 0.0, %v1789
      %1791 = vmatmul.f32.gmra.mxu0 %v1581
      %v1792 = vpop.f32.mrf.mxu0
      %v1793 = vadd.f32 0.0, %v1792
      %1794 = vmatmul.f32.gmra.mxu0 %v1584
      %v1795 = vpop.f32.mrf.mxu0
      %v1796 = vadd.f32 0.0, %v1795
      %1797 = vmatmul.f32.gmra.mxu0 %v1587
      %v1798 = vpop.f32.mrf.mxu0
      %v1799 = vadd.f32 0.0, %v1798
      %1800 = vmatmul.f32.gmra.mxu0 %v1590
      %v1801 = vpop.f32.mrf.mxu0
      %v1802 = vadd.f32 0.0, %v1801
      %1803 = vmatmul.f32.gmra.mxu0 %v1593
      %v1804 = vpop.f32.mrf.mxu0
      %v1805 = vadd.f32 0.0, %v1804
      %1806 = vmatmul.f32.gmra.mxu0 %v1596
      %v1807 = vpop.f32.mrf.mxu0
      %v1808 = vadd.f32 0.0, %v1807
      %1809 = vmatmul.f32.gmra.mxu0 %v1599
      %v1810 = vpop.f32.mrf.mxu0
      %v1811 = vadd.f32 0.0, %v1810
      %1812 = vmatmul.f32.gmra.mxu0 %v1602
      %v1813 = vpop.f32.mrf.mxu0
      %v1814 = vadd.f32 0.0, %v1813
      %1815 = vmatmul.f32.gmra.mxu0 %v1605
      %v1816 = vpop.f32.mrf.mxu0
      %v1817 = vadd.f32 0.0, %v1816
      %1818 = vmatmul.f32.gmra.mxu0 %v1608
      %v1819 = vpop.f32.mrf.mxu0
      %v1820 = vadd.f32 0.0, %v1819
      %1821 = vmatmul.f32.gmra.mxu0 %v1611
      %v1822 = vpop.f32.mrf.mxu0
      %v1823 = vadd.f32 0.0, %v1822
      %1824 = vmatmul.f32.gmra.mxu0 %v1614
      %v1825 = vpop.f32.mrf.mxu0
      %v1826 = vadd.f32 0.0, %v1825
      %1827 = vdwg.mxu0
      %v1828 = vadd.f32 %v1167, %v1637
      %v1829 = vadd.f32 %v1170, %v1640
      %v1830 = vadd.f32 %v1173, %v1643
      %v1831 = vadd.f32 %v1176, %v1646
      %v1832 = vadd.f32 %v1179, %v1649
      %v1833 = vadd.f32 %v1182, %v1652
      %v1834 = vadd.f32 %v1185, %v1655
      %v1835 = vadd.f32 %v1188, %v1658
      %v1836 = vadd.f32 %v1191, %v1661
      %v1837 = vadd.f32 %v1194, %v1664
      %v1838 = vadd.f32 %v1197, %v1667
      %v1839 = vadd.f32 %v1200, %v1670
      %v1840 = vadd.f32 %v1203, %v1673
      %v1841 = vadd.f32 %v1206, %v1676
      %v1842 = vadd.f32 %v1209, %v1679
      %v1843 = vadd.f32 %v1212, %v1682
      %v1844 = vadd.f32 %v1215, %v1685
      %v1845 = vadd.f32 %v1218, %v1688
      %v1846 = vadd.f32 %v1221, %v1691
      %v1847 = vadd.f32 %v1224, %v1694
      %v1848 = vadd.f32 %v1227, %v1697
      %v1849 = vadd.f32 %v1230, %v1700
      %v1850 = vadd.f32 %v1233, %v1703
      %v1851 = vadd.f32 %v1236, %v1706
      %v1852 = vadd.f32 %v1239, %v1709
      %v1853 = vadd.f32 %v1242, %v1712
      %v1854 = vadd.f32 %v1245, %v1715
      %v1855 = vadd.f32 %v1248, %v1718
      %v1856 = vadd.f32 %v1251, %v1721
      %v1857 = vadd.f32 %v1254, %v1724
      %v1858 = vadd.f32 %v1257, %v1727
      %v1859 = vadd.f32 %v1260, %v1730
      %v1860 = vadd.f32 %v1263, %v1733
      %v1861 = vadd.f32 %v1266, %v1736
      %v1862 = vadd.f32 %v1269, %v1739
      %v1863 = vadd.f32 %v1272, %v1742
      %v1864 = vadd.f32 %v1275, %v1745
      %v1865 = vadd.f32 %v1278, %v1748
      %v1866 = vadd.f32 %v1281, %v1751
      %v1867 = vadd.f32 %v1284, %v1754
      %v1868 = vadd.f32 %v1287, %v1757
      %v1869 = vadd.f32 %v1290, %v1760
      %v1870 = vadd.f32 %v1293, %v1763
      %v1871 = vadd.f32 %v1296, %v1766
      %v1872 = vadd.f32 %v1299, %v1769
      %v1873 = vadd.f32 %v1302, %v1772
      %v1874 = vadd.f32 %v1305, %v1775
      %v1875 = vadd.f32 %v1308, %v1778
      %v1876 = vadd.f32 %v1311, %v1781
      %v1877 = vadd.f32 %v1314, %v1784
      %v1878 = vadd.f32 %v1317, %v1787
      %v1879 = vadd.f32 %v1320, %v1790
      %v1880 = vadd.f32 %v1323, %v1793
      %v1881 = vadd.f32 %v1326, %v1796
      %v1882 = vadd.f32 %v1329, %v1799
      %v1883 = vadd.f32 %v1332, %v1802
      %v1884 = vadd.f32 %v1335, %v1805
      %v1885 = vadd.f32 %v1338, %v1808
      %v1886 = vadd.f32 %v1341, %v1811
      %v1887 = vadd.f32 %v1344, %v1814
      %v1888 = vadd.f32 %v1347, %v1817
      %v1889 = vadd.f32 %v1350, %v1820
      %v1890 = vadd.f32 %v1353, %v1823
      %v1891 = vadd.f32 %v1356, %v1826
      %v1892 = vld [vmem:[#allocation2 + $0x27] sm:$0xff]
      %v1893 = vld [vmem:[#allocation2 + $0x2f] sm:$0xff]
      %v1894 = vld [vmem:[#allocation2 + $0x37] sm:$0xff]
      %v1895 = vld [vmem:[#allocation2 + $0x3f] sm:$0xff]
      %v1896 = vld [vmem:[#allocation2 + $0x47] sm:$0xff]
      %v1897 = vld [vmem:[#allocation2 + $0x4f] sm:$0xff]
      %v1898 = vld [vmem:[#allocation2 + $0x57] sm:$0xff]
      %v1899 = vld [vmem:[#allocation2 + $0x5f] sm:$0xff]
      %v1900 = vld [vmem:[#allocation2 + $0x67] sm:$0xff]
      %v1901 = vld [vmem:[#allocation2 + $0x6f] sm:$0xff]
      %v1902 = vld [vmem:[#allocation2 + $0x77] sm:$0xff]
      %v1903 = vld [vmem:[#allocation2 + $0x7f] sm:$0xff]
      %v1904 = vld [vmem:[#allocation2 + $0x87] sm:$0xff]
      %v1905 = vld [vmem:[#allocation2 + $0x8f] sm:$0xff]
      %v1906 = vld [vmem:[#allocation2 + $0x97] sm:$0xff]
      %v1907 = vld [vmem:[#allocation2 + $0x9f] sm:$0xff]
      %v1908 = vld [vmem:[#allocation2 + $0xa7] sm:$0xff]
      %v1909 = vld [vmem:[#allocation2 + $0xaf] sm:$0xff]
      %v1910 = vld [vmem:[#allocation2 + $0xb7] sm:$0xff]
      %v1911 = vld [vmem:[#allocation2 + $0xbf] sm:$0xff]
      %v1912 = vld [vmem:[#allocation2 + $0xc7] sm:$0xff]
      %v1913 = vld [vmem:[#allocation2 + $0xcf] sm:$0xff]
      %v1914 = vld [vmem:[#allocation2 + $0xd7] sm:$0xff]
      %v1915 = vld [vmem:[#allocation2 + $0xdf] sm:$0xff]
      %v1916 = vld [vmem:[#allocation2 + $0xe7] sm:$0xff]
      %v1917 = vld [vmem:[#allocation2 + $0xef] sm:$0xff]
      %v1918 = vld [vmem:[#allocation2 + $0xf7] sm:$0xff]
      %v1919 = vld [vmem:[#allocation2 + $0xff] sm:$0xff]
      %v1920 = vld [vmem:[#allocation2 + $0x107] sm:$0xff]
      %v1921 = vld [vmem:[#allocation2 + $0x10f] sm:$0xff]
      %v1922 = vld [vmem:[#allocation2 + $0x117] sm:$0xff]
      %v1923 = vld [vmem:[#allocation2 + $0x11f] sm:$0xff]
      %v1924 = vld [vmem:[#allocation2 + $0x127] sm:$0xff]
      %v1925 = vld [vmem:[#allocation2 + $0x12f] sm:$0xff]
      %v1926 = vld [vmem:[#allocation2 + $0x137] sm:$0xff]
      %v1927 = vld [vmem:[#allocation2 + $0x13f] sm:$0xff]
      %v1928 = vld [vmem:[#allocation2 + $0x147] sm:$0xff]
      %v1929 = vld [vmem:[#allocation2 + $0x14f] sm:$0xff]
      %v1930 = vld [vmem:[#allocation2 + $0x157] sm:$0xff]
      %v1931 = vld [vmem:[#allocation2 + $0x15f] sm:$0xff]
      %v1932 = vld [vmem:[#allocation2 + $0x167] sm:$0xff]
      %v1933 = vld [vmem:[#allocation2 + $0x16f] sm:$0xff]
      %v1934 = vld [vmem:[#allocation2 + $0x177] sm:$0xff]
      %v1935 = vld [vmem:[#allocation2 + $0x17f] sm:$0xff]
      %v1936 = vld [vmem:[#allocation2 + $0x187] sm:$0xff]
      %v1937 = vld [vmem:[#allocation2 + $0x18f] sm:$0xff]
      %v1938 = vld [vmem:[#allocation2 + $0x197] sm:$0xff]
      %v1939 = vld [vmem:[#allocation2 + $0x19f] sm:$0xff]
      %v1940 = vld [vmem:[#allocation2 + $0x1a7] sm:$0xff]
      %v1941 = vld [vmem:[#allocation2 + $0x1af] sm:$0xff]
      %v1942 = vld [vmem:[#allocation2 + $0x1b7] sm:$0xff]
      %v1943 = vld [vmem:[#allocation2 + $0x1bf] sm:$0xff]
      %v1944 = vld [vmem:[#allocation2 + $0x1c7] sm:$0xff]
      %v1945 = vld [vmem:[#allocation2 + $0x1cf] sm:$0xff]
      %v1946 = vld [vmem:[#allocation2 + $0x1d7] sm:$0xff]
      %v1947 = vld [vmem:[#allocation2 + $0x1df] sm:$0xff]
      %v1948 = vld [vmem:[#allocation2 + $0x1e7] sm:$0xff]
      %v1949 = vld [vmem:[#allocation2 + $0x1ef] sm:$0xff]
      %v1950 = vld [vmem:[#allocation2 + $0x1f7] sm:$0xff]
      %v1951 = vld [vmem:[#allocation2 + $0x1ff] sm:$0xff]
      %v1952 = vld [vmem:[#allocation2 + $0x207] sm:$0xff]
      %v1953 = vld [vmem:[#allocation2 + $0x20f] sm:$0xff]
      %v1954 = vld [vmem:[#allocation2 + $0x217] sm:$0xff]
      %v1955 = vld [vmem:[#allocation2 + $0x21f] sm:$0xff]
      %s1956 = scalar_lea.vmem %s1, 12
      %v1957 = vld [vmem:[%s1956] sm:$0xf]
      %v1959 = vsel %vm171, %v1892, 0
      %v1962 = vsel %vm171, %v1893, 0
      %v1965 = vsel %vm171, %v1894, 0
      %v1968 = vsel %vm171, %v1895, 0
      %v1971 = vsel %vm171, %v1896, 0
      %v1974 = vsel %vm171, %v1897, 0
      %v1977 = vsel %vm171, %v1898, 0
      %v1980 = vsel %vm171, %v1899, 0
      %v1983 = vsel %vm171, %v1900, 0
      %v1986 = vsel %vm171, %v1901, 0
      %v1989 = vsel %vm171, %v1902, 0
      %v1992 = vsel %vm171, %v1903, 0
      %v1995 = vsel %vm171, %v1904, 0
      %v1998 = vsel %vm171, %v1905, 0
      %v2001 = vsel %vm171, %v1906, 0
      %v2004 = vsel %vm171, %v1907, 0
      %v2007 = vsel %vm171, %v1908, 0
      %v2010 = vsel %vm171, %v1909, 0
      %v2013 = vsel %vm171, %v1910, 0
      %v2016 = vsel %vm171, %v1911, 0
      %v2019 = vsel %vm171, %v1912, 0
      %v2022 = vsel %vm171, %v1913, 0
      %v2025 = vsel %vm171, %v1914, 0
      %v2028 = vsel %vm171, %v1915, 0
      %v2031 = vsel %vm171, %v1916, 0
      %v2034 = vsel %vm171, %v1917, 0
      %v2037 = vsel %vm171, %v1918, 0
      %v2040 = vsel %vm171, %v1919, 0
      %v2043 = vsel %vm171, %v1920, 0
      %v2046 = vsel %vm171, %v1921, 0
      %v2049 = vsel %vm171, %v1922, 0
      %v2052 = vsel %vm171, %v1923, 0
      %v2055 = vsel %vm171, %v1924, 0
      %v2058 = vsel %vm171, %v1925, 0
      %v2061 = vsel %vm171, %v1926, 0
      %v2064 = vsel %vm171, %v1927, 0
      %v2067 = vsel %vm171, %v1928, 0
      %v2070 = vsel %vm171, %v1929, 0
      %v2073 = vsel %vm171, %v1930, 0
      %v2076 = vsel %vm171, %v1931, 0
      %v2079 = vsel %vm171, %v1932, 0
      %v2082 = vsel %vm171, %v1933, 0
      %v2085 = vsel %vm171, %v1934, 0
      %v2088 = vsel %vm171, %v1935, 0
      %v2091 = vsel %vm171, %v1936, 0
      %v2094 = vsel %vm171, %v1937, 0
      %v2097 = vsel %vm171, %v1938, 0
      %v2100 = vsel %vm171, %v1939, 0
      %v2103 = vsel %vm171, %v1940, 0
      %v2106 = vsel %vm171, %v1941, 0
      %v2109 = vsel %vm171, %v1942, 0
      %v2112 = vsel %vm171, %v1943, 0
      %v2115 = vsel %vm171, %v1944, 0
      %v2118 = vsel %vm171, %v1945, 0
      %v2121 = vsel %vm171, %v1946, 0
      %v2124 = vsel %vm171, %v1947, 0
      %v2127 = vsel %vm171, %v1948, 0
      %v2130 = vsel %vm171, %v1949, 0
      %v2133 = vsel %vm171, %v1950, 0
      %v2136 = vsel %vm171, %v1951, 0
      %v2139 = vsel %vm171, %v1952, 0
      %v2142 = vsel %vm171, %v1953, 0
      %v2145 = vsel %vm171, %v1954, 0
      %v2148 = vsel %vm171, %v1955, 0
      %v2151 = vsel %vm741, %v1957, 0
      %2153 = vmatpush.msra.mxu0 0.0
      %2154 = vmatpush.msra.mxu0 0.0
      %2155 = vmatpush.msra.mxu0 0.0
      %2156 = vmatpush.msra.mxu0 0.0
      %2157 = vmatpush.msra.mxu0 0.0
      %2158 = vmatpush.msra.mxu0 0.0
      %2159 = vmatpush.msra.mxu0 0.0
      %2160 = vmatpush.msra.mxu0 0.0
      %2161 = vmatpush.msra.mxu0 0.0
      %2162 = vmatpush.msra.mxu0 0.0
      %2163 = vmatpush.msra.mxu0 0.0
      %2164 = vmatpush.msra.mxu0 0.0
      %2165 = vmatpush.msra.mxu0 0.0
      %2166 = vmatpush.msra.mxu0 0.0
      %2167 = vmatpush.msra.mxu0 0.0
      %2168 = vmatpush.msra.mxu0 %v2151
      %2169 = vmatmul.f32.gmra.mxu0 %v1959
      %v2170 = vpop.f32.mrf.mxu0
      %v2171 = vadd.f32 0.0, %v2170
      %2172 = vmatmul.f32.gmra.mxu0 %v1962
      %v2173 = vpop.f32.mrf.mxu0
      %v2174 = vadd.f32 0.0, %v2173
      %2175 = vmatmul.f32.gmra.mxu0 %v1965
      %v2176 = vpop.f32.mrf.mxu0
      %v2177 = vadd.f32 0.0, %v2176
      %2178 = vmatmul.f32.gmra.mxu0 %v1968
      %v2179 = vpop.f32.mrf.mxu0
      %v2180 = vadd.f32 0.0, %v2179
      %2181 = vmatmul.f32.gmra.mxu0 %v1971
      %v2182 = vpop.f32.mrf.mxu0
      %v2183 = vadd.f32 0.0, %v2182
      %2184 = vmatmul.f32.gmra.mxu0 %v1974
      %v2185 = vpop.f32.mrf.mxu0
      %v2186 = vadd.f32 0.0, %v2185
      %2187 = vmatmul.f32.gmra.mxu0 %v1977
      %v2188 = vpop.f32.mrf.mxu0
      %v2189 = vadd.f32 0.0, %v2188
      %2190 = vmatmul.f32.gmra.mxu0 %v1980
      %v2191 = vpop.f32.mrf.mxu0
      %v2192 = vadd.f32 0.0, %v2191
      %2193 = vmatmul.f32.gmra.mxu0 %v1983
      %v2194 = vpop.f32.mrf.mxu0
      %v2195 = vadd.f32 0.0, %v2194
      %2196 = vmatmul.f32.gmra.mxu0 %v1986
      %v2197 = vpop.f32.mrf.mxu0
      %v2198 = vadd.f32 0.0, %v2197
      %2199 = vmatmul.f32.gmra.mxu0 %v1989
      %v2200 = vpop.f32.mrf.mxu0
      %v2201 = vadd.f32 0.0, %v2200
      %2202 = vmatmul.f32.gmra.mxu0 %v1992
      %v2203 = vpop.f32.mrf.mxu0
      %v2204 = vadd.f32 0.0, %v2203
      %2205 = vmatmul.f32.gmra.mxu0 %v1995
      %v2206 = vpop.f32.mrf.mxu0
      %v2207 = vadd.f32 0.0, %v2206
      %2208 = vmatmul.f32.gmra.mxu0 %v1998
      %v2209 = vpop.f32.mrf.mxu0
      %v2210 = vadd.f32 0.0, %v2209
      %2211 = vmatmul.f32.gmra.mxu0 %v2001
      %v2212 = vpop.f32.mrf.mxu0
      %v2213 = vadd.f32 0.0, %v2212
      %2214 = vmatmul.f32.gmra.mxu0 %v2004
      %v2215 = vpop.f32.mrf.mxu0
      %v2216 = vadd.f32 0.0, %v2215
      %2217 = vmatmul.f32.gmra.mxu0 %v2007
      %v2218 = vpop.f32.mrf.mxu0
      %v2219 = vadd.f32 0.0, %v2218
      %2220 = vmatmul.f32.gmra.mxu0 %v2010
      %v2221 = vpop.f32.mrf.mxu0
      %v2222 = vadd.f32 0.0, %v2221
      %2223 = vmatmul.f32.gmra.mxu0 %v2013
      %v2224 = vpop.f32.mrf.mxu0
      %v2225 = vadd.f32 0.0, %v2224
      %2226 = vmatmul.f32.gmra.mxu0 %v2016
      %v2227 = vpop.f32.mrf.mxu0
      %v2228 = vadd.f32 0.0, %v2227
      %2229 = vmatmul.f32.gmra.mxu0 %v2019
      %v2230 = vpop.f32.mrf.mxu0
      %v2231 = vadd.f32 0.0, %v2230
      %2232 = vmatmul.f32.gmra.mxu0 %v2022
      %v2233 = vpop.f32.mrf.mxu0
      %v2234 = vadd.f32 0.0, %v2233
      %2235 = vmatmul.f32.gmra.mxu0 %v2025
      %v2236 = vpop.f32.mrf.mxu0
      %v2237 = vadd.f32 0.0, %v2236
      %2238 = vmatmul.f32.gmra.mxu0 %v2028
      %v2239 = vpop.f32.mrf.mxu0
      %v2240 = vadd.f32 0.0, %v2239
      %2241 = vmatmul.f32.gmra.mxu0 %v2031
      %v2242 = vpop.f32.mrf.mxu0
      %v2243 = vadd.f32 0.0, %v2242
      %2244 = vmatmul.f32.gmra.mxu0 %v2034
      %v2245 = vpop.f32.mrf.mxu0
      %v2246 = vadd.f32 0.0, %v2245
      %2247 = vmatmul.f32.gmra.mxu0 %v2037
      %v2248 = vpop.f32.mrf.mxu0
      %v2249 = vadd.f32 0.0, %v2248
      %2250 = vmatmul.f32.gmra.mxu0 %v2040
      %v2251 = vpop.f32.mrf.mxu0
      %v2252 = vadd.f32 0.0, %v2251
      %2253 = vmatmul.f32.gmra.mxu0 %v2043
      %v2254 = vpop.f32.mrf.mxu0
      %v2255 = vadd.f32 0.0, %v2254
      %2256 = vmatmul.f32.gmra.mxu0 %v2046
      %v2257 = vpop.f32.mrf.mxu0
      %v2258 = vadd.f32 0.0, %v2257
      %2259 = vmatmul.f32.gmra.mxu0 %v2049
      %v2260 = vpop.f32.mrf.mxu0
      %v2261 = vadd.f32 0.0, %v2260
      %2262 = vmatmul.f32.gmra.mxu0 %v2052
      %v2263 = vpop.f32.mrf.mxu0
      %v2264 = vadd.f32 0.0, %v2263
      %2265 = vmatmul.f32.gmra.mxu0 %v2055
      %v2266 = vpop.f32.mrf.mxu0
      %v2267 = vadd.f32 0.0, %v2266
      %2268 = vmatmul.f32.gmra.mxu0 %v2058
      %v2269 = vpop.f32.mrf.mxu0
      %v2270 = vadd.f32 0.0, %v2269
      %2271 = vmatmul.f32.gmra.mxu0 %v2061
      %v2272 = vpop.f32.mrf.mxu0
      %v2273 = vadd.f32 0.0, %v2272
      %2274 = vmatmul.f32.gmra.mxu0 %v2064
      %v2275 = vpop.f32.mrf.mxu0
      %v2276 = vadd.f32 0.0, %v2275
      %2277 = vmatmul.f32.gmra.mxu0 %v2067
      %v2278 = vpop.f32.mrf.mxu0
      %v2279 = vadd.f32 0.0, %v2278
      %2280 = vmatmul.f32.gmra.mxu0 %v2070
      %v2281 = vpop.f32.mrf.mxu0
      %v2282 = vadd.f32 0.0, %v2281
      %2283 = vmatmul.f32.gmra.mxu0 %v2073
      %v2284 = vpop.f32.mrf.mxu0
      %v2285 = vadd.f32 0.0, %v2284
      %2286 = vmatmul.f32.gmra.mxu0 %v2076
      %v2287 = vpop.f32.mrf.mxu0
      %v2288 = vadd.f32 0.0, %v2287
      %2289 = vmatmul.f32.gmra.mxu0 %v2079
      %v2290 = vpop.f32.mrf.mxu0
      %v2291 = vadd.f32 0.0, %v2290
      %2292 = vmatmul.f32.gmra.mxu0 %v2082
      %v2293 = vpop.f32.mrf.mxu0
      %v2294 = vadd.f32 0.0, %v2293
      %2295 = vmatmul.f32.gmra.mxu0 %v2085
      %v2296 = vpop.f32.mrf.mxu0
      %v2297 = vadd.f32 0.0, %v2296
      %2298 = vmatmul.f32.gmra.mxu0 %v2088
      %v2299 = vpop.f32.mrf.mxu0
      %v2300 = vadd.f32 0.0, %v2299
      %2301 = vmatmul.f32.gmra.mxu0 %v2091
      %v2302 = vpop.f32.mrf.mxu0
      %v2303 = vadd.f32 0.0, %v2302
      %2304 = vmatmul.f32.gmra.mxu0 %v2094
      %v2305 = vpop.f32.mrf.mxu0
      %v2306 = vadd.f32 0.0, %v2305
      %2307 = vmatmul.f32.gmra.mxu0 %v2097
      %v2308 = vpop.f32.mrf.mxu0
      %v2309 = vadd.f32 0.0, %v2308
      %2310 = vmatmul.f32.gmra.mxu0 %v2100
      %v2311 = vpop.f32.mrf.mxu0
      %v2312 = vadd.f32 0.0, %v2311
      %2313 = vmatmul.f32.gmra.mxu0 %v2103
      %v2314 = vpop.f32.mrf.mxu0
      %v2315 = vadd.f32 0.0, %v2314
      %2316 = vmatmul.f32.gmra.mxu0 %v2106
      %v2317 = vpop.f32.mrf.mxu0
      %v2318 = vadd.f32 0.0, %v2317
      %2319 = vmatmul.f32.gmra.mxu0 %v2109
      %v2320 = vpop.f32.mrf.mxu0
      %v2321 = vadd.f32 0.0, %v2320
      %2322 = vmatmul.f32.gmra.mxu0 %v2112
      %v2323 = vpop.f32.mrf.mxu0
      %v2324 = vadd.f32 0.0, %v2323
      %2325 = vmatmul.f32.gmra.mxu0 %v2115
      %v2326 = vpop.f32.mrf.mxu0
      %v2327 = vadd.f32 0.0, %v2326
      %2328 = vmatmul.f32.gmra.mxu0 %v2118
      %v2329 = vpop.f32.mrf.mxu0
      %v2330 = vadd.f32 0.0, %v2329
      %2331 = vmatmul.f32.gmra.mxu0 %v2121
      %v2332 = vpop.f32.mrf.mxu0
      %v2333 = vadd.f32 0.0, %v2332
      %2334 = vmatmul.f32.gmra.mxu0 %v2124
      %v2335 = vpop.f32.mrf.mxu0
      %v2336 = vadd.f32 0.0, %v2335
      %2337 = vmatmul.f32.gmra.mxu0 %v2127
      %v2338 = vpop.f32.mrf.mxu0
      %v2339 = vadd.f32 0.0, %v2338
      %2340 = vmatmul.f32.gmra.mxu0 %v2130
      %v2341 = vpop.f32.mrf.mxu0
      %v2342 = vadd.f32 0.0, %v2341
      %2343 = vmatmul.f32.gmra.mxu0 %v2133
      %v2344 = vpop.f32.mrf.mxu0
      %v2345 = vadd.f32 0.0, %v2344
      %2346 = vmatmul.f32.gmra.mxu0 %v2136
      %v2347 = vpop.f32.mrf.mxu0
      %v2348 = vadd.f32 0.0, %v2347
      %2349 = vmatmul.f32.gmra.mxu0 %v2139
      %v2350 = vpop.f32.mrf.mxu0
      %v2351 = vadd.f32 0.0, %v2350
      %2352 = vmatmul.f32.gmra.mxu0 %v2142
      %v2353 = vpop.f32.mrf.mxu0
      %v2354 = vadd.f32 0.0, %v2353
      %2355 = vmatmul.f32.gmra.mxu0 %v2145
      %v2356 = vpop.f32.mrf.mxu0
      %v2357 = vadd.f32 0.0, %v2356
      %2358 = vmatmul.f32.gmra.mxu0 %v2148
      %v2359 = vpop.f32.mrf.mxu0
      %v2360 = vadd.f32 0.0, %v2359
      %2361 = vdwg.mxu0
      %v2362 = vadd.f32 %v1828, %v2171
      %v2363 = vadd.f32 %v1829, %v2174
      %v2364 = vadd.f32 %v1830, %v2177
      %v2365 = vadd.f32 %v1831, %v2180
      %v2366 = vadd.f32 %v1832, %v2183
      %v2367 = vadd.f32 %v1833, %v2186
      %v2368 = vadd.f32 %v1834, %v2189
      %v2369 = vadd.f32 %v1835, %v2192
      %v2370 = vadd.f32 %v1836, %v2195
      %v2371 = vadd.f32 %v1837, %v2198
      %v2372 = vadd.f32 %v1838, %v2201
      %v2373 = vadd.f32 %v1839, %v2204
      %v2374 = vadd.f32 %v1840, %v2207
      %v2375 = vadd.f32 %v1841, %v2210
      %v2376 = vadd.f32 %v1842, %v2213
      %v2377 = vadd.f32 %v1843, %v2216
      %v2378 = vadd.f32 %v1844, %v2219
      %v2379 = vadd.f32 %v1845, %v2222
      %v2380 = vadd.f32 %v1846, %v2225
      %v2381 = vadd.f32 %v1847, %v2228
      %v2382 = vadd.f32 %v1848, %v2231
      %v2383 = vadd.f32 %v1849, %v2234
      %v2384 = vadd.f32 %v1850, %v2237
      %v2385 = vadd.f32 %v1851, %v2240
      %v2386 = vadd.f32 %v1852, %v2243
      %v2387 = vadd.f32 %v1853, %v2246
      %v2388 = vadd.f32 %v1854, %v2249
      %v2389 = vadd.f32 %v1855, %v2252
      %v2390 = vadd.f32 %v1856, %v2255
      %v2391 = vadd.f32 %v1857, %v2258
      %v2392 = vadd.f32 %v1858, %v2261
      %v2393 = vadd.f32 %v1859, %v2264
      %v2394 = vadd.f32 %v1860, %v2267
      %v2395 = vadd.f32 %v1861, %v2270
      %v2396 = vadd.f32 %v1862, %v2273
      %v2397 = vadd.f32 %v1863, %v2276
      %v2398 = vadd.f32 %v1864, %v2279
      %v2399 = vadd.f32 %v1865, %v2282
      %v2400 = vadd.f32 %v1866, %v2285
      %v2401 = vadd.f32 %v1867, %v2288
      %v2402 = vadd.f32 %v1868, %v2291
      %v2403 = vadd.f32 %v1869, %v2294
      %v2404 = vadd.f32 %v1870, %v2297
      %v2405 = vadd.f32 %v1871, %v2300
      %v2406 = vadd.f32 %v1872, %v2303
      %v2407 = vadd.f32 %v1873, %v2306
      %v2408 = vadd.f32 %v1874, %v2309
      %v2409 = vadd.f32 %v1875, %v2312
      %v2410 = vadd.f32 %v1876, %v2315
      %v2411 = vadd.f32 %v1877, %v2318
      %v2412 = vadd.f32 %v1878, %v2321
      %v2413 = vadd.f32 %v1879, %v2324
      %v2414 = vadd.f32 %v1880, %v2327
      %v2415 = vadd.f32 %v1881, %v2330
      %v2416 = vadd.f32 %v1882, %v2333
      %v2417 = vadd.f32 %v1883, %v2336
      %v2418 = vadd.f32 %v1884, %v2339
      %v2419 = vadd.f32 %v1885, %v2342
      %v2420 = vadd.f32 %v1886, %v2345
      %v2421 = vadd.f32 %v1887, %v2348
      %v2422 = vadd.f32 %v1888, %v2351
      %v2423 = vadd.f32 %v1889, %v2354
      %v2424 = vadd.f32 %v1890, %v2357
      %v2425 = vadd.f32 %v1891, %v2360
      %v2426 = vld [vmem:[#allocation2 + $0x28] sm:$0xff]
      %v2427 = vld [vmem:[#allocation2 + $0x30] sm:$0xff]
      %v2428 = vld [vmem:[#allocation2 + $0x38] sm:$0xff]
      %v2429 = vld [vmem:[#allocation2 + $0x40] sm:$0xff]
      %v2430 = vld [vmem:[#allocation2 + $0x48] sm:$0xff]
      %v2431 = vld [vmem:[#allocation2 + $0x50] sm:$0xff]
      %v2432 = vld [vmem:[#allocation2 + $0x58] sm:$0xff]
      %v2433 = vld [vmem:[#allocation2 + $0x60] sm:$0xff]
      %v2434 = vld [vmem:[#allocation2 + $0x68] sm:$0xff]
      %v2435 = vld [vmem:[#allocation2 + $0x70] sm:$0xff]
      %v2436 = vld [vmem:[#allocation2 + $0x78] sm:$0xff]
      %v2437 = vld [vmem:[#allocation2 + $0x80] sm:$0xff]
      %v2438 = vld [vmem:[#allocation2 + $0x88] sm:$0xff]
      %v2439 = vld [vmem:[#allocation2 + $0x90] sm:$0xff]
      %v2440 = vld [vmem:[#allocation2 + $0x98] sm:$0xff]
      %v2441 = vld [vmem:[#allocation2 + $0xa0] sm:$0xff]
      %v2442 = vld [vmem:[#allocation2 + $0xa8] sm:$0xff]
      %v2443 = vld [vmem:[#allocation2 + $0xb0] sm:$0xff]
      %v2444 = vld [vmem:[#allocation2 + $0xb8] sm:$0xff]
      %v2445 = vld [vmem:[#allocation2 + $0xc0] sm:$0xff]
      %v2446 = vld [vmem:[#allocation2 + $0xc8] sm:$0xff]
      %v2447 = vld [vmem:[#allocation2 + $0xd0] sm:$0xff]
      %v2448 = vld [vmem:[#allocation2 + $0xd8] sm:$0xff]
      %v2449 = vld [vmem:[#allocation2 + $0xe0] sm:$0xff]
      %v2450 = vld [vmem:[#allocation2 + $0xe8] sm:$0xff]
      %v2451 = vld [vmem:[#allocation2 + $0xf0] sm:$0xff]
      %v2452 = vld [vmem:[#allocation2 + $0xf8] sm:$0xff]
      %v2453 = vld [vmem:[#allocation2 + $0x100] sm:$0xff]
      %v2454 = vld [vmem:[#allocation2 + $0x108] sm:$0xff]
      %v2455 = vld [vmem:[#allocation2 + $0x110] sm:$0xff]
      %v2456 = vld [vmem:[#allocation2 + $0x118] sm:$0xff]
      %v2457 = vld [vmem:[#allocation2 + $0x120] sm:$0xff]
      %v2458 = vld [vmem:[#allocation2 + $0x128] sm:$0xff]
      %v2459 = vld [vmem:[#allocation2 + $0x130] sm:$0xff]
      %v2460 = vld [vmem:[#allocation2 + $0x138] sm:$0xff]
      %v2461 = vld [vmem:[#allocation2 + $0x140] sm:$0xff]
      %v2462 = vld [vmem:[#allocation2 + $0x148] sm:$0xff]
      %v2463 = vld [vmem:[#allocation2 + $0x150] sm:$0xff]
      %v2464 = vld [vmem:[#allocation2 + $0x158] sm:$0xff]
      %v2465 = vld [vmem:[#allocation2 + $0x160] sm:$0xff]
      %v2466 = vld [vmem:[#allocation2 + $0x168] sm:$0xff]
      %v2467 = vld [vmem:[#allocation2 + $0x170] sm:$0xff]
      %v2468 = vld [vmem:[#allocation2 + $0x178] sm:$0xff]
      %v2469 = vld [vmem:[#allocation2 + $0x180] sm:$0xff]
      %v2470 = vld [vmem:[#allocation2 + $0x188] sm:$0xff]
      %v2471 = vld [vmem:[#allocation2 + $0x190] sm:$0xff]
      %v2472 = vld [vmem:[#allocation2 + $0x198] sm:$0xff]
      %v2473 = vld [vmem:[#allocation2 + $0x1a0] sm:$0xff]
      %v2474 = vld [vmem:[#allocation2 + $0x1a8] sm:$0xff]
      %v2475 = vld [vmem:[#allocation2 + $0x1b0] sm:$0xff]
      %v2476 = vld [vmem:[#allocation2 + $0x1b8] sm:$0xff]
      %v2477 = vld [vmem:[#allocation2 + $0x1c0] sm:$0xff]
      %v2478 = vld [vmem:[#allocation2 + $0x1c8] sm:$0xff]
      %v2479 = vld [vmem:[#allocation2 + $0x1d0] sm:$0xff]
      %v2480 = vld [vmem:[#allocation2 + $0x1d8] sm:$0xff]
      %v2481 = vld [vmem:[#allocation2 + $0x1e0] sm:$0xff]
      %v2482 = vld [vmem:[#allocation2 + $0x1e8] sm:$0xff]
      %v2483 = vld [vmem:[#allocation2 + $0x1f0] sm:$0xff]
      %v2484 = vld [vmem:[#allocation2 + $0x1f8] sm:$0xff]
      %v2485 = vld [vmem:[#allocation2 + $0x200] sm:$0xff]
      %v2486 = vld [vmem:[#allocation2 + $0x208] sm:$0xff]
      %v2487 = vld [vmem:[#allocation2 + $0x210] sm:$0xff]
      %v2488 = vld [vmem:[#allocation2 + $0x218] sm:$0xff]
      %v2489 = vld [vmem:[#allocation2 + $0x220] sm:$0xff]
      %s2490 = scalar_lea.vmem %s1, 16
      %v2491 = vld [vmem:[%s2490] sm:$0xf]
      %v2493 = vsel %vm171, %v2426, 0
      %v2496 = vsel %vm171, %v2427, 0
      %v2499 = vsel %vm171, %v2428, 0
      %v2502 = vsel %vm171, %v2429, 0
      %v2505 = vsel %vm171, %v2430, 0
      %v2508 = vsel %vm171, %v2431, 0
      %v2511 = vsel %vm171, %v2432, 0
      %v2514 = vsel %vm171, %v2433, 0
      %v2517 = vsel %vm171, %v2434, 0
      %v2520 = vsel %vm171, %v2435, 0
      %v2523 = vsel %vm171, %v2436, 0
      %v2526 = vsel %vm171, %v2437, 0
      %v2529 = vsel %vm171, %v2438, 0
      %v2532 = vsel %vm171, %v2439, 0
      %v2535 = vsel %vm171, %v2440, 0
      %v2538 = vsel %vm171, %v2441, 0
      %v2541 = vsel %vm171, %v2442, 0
      %v2544 = vsel %vm171, %v2443, 0
      %v2547 = vsel %vm171, %v2444, 0
      %v2550 = vsel %vm171, %v2445, 0
      %v2553 = vsel %vm171, %v2446, 0
      %v2556 = vsel %vm171, %v2447, 0
      %v2559 = vsel %vm171, %v2448, 0
      %v2562 = vsel %vm171, %v2449, 0
      %v2565 = vsel %vm171, %v2450, 0
      %v2568 = vsel %vm171, %v2451, 0
      %v2571 = vsel %vm171, %v2452, 0
      %v2574 = vsel %vm171, %v2453, 0
      %v2577 = vsel %vm171, %v2454, 0
      %v2580 = vsel %vm171, %v2455, 0
      %v2583 = vsel %vm171, %v2456, 0
      %v2586 = vsel %vm171, %v2457, 0
      %v2589 = vsel %vm171, %v2458, 0
      %v2592 = vsel %vm171, %v2459, 0
      %v2595 = vsel %vm171, %v2460, 0
      %v2598 = vsel %vm171, %v2461, 0
      %v2601 = vsel %vm171, %v2462, 0
      %v2604 = vsel %vm171, %v2463, 0
      %v2607 = vsel %vm171, %v2464, 0
      %v2610 = vsel %vm171, %v2465, 0
      %v2613 = vsel %vm171, %v2466, 0
      %v2616 = vsel %vm171, %v2467, 0
      %v2619 = vsel %vm171, %v2468, 0
      %v2622 = vsel %vm171, %v2469, 0
      %v2625 = vsel %vm171, %v2470, 0
      %v2628 = vsel %vm171, %v2471, 0
      %v2631 = vsel %vm171, %v2472, 0
      %v2634 = vsel %vm171, %v2473, 0
      %v2637 = vsel %vm171, %v2474, 0
      %v2640 = vsel %vm171, %v2475, 0
      %v2643 = vsel %vm171, %v2476, 0
      %v2646 = vsel %vm171, %v2477, 0
      %v2649 = vsel %vm171, %v2478, 0
      %v2652 = vsel %vm171, %v2479, 0
      %v2655 = vsel %vm171, %v2480, 0
      %v2658 = vsel %vm171, %v2481, 0
      %v2661 = vsel %vm171, %v2482, 0
      %v2664 = vsel %vm171, %v2483, 0
      %v2667 = vsel %vm171, %v2484, 0
      %v2670 = vsel %vm171, %v2485, 0
      %v2673 = vsel %vm171, %v2486, 0
      %v2676 = vsel %vm171, %v2487, 0
      %v2679 = vsel %vm171, %v2488, 0
      %v2682 = vsel %vm171, %v2489, 0
      %v2685 = vsel %vm741, %v2491, 0
      %2687 = vmatpush.msra.mxu0 0.0
      %2688 = vmatpush.msra.mxu0 0.0
      %2689 = vmatpush.msra.mxu0 0.0
      %2690 = vmatpush.msra.mxu0 0.0
      %2691 = vmatpush.msra.mxu0 0.0
      %2692 = vmatpush.msra.mxu0 0.0
      %2693 = vmatpush.msra.mxu0 0.0
      %2694 = vmatpush.msra.mxu0 0.0
      %2695 = vmatpush.msra.mxu0 0.0
      %2696 = vmatpush.msra.mxu0 0.0
      %2697 = vmatpush.msra.mxu0 0.0
      %2698 = vmatpush.msra.mxu0 0.0
      %2699 = vmatpush.msra.mxu0 0.0
      %2700 = vmatpush.msra.mxu0 0.0
      %2701 = vmatpush.msra.mxu0 0.0
      %2702 = vmatpush.msra.mxu0 %v2685
      %2703 = vmatmul.f32.gmra.mxu0 %v2493
      %v2704 = vpop.f32.mrf.mxu0
      %v2705 = vadd.f32 0.0, %v2704
      %2706 = vmatmul.f32.gmra.mxu0 %v2496
      %v2707 = vpop.f32.mrf.mxu0
      %v2708 = vadd.f32 0.0, %v2707
      %2709 = vmatmul.f32.gmra.mxu0 %v2499
      %v2710 = vpop.f32.mrf.mxu0
      %v2711 = vadd.f32 0.0, %v2710
      %2712 = vmatmul.f32.gmra.mxu0 %v2502
      %v2713 = vpop.f32.mrf.mxu0
      %v2714 = vadd.f32 0.0, %v2713
      %2715 = vmatmul.f32.gmra.mxu0 %v2505
      %v2716 = vpop.f32.mrf.mxu0
      %v2717 = vadd.f32 0.0, %v2716
      %2718 = vmatmul.f32.gmra.mxu0 %v2508
      %v2719 = vpop.f32.mrf.mxu0
      %v2720 = vadd.f32 0.0, %v2719
      %2721 = vmatmul.f32.gmra.mxu0 %v2511
      %v2722 = vpop.f32.mrf.mxu0
      %v2723 = vadd.f32 0.0, %v2722
      %2724 = vmatmul.f32.gmra.mxu0 %v2514
      %v2725 = vpop.f32.mrf.mxu0
      %v2726 = vadd.f32 0.0, %v2725
      %2727 = vmatmul.f32.gmra.mxu0 %v2517
      %v2728 = vpop.f32.mrf.mxu0
      %v2729 = vadd.f32 0.0, %v2728
      %2730 = vmatmul.f32.gmra.mxu0 %v2520
      %v2731 = vpop.f32.mrf.mxu0
      %v2732 = vadd.f32 0.0, %v2731
      %2733 = vmatmul.f32.gmra.mxu0 %v2523
      %v2734 = vpop.f32.mrf.mxu0
      %v2735 = vadd.f32 0.0, %v2734
      %2736 = vmatmul.f32.gmra.mxu0 %v2526
      %v2737 = vpop.f32.mrf.mxu0
      %v2738 = vadd.f32 0.0, %v2737
      %2739 = vmatmul.f32.gmra.mxu0 %v2529
      %v2740 = vpop.f32.mrf.mxu0
      %v2741 = vadd.f32 0.0, %v2740
      %2742 = vmatmul.f32.gmra.mxu0 %v2532
      %v2743 = vpop.f32.mrf.mxu0
      %v2744 = vadd.f32 0.0, %v2743
      %2745 = vmatmul.f32.gmra.mxu0 %v2535
      %v2746 = vpop.f32.mrf.mxu0
      %v2747 = vadd.f32 0.0, %v2746
      %2748 = vmatmul.f32.gmra.mxu0 %v2538
      %v2749 = vpop.f32.mrf.mxu0
      %v2750 = vadd.f32 0.0, %v2749
      %2751 = vmatmul.f32.gmra.mxu0 %v2541
      %v2752 = vpop.f32.mrf.mxu0
      %v2753 = vadd.f32 0.0, %v2752
      %2754 = vmatmul.f32.gmra.mxu0 %v2544
      %v2755 = vpop.f32.mrf.mxu0
      %v2756 = vadd.f32 0.0, %v2755
      %2757 = vmatmul.f32.gmra.mxu0 %v2547
      %v2758 = vpop.f32.mrf.mxu0
      %v2759 = vadd.f32 0.0, %v2758
      %2760 = vmatmul.f32.gmra.mxu0 %v2550
      %v2761 = vpop.f32.mrf.mxu0
      %v2762 = vadd.f32 0.0, %v2761
      %2763 = vmatmul.f32.gmra.mxu0 %v2553
      %v2764 = vpop.f32.mrf.mxu0
      %v2765 = vadd.f32 0.0, %v2764
      %2766 = vmatmul.f32.gmra.mxu0 %v2556
      %v2767 = vpop.f32.mrf.mxu0
      %v2768 = vadd.f32 0.0, %v2767
      %2769 = vmatmul.f32.gmra.mxu0 %v2559
      %v2770 = vpop.f32.mrf.mxu0
      %v2771 = vadd.f32 0.0, %v2770
      %2772 = vmatmul.f32.gmra.mxu0 %v2562
      %v2773 = vpop.f32.mrf.mxu0
      %v2774 = vadd.f32 0.0, %v2773
      %2775 = vmatmul.f32.gmra.mxu0 %v2565
      %v2776 = vpop.f32.mrf.mxu0
      %v2777 = vadd.f32 0.0, %v2776
      %2778 = vmatmul.f32.gmra.mxu0 %v2568
      %v2779 = vpop.f32.mrf.mxu0
      %v2780 = vadd.f32 0.0, %v2779
      %2781 = vmatmul.f32.gmra.mxu0 %v2571
      %v2782 = vpop.f32.mrf.mxu0
      %v2783 = vadd.f32 0.0, %v2782
      %2784 = vmatmul.f32.gmra.mxu0 %v2574
      %v2785 = vpop.f32.mrf.mxu0
      %v2786 = vadd.f32 0.0, %v2785
      %2787 = vmatmul.f32.gmra.mxu0 %v2577
      %v2788 = vpop.f32.mrf.mxu0
      %v2789 = vadd.f32 0.0, %v2788
      %2790 = vmatmul.f32.gmra.mxu0 %v2580
      %v2791 = vpop.f32.mrf.mxu0
      %v2792 = vadd.f32 0.0, %v2791
      %2793 = vmatmul.f32.gmra.mxu0 %v2583
      %v2794 = vpop.f32.mrf.mxu0
      %v2795 = vadd.f32 0.0, %v2794
      %2796 = vmatmul.f32.gmra.mxu0 %v2586
      %v2797 = vpop.f32.mrf.mxu0
      %v2798 = vadd.f32 0.0, %v2797
      %2799 = vmatmul.f32.gmra.mxu0 %v2589
      %v2800 = vpop.f32.mrf.mxu0
      %v2801 = vadd.f32 0.0, %v2800
      %2802 = vmatmul.f32.gmra.mxu0 %v2592
      %v2803 = vpop.f32.mrf.mxu0
      %v2804 = vadd.f32 0.0, %v2803
      %2805 = vmatmul.f32.gmra.mxu0 %v2595
      %v2806 = vpop.f32.mrf.mxu0
      %v2807 = vadd.f32 0.0, %v2806
      %2808 = vmatmul.f32.gmra.mxu0 %v2598
      %v2809 = vpop.f32.mrf.mxu0
      %v2810 = vadd.f32 0.0, %v2809
      %2811 = vmatmul.f32.gmra.mxu0 %v2601
      %v2812 = vpop.f32.mrf.mxu0
      %v2813 = vadd.f32 0.0, %v2812
      %2814 = vmatmul.f32.gmra.mxu0 %v2604
      %v2815 = vpop.f32.mrf.mxu0
      %v2816 = vadd.f32 0.0, %v2815
      %2817 = vmatmul.f32.gmra.mxu0 %v2607
      %v2818 = vpop.f32.mrf.mxu0
      %v2819 = vadd.f32 0.0, %v2818
      %2820 = vmatmul.f32.gmra.mxu0 %v2610
      %v2821 = vpop.f32.mrf.mxu0
      %v2822 = vadd.f32 0.0, %v2821
      %2823 = vmatmul.f32.gmra.mxu0 %v2613
      %v2824 = vpop.f32.mrf.mxu0
      %v2825 = vadd.f32 0.0, %v2824
      %2826 = vmatmul.f32.gmra.mxu0 %v2616
      %v2827 = vpop.f32.mrf.mxu0
      %v2828 = vadd.f32 0.0, %v2827
      %2829 = vmatmul.f32.gmra.mxu0 %v2619
      %v2830 = vpop.f32.mrf.mxu0
      %v2831 = vadd.f32 0.0, %v2830
      %2832 = vmatmul.f32.gmra.mxu0 %v2622
      %v2833 = vpop.f32.mrf.mxu0
      %v2834 = vadd.f32 0.0, %v2833
      %2835 = vmatmul.f32.gmra.mxu0 %v2625
      %v2836 = vpop.f32.mrf.mxu0
      %v2837 = vadd.f32 0.0, %v2836
      %2838 = vmatmul.f32.gmra.mxu0 %v2628
      %v2839 = vpop.f32.mrf.mxu0
      %v2840 = vadd.f32 0.0, %v2839
      %2841 = vmatmul.f32.gmra.mxu0 %v2631
      %v2842 = vpop.f32.mrf.mxu0
      %v2843 = vadd.f32 0.0, %v2842
      %2844 = vmatmul.f32.gmra.mxu0 %v2634
      %v2845 = vpop.f32.mrf.mxu0
      %v2846 = vadd.f32 0.0, %v2845
      %2847 = vmatmul.f32.gmra.mxu0 %v2637
      %v2848 = vpop.f32.mrf.mxu0
      %v2849 = vadd.f32 0.0, %v2848
      %2850 = vmatmul.f32.gmra.mxu0 %v2640
      %v2851 = vpop.f32.mrf.mxu0
      %v2852 = vadd.f32 0.0, %v2851
      %2853 = vmatmul.f32.gmra.mxu0 %v2643
      %v2854 = vpop.f32.mrf.mxu0
      %v2855 = vadd.f32 0.0, %v2854
      %2856 = vmatmul.f32.gmra.mxu0 %v2646
      %v2857 = vpop.f32.mrf.mxu0
      %v2858 = vadd.f32 0.0, %v2857
      %2859 = vmatmul.f32.gmra.mxu0 %v2649
      %v2860 = vpop.f32.mrf.mxu0
      %v2861 = vadd.f32 0.0, %v2860
      %2862 = vmatmul.f32.gmra.mxu0 %v2652
      %v2863 = vpop.f32.mrf.mxu0
      %v2864 = vadd.f32 0.0, %v2863
      %2865 = vmatmul.f32.gmra.mxu0 %v2655
      %v2866 = vpop.f32.mrf.mxu0
      %v2867 = vadd.f32 0.0, %v2866
      %2868 = vmatmul.f32.gmra.mxu0 %v2658
      %v2869 = vpop.f32.mrf.mxu0
      %v2870 = vadd.f32 0.0, %v2869
      %2871 = vmatmul.f32.gmra.mxu0 %v2661
      %v2872 = vpop.f32.mrf.mxu0
      %v2873 = vadd.f32 0.0, %v2872
      %2874 = vmatmul.f32.gmra.mxu0 %v2664
      %v2875 = vpop.f32.mrf.mxu0
      %v2876 = vadd.f32 0.0, %v2875
      %2877 = vmatmul.f32.gmra.mxu0 %v2667
      %v2878 = vpop.f32.mrf.mxu0
      %v2879 = vadd.f32 0.0, %v2878
      %2880 = vmatmul.f32.gmra.mxu0 %v2670
      %v2881 = vpop.f32.mrf.mxu0
      %v2882 = vadd.f32 0.0, %v2881
      %2883 = vmatmul.f32.gmra.mxu0 %v2673
      %v2884 = vpop.f32.mrf.mxu0
      %v2885 = vadd.f32 0.0, %v2884
      %2886 = vmatmul.f32.gmra.mxu0 %v2676
      %v2887 = vpop.f32.mrf.mxu0
      %v2888 = vadd.f32 0.0, %v2887
      %2889 = vmatmul.f32.gmra.mxu0 %v2679
      %v2890 = vpop.f32.mrf.mxu0
      %v2891 = vadd.f32 0.0, %v2890
      %2892 = vmatmul.f32.gmra.mxu0 %v2682
      %v2893 = vpop.f32.mrf.mxu0
      %v2894 = vadd.f32 0.0, %v2893
      %2895 = vdwg.mxu0
      %v2896 = vadd.f32 %v2362, %v2705
      %v2897 = vadd.f32 %v2363, %v2708
      %v2898 = vadd.f32 %v2364, %v2711
      %v2899 = vadd.f32 %v2365, %v2714
      %v2900 = vadd.f32 %v2366, %v2717
      %v2901 = vadd.f32 %v2367, %v2720
      %v2902 = vadd.f32 %v2368, %v2723
      %v2903 = vadd.f32 %v2369, %v2726
      %v2904 = vadd.f32 %v2370, %v2729
      %v2905 = vadd.f32 %v2371, %v2732
      %v2906 = vadd.f32 %v2372, %v2735
      %v2907 = vadd.f32 %v2373, %v2738
      %v2908 = vadd.f32 %v2374, %v2741
      %v2909 = vadd.f32 %v2375, %v2744
      %v2910 = vadd.f32 %v2376, %v2747
      %v2911 = vadd.f32 %v2377, %v2750
      %v2912 = vadd.f32 %v2378, %v2753
      %v2913 = vadd.f32 %v2379, %v2756
      %v2914 = vadd.f32 %v2380, %v2759
      %v2915 = vadd.f32 %v2381, %v2762
      %v2916 = vadd.f32 %v2382, %v2765
      %v2917 = vadd.f32 %v2383, %v2768
      %v2918 = vadd.f32 %v2384, %v2771
      %v2919 = vadd.f32 %v2385, %v2774
      %v2920 = vadd.f32 %v2386, %v2777
      %v2921 = vadd.f32 %v2387, %v2780
      %v2922 = vadd.f32 %v2388, %v2783
      %v2923 = vadd.f32 %v2389, %v2786
      %v2924 = vadd.f32 %v2390, %v2789
      %v2925 = vadd.f32 %v2391, %v2792
      %v2926 = vadd.f32 %v2392, %v2795
      %v2927 = vadd.f32 %v2393, %v2798
      %v2928 = vadd.f32 %v2394, %v2801
      %v2929 = vadd.f32 %v2395, %v2804
      %v2930 = vadd.f32 %v2396, %v2807
      %v2931 = vadd.f32 %v2397, %v2810
      %v2932 = vadd.f32 %v2398, %v2813
      %v2933 = vadd.f32 %v2399, %v2816
      %v2934 = vadd.f32 %v2400, %v2819
      %v2935 = vadd.f32 %v2401, %v2822
      %v2936 = vadd.f32 %v2402, %v2825
      %v2937 = vadd.f32 %v2403, %v2828
      %v2938 = vadd.f32 %v2404, %v2831
      %v2939 = vadd.f32 %v2405, %v2834
      %v2940 = vadd.f32 %v2406, %v2837
      %v2941 = vadd.f32 %v2407, %v2840
      %v2942 = vadd.f32 %v2408, %v2843
      %v2943 = vadd.f32 %v2409, %v2846
      %v2944 = vadd.f32 %v2410, %v2849
      %v2945 = vadd.f32 %v2411, %v2852
      %v2946 = vadd.f32 %v2412, %v2855
      %v2947 = vadd.f32 %v2413, %v2858
      %v2948 = vadd.f32 %v2414, %v2861
      %v2949 = vadd.f32 %v2415, %v2864
      %v2950 = vadd.f32 %v2416, %v2867
      %v2951 = vadd.f32 %v2417, %v2870
      %v2952 = vadd.f32 %v2418, %v2873
      %v2953 = vadd.f32 %v2419, %v2876
      %v2954 = vadd.f32 %v2420, %v2879
      %v2955 = vadd.f32 %v2421, %v2882
      %v2956 = vadd.f32 %v2422, %v2885
      %v2957 = vadd.f32 %v2423, %v2888
      %v2958 = vadd.f32 %v2424, %v2891
      %v2959 = vadd.f32 %v2425, %v2894
      %v2960 = vld [vmem:[#allocation2 + $0x29] sm:$0xff]
      %v2961 = vld [vmem:[#allocation2 + $0x31] sm:$0xff]
      %v2962 = vld [vmem:[#allocation2 + $0x39] sm:$0xff]
      %v2963 = vld [vmem:[#allocation2 + $0x41] sm:$0xff]
      %v2964 = vld [vmem:[#allocation2 + $0x49] sm:$0xff]
      %v2965 = vld [vmem:[#allocation2 + $0x51] sm:$0xff]
      %v2966 = vld [vmem:[#allocation2 + $0x59] sm:$0xff]
      %v2967 = vld [vmem:[#allocation2 + $0x61] sm:$0xff]
      %v2968 = vld [vmem:[#allocation2 + $0x69] sm:$0xff]
      %v2969 = vld [vmem:[#allocation2 + $0x71] sm:$0xff]
      %v2970 = vld [vmem:[#allocation2 + $0x79] sm:$0xff]
      %v2971 = vld [vmem:[#allocation2 + $0x81] sm:$0xff]
      %v2972 = vld [vmem:[#allocation2 + $0x89] sm:$0xff]
      %v2973 = vld [vmem:[#allocation2 + $0x91] sm:$0xff]
      %v2974 = vld [vmem:[#allocation2 + $0x99] sm:$0xff]
      %v2975 = vld [vmem:[#allocation2 + $0xa1] sm:$0xff]
      %v2976 = vld [vmem:[#allocation2 + $0xa9] sm:$0xff]
      %v2977 = vld [vmem:[#allocation2 + $0xb1] sm:$0xff]
      %v2978 = vld [vmem:[#allocation2 + $0xb9] sm:$0xff]
      %v2979 = vld [vmem:[#allocation2 + $0xc1] sm:$0xff]
      %v2980 = vld [vmem:[#allocation2 + $0xc9] sm:$0xff]
      %v2981 = vld [vmem:[#allocation2 + $0xd1] sm:$0xff]
      %v2982 = vld [vmem:[#allocation2 + $0xd9] sm:$0xff]
      %v2983 = vld [vmem:[#allocation2 + $0xe1] sm:$0xff]
      %v2984 = vld [vmem:[#allocation2 + $0xe9] sm:$0xff]
      %v2985 = vld [vmem:[#allocation2 + $0xf1] sm:$0xff]
      %v2986 = vld [vmem:[#allocation2 + $0xf9] sm:$0xff]
      %v2987 = vld [vmem:[#allocation2 + $0x101] sm:$0xff]
      %v2988 = vld [vmem:[#allocation2 + $0x109] sm:$0xff]
      %v2989 = vld [vmem:[#allocation2 + $0x111] sm:$0xff]
      %v2990 = vld [vmem:[#allocation2 + $0x119] sm:$0xff]
      %v2991 = vld [vmem:[#allocation2 + $0x121] sm:$0xff]
      %v2992 = vld [vmem:[#allocation2 + $0x129] sm:$0xff]
      %v2993 = vld [vmem:[#allocation2 + $0x131] sm:$0xff]
      %v2994 = vld [vmem:[#allocation2 + $0x139] sm:$0xff]
      %v2995 = vld [vmem:[#allocation2 + $0x141] sm:$0xff]
      %v2996 = vld [vmem:[#allocation2 + $0x149] sm:$0xff]
      %v2997 = vld [vmem:[#allocation2 + $0x151] sm:$0xff]
      %v2998 = vld [vmem:[#allocation2 + $0x159] sm:$0xff]
      %v2999 = vld [vmem:[#allocation2 + $0x161] sm:$0xff]
      %v3000 = vld [vmem:[#allocation2 + $0x169] sm:$0xff]
      %v3001 = vld [vmem:[#allocation2 + $0x171] sm:$0xff]
      %v3002 = vld [vmem:[#allocation2 + $0x179] sm:$0xff]
      %v3003 = vld [vmem:[#allocation2 + $0x181] sm:$0xff]
      %v3004 = vld [vmem:[#allocation2 + $0x189] sm:$0xff]
      %v3005 = vld [vmem:[#allocation2 + $0x191] sm:$0xff]
      %v3006 = vld [vmem:[#allocation2 + $0x199] sm:$0xff]
      %v3007 = vld [vmem:[#allocation2 + $0x1a1] sm:$0xff]
      %v3008 = vld [vmem:[#allocation2 + $0x1a9] sm:$0xff]
      %v3009 = vld [vmem:[#allocation2 + $0x1b1] sm:$0xff]
      %v3010 = vld [vmem:[#allocation2 + $0x1b9] sm:$0xff]
      %v3011 = vld [vmem:[#allocation2 + $0x1c1] sm:$0xff]
      %v3012 = vld [vmem:[#allocation2 + $0x1c9] sm:$0xff]
      %v3013 = vld [vmem:[#allocation2 + $0x1d1] sm:$0xff]
      %v3014 = vld [vmem:[#allocation2 + $0x1d9] sm:$0xff]
      %v3015 = vld [vmem:[#allocation2 + $0x1e1] sm:$0xff]
      %v3016 = vld [vmem:[#allocation2 + $0x1e9] sm:$0xff]
      %v3017 = vld [vmem:[#allocation2 + $0x1f1] sm:$0xff]
      %v3018 = vld [vmem:[#allocation2 + $0x1f9] sm:$0xff]
      %v3019 = vld [vmem:[#allocation2 + $0x201] sm:$0xff]
      %v3020 = vld [vmem:[#allocation2 + $0x209] sm:$0xff]
      %v3021 = vld [vmem:[#allocation2 + $0x211] sm:$0xff]
      %v3022 = vld [vmem:[#allocation2 + $0x219] sm:$0xff]
      %v3023 = vld [vmem:[#allocation2 + $0x221] sm:$0xff]
      %s3024 = scalar_lea.vmem %s1, 20
      %v3025 = vld [vmem:[%s3024] sm:$0xf]
      %v3027 = vsel %vm171, %v2960, 0
      %v3030 = vsel %vm171, %v2961, 0
      %v3033 = vsel %vm171, %v2962, 0
      %v3036 = vsel %vm171, %v2963, 0
      %v3039 = vsel %vm171, %v2964, 0
      %v3042 = vsel %vm171, %v2965, 0
      %v3045 = vsel %vm171, %v2966, 0
      %v3048 = vsel %vm171, %v2967, 0
      %v3051 = vsel %vm171, %v2968, 0
      %v3054 = vsel %vm171, %v2969, 0
      %v3057 = vsel %vm171, %v2970, 0
      %v3060 = vsel %vm171, %v2971, 0
      %v3063 = vsel %vm171, %v2972, 0
      %v3066 = vsel %vm171, %v2973, 0
      %v3069 = vsel %vm171, %v2974, 0
      %v3072 = vsel %vm171, %v2975, 0
      %v3075 = vsel %vm171, %v2976, 0
      %v3078 = vsel %vm171, %v2977, 0
      %v3081 = vsel %vm171, %v2978, 0
      %v3084 = vsel %vm171, %v2979, 0
      %v3087 = vsel %vm171, %v2980, 0
      %v3090 = vsel %vm171, %v2981, 0
      %v3093 = vsel %vm171, %v2982, 0
      %v3096 = vsel %vm171, %v2983, 0
      %v3099 = vsel %vm171, %v2984, 0
      %v3102 = vsel %vm171, %v2985, 0
      %v3105 = vsel %vm171, %v2986, 0
      %v3108 = vsel %vm171, %v2987, 0
      %v3111 = vsel %vm171, %v2988, 0
      %v3114 = vsel %vm171, %v2989, 0
      %v3117 = vsel %vm171, %v2990, 0
      %v3120 = vsel %vm171, %v2991, 0
      %v3123 = vsel %vm171, %v2992, 0
      %v3126 = vsel %vm171, %v2993, 0
      %v3129 = vsel %vm171, %v2994, 0
      %v3132 = vsel %vm171, %v2995, 0
      %v3135 = vsel %vm171, %v2996, 0
      %v3138 = vsel %vm171, %v2997, 0
      %v3141 = vsel %vm171, %v2998, 0
      %v3144 = vsel %vm171, %v2999, 0
      %v3147 = vsel %vm171, %v3000, 0
      %v3150 = vsel %vm171, %v3001, 0
      %v3153 = vsel %vm171, %v3002, 0
      %v3156 = vsel %vm171, %v3003, 0
      %v3159 = vsel %vm171, %v3004, 0
      %v3162 = vsel %vm171, %v3005, 0
      %v3165 = vsel %vm171, %v3006, 0
      %v3168 = vsel %vm171, %v3007, 0
      %v3171 = vsel %vm171, %v3008, 0
      %v3174 = vsel %vm171, %v3009, 0
      %v3177 = vsel %vm171, %v3010, 0
      %v3180 = vsel %vm171, %v3011, 0
      %v3183 = vsel %vm171, %v3012, 0
      %v3186 = vsel %vm171, %v3013, 0
      %v3189 = vsel %vm171, %v3014, 0
      %v3192 = vsel %vm171, %v3015, 0
      %v3195 = vsel %vm171, %v3016, 0
      %v3198 = vsel %vm171, %v3017, 0
      %v3201 = vsel %vm171, %v3018, 0
      %v3204 = vsel %vm171, %v3019, 0
      %v3207 = vsel %vm171, %v3020, 0
      %v3210 = vsel %vm171, %v3021, 0
      %v3213 = vsel %vm171, %v3022, 0
      %v3216 = vsel %vm171, %v3023, 0
      %v3219 = vsel %vm741, %v3025, 0
      %3221 = vmatpush.msra.mxu0 0.0
      %3222 = vmatpush.msra.mxu0 0.0
      %3223 = vmatpush.msra.mxu0 0.0
      %3224 = vmatpush.msra.mxu0 0.0
      %3225 = vmatpush.msra.mxu0 0.0
      %3226 = vmatpush.msra.mxu0 0.0
      %3227 = vmatpush.msra.mxu0 0.0
      %3228 = vmatpush.msra.mxu0 0.0
      %3229 = vmatpush.msra.mxu0 0.0
      %3230 = vmatpush.msra.mxu0 0.0
      %3231 = vmatpush.msra.mxu0 0.0
      %3232 = vmatpush.msra.mxu0 0.0
      %3233 = vmatpush.msra.mxu0 0.0
      %3234 = vmatpush.msra.mxu0 0.0
      %3235 = vmatpush.msra.mxu0 0.0
      %3236 = vmatpush.msra.mxu0 %v3219
      %3237 = vmatmul.f32.gmra.mxu0 %v3027
      %v3238 = vpop.f32.mrf.mxu0
      %v3239 = vadd.f32 0.0, %v3238
      %3240 = vmatmul.f32.gmra.mxu0 %v3030
      %v3241 = vpop.f32.mrf.mxu0
      %v3242 = vadd.f32 0.0, %v3241
      %3243 = vmatmul.f32.gmra.mxu0 %v3033
      %v3244 = vpop.f32.mrf.mxu0
      %v3245 = vadd.f32 0.0, %v3244
      %3246 = vmatmul.f32.gmra.mxu0 %v3036
      %v3247 = vpop.f32.mrf.mxu0
      %v3248 = vadd.f32 0.0, %v3247
      %3249 = vmatmul.f32.gmra.mxu0 %v3039
      %v3250 = vpop.f32.mrf.mxu0
      %v3251 = vadd.f32 0.0, %v3250
      %3252 = vmatmul.f32.gmra.mxu0 %v3042
      %v3253 = vpop.f32.mrf.mxu0
      %v3254 = vadd.f32 0.0, %v3253
      %3255 = vmatmul.f32.gmra.mxu0 %v3045
      %v3256 = vpop.f32.mrf.mxu0
      %v3257 = vadd.f32 0.0, %v3256
      %3258 = vmatmul.f32.gmra.mxu0 %v3048
      %v3259 = vpop.f32.mrf.mxu0
      %v3260 = vadd.f32 0.0, %v3259
      %3261 = vmatmul.f32.gmra.mxu0 %v3051
      %v3262 = vpop.f32.mrf.mxu0
      %v3263 = vadd.f32 0.0, %v3262
      %3264 = vmatmul.f32.gmra.mxu0 %v3054
      %v3265 = vpop.f32.mrf.mxu0
      %v3266 = vadd.f32 0.0, %v3265
      %3267 = vmatmul.f32.gmra.mxu0 %v3057
      %v3268 = vpop.f32.mrf.mxu0
      %v3269 = vadd.f32 0.0, %v3268
      %3270 = vmatmul.f32.gmra.mxu0 %v3060
      %v3271 = vpop.f32.mrf.mxu0
      %v3272 = vadd.f32 0.0, %v3271
      %3273 = vmatmul.f32.gmra.mxu0 %v3063
      %v3274 = vpop.f32.mrf.mxu0
      %v3275 = vadd.f32 0.0, %v3274
      %3276 = vmatmul.f32.gmra.mxu0 %v3066
      %v3277 = vpop.f32.mrf.mxu0
      %v3278 = vadd.f32 0.0, %v3277
      %3279 = vmatmul.f32.gmra.mxu0 %v3069
      %v3280 = vpop.f32.mrf.mxu0
      %v3281 = vadd.f32 0.0, %v3280
      %3282 = vmatmul.f32.gmra.mxu0 %v3072
      %v3283 = vpop.f32.mrf.mxu0
      %v3284 = vadd.f32 0.0, %v3283
      %3285 = vmatmul.f32.gmra.mxu0 %v3075
      %v3286 = vpop.f32.mrf.mxu0
      %v3287 = vadd.f32 0.0, %v3286
      %3288 = vmatmul.f32.gmra.mxu0 %v3078
      %v3289 = vpop.f32.mrf.mxu0
      %v3290 = vadd.f32 0.0, %v3289
      %3291 = vmatmul.f32.gmra.mxu0 %v3081
      %v3292 = vpop.f32.mrf.mxu0
      %v3293 = vadd.f32 0.0, %v3292
      %3294 = vmatmul.f32.gmra.mxu0 %v3084
      %v3295 = vpop.f32.mrf.mxu0
      %v3296 = vadd.f32 0.0, %v3295
      %3297 = vmatmul.f32.gmra.mxu0 %v3087
      %v3298 = vpop.f32.mrf.mxu0
      %v3299 = vadd.f32 0.0, %v3298
      %3300 = vmatmul.f32.gmra.mxu0 %v3090
      %v3301 = vpop.f32.mrf.mxu0
      %v3302 = vadd.f32 0.0, %v3301
      %3303 = vmatmul.f32.gmra.mxu0 %v3093
      %v3304 = vpop.f32.mrf.mxu0
      %v3305 = vadd.f32 0.0, %v3304
      %3306 = vmatmul.f32.gmra.mxu0 %v3096
      %v3307 = vpop.f32.mrf.mxu0
      %v3308 = vadd.f32 0.0, %v3307
      %3309 = vmatmul.f32.gmra.mxu0 %v3099
      %v3310 = vpop.f32.mrf.mxu0
      %v3311 = vadd.f32 0.0, %v3310
      %3312 = vmatmul.f32.gmra.mxu0 %v3102
      %v3313 = vpop.f32.mrf.mxu0
      %v3314 = vadd.f32 0.0, %v3313
      %3315 = vmatmul.f32.gmra.mxu0 %v3105
      %v3316 = vpop.f32.mrf.mxu0
      %v3317 = vadd.f32 0.0, %v3316
      %3318 = vmatmul.f32.gmra.mxu0 %v3108
      %v3319 = vpop.f32.mrf.mxu0
      %v3320 = vadd.f32 0.0, %v3319
      %3321 = vmatmul.f32.gmra.mxu0 %v3111
      %v3322 = vpop.f32.mrf.mxu0
      %v3323 = vadd.f32 0.0, %v3322
      %3324 = vmatmul.f32.gmra.mxu0 %v3114
      %v3325 = vpop.f32.mrf.mxu0
      %v3326 = vadd.f32 0.0, %v3325
      %3327 = vmatmul.f32.gmra.mxu0 %v3117
      %v3328 = vpop.f32.mrf.mxu0
      %v3329 = vadd.f32 0.0, %v3328
      %3330 = vmatmul.f32.gmra.mxu0 %v3120
      %v3331 = vpop.f32.mrf.mxu0
      %v3332 = vadd.f32 0.0, %v3331
      %3333 = vmatmul.f32.gmra.mxu0 %v3123
      %v3334 = vpop.f32.mrf.mxu0
      %v3335 = vadd.f32 0.0, %v3334
      %3336 = vmatmul.f32.gmra.mxu0 %v3126
      %v3337 = vpop.f32.mrf.mxu0
      %v3338 = vadd.f32 0.0, %v3337
      %3339 = vmatmul.f32.gmra.mxu0 %v3129
      %v3340 = vpop.f32.mrf.mxu0
      %v3341 = vadd.f32 0.0, %v3340
      %3342 = vmatmul.f32.gmra.mxu0 %v3132
      %v3343 = vpop.f32.mrf.mxu0
      %v3344 = vadd.f32 0.0, %v3343
      %3345 = vmatmul.f32.gmra.mxu0 %v3135
      %v3346 = vpop.f32.mrf.mxu0
      %v3347 = vadd.f32 0.0, %v3346
      %3348 = vmatmul.f32.gmra.mxu0 %v3138
      %v3349 = vpop.f32.mrf.mxu0
      %v3350 = vadd.f32 0.0, %v3349
      %3351 = vmatmul.f32.gmra.mxu0 %v3141
      %v3352 = vpop.f32.mrf.mxu0
      %v3353 = vadd.f32 0.0, %v3352
      %3354 = vmatmul.f32.gmra.mxu0 %v3144
      %v3355 = vpop.f32.mrf.mxu0
      %v3356 = vadd.f32 0.0, %v3355
      %3357 = vmatmul.f32.gmra.mxu0 %v3147
      %v3358 = vpop.f32.mrf.mxu0
      %v3359 = vadd.f32 0.0, %v3358
      %3360 = vmatmul.f32.gmra.mxu0 %v3150
      %v3361 = vpop.f32.mrf.mxu0
      %v3362 = vadd.f32 0.0, %v3361
      %3363 = vmatmul.f32.gmra.mxu0 %v3153
      %v3364 = vpop.f32.mrf.mxu0
      %v3365 = vadd.f32 0.0, %v3364
      %3366 = vmatmul.f32.gmra.mxu0 %v3156
      %v3367 = vpop.f32.mrf.mxu0
      %v3368 = vadd.f32 0.0, %v3367
      %3369 = vmatmul.f32.gmra.mxu0 %v3159
      %v3370 = vpop.f32.mrf.mxu0
      %v3371 = vadd.f32 0.0, %v3370
      %3372 = vmatmul.f32.gmra.mxu0 %v3162
      %v3373 = vpop.f32.mrf.mxu0
      %v3374 = vadd.f32 0.0, %v3373
      %3375 = vmatmul.f32.gmra.mxu0 %v3165
      %v3376 = vpop.f32.mrf.mxu0
      %v3377 = vadd.f32 0.0, %v3376
      %3378 = vmatmul.f32.gmra.mxu0 %v3168
      %v3379 = vpop.f32.mrf.mxu0
      %v3380 = vadd.f32 0.0, %v3379
      %3381 = vmatmul.f32.gmra.mxu0 %v3171
      %v3382 = vpop.f32.mrf.mxu0
      %v3383 = vadd.f32 0.0, %v3382
      %3384 = vmatmul.f32.gmra.mxu0 %v3174
      %v3385 = vpop.f32.mrf.mxu0
      %v3386 = vadd.f32 0.0, %v3385
      %3387 = vmatmul.f32.gmra.mxu0 %v3177
      %v3388 = vpop.f32.mrf.mxu0
      %v3389 = vadd.f32 0.0, %v3388
      %3390 = vmatmul.f32.gmra.mxu0 %v3180
      %v3391 = vpop.f32.mrf.mxu0
      %v3392 = vadd.f32 0.0, %v3391
      %3393 = vmatmul.f32.gmra.mxu0 %v3183
      %v3394 = vpop.f32.mrf.mxu0
      %v3395 = vadd.f32 0.0, %v3394
      %3396 = vmatmul.f32.gmra.mxu0 %v3186
      %v3397 = vpop.f32.mrf.mxu0
      %v3398 = vadd.f32 0.0, %v3397
      %3399 = vmatmul.f32.gmra.mxu0 %v3189
      %v3400 = vpop.f32.mrf.mxu0
      %v3401 = vadd.f32 0.0, %v3400
      %3402 = vmatmul.f32.gmra.mxu0 %v3192
      %v3403 = vpop.f32.mrf.mxu0
      %v3404 = vadd.f32 0.0, %v3403
      %3405 = vmatmul.f32.gmra.mxu0 %v3195
      %v3406 = vpop.f32.mrf.mxu0
      %v3407 = vadd.f32 0.0, %v3406
      %3408 = vmatmul.f32.gmra.mxu0 %v3198
      %v3409 = vpop.f32.mrf.mxu0
      %v3410 = vadd.f32 0.0, %v3409
      %3411 = vmatmul.f32.gmra.mxu0 %v3201
      %v3412 = vpop.f32.mrf.mxu0
      %v3413 = vadd.f32 0.0, %v3412
      %3414 = vmatmul.f32.gmra.mxu0 %v3204
      %v3415 = vpop.f32.mrf.mxu0
      %v3416 = vadd.f32 0.0, %v3415
      %3417 = vmatmul.f32.gmra.mxu0 %v3207
      %v3418 = vpop.f32.mrf.mxu0
      %v3419 = vadd.f32 0.0, %v3418
      %3420 = vmatmul.f32.gmra.mxu0 %v3210
      %v3421 = vpop.f32.mrf.mxu0
      %v3422 = vadd.f32 0.0, %v3421
      %3423 = vmatmul.f32.gmra.mxu0 %v3213
      %v3424 = vpop.f32.mrf.mxu0
      %v3425 = vadd.f32 0.0, %v3424
      %3426 = vmatmul.f32.gmra.mxu0 %v3216
      %v3427 = vpop.f32.mrf.mxu0
      %v3428 = vadd.f32 0.0, %v3427
      %3429 = vdwg.mxu0
      %v3430 = vadd.f32 %v2896, %v3239
      %v3431 = vadd.f32 %v2897, %v3242
      %v3432 = vadd.f32 %v2898, %v3245
      %v3433 = vadd.f32 %v2899, %v3248
      %v3434 = vadd.f32 %v2900, %v3251
      %v3435 = vadd.f32 %v2901, %v3254
      %v3436 = vadd.f32 %v2902, %v3257
      %v3437 = vadd.f32 %v2903, %v3260
      %v3438 = vadd.f32 %v2904, %v3263
      %v3439 = vadd.f32 %v2905, %v3266
      %v3440 = vadd.f32 %v2906, %v3269
      %v3441 = vadd.f32 %v2907, %v3272
      %v3442 = vadd.f32 %v2908, %v3275
      %v3443 = vadd.f32 %v2909, %v3278
      %v3444 = vadd.f32 %v2910, %v3281
      %v3445 = vadd.f32 %v2911, %v3284
      %v3446 = vadd.f32 %v2912, %v3287
      %v3447 = vadd.f32 %v2913, %v3290
      %v3448 = vadd.f32 %v2914, %v3293
      %v3449 = vadd.f32 %v2915, %v3296
      %v3450 = vadd.f32 %v2916, %v3299
      %v3451 = vadd.f32 %v2917, %v3302
      %v3452 = vadd.f32 %v2918, %v3305
      %v3453 = vadd.f32 %v2919, %v3308
      %v3454 = vadd.f32 %v2920, %v3311
      %v3455 = vadd.f32 %v2921, %v3314
      %v3456 = vadd.f32 %v2922, %v3317
      %v3457 = vadd.f32 %v2923, %v3320
      %v3458 = vadd.f32 %v2924, %v3323
      %v3459 = vadd.f32 %v2925, %v3326
      %v3460 = vadd.f32 %v2926, %v3329
      %v3461 = vadd.f32 %v2927, %v3332
      %v3462 = vadd.f32 %v2928, %v3335
      %v3463 = vadd.f32 %v2929, %v3338
      %v3464 = vadd.f32 %v2930, %v3341
      %v3465 = vadd.f32 %v2931, %v3344
      %v3466 = vadd.f32 %v2932, %v3347
      %v3467 = vadd.f32 %v2933, %v3350
      %v3468 = vadd.f32 %v2934, %v3353
      %v3469 = vadd.f32 %v2935, %v3356
      %v3470 = vadd.f32 %v2936, %v3359
      %v3471 = vadd.f32 %v2937, %v3362
      %v3472 = vadd.f32 %v2938, %v3365
      %v3473 = vadd.f32 %v2939, %v3368
      %v3474 = vadd.f32 %v2940, %v3371
      %v3475 = vadd.f32 %v2941, %v3374
      %v3476 = vadd.f32 %v2942, %v3377
      %v3477 = vadd.f32 %v2943, %v3380
      %v3478 = vadd.f32 %v2944, %v3383
      %v3479 = vadd.f32 %v2945, %v3386
      %v3480 = vadd.f32 %v2946, %v3389
      %v3481 = vadd.f32 %v2947, %v3392
      %v3482 = vadd.f32 %v2948, %v3395
      %v3483 = vadd.f32 %v2949, %v3398
      %v3484 = vadd.f32 %v2950, %v3401
      %v3485 = vadd.f32 %v2951, %v3404
      %v3486 = vadd.f32 %v2952, %v3407
      %v3487 = vadd.f32 %v2953, %v3410
      %v3488 = vadd.f32 %v2954, %v3413
      %v3489 = vadd.f32 %v2955, %v3416
      %v3490 = vadd.f32 %v2956, %v3419
      %v3491 = vadd.f32 %v2957, %v3422
      %v3492 = vadd.f32 %v2958, %v3425
      %v3493 = vadd.f32 %v2959, %v3428
      %v3494 = vld [vmem:[#allocation2 + $0x47] sm:$0xff]
      %v3495 = vld [vmem:[#allocation2 + $0x4f] sm:$0xff]
      %v3496 = vld [vmem:[#allocation2 + $0x57] sm:$0xff]
      %v3497 = vld [vmem:[#allocation2 + $0x5f] sm:$0xff]
      %v3498 = vld [vmem:[#allocation2 + $0x67] sm:$0xff]
      %v3499 = vld [vmem:[#allocation2 + $0x6f] sm:$0xff]
      %v3500 = vld [vmem:[#allocation2 + $0x77] sm:$0xff]
      %v3501 = vld [vmem:[#allocation2 + $0x7f] sm:$0xff]
      %v3502 = vld [vmem:[#allocation2 + $0x87] sm:$0xff]
      %v3503 = vld [vmem:[#allocation2 + $0x8f] sm:$0xff]
      %v3504 = vld [vmem:[#allocation2 + $0x97] sm:$0xff]
      %v3505 = vld [vmem:[#allocation2 + $0x9f] sm:$0xff]
      %v3506 = vld [vmem:[#allocation2 + $0xa7] sm:$0xff]
      %v3507 = vld [vmem:[#allocation2 + $0xaf] sm:$0xff]
      %v3508 = vld [vmem:[#allocation2 + $0xb7] sm:$0xff]
      %v3509 = vld [vmem:[#allocation2 + $0xbf] sm:$0xff]
      %v3510 = vld [vmem:[#allocation2 + $0xc7] sm:$0xff]
      %v3511 = vld [vmem:[#allocation2 + $0xcf] sm:$0xff]
      %v3512 = vld [vmem:[#allocation2 + $0xd7] sm:$0xff]
      %v3513 = vld [vmem:[#allocation2 + $0xdf] sm:$0xff]
      %v3514 = vld [vmem:[#allocation2 + $0xe7] sm:$0xff]
      %v3515 = vld [vmem:[#allocation2 + $0xef] sm:$0xff]
      %v3516 = vld [vmem:[#allocation2 + $0xf7] sm:$0xff]
      %v3517 = vld [vmem:[#allocation2 + $0xff] sm:$0xff]
      %v3518 = vld [vmem:[#allocation2 + $0x107] sm:$0xff]
      %v3519 = vld [vmem:[#allocation2 + $0x10f] sm:$0xff]
      %v3520 = vld [vmem:[#allocation2 + $0x117] sm:$0xff]
      %v3521 = vld [vmem:[#allocation2 + $0x11f] sm:$0xff]
      %v3522 = vld [vmem:[#allocation2 + $0x127] sm:$0xff]
      %v3523 = vld [vmem:[#allocation2 + $0x12f] sm:$0xff]
      %v3524 = vld [vmem:[#allocation2 + $0x137] sm:$0xff]
      %v3525 = vld [vmem:[#allocation2 + $0x13f] sm:$0xff]
      %v3526 = vld [vmem:[#allocation2 + $0x147] sm:$0xff]
      %v3527 = vld [vmem:[#allocation2 + $0x14f] sm:$0xff]
      %v3528 = vld [vmem:[#allocation2 + $0x157] sm:$0xff]
      %v3529 = vld [vmem:[#allocation2 + $0x15f] sm:$0xff]
      %v3530 = vld [vmem:[#allocation2 + $0x167] sm:$0xff]
      %v3531 = vld [vmem:[#allocation2 + $0x16f] sm:$0xff]
      %v3532 = vld [vmem:[#allocation2 + $0x177] sm:$0xff]
      %v3533 = vld [vmem:[#allocation2 + $0x17f] sm:$0xff]
      %v3534 = vld [vmem:[#allocation2 + $0x187] sm:$0xff]
      %v3535 = vld [vmem:[#allocation2 + $0x18f] sm:$0xff]
      %v3536 = vld [vmem:[#allocation2 + $0x197] sm:$0xff]
      %v3537 = vld [vmem:[#allocation2 + $0x19f] sm:$0xff]
      %v3538 = vld [vmem:[#allocation2 + $0x1a7] sm:$0xff]
      %v3539 = vld [vmem:[#allocation2 + $0x1af] sm:$0xff]
      %v3540 = vld [vmem:[#allocation2 + $0x1b7] sm:$0xff]
      %v3541 = vld [vmem:[#allocation2 + $0x1bf] sm:$0xff]
      %v3542 = vld [vmem:[#allocation2 + $0x1c7] sm:$0xff]
      %v3543 = vld [vmem:[#allocation2 + $0x1cf] sm:$0xff]
      %v3544 = vld [vmem:[#allocation2 + $0x1d7] sm:$0xff]
      %v3545 = vld [vmem:[#allocation2 + $0x1df] sm:$0xff]
      %v3546 = vld [vmem:[#allocation2 + $0x1e7] sm:$0xff]
      %v3547 = vld [vmem:[#allocation2 + $0x1ef] sm:$0xff]
      %v3548 = vld [vmem:[#allocation2 + $0x1f7] sm:$0xff]
      %v3549 = vld [vmem:[#allocation2 + $0x1ff] sm:$0xff]
      %v3550 = vld [vmem:[#allocation2 + $0x207] sm:$0xff]
      %v3551 = vld [vmem:[#allocation2 + $0x20f] sm:$0xff]
      %v3552 = vld [vmem:[#allocation2 + $0x217] sm:$0xff]
      %v3553 = vld [vmem:[#allocation2 + $0x21f] sm:$0xff]
      %v3554 = vld [vmem:[#allocation2 + $0x227] sm:$0xff]
      %v3555 = vld [vmem:[#allocation2 + $0x22f] sm:$0xff]
      %v3556 = vld [vmem:[#allocation2 + $0x237] sm:$0xff]
      %v3557 = vld [vmem:[#allocation2 + $0x23f] sm:$0xff]
      %s3558 = scalar_lea.vmem %s1, 24
      %v3559 = vld [vmem:[%s3558] sm:$0xf]
      %v3561 = vsel %vm171, %v3494, 0
      %v3564 = vsel %vm171, %v3495, 0
      %v3567 = vsel %vm171, %v3496, 0
      %v3570 = vsel %vm171, %v3497, 0
      %v3573 = vsel %vm171, %v3498, 0
      %v3576 = vsel %vm171, %v3499, 0
      %v3579 = vsel %vm171, %v3500, 0
      %v3582 = vsel %vm171, %v3501, 0
      %v3585 = vsel %vm171, %v3502, 0
      %v3588 = vsel %vm171, %v3503, 0
      %v3591 = vsel %vm171, %v3504, 0
      %v3594 = vsel %vm171, %v3505, 0
      %v3597 = vsel %vm171, %v3506, 0
      %v3600 = vsel %vm171, %v3507, 0
      %v3603 = vsel %vm171, %v3508, 0
      %v3606 = vsel %vm171, %v3509, 0
      %v3609 = vsel %vm171, %v3510, 0
      %v3612 = vsel %vm171, %v3511, 0
      %v3615 = vsel %vm171, %v3512, 0
      %v3618 = vsel %vm171, %v3513, 0
      %v3621 = vsel %vm171, %v3514, 0
      %v3624 = vsel %vm171, %v3515, 0
      %v3627 = vsel %vm171, %v3516, 0
      %v3630 = vsel %vm171, %v3517, 0
      %v3633 = vsel %vm171, %v3518, 0
      %v3636 = vsel %vm171, %v3519, 0
      %v3639 = vsel %vm171, %v3520, 0
      %v3642 = vsel %vm171, %v3521, 0
      %v3645 = vsel %vm171, %v3522, 0
      %v3648 = vsel %vm171, %v3523, 0
      %v3651 = vsel %vm171, %v3524, 0
      %v3654 = vsel %vm171, %v3525, 0
      %v3657 = vsel %vm171, %v3526, 0
      %v3660 = vsel %vm171, %v3527, 0
      %v3663 = vsel %vm171, %v3528, 0
      %v3666 = vsel %vm171, %v3529, 0
      %v3669 = vsel %vm171, %v3530, 0
      %v3672 = vsel %vm171, %v3531, 0
      %v3675 = vsel %vm171, %v3532, 0
      %v3678 = vsel %vm171, %v3533, 0
      %v3681 = vsel %vm171, %v3534, 0
      %v3684 = vsel %vm171, %v3535, 0
      %v3687 = vsel %vm171, %v3536, 0
      %v3690 = vsel %vm171, %v3537, 0
      %v3693 = vsel %vm171, %v3538, 0
      %v3696 = vsel %vm171, %v3539, 0
      %v3699 = vsel %vm171, %v3540, 0
      %v3702 = vsel %vm171, %v3541, 0
      %v3705 = vsel %vm171, %v3542, 0
      %v3708 = vsel %vm171, %v3543, 0
      %v3711 = vsel %vm171, %v3544, 0
      %v3714 = vsel %vm171, %v3545, 0
      %v3717 = vsel %vm171, %v3546, 0
      %v3720 = vsel %vm171, %v3547, 0
      %v3723 = vsel %vm171, %v3548, 0
      %v3726 = vsel %vm171, %v3549, 0
      %v3729 = vsel %vm171, %v3550, 0
      %v3732 = vsel %vm171, %v3551, 0
      %v3735 = vsel %vm171, %v3552, 0
      %v3738 = vsel %vm171, %v3553, 0
      %v3741 = vsel %vm171, %v3554, 0
      %v3744 = vsel %vm171, %v3555, 0
      %v3747 = vsel %vm171, %v3556, 0
      %v3750 = vsel %vm171, %v3557, 0
      %v3753 = vsel %vm741, %v3559, 0
      %3755 = vmatpush.msra.mxu0 0.0
      %3756 = vmatpush.msra.mxu0 0.0
      %3757 = vmatpush.msra.mxu0 0.0
      %3758 = vmatpush.msra.mxu0 0.0
      %3759 = vmatpush.msra.mxu0 0.0
      %3760 = vmatpush.msra.mxu0 0.0
      %3761 = vmatpush.msra.mxu0 0.0
      %3762 = vmatpush.msra.mxu0 0.0
      %3763 = vmatpush.msra.mxu0 0.0
      %3764 = vmatpush.msra.mxu0 0.0
      %3765 = vmatpush.msra.mxu0 0.0
      %3766 = vmatpush.msra.mxu0 0.0
      %3767 = vmatpush.msra.mxu0 0.0
      %3768 = vmatpush.msra.mxu0 0.0
      %3769 = vmatpush.msra.mxu0 0.0
      %3770 = vmatpush.msra.mxu0 %v3753
      %3771 = vmatmul.f32.gmra.mxu0 %v3561
      %v3772 = vpop.f32.mrf.mxu0
      %v3773 = vadd.f32 0.0, %v3772
      %3774 = vmatmul.f32.gmra.mxu0 %v3564
      %v3775 = vpop.f32.mrf.mxu0
      %v3776 = vadd.f32 0.0, %v3775
      %3777 = vmatmul.f32.gmra.mxu0 %v3567
      %v3778 = vpop.f32.mrf.mxu0
      %v3779 = vadd.f32 0.0, %v3778
      %3780 = vmatmul.f32.gmra.mxu0 %v3570
      %v3781 = vpop.f32.mrf.mxu0
      %v3782 = vadd.f32 0.0, %v3781
      %3783 = vmatmul.f32.gmra.mxu0 %v3573
      %v3784 = vpop.f32.mrf.mxu0
      %v3785 = vadd.f32 0.0, %v3784
      %3786 = vmatmul.f32.gmra.mxu0 %v3576
      %v3787 = vpop.f32.mrf.mxu0
      %v3788 = vadd.f32 0.0, %v3787
      %3789 = vmatmul.f32.gmra.mxu0 %v3579
      %v3790 = vpop.f32.mrf.mxu0
      %v3791 = vadd.f32 0.0, %v3790
      %3792 = vmatmul.f32.gmra.mxu0 %v3582
      %v3793 = vpop.f32.mrf.mxu0
      %v3794 = vadd.f32 0.0, %v3793
      %3795 = vmatmul.f32.gmra.mxu0 %v3585
      %v3796 = vpop.f32.mrf.mxu0
      %v3797 = vadd.f32 0.0, %v3796
      %3798 = vmatmul.f32.gmra.mxu0 %v3588
      %v3799 = vpop.f32.mrf.mxu0
      %v3800 = vadd.f32 0.0, %v3799
      %3801 = vmatmul.f32.gmra.mxu0 %v3591
      %v3802 = vpop.f32.mrf.mxu0
      %v3803 = vadd.f32 0.0, %v3802
      %3804 = vmatmul.f32.gmra.mxu0 %v3594
      %v3805 = vpop.f32.mrf.mxu0
      %v3806 = vadd.f32 0.0, %v3805
      %3807 = vmatmul.f32.gmra.mxu0 %v3597
      %v3808 = vpop.f32.mrf.mxu0
      %v3809 = vadd.f32 0.0, %v3808
      %3810 = vmatmul.f32.gmra.mxu0 %v3600
      %v3811 = vpop.f32.mrf.mxu0
      %v3812 = vadd.f32 0.0, %v3811
      %3813 = vmatmul.f32.gmra.mxu0 %v3603
      %v3814 = vpop.f32.mrf.mxu0
      %v3815 = vadd.f32 0.0, %v3814
      %3816 = vmatmul.f32.gmra.mxu0 %v3606
      %v3817 = vpop.f32.mrf.mxu0
      %v3818 = vadd.f32 0.0, %v3817
      %3819 = vmatmul.f32.gmra.mxu0 %v3609
      %v3820 = vpop.f32.mrf.mxu0
      %v3821 = vadd.f32 0.0, %v3820
      %3822 = vmatmul.f32.gmra.mxu0 %v3612
      %v3823 = vpop.f32.mrf.mxu0
      %v3824 = vadd.f32 0.0, %v3823
      %3825 = vmatmul.f32.gmra.mxu0 %v3615
      %v3826 = vpop.f32.mrf.mxu0
      %v3827 = vadd.f32 0.0, %v3826
      %3828 = vmatmul.f32.gmra.mxu0 %v3618
      %v3829 = vpop.f32.mrf.mxu0
      %v3830 = vadd.f32 0.0, %v3829
      %3831 = vmatmul.f32.gmra.mxu0 %v3621
      %v3832 = vpop.f32.mrf.mxu0
      %v3833 = vadd.f32 0.0, %v3832
      %3834 = vmatmul.f32.gmra.mxu0 %v3624
      %v3835 = vpop.f32.mrf.mxu0
      %v3836 = vadd.f32 0.0, %v3835
      %3837 = vmatmul.f32.gmra.mxu0 %v3627
      %v3838 = vpop.f32.mrf.mxu0
      %v3839 = vadd.f32 0.0, %v3838
      %3840 = vmatmul.f32.gmra.mxu0 %v3630
      %v3841 = vpop.f32.mrf.mxu0
      %v3842 = vadd.f32 0.0, %v3841
      %3843 = vmatmul.f32.gmra.mxu0 %v3633
      %v3844 = vpop.f32.mrf.mxu0
      %v3845 = vadd.f32 0.0, %v3844
      %3846 = vmatmul.f32.gmra.mxu0 %v3636
      %v3847 = vpop.f32.mrf.mxu0
      %v3848 = vadd.f32 0.0, %v3847
      %3849 = vmatmul.f32.gmra.mxu0 %v3639
      %v3850 = vpop.f32.mrf.mxu0
      %v3851 = vadd.f32 0.0, %v3850
      %3852 = vmatmul.f32.gmra.mxu0 %v3642
      %v3853 = vpop.f32.mrf.mxu0
      %v3854 = vadd.f32 0.0, %v3853
      %3855 = vmatmul.f32.gmra.mxu0 %v3645
      %v3856 = vpop.f32.mrf.mxu0
      %v3857 = vadd.f32 0.0, %v3856
      %3858 = vmatmul.f32.gmra.mxu0 %v3648
      %v3859 = vpop.f32.mrf.mxu0
      %v3860 = vadd.f32 0.0, %v3859
      %3861 = vmatmul.f32.gmra.mxu0 %v3651
      %v3862 = vpop.f32.mrf.mxu0
      %v3863 = vadd.f32 0.0, %v3862
      %3864 = vmatmul.f32.gmra.mxu0 %v3654
      %v3865 = vpop.f32.mrf.mxu0
      %v3866 = vadd.f32 0.0, %v3865
      %3867 = vmatmul.f32.gmra.mxu0 %v3657
      %v3868 = vpop.f32.mrf.mxu0
      %v3869 = vadd.f32 0.0, %v3868
      %3870 = vmatmul.f32.gmra.mxu0 %v3660
      %v3871 = vpop.f32.mrf.mxu0
      %v3872 = vadd.f32 0.0, %v3871
      %3873 = vmatmul.f32.gmra.mxu0 %v3663
      %v3874 = vpop.f32.mrf.mxu0
      %v3875 = vadd.f32 0.0, %v3874
      %3876 = vmatmul.f32.gmra.mxu0 %v3666
      %v3877 = vpop.f32.mrf.mxu0
      %v3878 = vadd.f32 0.0, %v3877
      %3879 = vmatmul.f32.gmra.mxu0 %v3669
      %v3880 = vpop.f32.mrf.mxu0
      %v3881 = vadd.f32 0.0, %v3880
      %3882 = vmatmul.f32.gmra.mxu0 %v3672
      %v3883 = vpop.f32.mrf.mxu0
      %v3884 = vadd.f32 0.0, %v3883
      %3885 = vmatmul.f32.gmra.mxu0 %v3675
      %v3886 = vpop.f32.mrf.mxu0
      %v3887 = vadd.f32 0.0, %v3886
      %3888 = vmatmul.f32.gmra.mxu0 %v3678
      %v3889 = vpop.f32.mrf.mxu0
      %v3890 = vadd.f32 0.0, %v3889
      %3891 = vmatmul.f32.gmra.mxu0 %v3681
      %v3892 = vpop.f32.mrf.mxu0
      %v3893 = vadd.f32 0.0, %v3892
      %3894 = vmatmul.f32.gmra.mxu0 %v3684
      %v3895 = vpop.f32.mrf.mxu0
      %v3896 = vadd.f32 0.0, %v3895
      %3897 = vmatmul.f32.gmra.mxu0 %v3687
      %v3898 = vpop.f32.mrf.mxu0
      %v3899 = vadd.f32 0.0, %v3898
      %3900 = vmatmul.f32.gmra.mxu0 %v3690
      %v3901 = vpop.f32.mrf.mxu0
      %v3902 = vadd.f32 0.0, %v3901
      %3903 = vmatmul.f32.gmra.mxu0 %v3693
      %v3904 = vpop.f32.mrf.mxu0
      %v3905 = vadd.f32 0.0, %v3904
      %3906 = vmatmul.f32.gmra.mxu0 %v3696
      %v3907 = vpop.f32.mrf.mxu0
      %v3908 = vadd.f32 0.0, %v3907
      %3909 = vmatmul.f32.gmra.mxu0 %v3699
      %v3910 = vpop.f32.mrf.mxu0
      %v3911 = vadd.f32 0.0, %v3910
      %3912 = vmatmul.f32.gmra.mxu0 %v3702
      %v3913 = vpop.f32.mrf.mxu0
      %v3914 = vadd.f32 0.0, %v3913
      %3915 = vmatmul.f32.gmra.mxu0 %v3705
      %v3916 = vpop.f32.mrf.mxu0
      %v3917 = vadd.f32 0.0, %v3916
      %3918 = vmatmul.f32.gmra.mxu0 %v3708
      %v3919 = vpop.f32.mrf.mxu0
      %v3920 = vadd.f32 0.0, %v3919
      %3921 = vmatmul.f32.gmra.mxu0 %v3711
      %v3922 = vpop.f32.mrf.mxu0
      %v3923 = vadd.f32 0.0, %v3922
      %3924 = vmatmul.f32.gmra.mxu0 %v3714
      %v3925 = vpop.f32.mrf.mxu0
      %v3926 = vadd.f32 0.0, %v3925
      %3927 = vmatmul.f32.gmra.mxu0 %v3717
      %v3928 = vpop.f32.mrf.mxu0
      %v3929 = vadd.f32 0.0, %v3928
      %3930 = vmatmul.f32.gmra.mxu0 %v3720
      %v3931 = vpop.f32.mrf.mxu0
      %v3932 = vadd.f32 0.0, %v3931
      %3933 = vmatmul.f32.gmra.mxu0 %v3723
      %v3934 = vpop.f32.mrf.mxu0
      %v3935 = vadd.f32 0.0, %v3934
      %3936 = vmatmul.f32.gmra.mxu0 %v3726
      %v3937 = vpop.f32.mrf.mxu0
      %v3938 = vadd.f32 0.0, %v3937
      %3939 = vmatmul.f32.gmra.mxu0 %v3729
      %v3940 = vpop.f32.mrf.mxu0
      %v3941 = vadd.f32 0.0, %v3940
      %3942 = vmatmul.f32.gmra.mxu0 %v3732
      %v3943 = vpop.f32.mrf.mxu0
      %v3944 = vadd.f32 0.0, %v3943
      %3945 = vmatmul.f32.gmra.mxu0 %v3735
      %v3946 = vpop.f32.mrf.mxu0
      %v3947 = vadd.f32 0.0, %v3946
      %3948 = vmatmul.f32.gmra.mxu0 %v3738
      %v3949 = vpop.f32.mrf.mxu0
      %v3950 = vadd.f32 0.0, %v3949
      %3951 = vmatmul.f32.gmra.mxu0 %v3741
      %v3952 = vpop.f32.mrf.mxu0
      %v3953 = vadd.f32 0.0, %v3952
      %3954 = vmatmul.f32.gmra.mxu0 %v3744
      %v3955 = vpop.f32.mrf.mxu0
      %v3956 = vadd.f32 0.0, %v3955
      %3957 = vmatmul.f32.gmra.mxu0 %v3747
      %v3958 = vpop.f32.mrf.mxu0
      %v3959 = vadd.f32 0.0, %v3958
      %3960 = vmatmul.f32.gmra.mxu0 %v3750
      %v3961 = vpop.f32.mrf.mxu0
      %v3962 = vadd.f32 0.0, %v3961
      %3963 = vdwg.mxu0
      %v3964 = vadd.f32 %v3430, %v3773
      %v3965 = vadd.f32 %v3431, %v3776
      %v3966 = vadd.f32 %v3432, %v3779
      %v3967 = vadd.f32 %v3433, %v3782
      %v3968 = vadd.f32 %v3434, %v3785
      %v3969 = vadd.f32 %v3435, %v3788
      %v3970 = vadd.f32 %v3436, %v3791
      %v3971 = vadd.f32 %v3437, %v3794
      %v3972 = vadd.f32 %v3438, %v3797
      %v3973 = vadd.f32 %v3439, %v3800
      %v3974 = vadd.f32 %v3440, %v3803
      %v3975 = vadd.f32 %v3441, %v3806
      %v3976 = vadd.f32 %v3442, %v3809
      %v3977 = vadd.f32 %v3443, %v3812
      %v3978 = vadd.f32 %v3444, %v3815
      %v3979 = vadd.f32 %v3445, %v3818
      %v3980 = vadd.f32 %v3446, %v3821
      %v3981 = vadd.f32 %v3447, %v3824
      %v3982 = vadd.f32 %v3448, %v3827
      %v3983 = vadd.f32 %v3449, %v3830
      %v3984 = vadd.f32 %v3450, %v3833
      %v3985 = vadd.f32 %v3451, %v3836
      %v3986 = vadd.f32 %v3452, %v3839
      %v3987 = vadd.f32 %v3453, %v3842
      %v3988 = vadd.f32 %v3454, %v3845
      %v3989 = vadd.f32 %v3455, %v3848
      %v3990 = vadd.f32 %v3456, %v3851
      %v3991 = vadd.f32 %v3457, %v3854
      %v3992 = vadd.f32 %v3458, %v3857
      %v3993 = vadd.f32 %v3459, %v3860
      %v3994 = vadd.f32 %v3460, %v3863
      %v3995 = vadd.f32 %v3461, %v3866
      %v3996 = vadd.f32 %v3462, %v3869
      %v3997 = vadd.f32 %v3463, %v3872
      %v3998 = vadd.f32 %v3464, %v3875
      %v3999 = vadd.f32 %v3465, %v3878
      %v4000 = vadd.f32 %v3466, %v3881
      %v4001 = vadd.f32 %v3467, %v3884
      %v4002 = vadd.f32 %v3468, %v3887
      %v4003 = vadd.f32 %v3469, %v3890
      %v4004 = vadd.f32 %v3470, %v3893
      %v4005 = vadd.f32 %v3471, %v3896
      %v4006 = vadd.f32 %v3472, %v3899
      %v4007 = vadd.f32 %v3473, %v3902
      %v4008 = vadd.f32 %v3474, %v3905
      %v4009 = vadd.f32 %v3475, %v3908
      %v4010 = vadd.f32 %v3476, %v3911
      %v4011 = vadd.f32 %v3477, %v3914
      %v4012 = vadd.f32 %v3478, %v3917
      %v4013 = vadd.f32 %v3479, %v3920
      %v4014 = vadd.f32 %v3480, %v3923
      %v4015 = vadd.f32 %v3481, %v3926
      %v4016 = vadd.f32 %v3482, %v3929
      %v4017 = vadd.f32 %v3483, %v3932
      %v4018 = vadd.f32 %v3484, %v3935
      %v4019 = vadd.f32 %v3485, %v3938
      %v4020 = vadd.f32 %v3486, %v3941
      %v4021 = vadd.f32 %v3487, %v3944
      %v4022 = vadd.f32 %v3488, %v3947
      %v4023 = vadd.f32 %v3489, %v3950
      %v4024 = vadd.f32 %v3490, %v3953
      %v4025 = vadd.f32 %v3491, %v3956
      %v4026 = vadd.f32 %v3492, %v3959
      %v4027 = vadd.f32 %v3493, %v3962
      %v4028 = vld [vmem:[#allocation2 + $0x48] sm:$0xff]
      %v4029 = vld [vmem:[#allocation2 + $0x50] sm:$0xff]
      %v4030 = vld [vmem:[#allocation2 + $0x58] sm:$0xff]
      %v4031 = vld [vmem:[#allocation2 + $0x60] sm:$0xff]
      %v4032 = vld [vmem:[#allocation2 + $0x68] sm:$0xff]
      %v4033 = vld [vmem:[#allocation2 + $0x70] sm:$0xff]
      %v4034 = vld [vmem:[#allocation2 + $0x78] sm:$0xff]
      %v4035 = vld [vmem:[#allocation2 + $0x80] sm:$0xff]
      %v4036 = vld [vmem:[#allocation2 + $0x88] sm:$0xff]
      %v4037 = vld [vmem:[#allocation2 + $0x90] sm:$0xff]
      %v4038 = vld [vmem:[#allocation2 + $0x98] sm:$0xff]
      %v4039 = vld [vmem:[#allocation2 + $0xa0] sm:$0xff]
      %v4040 = vld [vmem:[#allocation2 + $0xa8] sm:$0xff]
      %v4041 = vld [vmem:[#allocation2 + $0xb0] sm:$0xff]
      %v4042 = vld [vmem:[#allocation2 + $0xb8] sm:$0xff]
      %v4043 = vld [vmem:[#allocation2 + $0xc0] sm:$0xff]
      %v4044 = vld [vmem:[#allocation2 + $0xc8] sm:$0xff]
      %v4045 = vld [vmem:[#allocation2 + $0xd0] sm:$0xff]
      %v4046 = vld [vmem:[#allocation2 + $0xd8] sm:$0xff]
      %v4047 = vld [vmem:[#allocation2 + $0xe0] sm:$0xff]
      %v4048 = vld [vmem:[#allocation2 + $0xe8] sm:$0xff]
      %v4049 = vld [vmem:[#allocation2 + $0xf0] sm:$0xff]
      %v4050 = vld [vmem:[#allocation2 + $0xf8] sm:$0xff]
      %v4051 = vld [vmem:[#allocation2 + $0x100] sm:$0xff]
      %v4052 = vld [vmem:[#allocation2 + $0x108] sm:$0xff]
      %v4053 = vld [vmem:[#allocation2 + $0x110] sm:$0xff]
      %v4054 = vld [vmem:[#allocation2 + $0x118] sm:$0xff]
      %v4055 = vld [vmem:[#allocation2 + $0x120] sm:$0xff]
      %v4056 = vld [vmem:[#allocation2 + $0x128] sm:$0xff]
      %v4057 = vld [vmem:[#allocation2 + $0x130] sm:$0xff]
      %v4058 = vld [vmem:[#allocation2 + $0x138] sm:$0xff]
      %v4059 = vld [vmem:[#allocation2 + $0x140] sm:$0xff]
      %v4060 = vld [vmem:[#allocation2 + $0x148] sm:$0xff]
      %v4061 = vld [vmem:[#allocation2 + $0x150] sm:$0xff]
      %v4062 = vld [vmem:[#allocation2 + $0x158] sm:$0xff]
      %v4063 = vld [vmem:[#allocation2 + $0x160] sm:$0xff]
      %v4064 = vld [vmem:[#allocation2 + $0x168] sm:$0xff]
      %v4065 = vld [vmem:[#allocation2 + $0x170] sm:$0xff]
      %v4066 = vld [vmem:[#allocation2 + $0x178] sm:$0xff]
      %v4067 = vld [vmem:[#allocation2 + $0x180] sm:$0xff]
      %v4068 = vld [vmem:[#allocation2 + $0x188] sm:$0xff]
      %v4069 = vld [vmem:[#allocation2 + $0x190] sm:$0xff]
      %v4070 = vld [vmem:[#allocation2 + $0x198] sm:$0xff]
      %v4071 = vld [vmem:[#allocation2 + $0x1a0] sm:$0xff]
      %v4072 = vld [vmem:[#allocation2 + $0x1a8] sm:$0xff]
      %v4073 = vld [vmem:[#allocation2 + $0x1b0] sm:$0xff]
      %v4074 = vld [vmem:[#allocation2 + $0x1b8] sm:$0xff]
      %v4075 = vld [vmem:[#allocation2 + $0x1c0] sm:$0xff]
      %v4076 = vld [vmem:[#allocation2 + $0x1c8] sm:$0xff]
      %v4077 = vld [vmem:[#allocation2 + $0x1d0] sm:$0xff]
      %v4078 = vld [vmem:[#allocation2 + $0x1d8] sm:$0xff]
      %v4079 = vld [vmem:[#allocation2 + $0x1e0] sm:$0xff]
      %v4080 = vld [vmem:[#allocation2 + $0x1e8] sm:$0xff]
      %v4081 = vld [vmem:[#allocation2 + $0x1f0] sm:$0xff]
      %v4082 = vld [vmem:[#allocation2 + $0x1f8] sm:$0xff]
      %v4083 = vld [vmem:[#allocation2 + $0x200] sm:$0xff]
      %v4084 = vld [vmem:[#allocation2 + $0x208] sm:$0xff]
      %v4085 = vld [vmem:[#allocation2 + $0x210] sm:$0xff]
      %v4086 = vld [vmem:[#allocation2 + $0x218] sm:$0xff]
      %v4087 = vld [vmem:[#allocation2 + $0x220] sm:$0xff]
      %v4088 = vld [vmem:[#allocation2 + $0x228] sm:$0xff]
      %v4089 = vld [vmem:[#allocation2 + $0x230] sm:$0xff]
      %v4090 = vld [vmem:[#allocation2 + $0x238] sm:$0xff]
      %v4091 = vld [vmem:[#allocation2 + $0x240] sm:$0xff]
      %s4092 = scalar_lea.vmem %s1, 28
      %v4093 = vld [vmem:[%s4092] sm:$0xf]
      %v4095 = vsel %vm171, %v4028, 0
      %v4098 = vsel %vm171, %v4029, 0
      %v4101 = vsel %vm171, %v4030, 0
      %v4104 = vsel %vm171, %v4031, 0
      %v4107 = vsel %vm171, %v4032, 0
      %v4110 = vsel %vm171, %v4033, 0
      %v4113 = vsel %vm171, %v4034, 0
      %v4116 = vsel %vm171, %v4035, 0
      %v4119 = vsel %vm171, %v4036, 0
      %v4122 = vsel %vm171, %v4037, 0
      %v4125 = vsel %vm171, %v4038, 0
      %v4128 = vsel %vm171, %v4039, 0
      %v4131 = vsel %vm171, %v4040, 0
      %v4134 = vsel %vm171, %v4041, 0
      %v4137 = vsel %vm171, %v4042, 0
      %v4140 = vsel %vm171, %v4043, 0
      %v4143 = vsel %vm171, %v4044, 0
      %v4146 = vsel %vm171, %v4045, 0
      %v4149 = vsel %vm171, %v4046, 0
      %v4152 = vsel %vm171, %v4047, 0
      %v4155 = vsel %vm171, %v4048, 0
      %v4158 = vsel %vm171, %v4049, 0
      %v4161 = vsel %vm171, %v4050, 0
      %v4164 = vsel %vm171, %v4051, 0
      %v4167 = vsel %vm171, %v4052, 0
      %v4170 = vsel %vm171, %v4053, 0
      %v4173 = vsel %vm171, %v4054, 0
      %v4176 = vsel %vm171, %v4055, 0
      %v4179 = vsel %vm171, %v4056, 0
      %v4182 = vsel %vm171, %v4057, 0
      %v4185 = vsel %vm171, %v4058, 0
      %v4188 = vsel %vm171, %v4059, 0
      %v4191 = vsel %vm171, %v4060, 0
      %v4194 = vsel %vm171, %v4061, 0
      %v4197 = vsel %vm171, %v4062, 0
      %v4200 = vsel %vm171, %v4063, 0
      %v4203 = vsel %vm171, %v4064, 0
      %v4206 = vsel %vm171, %v4065, 0
      %v4209 = vsel %vm171, %v4066, 0
      %v4212 = vsel %vm171, %v4067, 0
      %v4215 = vsel %vm171, %v4068, 0
      %v4218 = vsel %vm171, %v4069, 0
      %v4221 = vsel %vm171, %v4070, 0
      %v4224 = vsel %vm171, %v4071, 0
      %v4227 = vsel %vm171, %v4072, 0
      %v4230 = vsel %vm171, %v4073, 0
      %v4233 = vsel %vm171, %v4074, 0
      %v4236 = vsel %vm171, %v4075, 0
      %v4239 = vsel %vm171, %v4076, 0
      %v4242 = vsel %vm171, %v4077, 0
      %v4245 = vsel %vm171, %v4078, 0
      %v4248 = vsel %vm171, %v4079, 0
      %v4251 = vsel %vm171, %v4080, 0
      %v4254 = vsel %vm171, %v4081, 0
      %v4257 = vsel %vm171, %v4082, 0
      %v4260 = vsel %vm171, %v4083, 0
      %v4263 = vsel %vm171, %v4084, 0
      %v4266 = vsel %vm171, %v4085, 0
      %v4269 = vsel %vm171, %v4086, 0
      %v4272 = vsel %vm171, %v4087, 0
      %v4275 = vsel %vm171, %v4088, 0
      %v4278 = vsel %vm171, %v4089, 0
      %v4281 = vsel %vm171, %v4090, 0
      %v4284 = vsel %vm171, %v4091, 0
      %v4287 = vsel %vm741, %v4093, 0
      %4289 = vmatpush.msra.mxu0 0.0
      %4290 = vmatpush.msra.mxu0 0.0
      %4291 = vmatpush.msra.mxu0 0.0
      %4292 = vmatpush.msra.mxu0 0.0
      %4293 = vmatpush.msra.mxu0 0.0
      %4294 = vmatpush.msra.mxu0 0.0
      %4295 = vmatpush.msra.mxu0 0.0
      %4296 = vmatpush.msra.mxu0 0.0
      %4297 = vmatpush.msra.mxu0 0.0
      %4298 = vmatpush.msra.mxu0 0.0
      %4299 = vmatpush.msra.mxu0 0.0
      %4300 = vmatpush.msra.mxu0 0.0
      %4301 = vmatpush.msra.mxu0 0.0
      %4302 = vmatpush.msra.mxu0 0.0
      %4303 = vmatpush.msra.mxu0 0.0
      %4304 = vmatpush.msra.mxu0 %v4287
      %4305 = vmatmul.f32.gmra.mxu0 %v4095
      %v4306 = vpop.f32.mrf.mxu0
      %v4307 = vadd.f32 0.0, %v4306
      %4308 = vmatmul.f32.gmra.mxu0 %v4098
      %v4309 = vpop.f32.mrf.mxu0
      %v4310 = vadd.f32 0.0, %v4309
      %4311 = vmatmul.f32.gmra.mxu0 %v4101
      %v4312 = vpop.f32.mrf.mxu0
      %v4313 = vadd.f32 0.0, %v4312
      %4314 = vmatmul.f32.gmra.mxu0 %v4104
      %v4315 = vpop.f32.mrf.mxu0
      %v4316 = vadd.f32 0.0, %v4315
      %4317 = vmatmul.f32.gmra.mxu0 %v4107
      %v4318 = vpop.f32.mrf.mxu0
      %v4319 = vadd.f32 0.0, %v4318
      %4320 = vmatmul.f32.gmra.mxu0 %v4110
      %v4321 = vpop.f32.mrf.mxu0
      %v4322 = vadd.f32 0.0, %v4321
      %4323 = vmatmul.f32.gmra.mxu0 %v4113
      %v4324 = vpop.f32.mrf.mxu0
      %v4325 = vadd.f32 0.0, %v4324
      %4326 = vmatmul.f32.gmra.mxu0 %v4116
      %v4327 = vpop.f32.mrf.mxu0
      %v4328 = vadd.f32 0.0, %v4327
      %4329 = vmatmul.f32.gmra.mxu0 %v4119
      %v4330 = vpop.f32.mrf.mxu0
      %v4331 = vadd.f32 0.0, %v4330
      %4332 = vmatmul.f32.gmra.mxu0 %v4122
      %v4333 = vpop.f32.mrf.mxu0
      %v4334 = vadd.f32 0.0, %v4333
      %4335 = vmatmul.f32.gmra.mxu0 %v4125
      %v4336 = vpop.f32.mrf.mxu0
      %v4337 = vadd.f32 0.0, %v4336
      %4338 = vmatmul.f32.gmra.mxu0 %v4128
      %v4339 = vpop.f32.mrf.mxu0
      %v4340 = vadd.f32 0.0, %v4339
      %4341 = vmatmul.f32.gmra.mxu0 %v4131
      %v4342 = vpop.f32.mrf.mxu0
      %v4343 = vadd.f32 0.0, %v4342
      %4344 = vmatmul.f32.gmra.mxu0 %v4134
      %v4345 = vpop.f32.mrf.mxu0
      %v4346 = vadd.f32 0.0, %v4345
      %4347 = vmatmul.f32.gmra.mxu0 %v4137
      %v4348 = vpop.f32.mrf.mxu0
      %v4349 = vadd.f32 0.0, %v4348
      %4350 = vmatmul.f32.gmra.mxu0 %v4140
      %v4351 = vpop.f32.mrf.mxu0
      %v4352 = vadd.f32 0.0, %v4351
      %4353 = vmatmul.f32.gmra.mxu0 %v4143
      %v4354 = vpop.f32.mrf.mxu0
      %v4355 = vadd.f32 0.0, %v4354
      %4356 = vmatmul.f32.gmra.mxu0 %v4146
      %v4357 = vpop.f32.mrf.mxu0
      %v4358 = vadd.f32 0.0, %v4357
      %4359 = vmatmul.f32.gmra.mxu0 %v4149
      %v4360 = vpop.f32.mrf.mxu0
      %v4361 = vadd.f32 0.0, %v4360
      %4362 = vmatmul.f32.gmra.mxu0 %v4152
      %v4363 = vpop.f32.mrf.mxu0
      %v4364 = vadd.f32 0.0, %v4363
      %4365 = vmatmul.f32.gmra.mxu0 %v4155
      %v4366 = vpop.f32.mrf.mxu0
      %v4367 = vadd.f32 0.0, %v4366
      %4368 = vmatmul.f32.gmra.mxu0 %v4158
      %v4369 = vpop.f32.mrf.mxu0
      %v4370 = vadd.f32 0.0, %v4369
      %4371 = vmatmul.f32.gmra.mxu0 %v4161
      %v4372 = vpop.f32.mrf.mxu0
      %v4373 = vadd.f32 0.0, %v4372
      %4374 = vmatmul.f32.gmra.mxu0 %v4164
      %v4375 = vpop.f32.mrf.mxu0
      %v4376 = vadd.f32 0.0, %v4375
      %4377 = vmatmul.f32.gmra.mxu0 %v4167
      %v4378 = vpop.f32.mrf.mxu0
      %v4379 = vadd.f32 0.0, %v4378
      %4380 = vmatmul.f32.gmra.mxu0 %v4170
      %v4381 = vpop.f32.mrf.mxu0
      %v4382 = vadd.f32 0.0, %v4381
      %4383 = vmatmul.f32.gmra.mxu0 %v4173
      %v4384 = vpop.f32.mrf.mxu0
      %v4385 = vadd.f32 0.0, %v4384
      %4386 = vmatmul.f32.gmra.mxu0 %v4176
      %v4387 = vpop.f32.mrf.mxu0
      %v4388 = vadd.f32 0.0, %v4387
      %4389 = vmatmul.f32.gmra.mxu0 %v4179
      %v4390 = vpop.f32.mrf.mxu0
      %v4391 = vadd.f32 0.0, %v4390
      %4392 = vmatmul.f32.gmra.mxu0 %v4182
      %v4393 = vpop.f32.mrf.mxu0
      %v4394 = vadd.f32 0.0, %v4393
      %4395 = vmatmul.f32.gmra.mxu0 %v4185
      %v4396 = vpop.f32.mrf.mxu0
      %v4397 = vadd.f32 0.0, %v4396
      %4398 = vmatmul.f32.gmra.mxu0 %v4188
      %v4399 = vpop.f32.mrf.mxu0
      %v4400 = vadd.f32 0.0, %v4399
      %4401 = vmatmul.f32.gmra.mxu0 %v4191
      %v4402 = vpop.f32.mrf.mxu0
      %v4403 = vadd.f32 0.0, %v4402
      %4404 = vmatmul.f32.gmra.mxu0 %v4194
      %v4405 = vpop.f32.mrf.mxu0
      %v4406 = vadd.f32 0.0, %v4405
      %4407 = vmatmul.f32.gmra.mxu0 %v4197
      %v4408 = vpop.f32.mrf.mxu0
      %v4409 = vadd.f32 0.0, %v4408
      %4410 = vmatmul.f32.gmra.mxu0 %v4200
      %v4411 = vpop.f32.mrf.mxu0
      %v4412 = vadd.f32 0.0, %v4411
      %4413 = vmatmul.f32.gmra.mxu0 %v4203
      %v4414 = vpop.f32.mrf.mxu0
      %v4415 = vadd.f32 0.0, %v4414
      %4416 = vmatmul.f32.gmra.mxu0 %v4206
      %v4417 = vpop.f32.mrf.mxu0
      %v4418 = vadd.f32 0.0, %v4417
      %4419 = vmatmul.f32.gmra.mxu0 %v4209
      %v4420 = vpop.f32.mrf.mxu0
      %v4421 = vadd.f32 0.0, %v4420
      %4422 = vmatmul.f32.gmra.mxu0 %v4212
      %v4423 = vpop.f32.mrf.mxu0
      %v4424 = vadd.f32 0.0, %v4423
      %4425 = vmatmul.f32.gmra.mxu0 %v4215
      %v4426 = vpop.f32.mrf.mxu0
      %v4427 = vadd.f32 0.0, %v4426
      %4428 = vmatmul.f32.gmra.mxu0 %v4218
      %v4429 = vpop.f32.mrf.mxu0
      %v4430 = vadd.f32 0.0, %v4429
      %4431 = vmatmul.f32.gmra.mxu0 %v4221
      %v4432 = vpop.f32.mrf.mxu0
      %v4433 = vadd.f32 0.0, %v4432
      %4434 = vmatmul.f32.gmra.mxu0 %v4224
      %v4435 = vpop.f32.mrf.mxu0
      %v4436 = vadd.f32 0.0, %v4435
      %4437 = vmatmul.f32.gmra.mxu0 %v4227
      %v4438 = vpop.f32.mrf.mxu0
      %v4439 = vadd.f32 0.0, %v4438
      %4440 = vmatmul.f32.gmra.mxu0 %v4230
      %v4441 = vpop.f32.mrf.mxu0
      %v4442 = vadd.f32 0.0, %v4441
      %4443 = vmatmul.f32.gmra.mxu0 %v4233
      %v4444 = vpop.f32.mrf.mxu0
      %v4445 = vadd.f32 0.0, %v4444
      %4446 = vmatmul.f32.gmra.mxu0 %v4236
      %v4447 = vpop.f32.mrf.mxu0
      %v4448 = vadd.f32 0.0, %v4447
      %4449 = vmatmul.f32.gmra.mxu0 %v4239
      %v4450 = vpop.f32.mrf.mxu0
      %v4451 = vadd.f32 0.0, %v4450
      %4452 = vmatmul.f32.gmra.mxu0 %v4242
      %v4453 = vpop.f32.mrf.mxu0
      %v4454 = vadd.f32 0.0, %v4453
      %4455 = vmatmul.f32.gmra.mxu0 %v4245
      %v4456 = vpop.f32.mrf.mxu0
      %v4457 = vadd.f32 0.0, %v4456
      %4458 = vmatmul.f32.gmra.mxu0 %v4248
      %v4459 = vpop.f32.mrf.mxu0
      %v4460 = vadd.f32 0.0, %v4459
      %4461 = vmatmul.f32.gmra.mxu0 %v4251
      %v4462 = vpop.f32.mrf.mxu0
      %v4463 = vadd.f32 0.0, %v4462
      %4464 = vmatmul.f32.gmra.mxu0 %v4254
      %v4465 = vpop.f32.mrf.mxu0
      %v4466 = vadd.f32 0.0, %v4465
      %4467 = vmatmul.f32.gmra.mxu0 %v4257
      %v4468 = vpop.f32.mrf.mxu0
      %v4469 = vadd.f32 0.0, %v4468
      %4470 = vmatmul.f32.gmra.mxu0 %v4260
      %v4471 = vpop.f32.mrf.mxu0
      %v4472 = vadd.f32 0.0, %v4471
      %4473 = vmatmul.f32.gmra.mxu0 %v4263
      %v4474 = vpop.f32.mrf.mxu0
      %v4475 = vadd.f32 0.0, %v4474
      %4476 = vmatmul.f32.gmra.mxu0 %v4266
      %v4477 = vpop.f32.mrf.mxu0
      %v4478 = vadd.f32 0.0, %v4477
      %4479 = vmatmul.f32.gmra.mxu0 %v4269
      %v4480 = vpop.f32.mrf.mxu0
      %v4481 = vadd.f32 0.0, %v4480
      %4482 = vmatmul.f32.gmra.mxu0 %v4272
      %v4483 = vpop.f32.mrf.mxu0
      %v4484 = vadd.f32 0.0, %v4483
      %4485 = vmatmul.f32.gmra.mxu0 %v4275
      %v4486 = vpop.f32.mrf.mxu0
      %v4487 = vadd.f32 0.0, %v4486
      %4488 = vmatmul.f32.gmra.mxu0 %v4278
      %v4489 = vpop.f32.mrf.mxu0
      %v4490 = vadd.f32 0.0, %v4489
      %4491 = vmatmul.f32.gmra.mxu0 %v4281
      %v4492 = vpop.f32.mrf.mxu0
      %v4493 = vadd.f32 0.0, %v4492
      %4494 = vmatmul.f32.gmra.mxu0 %v4284
      %v4495 = vpop.f32.mrf.mxu0
      %v4496 = vadd.f32 0.0, %v4495
      %4497 = vdwg.mxu0
      %v4498 = vadd.f32 %v3964, %v4307
      %v4499 = vadd.f32 %v3965, %v4310
      %v4500 = vadd.f32 %v3966, %v4313
      %v4501 = vadd.f32 %v3967, %v4316
      %v4502 = vadd.f32 %v3968, %v4319
      %v4503 = vadd.f32 %v3969, %v4322
      %v4504 = vadd.f32 %v3970, %v4325
      %v4505 = vadd.f32 %v3971, %v4328
      %v4506 = vadd.f32 %v3972, %v4331
      %v4507 = vadd.f32 %v3973, %v4334
      %v4508 = vadd.f32 %v3974, %v4337
      %v4509 = vadd.f32 %v3975, %v4340
      %v4510 = vadd.f32 %v3976, %v4343
      %v4511 = vadd.f32 %v3977, %v4346
      %v4512 = vadd.f32 %v3978, %v4349
      %v4513 = vadd.f32 %v3979, %v4352
      %v4514 = vadd.f32 %v3980, %v4355
      %v4515 = vadd.f32 %v3981, %v4358
      %v4516 = vadd.f32 %v3982, %v4361
      %v4517 = vadd.f32 %v3983, %v4364
      %v4518 = vadd.f32 %v3984, %v4367
      %v4519 = vadd.f32 %v3985, %v4370
      %v4520 = vadd.f32 %v3986, %v4373
      %v4521 = vadd.f32 %v3987, %v4376
      %v4522 = vadd.f32 %v3988, %v4379
      %v4523 = vadd.f32 %v3989, %v4382
      %v4524 = vadd.f32 %v3990, %v4385
      %v4525 = vadd.f32 %v3991, %v4388
      %v4526 = vadd.f32 %v3992, %v4391
      %v4527 = vadd.f32 %v3993, %v4394
      %v4528 = vadd.f32 %v3994, %v4397
      %v4529 = vadd.f32 %v3995, %v4400
      %v4530 = vadd.f32 %v3996, %v4403
      %v4531 = vadd.f32 %v3997, %v4406
      %v4532 = vadd.f32 %v3998, %v4409
      %v4533 = vadd.f32 %v3999, %v4412
      %v4534 = vadd.f32 %v4000, %v4415
      %v4535 = vadd.f32 %v4001, %v4418
      %v4536 = vadd.f32 %v4002, %v4421
      %v4537 = vadd.f32 %v4003, %v4424
      %v4538 = vadd.f32 %v4004, %v4427
      %v4539 = vadd.f32 %v4005, %v4430
      %v4540 = vadd.f32 %v4006, %v4433
      %v4541 = vadd.f32 %v4007, %v4436
      %v4542 = vadd.f32 %v4008, %v4439
      %v4543 = vadd.f32 %v4009, %v4442
      %v4544 = vadd.f32 %v4010, %v4445
      %v4545 = vadd.f32 %v4011, %v4448
      %v4546 = vadd.f32 %v4012, %v4451
      %v4547 = vadd.f32 %v4013, %v4454
      %v4548 = vadd.f32 %v4014, %v4457
      %v4549 = vadd.f32 %v4015, %v4460
      %v4550 = vadd.f32 %v4016, %v4463
      %v4551 = vadd.f32 %v4017, %v4466
      %v4552 = vadd.f32 %v4018, %v4469
      %v4553 = vadd.f32 %v4019, %v4472
      %v4554 = vadd.f32 %v4020, %v4475
      %v4555 = vadd.f32 %v4021, %v4478
      %v4556 = vadd.f32 %v4022, %v4481
      %v4557 = vadd.f32 %v4023, %v4484
      %v4558 = vadd.f32 %v4024, %v4487
      %v4559 = vadd.f32 %v4025, %v4490
      %v4560 = vadd.f32 %v4026, %v4493
      %v4561 = vadd.f32 %v4027, %v4496
      %v4562 = vld [vmem:[#allocation2 + $0x49] sm:$0xff]
      %v4563 = vld [vmem:[#allocation2 + $0x51] sm:$0xff]
      %v4564 = vld [vmem:[#allocation2 + $0x59] sm:$0xff]
      %v4565 = vld [vmem:[#allocation2 + $0x61] sm:$0xff]
      %v4566 = vld [vmem:[#allocation2 + $0x69] sm:$0xff]
      %v4567 = vld [vmem:[#allocation2 + $0x71] sm:$0xff]
      %v4568 = vld [vmem:[#allocation2 + $0x79] sm:$0xff]
      %v4569 = vld [vmem:[#allocation2 + $0x81] sm:$0xff]
      %v4570 = vld [vmem:[#allocation2 + $0x89] sm:$0xff]
      %v4571 = vld [vmem:[#allocation2 + $0x91] sm:$0xff]
      %v4572 = vld [vmem:[#allocation2 + $0x99] sm:$0xff]
      %v4573 = vld [vmem:[#allocation2 + $0xa1] sm:$0xff]
      %v4574 = vld [vmem:[#allocation2 + $0xa9] sm:$0xff]
      %v4575 = vld [vmem:[#allocation2 + $0xb1] sm:$0xff]
      %v4576 = vld [vmem:[#allocation2 + $0xb9] sm:$0xff]
      %v4577 = vld [vmem:[#allocation2 + $0xc1] sm:$0xff]
      %v4578 = vld [vmem:[#allocation2 + $0xc9] sm:$0xff]
      %v4579 = vld [vmem:[#allocation2 + $0xd1] sm:$0xff]
      %v4580 = vld [vmem:[#allocation2 + $0xd9] sm:$0xff]
      %v4581 = vld [vmem:[#allocation2 + $0xe1] sm:$0xff]
      %v4582 = vld [vmem:[#allocation2 + $0xe9] sm:$0xff]
      %v4583 = vld [vmem:[#allocation2 + $0xf1] sm:$0xff]
      %v4584 = vld [vmem:[#allocation2 + $0xf9] sm:$0xff]
      %v4585 = vld [vmem:[#allocation2 + $0x101] sm:$0xff]
      %v4586 = vld [vmem:[#allocation2 + $0x109] sm:$0xff]
      %v4587 = vld [vmem:[#allocation2 + $0x111] sm:$0xff]
      %v4588 = vld [vmem:[#allocation2 + $0x119] sm:$0xff]
      %v4589 = vld [vmem:[#allocation2 + $0x121] sm:$0xff]
      %v4590 = vld [vmem:[#allocation2 + $0x129] sm:$0xff]
      %v4591 = vld [vmem:[#allocation2 + $0x131] sm:$0xff]
      %v4592 = vld [vmem:[#allocation2 + $0x139] sm:$0xff]
      %v4593 = vld [vmem:[#allocation2 + $0x141] sm:$0xff]
      %v4594 = vld [vmem:[#allocation2 + $0x149] sm:$0xff]
      %v4595 = vld [vmem:[#allocation2 + $0x151] sm:$0xff]
      %v4596 = vld [vmem:[#allocation2 + $0x159] sm:$0xff]
      %v4597 = vld [vmem:[#allocation2 + $0x161] sm:$0xff]
      %v4598 = vld [vmem:[#allocation2 + $0x169] sm:$0xff]
      %v4599 = vld [vmem:[#allocation2 + $0x171] sm:$0xff]
      %v4600 = vld [vmem:[#allocation2 + $0x179] sm:$0xff]
      %v4601 = vld [vmem:[#allocation2 + $0x181] sm:$0xff]
      %v4602 = vld [vmem:[#allocation2 + $0x189] sm:$0xff]
      %v4603 = vld [vmem:[#allocation2 + $0x191] sm:$0xff]
      %v4604 = vld [vmem:[#allocation2 + $0x199] sm:$0xff]
      %v4605 = vld [vmem:[#allocation2 + $0x1a1] sm:$0xff]
      %v4606 = vld [vmem:[#allocation2 + $0x1a9] sm:$0xff]
      %v4607 = vld [vmem:[#allocation2 + $0x1b1] sm:$0xff]
      %v4608 = vld [vmem:[#allocation2 + $0x1b9] sm:$0xff]
      %v4609 = vld [vmem:[#allocation2 + $0x1c1] sm:$0xff]
      %v4610 = vld [vmem:[#allocation2 + $0x1c9] sm:$0xff]
      %v4611 = vld [vmem:[#allocation2 + $0x1d1] sm:$0xff]
      %v4612 = vld [vmem:[#allocation2 + $0x1d9] sm:$0xff]
      %v4613 = vld [vmem:[#allocation2 + $0x1e1] sm:$0xff]
      %v4614 = vld [vmem:[#allocation2 + $0x1e9] sm:$0xff]
      %v4615 = vld [vmem:[#allocation2 + $0x1f1] sm:$0xff]
      %v4616 = vld [vmem:[#allocation2 + $0x1f9] sm:$0xff]
      %v4617 = vld [vmem:[#allocation2 + $0x201] sm:$0xff]
      %v4618 = vld [vmem:[#allocation2 + $0x209] sm:$0xff]
      %v4619 = vld [vmem:[#allocation2 + $0x211] sm:$0xff]
      %v4620 = vld [vmem:[#allocation2 + $0x219] sm:$0xff]
      %v4621 = vld [vmem:[#allocation2 + $0x221] sm:$0xff]
      %v4622 = vld [vmem:[#allocation2 + $0x229] sm:$0xff]
      %v4623 = vld [vmem:[#allocation2 + $0x231] sm:$0xff]
      %v4624 = vld [vmem:[#allocation2 + $0x239] sm:$0xff]
      %v4625 = vld [vmem:[#allocation2 + $0x241] sm:$0xff]
      %s4626 = scalar_lea.vmem %s1, 32
      %v4627 = vld [vmem:[%s4626] sm:$0xf]
      %v4629 = vsel %vm171, %v4562, 0
      %v4632 = vsel %vm171, %v4563, 0
      %v4635 = vsel %vm171, %v4564, 0
      %v4638 = vsel %vm171, %v4565, 0
      %v4641 = vsel %vm171, %v4566, 0
      %v4644 = vsel %vm171, %v4567, 0
      %v4647 = vsel %vm171, %v4568, 0
      %v4650 = vsel %vm171, %v4569, 0
      %v4653 = vsel %vm171, %v4570, 0
      %v4656 = vsel %vm171, %v4571, 0
      %v4659 = vsel %vm171, %v4572, 0
      %v4662 = vsel %vm171, %v4573, 0
      %v4665 = vsel %vm171, %v4574, 0
      %v4668 = vsel %vm171, %v4575, 0
      %v4671 = vsel %vm171, %v4576, 0
      %v4674 = vsel %vm171, %v4577, 0
      %v4677 = vsel %vm171, %v4578, 0
      %v4680 = vsel %vm171, %v4579, 0
      %v4683 = vsel %vm171, %v4580, 0
      %v4686 = vsel %vm171, %v4581, 0
      %v4689 = vsel %vm171, %v4582, 0
      %v4692 = vsel %vm171, %v4583, 0
      %v4695 = vsel %vm171, %v4584, 0
      %v4698 = vsel %vm171, %v4585, 0
      %v4701 = vsel %vm171, %v4586, 0
      %v4704 = vsel %vm171, %v4587, 0
      %v4707 = vsel %vm171, %v4588, 0
      %v4710 = vsel %vm171, %v4589, 0
      %v4713 = vsel %vm171, %v4590, 0
      %v4716 = vsel %vm171, %v4591, 0
      %v4719 = vsel %vm171, %v4592, 0
      %v4722 = vsel %vm171, %v4593, 0
      %v4725 = vsel %vm171, %v4594, 0
      %v4728 = vsel %vm171, %v4595, 0
      %v4731 = vsel %vm171, %v4596, 0
      %v4734 = vsel %vm171, %v4597, 0
      %v4737 = vsel %vm171, %v4598, 0
      %v4740 = vsel %vm171, %v4599, 0
      %v4743 = vsel %vm171, %v4600, 0
      %v4746 = vsel %vm171, %v4601, 0
      %v4749 = vsel %vm171, %v4602, 0
      %v4752 = vsel %vm171, %v4603, 0
      %v4755 = vsel %vm171, %v4604, 0
      %v4758 = vsel %vm171, %v4605, 0
      %v4761 = vsel %vm171, %v4606, 0
      %v4764 = vsel %vm171, %v4607, 0
      %v4767 = vsel %vm171, %v4608, 0
      %v4770 = vsel %vm171, %v4609, 0
      %v4773 = vsel %vm171, %v4610, 0
      %v4776 = vsel %vm171, %v4611, 0
      %v4779 = vsel %vm171, %v4612, 0
      %v4782 = vsel %vm171, %v4613, 0
      %v4785 = vsel %vm171, %v4614, 0
      %v4788 = vsel %vm171, %v4615, 0
      %v4791 = vsel %vm171, %v4616, 0
      %v4794 = vsel %vm171, %v4617, 0
      %v4797 = vsel %vm171, %v4618, 0
      %v4800 = vsel %vm171, %v4619, 0
      %v4803 = vsel %vm171, %v4620, 0
      %v4806 = vsel %vm171, %v4621, 0
      %v4809 = vsel %vm171, %v4622, 0
      %v4812 = vsel %vm171, %v4623, 0
      %v4815 = vsel %vm171, %v4624, 0
      %v4818 = vsel %vm171, %v4625, 0
      %v4821 = vsel %vm741, %v4627, 0
      %4823 = vmatpush.msra.mxu0 0.0
      %4824 = vmatpush.msra.mxu0 0.0
      %4825 = vmatpush.msra.mxu0 0.0
      %4826 = vmatpush.msra.mxu0 0.0
      %4827 = vmatpush.msra.mxu0 0.0
      %4828 = vmatpush.msra.mxu0 0.0
      %4829 = vmatpush.msra.mxu0 0.0
      %4830 = vmatpush.msra.mxu0 0.0
      %4831 = vmatpush.msra.mxu0 0.0
      %4832 = vmatpush.msra.mxu0 0.0
      %4833 = vmatpush.msra.mxu0 0.0
      %4834 = vmatpush.msra.mxu0 0.0
      %4835 = vmatpush.msra.mxu0 0.0
      %4836 = vmatpush.msra.mxu0 0.0
      %4837 = vmatpush.msra.mxu0 0.0
      %4838 = vmatpush.msra.mxu0 %v4821
      %4839 = vmatmul.f32.gmra.mxu0 %v4629
      %v4840 = vpop.f32.mrf.mxu0
      %v4841 = vadd.f32 0.0, %v4840
      %4842 = vmatmul.f32.gmra.mxu0 %v4632
      %v4843 = vpop.f32.mrf.mxu0
      %v4844 = vadd.f32 0.0, %v4843
      %4845 = vmatmul.f32.gmra.mxu0 %v4635
      %v4846 = vpop.f32.mrf.mxu0
      %v4847 = vadd.f32 0.0, %v4846
      %4848 = vmatmul.f32.gmra.mxu0 %v4638
      %v4849 = vpop.f32.mrf.mxu0
      %v4850 = vadd.f32 0.0, %v4849
      %4851 = vmatmul.f32.gmra.mxu0 %v4641
      %v4852 = vpop.f32.mrf.mxu0
      %v4853 = vadd.f32 0.0, %v4852
      %4854 = vmatmul.f32.gmra.mxu0 %v4644
      %v4855 = vpop.f32.mrf.mxu0
      %v4856 = vadd.f32 0.0, %v4855
      %4857 = vmatmul.f32.gmra.mxu0 %v4647
      %v4858 = vpop.f32.mrf.mxu0
      %v4859 = vadd.f32 0.0, %v4858
      %4860 = vmatmul.f32.gmra.mxu0 %v4650
      %v4861 = vpop.f32.mrf.mxu0
      %v4862 = vadd.f32 0.0, %v4861
      %4863 = vmatmul.f32.gmra.mxu0 %v4653
      %v4864 = vpop.f32.mrf.mxu0
      %v4865 = vadd.f32 0.0, %v4864
      %4866 = vmatmul.f32.gmra.mxu0 %v4656
      %v4867 = vpop.f32.mrf.mxu0
      %v4868 = vadd.f32 0.0, %v4867
      %4869 = vmatmul.f32.gmra.mxu0 %v4659
      %v4870 = vpop.f32.mrf.mxu0
      %v4871 = vadd.f32 0.0, %v4870
      %4872 = vmatmul.f32.gmra.mxu0 %v4662
      %v4873 = vpop.f32.mrf.mxu0
      %v4874 = vadd.f32 0.0, %v4873
      %4875 = vmatmul.f32.gmra.mxu0 %v4665
      %v4876 = vpop.f32.mrf.mxu0
      %v4877 = vadd.f32 0.0, %v4876
      %4878 = vmatmul.f32.gmra.mxu0 %v4668
      %v4879 = vpop.f32.mrf.mxu0
      %v4880 = vadd.f32 0.0, %v4879
      %4881 = vmatmul.f32.gmra.mxu0 %v4671
      %v4882 = vpop.f32.mrf.mxu0
      %v4883 = vadd.f32 0.0, %v4882
      %4884 = vmatmul.f32.gmra.mxu0 %v4674
      %v4885 = vpop.f32.mrf.mxu0
      %v4886 = vadd.f32 0.0, %v4885
      %4887 = vmatmul.f32.gmra.mxu0 %v4677
      %v4888 = vpop.f32.mrf.mxu0
      %v4889 = vadd.f32 0.0, %v4888
      %4890 = vmatmul.f32.gmra.mxu0 %v4680
      %v4891 = vpop.f32.mrf.mxu0
      %v4892 = vadd.f32 0.0, %v4891
      %4893 = vmatmul.f32.gmra.mxu0 %v4683
      %v4894 = vpop.f32.mrf.mxu0
      %v4895 = vadd.f32 0.0, %v4894
      %4896 = vmatmul.f32.gmra.mxu0 %v4686
      %v4897 = vpop.f32.mrf.mxu0
      %v4898 = vadd.f32 0.0, %v4897
      %4899 = vmatmul.f32.gmra.mxu0 %v4689
      %v4900 = vpop.f32.mrf.mxu0
      %v4901 = vadd.f32 0.0, %v4900
      %4902 = vmatmul.f32.gmra.mxu0 %v4692
      %v4903 = vpop.f32.mrf.mxu0
      %v4904 = vadd.f32 0.0, %v4903
      %4905 = vmatmul.f32.gmra.mxu0 %v4695
      %v4906 = vpop.f32.mrf.mxu0
      %v4907 = vadd.f32 0.0, %v4906
      %4908 = vmatmul.f32.gmra.mxu0 %v4698
      %v4909 = vpop.f32.mrf.mxu0
      %v4910 = vadd.f32 0.0, %v4909
      %4911 = vmatmul.f32.gmra.mxu0 %v4701
      %v4912 = vpop.f32.mrf.mxu0
      %v4913 = vadd.f32 0.0, %v4912
      %4914 = vmatmul.f32.gmra.mxu0 %v4704
      %v4915 = vpop.f32.mrf.mxu0
      %v4916 = vadd.f32 0.0, %v4915
      %4917 = vmatmul.f32.gmra.mxu0 %v4707
      %v4918 = vpop.f32.mrf.mxu0
      %v4919 = vadd.f32 0.0, %v4918
      %4920 = vmatmul.f32.gmra.mxu0 %v4710
      %v4921 = vpop.f32.mrf.mxu0
      %v4922 = vadd.f32 0.0, %v4921
      %4923 = vmatmul.f32.gmra.mxu0 %v4713
      %v4924 = vpop.f32.mrf.mxu0
      %v4925 = vadd.f32 0.0, %v4924
      %4926 = vmatmul.f32.gmra.mxu0 %v4716
      %v4927 = vpop.f32.mrf.mxu0
      %v4928 = vadd.f32 0.0, %v4927
      %4929 = vmatmul.f32.gmra.mxu0 %v4719
      %v4930 = vpop.f32.mrf.mxu0
      %v4931 = vadd.f32 0.0, %v4930
      %4932 = vmatmul.f32.gmra.mxu0 %v4722
      %v4933 = vpop.f32.mrf.mxu0
      %v4934 = vadd.f32 0.0, %v4933
      %4935 = vmatmul.f32.gmra.mxu0 %v4725
      %v4936 = vpop.f32.mrf.mxu0
      %v4937 = vadd.f32 0.0, %v4936
      %4938 = vmatmul.f32.gmra.mxu0 %v4728
      %v4939 = vpop.f32.mrf.mxu0
      %v4940 = vadd.f32 0.0, %v4939
      %4941 = vmatmul.f32.gmra.mxu0 %v4731
      %v4942 = vpop.f32.mrf.mxu0
      %v4943 = vadd.f32 0.0, %v4942
      %4944 = vmatmul.f32.gmra.mxu0 %v4734
      %v4945 = vpop.f32.mrf.mxu0
      %v4946 = vadd.f32 0.0, %v4945
      %4947 = vmatmul.f32.gmra.mxu0 %v4737
      %v4948 = vpop.f32.mrf.mxu0
      %v4949 = vadd.f32 0.0, %v4948
      %4950 = vmatmul.f32.gmra.mxu0 %v4740
      %v4951 = vpop.f32.mrf.mxu0
      %v4952 = vadd.f32 0.0, %v4951
      %4953 = vmatmul.f32.gmra.mxu0 %v4743
      %v4954 = vpop.f32.mrf.mxu0
      %v4955 = vadd.f32 0.0, %v4954
      %4956 = vmatmul.f32.gmra.mxu0 %v4746
      %v4957 = vpop.f32.mrf.mxu0
      %v4958 = vadd.f32 0.0, %v4957
      %4959 = vmatmul.f32.gmra.mxu0 %v4749
      %v4960 = vpop.f32.mrf.mxu0
      %v4961 = vadd.f32 0.0, %v4960
      %4962 = vmatmul.f32.gmra.mxu0 %v4752
      %v4963 = vpop.f32.mrf.mxu0
      %v4964 = vadd.f32 0.0, %v4963
      %4965 = vmatmul.f32.gmra.mxu0 %v4755
      %v4966 = vpop.f32.mrf.mxu0
      %v4967 = vadd.f32 0.0, %v4966
      %4968 = vmatmul.f32.gmra.mxu0 %v4758
      %v4969 = vpop.f32.mrf.mxu0
      %v4970 = vadd.f32 0.0, %v4969
      %4971 = vmatmul.f32.gmra.mxu0 %v4761
      %v4972 = vpop.f32.mrf.mxu0
      %v4973 = vadd.f32 0.0, %v4972
      %4974 = vmatmul.f32.gmra.mxu0 %v4764
      %v4975 = vpop.f32.mrf.mxu0
      %v4976 = vadd.f32 0.0, %v4975
      %4977 = vmatmul.f32.gmra.mxu0 %v4767
      %v4978 = vpop.f32.mrf.mxu0
      %v4979 = vadd.f32 0.0, %v4978
      %4980 = vmatmul.f32.gmra.mxu0 %v4770
      %v4981 = vpop.f32.mrf.mxu0
      %v4982 = vadd.f32 0.0, %v4981
      %4983 = vmatmul.f32.gmra.mxu0 %v4773
      %v4984 = vpop.f32.mrf.mxu0
      %v4985 = vadd.f32 0.0, %v4984
      %4986 = vmatmul.f32.gmra.mxu0 %v4776
      %v4987 = vpop.f32.mrf.mxu0
      %v4988 = vadd.f32 0.0, %v4987
      %4989 = vmatmul.f32.gmra.mxu0 %v4779
      %v4990 = vpop.f32.mrf.mxu0
      %v4991 = vadd.f32 0.0, %v4990
      %4992 = vmatmul.f32.gmra.mxu0 %v4782
      %v4993 = vpop.f32.mrf.mxu0
      %v4994 = vadd.f32 0.0, %v4993
      %4995 = vmatmul.f32.gmra.mxu0 %v4785
      %v4996 = vpop.f32.mrf.mxu0
      %v4997 = vadd.f32 0.0, %v4996
      %4998 = vmatmul.f32.gmra.mxu0 %v4788
      %v4999 = vpop.f32.mrf.mxu0
      %v5000 = vadd.f32 0.0, %v4999
      %5001 = vmatmul.f32.gmra.mxu0 %v4791
      %v5002 = vpop.f32.mrf.mxu0
      %v5003 = vadd.f32 0.0, %v5002
      %5004 = vmatmul.f32.gmra.mxu0 %v4794
      %v5005 = vpop.f32.mrf.mxu0
      %v5006 = vadd.f32 0.0, %v5005
      %5007 = vmatmul.f32.gmra.mxu0 %v4797
      %v5008 = vpop.f32.mrf.mxu0
      %v5009 = vadd.f32 0.0, %v5008
      %5010 = vmatmul.f32.gmra.mxu0 %v4800
      %v5011 = vpop.f32.mrf.mxu0
      %v5012 = vadd.f32 0.0, %v5011
      %5013 = vmatmul.f32.gmra.mxu0 %v4803
      %v5014 = vpop.f32.mrf.mxu0
      %v5015 = vadd.f32 0.0, %v5014
      %5016 = vmatmul.f32.gmra.mxu0 %v4806
      %v5017 = vpop.f32.mrf.mxu0
      %v5018 = vadd.f32 0.0, %v5017
      %5019 = vmatmul.f32.gmra.mxu0 %v4809
      %v5020 = vpop.f32.mrf.mxu0
      %v5021 = vadd.f32 0.0, %v5020
      %5022 = vmatmul.f32.gmra.mxu0 %v4812
      %v5023 = vpop.f32.mrf.mxu0
      %v5024 = vadd.f32 0.0, %v5023
      %5025 = vmatmul.f32.gmra.mxu0 %v4815
      %v5026 = vpop.f32.mrf.mxu0
      %v5027 = vadd.f32 0.0, %v5026
      %5028 = vmatmul.f32.gmra.mxu0 %v4818
      %v5029 = vpop.f32.mrf.mxu0
      %v5030 = vadd.f32 0.0, %v5029
      %5031 = vdwg.mxu0
      %v5032 = vadd.f32 %v4498, %v4841
      %v5033 = vadd.f32 %v4499, %v4844
      %v5034 = vadd.f32 %v4500, %v4847
      %v5035 = vadd.f32 %v4501, %v4850
      %v5036 = vadd.f32 %v4502, %v4853
      %v5037 = vadd.f32 %v4503, %v4856
      %v5038 = vadd.f32 %v4504, %v4859
      %v5039 = vadd.f32 %v4505, %v4862
      %v5040 = vadd.f32 %v4506, %v4865
      %v5041 = vadd.f32 %v4507, %v4868
      %v5042 = vadd.f32 %v4508, %v4871
      %v5043 = vadd.f32 %v4509, %v4874
      %v5044 = vadd.f32 %v4510, %v4877
      %v5045 = vadd.f32 %v4511, %v4880
      %v5046 = vadd.f32 %v4512, %v4883
      %v5047 = vadd.f32 %v4513, %v4886
      %v5048 = vadd.f32 %v4514, %v4889
      %v5049 = vadd.f32 %v4515, %v4892
      %v5050 = vadd.f32 %v4516, %v4895
      %v5051 = vadd.f32 %v4517, %v4898
      %v5052 = vadd.f32 %v4518, %v4901
      %v5053 = vadd.f32 %v4519, %v4904
      %v5054 = vadd.f32 %v4520, %v4907
      %v5055 = vadd.f32 %v4521, %v4910
      %v5056 = vadd.f32 %v4522, %v4913
      %v5057 = vadd.f32 %v4523, %v4916
      %v5058 = vadd.f32 %v4524, %v4919
      %v5059 = vadd.f32 %v4525, %v4922
      %v5060 = vadd.f32 %v4526, %v4925
      %v5061 = vadd.f32 %v4527, %v4928
      %v5062 = vadd.f32 %v4528, %v4931
      %v5063 = vadd.f32 %v4529, %v4934
      %v5064 = vadd.f32 %v4530, %v4937
      %v5065 = vadd.f32 %v4531, %v4940
      %v5066 = vadd.f32 %v4532, %v4943
      %v5067 = vadd.f32 %v4533, %v4946
      %v5068 = vadd.f32 %v4534, %v4949
      %v5069 = vadd.f32 %v4535, %v4952
      %v5070 = vadd.f32 %v4536, %v4955
      %v5071 = vadd.f32 %v4537, %v4958
      %v5072 = vadd.f32 %v4538, %v4961
      %v5073 = vadd.f32 %v4539, %v4964
      %v5074 = vadd.f32 %v4540, %v4967
      %v5075 = vadd.f32 %v4541, %v4970
      %v5076 = vadd.f32 %v4542, %v4973
      %v5077 = vadd.f32 %v4543, %v4976
      %v5078 = vadd.f32 %v4544, %v4979
      %v5079 = vadd.f32 %v4545, %v4982
      %v5080 = vadd.f32 %v4546, %v4985
      %v5081 = vadd.f32 %v4547, %v4988
      %v5082 = vadd.f32 %v4548, %v4991
      %v5083 = vadd.f32 %v4549, %v4994
      %v5084 = vadd.f32 %v4550, %v4997
      %v5085 = vadd.f32 %v4551, %v5000
      %v5086 = vadd.f32 %v4552, %v5003
      %v5087 = vadd.f32 %v4553, %v5006
      %v5088 = vadd.f32 %v4554, %v5009
      %v5089 = vadd.f32 %v4555, %v5012
      %v5090 = vadd.f32 %v4556, %v5015
      %v5091 = vadd.f32 %v4557, %v5018
      %v5092 = vadd.f32 %v4558, %v5021
      %v5093 = vadd.f32 %v4559, %v5024
      %v5094 = vadd.f32 %v4560, %v5027
      %v5095 = vadd.f32 %v4561, %v5030
      %v5096 = vlaneseq
      %v5097 = vshrl.u32 %v5096, 7
      %v5098 = vadd.s32 %v5097, 8
      %v5099 = vadd.s32 %v5097, 16
      %v5100 = vadd.s32 %v5097, 24
      %v5101 = vadd.s32 %v5097, 32
      %v5102 = vadd.s32 %v5097, 40
      %v5103 = vadd.s32 %v5097, 48
      %v5104 = vadd.s32 %v5097, 56
      %v5105 = vadd.s32 %v5097, 64
      %v5106 = vadd.s32 %v5097, 72
      %v5107 = vadd.s32 %v5097, 80
      %v5108 = vadd.s32 %v5097, 88
      %v5109 = vadd.s32 %v5097, 96
      %v5110 = vadd.s32 %v5097, 104
      %v5111 = vadd.s32 %v5097, 112
      %v5112 = vadd.s32 %v5097, 120
      %v5113 = vadd.s32 %v5097, 128
      %v5114 = vadd.s32 %v5097, 136
      %v5115 = vadd.s32 %v5097, 144
      %v5116 = vadd.s32 %v5097, 152
      %v5117 = vadd.s32 %v5097, 160
      %v5118 = vadd.s32 %v5097, 168
      %v5119 = vadd.s32 %v5097, 176
      %v5120 = vadd.s32 %v5097, 184
      %v5121 = vadd.s32 %v5097, 192
      %v5122 = vadd.s32 %v5097, 200
      %v5123 = vadd.s32 %v5097, 208
      %v5124 = vadd.s32 %v5097, 216
      %v5125 = vadd.s32 %v5097, 224
      %v5126 = vadd.s32 %v5097, 232
      %v5127 = vadd.s32 %v5097, 240
      %v5128 = vadd.s32 %v5097, 248
      %v5129 = vadd.s32 %v5097, 256
      %v5130 = vadd.s32 %v5097, 264
      %v5131 = vadd.s32 %v5097, 272
      %v5132 = vadd.s32 %v5097, 280
      %v5133 = vadd.s32 %v5097, 288
      %v5134 = vadd.s32 %v5097, 296
      %v5135 = vadd.s32 %v5097, 304
      %v5136 = vadd.s32 %v5097, 312
      %v5137 = vadd.s32 %v5097, 320
      %v5138 = vadd.s32 %v5097, 328
      %v5139 = vadd.s32 %v5097, 336
      %v5140 = vadd.s32 %v5097, 344
      %v5141 = vadd.s32 %v5097, 352
      %v5142 = vadd.s32 %v5097, 360
      %v5143 = vadd.s32 %v5097, 368
      %v5144 = vadd.s32 %v5097, 376
      %v5145 = vadd.s32 %v5097, 384
      %v5146 = vadd.s32 %v5097, 392
      %v5147 = vadd.s32 %v5097, 400
      %v5148 = vadd.s32 %v5097, 408
      %v5149 = vadd.s32 %v5097, 416
      %v5150 = vadd.s32 %v5097, 424
      %v5151 = vadd.s32 %v5097, 432
      %v5152 = vadd.s32 %v5097, 440
      %v5153 = vadd.s32 %v5097, 448
      %v5154 = vadd.s32 %v5097, 456
      %v5155 = vadd.s32 %v5097, 464
      %v5156 = vadd.s32 %v5097, 472
      %v5157 = vadd.s32 %v5097, 480
      %v5158 = vadd.s32 %v5097, 488
      %v5159 = vadd.s32 %v5097, 496
      %v5160 = vadd.s32 %v5097, 504
      %vm5161 = vcmp.lt.s32.totalorder %v5097, 0
      %v5162 = vsub.s32 0, %v5097
      %v5163 = vsel %vm5161, %v5162, %v5097
      %v5164 = vshrl.u32 %v5163, 5
      %v5165 = vand.u32 %v5163, 31
      %v5166 = vsub.s32 0, %v5165
      %v5167 = vsel %vm5161, %v5166, %v5165
      %vm5168 = vcmp.lt.s32.totalorder %v5098, 0
      %v5169 = vsub.s32 0, %v5098
      %v5170 = vsel %vm5168, %v5169, %v5098
      %v5171 = vshrl.u32 %v5170, 5
      %v5172 = vand.u32 %v5170, 31
      %v5173 = vsub.s32 0, %v5172
      %v5174 = vsel %vm5168, %v5173, %v5172
      %vm5175 = vcmp.lt.s32.totalorder %v5099, 0
      %v5176 = vsub.s32 0, %v5099
      %v5177 = vsel %vm5175, %v5176, %v5099
      %v5178 = vshrl.u32 %v5177, 5
      %v5179 = vand.u32 %v5177, 31
      %v5180 = vsub.s32 0, %v5179
      %v5181 = vsel %vm5175, %v5180, %v5179
      %vm5182 = vcmp.lt.s32.totalorder %v5100, 0
      %v5183 = vsub.s32 0, %v5100
      %v5184 = vsel %vm5182, %v5183, %v5100
      %v5185 = vshrl.u32 %v5184, 5
      %v5186 = vand.u32 %v5184, 31
      %v5187 = vsub.s32 0, %v5186
      %v5188 = vsel %vm5182, %v5187, %v5186
      %vm5189 = vcmp.lt.s32.totalorder %v5101, 0
      %v5190 = vsub.s32 0, %v5101
      %v5191 = vsel %vm5189, %v5190, %v5101
      %v5192 = vshrl.u32 %v5191, 5
      %v5193 = vand.u32 %v5191, 31
      %v5194 = vsub.s32 0, %v5193
      %v5195 = vsel %vm5189, %v5194, %v5193
      %vm5196 = vcmp.lt.s32.totalorder %v5102, 0
      %v5197 = vsub.s32 0, %v5102
      %v5198 = vsel %vm5196, %v5197, %v5102
      %v5199 = vshrl.u32 %v5198, 5
      %v5200 = vand.u32 %v5198, 31
      %v5201 = vsub.s32 0, %v5200
      %v5202 = vsel %vm5196, %v5201, %v5200
      %vm5203 = vcmp.lt.s32.totalorder %v5103, 0
      %v5204 = vsub.s32 0, %v5103
      %v5205 = vsel %vm5203, %v5204, %v5103
      %v5206 = vshrl.u32 %v5205, 5
      %v5207 = vand.u32 %v5205, 31
      %v5208 = vsub.s32 0, %v5207
      %v5209 = vsel %vm5203, %v5208, %v5207
      %vm5210 = vcmp.lt.s32.totalorder %v5104, 0
      %v5211 = vsub.s32 0, %v5104
      %v5212 = vsel %vm5210, %v5211, %v5104
      %v5213 = vshrl.u32 %v5212, 5
      %v5214 = vand.u32 %v5212, 31
      %v5215 = vsub.s32 0, %v5214
      %v5216 = vsel %vm5210, %v5215, %v5214
      %vm5217 = vcmp.lt.s32.totalorder %v5105, 0
      %v5218 = vsub.s32 0, %v5105
      %v5219 = vsel %vm5217, %v5218, %v5105
      %v5220 = vshrl.u32 %v5219, 5
      %v5221 = vand.u32 %v5219, 31
      %v5222 = vsub.s32 0, %v5221
      %v5223 = vsel %vm5217, %v5222, %v5221
      %vm5224 = vcmp.lt.s32.totalorder %v5106, 0
      %v5225 = vsub.s32 0, %v5106
      %v5226 = vsel %vm5224, %v5225, %v5106
      %v5227 = vshrl.u32 %v5226, 5
      %v5228 = vand.u32 %v5226, 31
      %v5229 = vsub.s32 0, %v5228
      %v5230 = vsel %vm5224, %v5229, %v5228
      %vm5231 = vcmp.lt.s32.totalorder %v5107, 0
      %v5232 = vsub.s32 0, %v5107
      %v5233 = vsel %vm5231, %v5232, %v5107
      %v5234 = vshrl.u32 %v5233, 5
      %v5235 = vand.u32 %v5233, 31
      %v5236 = vsub.s32 0, %v5235
      %v5237 = vsel %vm5231, %v5236, %v5235
      %vm5238 = vcmp.lt.s32.totalorder %v5108, 0
      %v5239 = vsub.s32 0, %v5108
      %v5240 = vsel %vm5238, %v5239, %v5108
      %v5241 = vshrl.u32 %v5240, 5
      %v5242 = vand.u32 %v5240, 31
      %v5243 = vsub.s32 0, %v5242
      %v5244 = vsel %vm5238, %v5243, %v5242
      %vm5245 = vcmp.lt.s32.totalorder %v5109, 0
      %v5246 = vsub.s32 0, %v5109
      %v5247 = vsel %vm5245, %v5246, %v5109
      %v5248 = vshrl.u32 %v5247, 5
      %v5249 = vand.u32 %v5247, 31
      %v5250 = vsub.s32 0, %v5249
      %v5251 = vsel %vm5245, %v5250, %v5249
      %vm5252 = vcmp.lt.s32.totalorder %v5110, 0
      %v5253 = vsub.s32 0, %v5110
      %v5254 = vsel %vm5252, %v5253, %v5110
      %v5255 = vshrl.u32 %v5254, 5
      %v5256 = vand.u32 %v5254, 31
      %v5257 = vsub.s32 0, %v5256
      %v5258 = vsel %vm5252, %v5257, %v5256
      %vm5259 = vcmp.lt.s32.totalorder %v5111, 0
      %v5260 = vsub.s32 0, %v5111
      %v5261 = vsel %vm5259, %v5260, %v5111
      %v5262 = vshrl.u32 %v5261, 5
      %v5263 = vand.u32 %v5261, 31
      %v5264 = vsub.s32 0, %v5263
      %v5265 = vsel %vm5259, %v5264, %v5263
      %vm5266 = vcmp.lt.s32.totalorder %v5112, 0
      %v5267 = vsub.s32 0, %v5112
      %v5268 = vsel %vm5266, %v5267, %v5112
      %v5269 = vshrl.u32 %v5268, 5
      %v5270 = vand.u32 %v5268, 31
      %v5271 = vsub.s32 0, %v5270
      %v5272 = vsel %vm5266, %v5271, %v5270
      %vm5273 = vcmp.lt.s32.totalorder %v5113, 0
      %v5274 = vsub.s32 0, %v5113
      %v5275 = vsel %vm5273, %v5274, %v5113
      %v5276 = vshrl.u32 %v5275, 5
      %v5277 = vand.u32 %v5275, 31
      %v5278 = vsub.s32 0, %v5277
      %v5279 = vsel %vm5273, %v5278, %v5277
      %vm5280 = vcmp.lt.s32.totalorder %v5114, 0
      %v5281 = vsub.s32 0, %v5114
      %v5282 = vsel %vm5280, %v5281, %v5114
      %v5283 = vshrl.u32 %v5282, 5
      %v5284 = vand.u32 %v5282, 31
      %v5285 = vsub.s32 0, %v5284
      %v5286 = vsel %vm5280, %v5285, %v5284
      %vm5287 = vcmp.lt.s32.totalorder %v5115, 0
      %v5288 = vsub.s32 0, %v5115
      %v5289 = vsel %vm5287, %v5288, %v5115
      %v5290 = vshrl.u32 %v5289, 5
      %v5291 = vand.u32 %v5289, 31
      %v5292 = vsub.s32 0, %v5291
      %v5293 = vsel %vm5287, %v5292, %v5291
      %vm5294 = vcmp.lt.s32.totalorder %v5116, 0
      %v5295 = vsub.s32 0, %v5116
      %v5296 = vsel %vm5294, %v5295, %v5116
      %v5297 = vshrl.u32 %v5296, 5
      %v5298 = vand.u32 %v5296, 31
      %v5299 = vsub.s32 0, %v5298
      %v5300 = vsel %vm5294, %v5299, %v5298
      %vm5301 = vcmp.lt.s32.totalorder %v5117, 0
      %v5302 = vsub.s32 0, %v5117
      %v5303 = vsel %vm5301, %v5302, %v5117
      %v5304 = vshrl.u32 %v5303, 5
      %v5305 = vand.u32 %v5303, 31
      %v5306 = vsub.s32 0, %v5305
      %v5307 = vsel %vm5301, %v5306, %v5305
      %vm5308 = vcmp.lt.s32.totalorder %v5118, 0
      %v5309 = vsub.s32 0, %v5118
      %v5310 = vsel %vm5308, %v5309, %v5118
      %v5311 = vshrl.u32 %v5310, 5
      %v5312 = vand.u32 %v5310, 31
      %v5313 = vsub.s32 0, %v5312
      %v5314 = vsel %vm5308, %v5313, %v5312
      %vm5315 = vcmp.lt.s32.totalorder %v5119, 0
      %v5316 = vsub.s32 0, %v5119
      %v5317 = vsel %vm5315, %v5316, %v5119
      %v5318 = vshrl.u32 %v5317, 5
      %v5319 = vand.u32 %v5317, 31
      %v5320 = vsub.s32 0, %v5319
      %v5321 = vsel %vm5315, %v5320, %v5319
      %vm5322 = vcmp.lt.s32.totalorder %v5120, 0
      %v5323 = vsub.s32 0, %v5120
      %v5324 = vsel %vm5322, %v5323, %v5120
      %v5325 = vshrl.u32 %v5324, 5
      %v5326 = vand.u32 %v5324, 31
      %v5327 = vsub.s32 0, %v5326
      %v5328 = vsel %vm5322, %v5327, %v5326
      %vm5329 = vcmp.lt.s32.totalorder %v5121, 0
      %v5330 = vsub.s32 0, %v5121
      %v5331 = vsel %vm5329, %v5330, %v5121
      %v5332 = vshrl.u32 %v5331, 5
      %v5333 = vand.u32 %v5331, 31
      %v5334 = vsub.s32 0, %v5333
      %v5335 = vsel %vm5329, %v5334, %v5333
      %vm5336 = vcmp.lt.s32.totalorder %v5122, 0
      %v5337 = vsub.s32 0, %v5122
      %v5338 = vsel %vm5336, %v5337, %v5122
      %v5339 = vshrl.u32 %v5338, 5
      %v5340 = vand.u32 %v5338, 31
      %v5341 = vsub.s32 0, %v5340
      %v5342 = vsel %vm5336, %v5341, %v5340
      %vm5343 = vcmp.lt.s32.totalorder %v5123, 0
      %v5344 = vsub.s32 0, %v5123
      %v5345 = vsel %vm5343, %v5344, %v5123
      %v5346 = vshrl.u32 %v5345, 5
      %v5347 = vand.u32 %v5345, 31
      %v5348 = vsub.s32 0, %v5347
      %v5349 = vsel %vm5343, %v5348, %v5347
      %vm5350 = vcmp.lt.s32.totalorder %v5124, 0
      %v5351 = vsub.s32 0, %v5124
      %v5352 = vsel %vm5350, %v5351, %v5124
      %v5353 = vshrl.u32 %v5352, 5
      %v5354 = vand.u32 %v5352, 31
      %v5355 = vsub.s32 0, %v5354
      %v5356 = vsel %vm5350, %v5355, %v5354
      %vm5357 = vcmp.lt.s32.totalorder %v5125, 0
      %v5358 = vsub.s32 0, %v5125
      %v5359 = vsel %vm5357, %v5358, %v5125
      %v5360 = vshrl.u32 %v5359, 5
      %v5361 = vand.u32 %v5359, 31
      %v5362 = vsub.s32 0, %v5361
      %v5363 = vsel %vm5357, %v5362, %v5361
      %vm5364 = vcmp.lt.s32.totalorder %v5126, 0
      %v5365 = vsub.s32 0, %v5126
      %v5366 = vsel %vm5364, %v5365, %v5126
      %v5367 = vshrl.u32 %v5366, 5
      %v5368 = vand.u32 %v5366, 31
      %v5369 = vsub.s32 0, %v5368
      %v5370 = vsel %vm5364, %v5369, %v5368
      %vm5371 = vcmp.lt.s32.totalorder %v5127, 0
      %v5372 = vsub.s32 0, %v5127
      %v5373 = vsel %vm5371, %v5372, %v5127
      %v5374 = vshrl.u32 %v5373, 5
      %v5375 = vand.u32 %v5373, 31
      %v5376 = vsub.s32 0, %v5375
      %v5377 = vsel %vm5371, %v5376, %v5375
      %vm5378 = vcmp.lt.s32.totalorder %v5128, 0
      %v5379 = vsub.s32 0, %v5128
      %v5380 = vsel %vm5378, %v5379, %v5128
      %v5381 = vshrl.u32 %v5380, 5
      %v5382 = vand.u32 %v5380, 31
      %v5383 = vsub.s32 0, %v5382
      %v5384 = vsel %vm5378, %v5383, %v5382
      %vm5385 = vcmp.lt.s32.totalorder %v5129, 0
      %v5386 = vsub.s32 0, %v5129
      %v5387 = vsel %vm5385, %v5386, %v5129
      %v5388 = vshrl.u32 %v5387, 5
      %v5389 = vand.u32 %v5387, 31
      %v5390 = vsub.s32 0, %v5389
      %v5391 = vsel %vm5385, %v5390, %v5389
      %vm5392 = vcmp.lt.s32.totalorder %v5130, 0
      %v5393 = vsub.s32 0, %v5130
      %v5394 = vsel %vm5392, %v5393, %v5130
      %v5395 = vshrl.u32 %v5394, 5
      %v5396 = vand.u32 %v5394, 31
      %v5397 = vsub.s32 0, %v5396
      %v5398 = vsel %vm5392, %v5397, %v5396
      %vm5399 = vcmp.lt.s32.totalorder %v5131, 0
      %v5400 = vsub.s32 0, %v5131
      %v5401 = vsel %vm5399, %v5400, %v5131
      %v5402 = vshrl.u32 %v5401, 5
      %v5403 = vand.u32 %v5401, 31
      %v5404 = vsub.s32 0, %v5403
      %v5405 = vsel %vm5399, %v5404, %v5403
      %vm5406 = vcmp.lt.s32.totalorder %v5132, 0
      %v5407 = vsub.s32 0, %v5132
      %v5408 = vsel %vm5406, %v5407, %v5132
      %v5409 = vshrl.u32 %v5408, 5
      %v5410 = vand.u32 %v5408, 31
      %v5411 = vsub.s32 0, %v5410
      %v5412 = vsel %vm5406, %v5411, %v5410
      %vm5413 = vcmp.lt.s32.totalorder %v5133, 0
      %v5414 = vsub.s32 0, %v5133
      %v5415 = vsel %vm5413, %v5414, %v5133
      %v5416 = vshrl.u32 %v5415, 5
      %v5417 = vand.u32 %v5415, 31
      %v5418 = vsub.s32 0, %v5417
      %v5419 = vsel %vm5413, %v5418, %v5417
      %vm5420 = vcmp.lt.s32.totalorder %v5134, 0
      %v5421 = vsub.s32 0, %v5134
      %v5422 = vsel %vm5420, %v5421, %v5134
      %v5423 = vshrl.u32 %v5422, 5
      %v5424 = vand.u32 %v5422, 31
      %v5425 = vsub.s32 0, %v5424
      %v5426 = vsel %vm5420, %v5425, %v5424
      %vm5427 = vcmp.lt.s32.totalorder %v5135, 0
      %v5428 = vsub.s32 0, %v5135
      %v5429 = vsel %vm5427, %v5428, %v5135
      %v5430 = vshrl.u32 %v5429, 5
      %v5431 = vand.u32 %v5429, 31
      %v5432 = vsub.s32 0, %v5431
      %v5433 = vsel %vm5427, %v5432, %v5431
      %vm5434 = vcmp.lt.s32.totalorder %v5136, 0
      %v5435 = vsub.s32 0, %v5136
      %v5436 = vsel %vm5434, %v5435, %v5136
      %v5437 = vshrl.u32 %v5436, 5
      %v5438 = vand.u32 %v5436, 31
      %v5439 = vsub.s32 0, %v5438
      %v5440 = vsel %vm5434, %v5439, %v5438
      %vm5441 = vcmp.lt.s32.totalorder %v5137, 0
      %v5442 = vsub.s32 0, %v5137
      %v5443 = vsel %vm5441, %v5442, %v5137
      %v5444 = vshrl.u32 %v5443, 5
      %v5445 = vand.u32 %v5443, 31
      %v5446 = vsub.s32 0, %v5445
      %v5447 = vsel %vm5441, %v5446, %v5445
      %vm5448 = vcmp.lt.s32.totalorder %v5138, 0
      %v5449 = vsub.s32 0, %v5138
      %v5450 = vsel %vm5448, %v5449, %v5138
      %v5451 = vshrl.u32 %v5450, 5
      %v5452 = vand.u32 %v5450, 31
      %v5453 = vsub.s32 0, %v5452
      %v5454 = vsel %vm5448, %v5453, %v5452
      %vm5455 = vcmp.lt.s32.totalorder %v5139, 0
      %v5456 = vsub.s32 0, %v5139
      %v5457 = vsel %vm5455, %v5456, %v5139
      %v5458 = vshrl.u32 %v5457, 5
      %v5459 = vand.u32 %v5457, 31
      %v5460 = vsub.s32 0, %v5459
      %v5461 = vsel %vm5455, %v5460, %v5459
      %vm5462 = vcmp.lt.s32.totalorder %v5140, 0
      %v5463 = vsub.s32 0, %v5140
      %v5464 = vsel %vm5462, %v5463, %v5140
      %v5465 = vshrl.u32 %v5464, 5
      %v5466 = vand.u32 %v5464, 31
      %v5467 = vsub.s32 0, %v5466
      %v5468 = vsel %vm5462, %v5467, %v5466
      %vm5469 = vcmp.lt.s32.totalorder %v5141, 0
      %v5470 = vsub.s32 0, %v5141
      %v5471 = vsel %vm5469, %v5470, %v5141
      %v5472 = vshrl.u32 %v5471, 5
      %v5473 = vand.u32 %v5471, 31
      %v5474 = vsub.s32 0, %v5473
      %v5475 = vsel %vm5469, %v5474, %v5473
      %vm5476 = vcmp.lt.s32.totalorder %v5142, 0
      %v5477 = vsub.s32 0, %v5142
      %v5478 = vsel %vm5476, %v5477, %v5142
      %v5479 = vshrl.u32 %v5478, 5
      %v5480 = vand.u32 %v5478, 31
      %v5481 = vsub.s32 0, %v5480
      %v5482 = vsel %vm5476, %v5481, %v5480
      %vm5483 = vcmp.lt.s32.totalorder %v5143, 0
      %v5484 = vsub.s32 0, %v5143
      %v5485 = vsel %vm5483, %v5484, %v5143
      %v5486 = vshrl.u32 %v5485, 5
      %v5487 = vand.u32 %v5485, 31
      %v5488 = vsub.s32 0, %v5487
      %v5489 = vsel %vm5483, %v5488, %v5487
      %vm5490 = vcmp.lt.s32.totalorder %v5144, 0
      %v5491 = vsub.s32 0, %v5144
      %v5492 = vsel %vm5490, %v5491, %v5144
      %v5493 = vshrl.u32 %v5492, 5
      %v5494 = vand.u32 %v5492, 31
      %v5495 = vsub.s32 0, %v5494
      %v5496 = vsel %vm5490, %v5495, %v5494
      %vm5497 = vcmp.lt.s32.totalorder %v5145, 0
      %v5498 = vsub.s32 0, %v5145
      %v5499 = vsel %vm5497, %v5498, %v5145
      %v5500 = vshrl.u32 %v5499, 5
      %v5501 = vand.u32 %v5499, 31
      %v5502 = vsub.s32 0, %v5501
      %v5503 = vsel %vm5497, %v5502, %v5501
      %vm5504 = vcmp.lt.s32.totalorder %v5146, 0
      %v5505 = vsub.s32 0, %v5146
      %v5506 = vsel %vm5504, %v5505, %v5146
      %v5507 = vshrl.u32 %v5506, 5
      %v5508 = vand.u32 %v5506, 31
      %v5509 = vsub.s32 0, %v5508
      %v5510 = vsel %vm5504, %v5509, %v5508
      %vm5511 = vcmp.lt.s32.totalorder %v5147, 0
      %v5512 = vsub.s32 0, %v5147
      %v5513 = vsel %vm5511, %v5512, %v5147
      %v5514 = vshrl.u32 %v5513, 5
      %v5515 = vand.u32 %v5513, 31
      %v5516 = vsub.s32 0, %v5515
      %v5517 = vsel %vm5511, %v5516, %v5515
      %vm5518 = vcmp.lt.s32.totalorder %v5148, 0
      %v5519 = vsub.s32 0, %v5148
      %v5520 = vsel %vm5518, %v5519, %v5148
      %v5521 = vshrl.u32 %v5520, 5
      %v5522 = vand.u32 %v5520, 31
      %v5523 = vsub.s32 0, %v5522
      %v5524 = vsel %vm5518, %v5523, %v5522
      %vm5525 = vcmp.lt.s32.totalorder %v5149, 0
      %v5526 = vsub.s32 0, %v5149
      %v5527 = vsel %vm5525, %v5526, %v5149
      %v5528 = vshrl.u32 %v5527, 5
      %v5529 = vand.u32 %v5527, 31
      %v5530 = vsub.s32 0, %v5529
      %v5531 = vsel %vm5525, %v5530, %v5529
      %vm5532 = vcmp.lt.s32.totalorder %v5150, 0
      %v5533 = vsub.s32 0, %v5150
      %v5534 = vsel %vm5532, %v5533, %v5150
      %v5535 = vshrl.u32 %v5534, 5
      %v5536 = vand.u32 %v5534, 31
      %v5537 = vsub.s32 0, %v5536
      %v5538 = vsel %vm5532, %v5537, %v5536
      %vm5539 = vcmp.lt.s32.totalorder %v5151, 0
      %v5540 = vsub.s32 0, %v5151
      %v5541 = vsel %vm5539, %v5540, %v5151
      %v5542 = vshrl.u32 %v5541, 5
      %v5543 = vand.u32 %v5541, 31
      %v5544 = vsub.s32 0, %v5543
      %v5545 = vsel %vm5539, %v5544, %v5543
      %vm5546 = vcmp.lt.s32.totalorder %v5152, 0
      %v5547 = vsub.s32 0, %v5152
      %v5548 = vsel %vm5546, %v5547, %v5152
      %v5549 = vshrl.u32 %v5548, 5
      %v5550 = vand.u32 %v5548, 31
      %v5551 = vsub.s32 0, %v5550
      %v5552 = vsel %vm5546, %v5551, %v5550
      %vm5553 = vcmp.lt.s32.totalorder %v5153, 0
      %v5554 = vsub.s32 0, %v5153
      %v5555 = vsel %vm5553, %v5554, %v5153
      %v5556 = vshrl.u32 %v5555, 5
      %v5557 = vand.u32 %v5555, 31
      %v5558 = vsub.s32 0, %v5557
      %v5559 = vsel %vm5553, %v5558, %v5557
      %vm5560 = vcmp.lt.s32.totalorder %v5154, 0
      %v5561 = vsub.s32 0, %v5154
      %v5562 = vsel %vm5560, %v5561, %v5154
      %v5563 = vshrl.u32 %v5562, 5
      %v5564 = vand.u32 %v5562, 31
      %v5565 = vsub.s32 0, %v5564
      %v5566 = vsel %vm5560, %v5565, %v5564
      %vm5567 = vcmp.lt.s32.totalorder %v5155, 0
      %v5568 = vsub.s32 0, %v5155
      %v5569 = vsel %vm5567, %v5568, %v5155
      %v5570 = vshrl.u32 %v5569, 5
      %v5571 = vand.u32 %v5569, 31
      %v5572 = vsub.s32 0, %v5571
      %v5573 = vsel %vm5567, %v5572, %v5571
      %vm5574 = vcmp.lt.s32.totalorder %v5156, 0
      %v5575 = vsub.s32 0, %v5156
      %v5576 = vsel %vm5574, %v5575, %v5156
      %v5577 = vshrl.u32 %v5576, 5
      %v5578 = vand.u32 %v5576, 31
      %v5579 = vsub.s32 0, %v5578
      %v5580 = vsel %vm5574, %v5579, %v5578
      %vm5581 = vcmp.lt.s32.totalorder %v5157, 0
      %v5582 = vsub.s32 0, %v5157
      %v5583 = vsel %vm5581, %v5582, %v5157
      %v5584 = vshrl.u32 %v5583, 5
      %v5585 = vand.u32 %v5583, 31
      %v5586 = vsub.s32 0, %v5585
      %v5587 = vsel %vm5581, %v5586, %v5585
      %vm5588 = vcmp.lt.s32.totalorder %v5158, 0
      %v5589 = vsub.s32 0, %v5158
      %v5590 = vsel %vm5588, %v5589, %v5158
      %v5591 = vshrl.u32 %v5590, 5
      %v5592 = vand.u32 %v5590, 31
      %v5593 = vsub.s32 0, %v5592
      %v5594 = vsel %vm5588, %v5593, %v5592
      %vm5595 = vcmp.lt.s32.totalorder %v5159, 0
      %v5596 = vsub.s32 0, %v5159
      %v5597 = vsel %vm5595, %v5596, %v5159
      %v5598 = vshrl.u32 %v5597, 5
      %v5599 = vand.u32 %v5597, 31
      %v5600 = vsub.s32 0, %v5599
      %v5601 = vsel %vm5595, %v5600, %v5599
      %vm5602 = vcmp.lt.s32.totalorder %v5160, 0
      %v5603 = vsub.s32 0, %v5160
      %v5604 = vsel %vm5602, %v5603, %v5160
      %v5605 = vshrl.u32 %v5604, 5
      %v5606 = vand.u32 %v5604, 31
      %v5607 = vsub.s32 0, %v5606
      %v5608 = vsel %vm5602, %v5607, %v5606
      %vm5609 = vcmp.ne.s32.totalorder %v5167, 0
      %vm5610 = vcmp.ne.s32.totalorder %v5174, 0
      %vm5611 = vcmp.ne.s32.totalorder %v5181, 0
      %vm5612 = vcmp.ne.s32.totalorder %v5188, 0
      %vm5613 = vcmp.ne.s32.totalorder %v5195, 0
      %vm5614 = vcmp.ne.s32.totalorder %v5202, 0
      %vm5615 = vcmp.ne.s32.totalorder %v5209, 0
      %vm5616 = vcmp.ne.s32.totalorder %v5216, 0
      %vm5617 = vcmp.ne.s32.totalorder %v5223, 0
      %vm5618 = vcmp.ne.s32.totalorder %v5230, 0
      %vm5619 = vcmp.ne.s32.totalorder %v5237, 0
      %vm5620 = vcmp.ne.s32.totalorder %v5244, 0
      %vm5621 = vcmp.ne.s32.totalorder %v5251, 0
      %vm5622 = vcmp.ne.s32.totalorder %v5258, 0
      %vm5623 = vcmp.ne.s32.totalorder %v5265, 0
      %vm5624 = vcmp.ne.s32.totalorder %v5272, 0
      %vm5625 = vcmp.ne.s32.totalorder %v5279, 0
      %vm5626 = vcmp.ne.s32.totalorder %v5286, 0
      %vm5627 = vcmp.ne.s32.totalorder %v5293, 0
      %vm5628 = vcmp.ne.s32.totalorder %v5300, 0
      %vm5629 = vcmp.ne.s32.totalorder %v5307, 0
      %vm5630 = vcmp.ne.s32.totalorder %v5314, 0
      %vm5631 = vcmp.ne.s32.totalorder %v5321, 0
      %vm5632 = vcmp.ne.s32.totalorder %v5328, 0
      %vm5633 = vcmp.ne.s32.totalorder %v5335, 0
      %vm5634 = vcmp.ne.s32.totalorder %v5342, 0
      %vm5635 = vcmp.ne.s32.totalorder %v5349, 0
      %vm5636 = vcmp.ne.s32.totalorder %v5356, 0
      %vm5637 = vcmp.ne.s32.totalorder %v5363, 0
      %vm5638 = vcmp.ne.s32.totalorder %v5370, 0
      %vm5639 = vcmp.ne.s32.totalorder %v5377, 0
      %vm5640 = vcmp.ne.s32.totalorder %v5384, 0
      %vm5641 = vcmp.ne.s32.totalorder %v5391, 0
      %vm5642 = vcmp.ne.s32.totalorder %v5398, 0
      %vm5643 = vcmp.ne.s32.totalorder %v5405, 0
      %vm5644 = vcmp.ne.s32.totalorder %v5412, 0
      %vm5645 = vcmp.ne.s32.totalorder %v5419, 0
      %vm5646 = vcmp.ne.s32.totalorder %v5426, 0
      %vm5647 = vcmp.ne.s32.totalorder %v5433, 0
      %vm5648 = vcmp.ne.s32.totalorder %v5440, 0
      %vm5649 = vcmp.ne.s32.totalorder %v5447, 0
      %vm5650 = vcmp.ne.s32.totalorder %v5454, 0
      %vm5651 = vcmp.ne.s32.totalorder %v5461, 0
      %vm5652 = vcmp.ne.s32.totalorder %v5468, 0
      %vm5653 = vcmp.ne.s32.totalorder %v5475, 0
      %vm5654 = vcmp.ne.s32.totalorder %v5482, 0
      %vm5655 = vcmp.ne.s32.totalorder %v5489, 0
      %vm5656 = vcmp.ne.s32.totalorder %v5496, 0
      %vm5657 = vcmp.ne.s32.totalorder %v5503, 0
      %vm5658 = vcmp.ne.s32.totalorder %v5510, 0
      %vm5659 = vcmp.ne.s32.totalorder %v5517, 0
      %vm5660 = vcmp.ne.s32.totalorder %v5524, 0
      %vm5661 = vcmp.ne.s32.totalorder %v5531, 0
      %vm5662 = vcmp.ne.s32.totalorder %v5538, 0
      %vm5663 = vcmp.ne.s32.totalorder %v5545, 0
      %vm5664 = vcmp.ne.s32.totalorder %v5552, 0
      %vm5665 = vcmp.ne.s32.totalorder %v5559, 0
      %vm5666 = vcmp.ne.s32.totalorder %v5566, 0
      %vm5667 = vcmp.ne.s32.totalorder %v5573, 0
      %vm5668 = vcmp.ne.s32.totalorder %v5580, 0
      %vm5669 = vcmp.ne.s32.totalorder %v5587, 0
      %vm5670 = vcmp.ne.s32.totalorder %v5594, 0
      %vm5671 = vcmp.ne.s32.totalorder %v5601, 0
      %vm5672 = vcmp.ne.s32.totalorder %v5608, 0
      %vm5673 = vcmp.lt.s32.totalorder %v5167, 0
      %vm5674 = vcmp.lt.s32.totalorder %v5174, 0
      %vm5675 = vcmp.lt.s32.totalorder %v5181, 0
      %vm5676 = vcmp.lt.s32.totalorder %v5188, 0
      %vm5677 = vcmp.lt.s32.totalorder %v5195, 0
      %vm5678 = vcmp.lt.s32.totalorder %v5202, 0
      %vm5679 = vcmp.lt.s32.totalorder %v5209, 0
      %vm5680 = vcmp.lt.s32.totalorder %v5216, 0
      %vm5681 = vcmp.lt.s32.totalorder %v5223, 0
      %vm5682 = vcmp.lt.s32.totalorder %v5230, 0
      %vm5683 = vcmp.lt.s32.totalorder %v5237, 0
      %vm5684 = vcmp.lt.s32.totalorder %v5244, 0
      %vm5685 = vcmp.lt.s32.totalorder %v5251, 0
      %vm5686 = vcmp.lt.s32.totalorder %v5258, 0
      %vm5687 = vcmp.lt.s32.totalorder %v5265, 0
      %vm5688 = vcmp.lt.s32.totalorder %v5272, 0
      %vm5689 = vcmp.lt.s32.totalorder %v5279, 0
      %vm5690 = vcmp.lt.s32.totalorder %v5286, 0
      %vm5691 = vcmp.lt.s32.totalorder %v5293, 0
      %vm5692 = vcmp.lt.s32.totalorder %v5300, 0
      %vm5693 = vcmp.lt.s32.totalorder %v5307, 0
      %vm5694 = vcmp.lt.s32.totalorder %v5314, 0
      %vm5695 = vcmp.lt.s32.totalorder %v5321, 0
      %vm5696 = vcmp.lt.s32.totalorder %v5328, 0
      %vm5697 = vcmp.lt.s32.totalorder %v5335, 0
      %vm5698 = vcmp.lt.s32.totalorder %v5342, 0
      %vm5699 = vcmp.lt.s32.totalorder %v5349, 0
      %vm5700 = vcmp.lt.s32.totalorder %v5356, 0
      %vm5701 = vcmp.lt.s32.totalorder %v5363, 0
      %vm5702 = vcmp.lt.s32.totalorder %v5370, 0
      %vm5703 = vcmp.lt.s32.totalorder %v5377, 0
      %vm5704 = vcmp.lt.s32.totalorder %v5384, 0
      %vm5705 = vcmp.lt.s32.totalorder %v5391, 0
      %vm5706 = vcmp.lt.s32.totalorder %v5398, 0
      %vm5707 = vcmp.lt.s32.totalorder %v5405, 0
      %vm5708 = vcmp.lt.s32.totalorder %v5412, 0
      %vm5709 = vcmp.lt.s32.totalorder %v5419, 0
      %vm5710 = vcmp.lt.s32.totalorder %v5426, 0
      %vm5711 = vcmp.lt.s32.totalorder %v5433, 0
      %vm5712 = vcmp.lt.s32.totalorder %v5440, 0
      %vm5713 = vcmp.lt.s32.totalorder %v5447, 0
      %vm5714 = vcmp.lt.s32.totalorder %v5454, 0
      %vm5715 = vcmp.lt.s32.totalorder %v5461, 0
      %vm5716 = vcmp.lt.s32.totalorder %v5468, 0
      %vm5717 = vcmp.lt.s32.totalorder %v5475, 0
      %vm5718 = vcmp.lt.s32.totalorder %v5482, 0
      %vm5719 = vcmp.lt.s32.totalorder %v5489, 0
      %vm5720 = vcmp.lt.s32.totalorder %v5496, 0
      %vm5721 = vcmp.lt.s32.totalorder %v5503, 0
      %vm5722 = vcmp.lt.s32.totalorder %v5510, 0
      %vm5723 = vcmp.lt.s32.totalorder %v5517, 0
      %vm5724 = vcmp.lt.s32.totalorder %v5524, 0
      %vm5725 = vcmp.lt.s32.totalorder %v5531, 0
      %vm5726 = vcmp.lt.s32.totalorder %v5538, 0
      %vm5727 = vcmp.lt.s32.totalorder %v5545, 0
      %vm5728 = vcmp.lt.s32.totalorder %v5552, 0
      %vm5729 = vcmp.lt.s32.totalorder %v5559, 0
      %vm5730 = vcmp.lt.s32.totalorder %v5566, 0
      %vm5731 = vcmp.lt.s32.totalorder %v5573, 0
      %vm5732 = vcmp.lt.s32.totalorder %v5580, 0
      %vm5733 = vcmp.lt.s32.totalorder %v5587, 0
      %vm5734 = vcmp.lt.s32.totalorder %v5594, 0
      %vm5735 = vcmp.lt.s32.totalorder %v5601, 0
      %vm5736 = vcmp.lt.s32.totalorder %v5608, 0
      %vm5737 = vmand %vm5673, %vm5609
      %vm5738 = vmand %vm5674, %vm5610
      %vm5739 = vmand %vm5675, %vm5611
      %vm5740 = vmand %vm5676, %vm5612
      %vm5741 = vmand %vm5677, %vm5613
      %vm5742 = vmand %vm5678, %vm5614
      %vm5743 = vmand %vm5679, %vm5615
      %vm5744 = vmand %vm5680, %vm5616
      %vm5745 = vmand %vm5681, %vm5617
      %vm5746 = vmand %vm5682, %vm5618
      %vm5747 = vmand %vm5683, %vm5619
      %vm5748 = vmand %vm5684, %vm5620
      %vm5749 = vmand %vm5685, %vm5621
      %vm5750 = vmand %vm5686, %vm5622
      %vm5751 = vmand %vm5687, %vm5623
      %vm5752 = vmand %vm5688, %vm5624
      %vm5753 = vmand %vm5689, %vm5625
      %vm5754 = vmand %vm5690, %vm5626
      %vm5755 = vmand %vm5691, %vm5627
      %vm5756 = vmand %vm5692, %vm5628
      %vm5757 = vmand %vm5693, %vm5629
      %vm5758 = vmand %vm5694, %vm5630
      %vm5759 = vmand %vm5695, %vm5631
      %vm5760 = vmand %vm5696, %vm5632
      %vm5761 = vmand %vm5697, %vm5633
      %vm5762 = vmand %vm5698, %vm5634
      %vm5763 = vmand %vm5699, %vm5635
      %vm5764 = vmand %vm5700, %vm5636
      %vm5765 = vmand %vm5701, %vm5637
      %vm5766 = vmand %vm5702, %vm5638
      %vm5767 = vmand %vm5703, %vm5639
      %vm5768 = vmand %vm5704, %vm5640
      %vm5769 = vmand %vm5705, %vm5641
      %vm5770 = vmand %vm5706, %vm5642
      %vm5771 = vmand %vm5707, %vm5643
      %vm5772 = vmand %vm5708, %vm5644
      %vm5773 = vmand %vm5709, %vm5645
      %vm5774 = vmand %vm5710, %vm5646
      %vm5775 = vmand %vm5711, %vm5647
      %vm5776 = vmand %vm5712, %vm5648
      %vm5777 = vmand %vm5713, %vm5649
      %vm5778 = vmand %vm5714, %vm5650
      %vm5779 = vmand %vm5715, %vm5651
      %vm5780 = vmand %vm5716, %vm5652
      %vm5781 = vmand %vm5717, %vm5653
      %vm5782 = vmand %vm5718, %vm5654
      %vm5783 = vmand %vm5719, %vm5655
      %vm5784 = vmand %vm5720, %vm5656
      %vm5785 = vmand %vm5721, %vm5657
      %vm5786 = vmand %vm5722, %vm5658
      %vm5787 = vmand %vm5723, %vm5659
      %vm5788 = vmand %vm5724, %vm5660
      %vm5789 = vmand %vm5725, %vm5661
      %vm5790 = vmand %vm5726, %vm5662
      %vm5791 = vmand %vm5727, %vm5663
      %vm5792 = vmand %vm5728, %vm5664
      %vm5793 = vmand %vm5729, %vm5665
      %vm5794 = vmand %vm5730, %vm5666
      %vm5795 = vmand %vm5731, %vm5667
      %vm5796 = vmand %vm5732, %vm5668
      %vm5797 = vmand %vm5733, %vm5669
      %vm5798 = vmand %vm5734, %vm5670
      %vm5799 = vmand %vm5735, %vm5671
      %vm5800 = vmand %vm5736, %vm5672
      %v5801 = vadd.s32 %v5167, 32
      %v5802 = vadd.s32 %v5174, 32
      %v5803 = vadd.s32 %v5181, 32
      %v5804 = vadd.s32 %v5188, 32
      %v5805 = vadd.s32 %v5195, 32
      %v5806 = vadd.s32 %v5202, 32
      %v5807 = vadd.s32 %v5209, 32
      %v5808 = vadd.s32 %v5216, 32
      %v5809 = vadd.s32 %v5223, 32
      %v5810 = vadd.s32 %v5230, 32
      %v5811 = vadd.s32 %v5237, 32
      %v5812 = vadd.s32 %v5244, 32
      %v5813 = vadd.s32 %v5251, 32
      %v5814 = vadd.s32 %v5258, 32
      %v5815 = vadd.s32 %v5265, 32
      %v5816 = vadd.s32 %v5272, 32
      %v5817 = vadd.s32 %v5279, 32
      %v5818 = vadd.s32 %v5286, 32
      %v5819 = vadd.s32 %v5293, 32
      %v5820 = vadd.s32 %v5300, 32
      %v5821 = vadd.s32 %v5307, 32
      %v5822 = vadd.s32 %v5314, 32
      %v5823 = vadd.s32 %v5321, 32
      %v5824 = vadd.s32 %v5328, 32
      %v5825 = vadd.s32 %v5335, 32
      %v5826 = vadd.s32 %v5342, 32
      %v5827 = vadd.s32 %v5349, 32
      %v5828 = vadd.s32 %v5356, 32
      %v5829 = vadd.s32 %v5363, 32
      %v5830 = vadd.s32 %v5370, 32
      %v5831 = vadd.s32 %v5377, 32
      %v5832 = vadd.s32 %v5384, 32
      %v5833 = vadd.s32 %v5391, 32
      %v5834 = vadd.s32 %v5398, 32
      %v5835 = vadd.s32 %v5405, 32
      %v5836 = vadd.s32 %v5412, 32
      %v5837 = vadd.s32 %v5419, 32
      %v5838 = vadd.s32 %v5426, 32
      %v5839 = vadd.s32 %v5433, 32
      %v5840 = vadd.s32 %v5440, 32
      %v5841 = vadd.s32 %v5447, 32
      %v5842 = vadd.s32 %v5454, 32
      %v5843 = vadd.s32 %v5461, 32
      %v5844 = vadd.s32 %v5468, 32
      %v5845 = vadd.s32 %v5475, 32
      %v5846 = vadd.s32 %v5482, 32
      %v5847 = vadd.s32 %v5489, 32
      %v5848 = vadd.s32 %v5496, 32
      %v5849 = vadd.s32 %v5503, 32
      %v5850 = vadd.s32 %v5510, 32
      %v5851 = vadd.s32 %v5517, 32
      %v5852 = vadd.s32 %v5524, 32
      %v5853 = vadd.s32 %v5531, 32
      %v5854 = vadd.s32 %v5538, 32
      %v5855 = vadd.s32 %v5545, 32
      %v5856 = vadd.s32 %v5552, 32
      %v5857 = vadd.s32 %v5559, 32
      %v5858 = vadd.s32 %v5566, 32
      %v5859 = vadd.s32 %v5573, 32
      %v5860 = vadd.s32 %v5580, 32
      %v5861 = vadd.s32 %v5587, 32
      %v5862 = vadd.s32 %v5594, 32
      %v5863 = vadd.s32 %v5601, 32
      %v5864 = vadd.s32 %v5608, 32
      %v5865 = vsel %vm5737, %v5801, %v5167
      %v5866 = vsel %vm5738, %v5802, %v5174
      %v5867 = vsel %vm5739, %v5803, %v5181
      %v5868 = vsel %vm5740, %v5804, %v5188
      %v5869 = vsel %vm5741, %v5805, %v5195
      %v5870 = vsel %vm5742, %v5806, %v5202
      %v5871 = vsel %vm5743, %v5807, %v5209
      %v5872 = vsel %vm5744, %v5808, %v5216
      %v5873 = vsel %vm5745, %v5809, %v5223
      %v5874 = vsel %vm5746, %v5810, %v5230
      %v5875 = vsel %vm5747, %v5811, %v5237
      %v5876 = vsel %vm5748, %v5812, %v5244
      %v5877 = vsel %vm5749, %v5813, %v5251
      %v5878 = vsel %vm5750, %v5814, %v5258
      %v5879 = vsel %vm5751, %v5815, %v5265
      %v5880 = vsel %vm5752, %v5816, %v5272
      %v5881 = vsel %vm5753, %v5817, %v5279
      %v5882 = vsel %vm5754, %v5818, %v5286
      %v5883 = vsel %vm5755, %v5819, %v5293
      %v5884 = vsel %vm5756, %v5820, %v5300
      %v5885 = vsel %vm5757, %v5821, %v5307
      %v5886 = vsel %vm5758, %v5822, %v5314
      %v5887 = vsel %vm5759, %v5823, %v5321
      %v5888 = vsel %vm5760, %v5824, %v5328
      %v5889 = vsel %vm5761, %v5825, %v5335
      %v5890 = vsel %vm5762, %v5826, %v5342
      %v5891 = vsel %vm5763, %v5827, %v5349
      %v5892 = vsel %vm5764, %v5828, %v5356
      %v5893 = vsel %vm5765, %v5829, %v5363
      %v5894 = vsel %vm5766, %v5830, %v5370
      %v5895 = vsel %vm5767, %v5831, %v5377
      %v5896 = vsel %vm5768, %v5832, %v5384
      %v5897 = vsel %vm5769, %v5833, %v5391
      %v5898 = vsel %vm5770, %v5834, %v5398
      %v5899 = vsel %vm5771, %v5835, %v5405
      %v5900 = vsel %vm5772, %v5836, %v5412
      %v5901 = vsel %vm5773, %v5837, %v5419
      %v5902 = vsel %vm5774, %v5838, %v5426
      %v5903 = vsel %vm5775, %v5839, %v5433
      %v5904 = vsel %vm5776, %v5840, %v5440
      %v5905 = vsel %vm5777, %v5841, %v5447
      %v5906 = vsel %vm5778, %v5842, %v5454
      %v5907 = vsel %vm5779, %v5843, %v5461
      %v5908 = vsel %vm5780, %v5844, %v5468
      %v5909 = vsel %vm5781, %v5845, %v5475
      %v5910 = vsel %vm5782, %v5846, %v5482
      %v5911 = vsel %vm5783, %v5847, %v5489
      %v5912 = vsel %vm5784, %v5848, %v5496
      %v5913 = vsel %vm5785, %v5849, %v5503
      %v5914 = vsel %vm5786, %v5850, %v5510
      %v5915 = vsel %vm5787, %v5851, %v5517
      %v5916 = vsel %vm5788, %v5852, %v5524
      %v5917 = vsel %vm5789, %v5853, %v5531
      %v5918 = vsel %vm5790, %v5854, %v5538
      %v5919 = vsel %vm5791, %v5855, %v5545
      %v5920 = vsel %vm5792, %v5856, %v5552
      %v5921 = vsel %vm5793, %v5857, %v5559
      %v5922 = vsel %vm5794, %v5858, %v5566
      %v5923 = vsel %vm5795, %v5859, %v5573
      %v5924 = vsel %vm5796, %v5860, %v5580
      %v5925 = vsel %vm5797, %v5861, %v5587
      %v5926 = vsel %vm5798, %v5862, %v5594
      %v5927 = vsel %vm5799, %v5863, %v5601
      %v5928 = vsel %vm5800, %v5864, %v5608
      %vm5929 = vcmp.lt.s32.totalorder %v5865, 16
      %vm5930 = vcmp.lt.s32.totalorder %v5866, 16
      %vm5931 = vcmp.lt.s32.totalorder %v5867, 16
      %vm5932 = vcmp.lt.s32.totalorder %v5868, 16
      %vm5933 = vcmp.lt.s32.totalorder %v5869, 16
      %vm5934 = vcmp.lt.s32.totalorder %v5870, 16
      %vm5935 = vcmp.lt.s32.totalorder %v5871, 16
      %vm5936 = vcmp.lt.s32.totalorder %v5872, 16
      %vm5937 = vcmp.lt.s32.totalorder %v5873, 16
      %vm5938 = vcmp.lt.s32.totalorder %v5874, 16
      %vm5939 = vcmp.lt.s32.totalorder %v5875, 16
      %vm5940 = vcmp.lt.s32.totalorder %v5876, 16
      %vm5941 = vcmp.lt.s32.totalorder %v5877, 16
      %vm5942 = vcmp.lt.s32.totalorder %v5878, 16
      %vm5943 = vcmp.lt.s32.totalorder %v5879, 16
      %vm5944 = vcmp.lt.s32.totalorder %v5880, 16
      %vm5945 = vcmp.lt.s32.totalorder %v5881, 16
      %vm5946 = vcmp.lt.s32.totalorder %v5882, 16
      %vm5947 = vcmp.lt.s32.totalorder %v5883, 16
      %vm5948 = vcmp.lt.s32.totalorder %v5884, 16
      %vm5949 = vcmp.lt.s32.totalorder %v5885, 16
      %vm5950 = vcmp.lt.s32.totalorder %v5886, 16
      %vm5951 = vcmp.lt.s32.totalorder %v5887, 16
      %vm5952 = vcmp.lt.s32.totalorder %v5888, 16
      %vm5953 = vcmp.lt.s32.totalorder %v5889, 16
      %vm5954 = vcmp.lt.s32.totalorder %v5890, 16
      %vm5955 = vcmp.lt.s32.totalorder %v5891, 16
      %vm5956 = vcmp.lt.s32.totalorder %v5892, 16
      %vm5957 = vcmp.lt.s32.totalorder %v5893, 16
      %vm5958 = vcmp.lt.s32.totalorder %v5894, 16
      %vm5959 = vcmp.lt.s32.totalorder %v5895, 16
      %vm5960 = vcmp.lt.s32.totalorder %v5896, 16
      %vm5961 = vcmp.lt.s32.totalorder %v5897, 16
      %vm5962 = vcmp.lt.s32.totalorder %v5898, 16
      %vm5963 = vcmp.lt.s32.totalorder %v5899, 16
      %vm5964 = vcmp.lt.s32.totalorder %v5900, 16
      %vm5965 = vcmp.lt.s32.totalorder %v5901, 16
      %vm5966 = vcmp.lt.s32.totalorder %v5902, 16
      %vm5967 = vcmp.lt.s32.totalorder %v5903, 16
      %vm5968 = vcmp.lt.s32.totalorder %v5904, 16
      %vm5969 = vcmp.lt.s32.totalorder %v5905, 16
      %vm5970 = vcmp.lt.s32.totalorder %v5906, 16
      %vm5971 = vcmp.lt.s32.totalorder %v5907, 16
      %vm5972 = vcmp.lt.s32.totalorder %v5908, 16
      %vm5973 = vcmp.lt.s32.totalorder %v5909, 16
      %vm5974 = vcmp.lt.s32.totalorder %v5910, 16
      %vm5975 = vcmp.lt.s32.totalorder %v5911, 16
      %vm5976 = vcmp.lt.s32.totalorder %v5912, 16
      %vm5977 = vcmp.lt.s32.totalorder %v5913, 16
      %vm5978 = vcmp.lt.s32.totalorder %v5914, 16
      %vm5979 = vcmp.lt.s32.totalorder %v5915, 16
      %vm5980 = vcmp.lt.s32.totalorder %v5916, 16
      %vm5981 = vcmp.lt.s32.totalorder %v5917, 16
      %vm5982 = vcmp.lt.s32.totalorder %v5918, 16
      %vm5983 = vcmp.lt.s32.totalorder %v5919, 16
      %vm5984 = vcmp.lt.s32.totalorder %v5920, 16
      %vm5985 = vcmp.lt.s32.totalorder %v5921, 16
      %vm5986 = vcmp.lt.s32.totalorder %v5922, 16
      %vm5987 = vcmp.lt.s32.totalorder %v5923, 16
      %vm5988 = vcmp.lt.s32.totalorder %v5924, 16
      %vm5989 = vcmp.lt.s32.totalorder %v5925, 16
      %vm5990 = vcmp.lt.s32.totalorder %v5926, 16
      %vm5991 = vcmp.lt.s32.totalorder %v5927, 16
      %vm5992 = vcmp.lt.s32.totalorder %v5928, 16
      %v5993 = vsel %vm5929, 1, 0
      %v5994 = vsel %vm5930, 1, 0
      %v5995 = vsel %vm5931, 1, 0
      %v5996 = vsel %vm5932, 1, 0
      %v5997 = vsel %vm5933, 1, 0
      %v5998 = vsel %vm5934, 1, 0
      %v5999 = vsel %vm5935, 1, 0
      %v6000 = vsel %vm5936, 1, 0
      %v6001 = vsel %vm5937, 1, 0
      %v6002 = vsel %vm5938, 1, 0
      %v6003 = vsel %vm5939, 1, 0
      %v6004 = vsel %vm5940, 1, 0
      %v6005 = vsel %vm5941, 1, 0
      %v6006 = vsel %vm5942, 1, 0
      %v6007 = vsel %vm5943, 1, 0
      %v6008 = vsel %vm5944, 1, 0
      %v6009 = vsel %vm5945, 1, 0
      %v6010 = vsel %vm5946, 1, 0
      %v6011 = vsel %vm5947, 1, 0
      %v6012 = vsel %vm5948, 1, 0
      %v6013 = vsel %vm5949, 1, 0
      %v6014 = vsel %vm5950, 1, 0
      %v6015 = vsel %vm5951, 1, 0
      %v6016 = vsel %vm5952, 1, 0
      %v6017 = vsel %vm5953, 1, 0
      %v6018 = vsel %vm5954, 1, 0
      %v6019 = vsel %vm5955, 1, 0
      %v6020 = vsel %vm5956, 1, 0
      %v6021 = vsel %vm5957, 1, 0
      %v6022 = vsel %vm5958, 1, 0
      %v6023 = vsel %vm5959, 1, 0
      %v6024 = vsel %vm5960, 1, 0
      %v6025 = vsel %vm5961, 1, 0
      %v6026 = vsel %vm5962, 1, 0
      %v6027 = vsel %vm5963, 1, 0
      %v6028 = vsel %vm5964, 1, 0
      %v6029 = vsel %vm5965, 1, 0
      %v6030 = vsel %vm5966, 1, 0
      %v6031 = vsel %vm5967, 1, 0
      %v6032 = vsel %vm5968, 1, 0
      %v6033 = vsel %vm5969, 1, 0
      %v6034 = vsel %vm5970, 1, 0
      %v6035 = vsel %vm5971, 1, 0
      %v6036 = vsel %vm5972, 1, 0
      %v6037 = vsel %vm5973, 1, 0
      %v6038 = vsel %vm5974, 1, 0
      %v6039 = vsel %vm5975, 1, 0
      %v6040 = vsel %vm5976, 1, 0
      %v6041 = vsel %vm5977, 1, 0
      %v6042 = vsel %vm5978, 1, 0
      %v6043 = vsel %vm5979, 1, 0
      %v6044 = vsel %vm5980, 1, 0
      %v6045 = vsel %vm5981, 1, 0
      %v6046 = vsel %vm5982, 1, 0
      %v6047 = vsel %vm5983, 1, 0
      %v6048 = vsel %vm5984, 1, 0
      %v6049 = vsel %vm5985, 1, 0
      %v6050 = vsel %vm5986, 1, 0
      %v6051 = vsel %vm5987, 1, 0
      %v6052 = vsel %vm5988, 1, 0
      %v6053 = vsel %vm5989, 1, 0
      %v6054 = vsel %vm5990, 1, 0
      %v6055 = vsel %vm5991, 1, 0
      %v6056 = vsel %vm5992, 1, 0
      %vm6057 = vcmp.eq.s32.totalorder %v5993, 1
      %vm6058 = vcmp.eq.s32.totalorder %v5994, 1
      %vm6059 = vcmp.eq.s32.totalorder %v5995, 1
      %vm6060 = vcmp.eq.s32.totalorder %v5996, 1
      %vm6061 = vcmp.eq.s32.totalorder %v5997, 1
      %vm6062 = vcmp.eq.s32.totalorder %v5998, 1
      %vm6063 = vcmp.eq.s32.totalorder %v5999, 1
      %vm6064 = vcmp.eq.s32.totalorder %v6000, 1
      %vm6065 = vcmp.eq.s32.totalorder %v6001, 1
      %vm6066 = vcmp.eq.s32.totalorder %v6002, 1
      %vm6067 = vcmp.eq.s32.totalorder %v6003, 1
      %vm6068 = vcmp.eq.s32.totalorder %v6004, 1
      %vm6069 = vcmp.eq.s32.totalorder %v6005, 1
      %vm6070 = vcmp.eq.s32.totalorder %v6006, 1
      %vm6071 = vcmp.eq.s32.totalorder %v6007, 1
      %vm6072 = vcmp.eq.s32.totalorder %v6008, 1
      %vm6073 = vcmp.eq.s32.totalorder %v6009, 1
      %vm6074 = vcmp.eq.s32.totalorder %v6010, 1
      %vm6075 = vcmp.eq.s32.totalorder %v6011, 1
      %vm6076 = vcmp.eq.s32.totalorder %v6012, 1
      %vm6077 = vcmp.eq.s32.totalorder %v6013, 1
      %vm6078 = vcmp.eq.s32.totalorder %v6014, 1
      %vm6079 = vcmp.eq.s32.totalorder %v6015, 1
      %vm6080 = vcmp.eq.s32.totalorder %v6016, 1
      %vm6081 = vcmp.eq.s32.totalorder %v6017, 1
      %vm6082 = vcmp.eq.s32.totalorder %v6018, 1
      %vm6083 = vcmp.eq.s32.totalorder %v6019, 1
      %vm6084 = vcmp.eq.s32.totalorder %v6020, 1
      %vm6085 = vcmp.eq.s32.totalorder %v6021, 1
      %vm6086 = vcmp.eq.s32.totalorder %v6022, 1
      %vm6087 = vcmp.eq.s32.totalorder %v6023, 1
      %vm6088 = vcmp.eq.s32.totalorder %v6024, 1
      %vm6089 = vcmp.eq.s32.totalorder %v6025, 1
      %vm6090 = vcmp.eq.s32.totalorder %v6026, 1
      %vm6091 = vcmp.eq.s32.totalorder %v6027, 1
      %vm6092 = vcmp.eq.s32.totalorder %v6028, 1
      %vm6093 = vcmp.eq.s32.totalorder %v6029, 1
      %vm6094 = vcmp.eq.s32.totalorder %v6030, 1
      %vm6095 = vcmp.eq.s32.totalorder %v6031, 1
      %vm6096 = vcmp.eq.s32.totalorder %v6032, 1
      %vm6097 = vcmp.eq.s32.totalorder %v6033, 1
      %vm6098 = vcmp.eq.s32.totalorder %v6034, 1
      %vm6099 = vcmp.eq.s32.totalorder %v6035, 1
      %vm6100 = vcmp.eq.s32.totalorder %v6036, 1
      %vm6101 = vcmp.eq.s32.totalorder %v6037, 1
      %vm6102 = vcmp.eq.s32.totalorder %v6038, 1
      %vm6103 = vcmp.eq.s32.totalorder %v6039, 1
      %vm6104 = vcmp.eq.s32.totalorder %v6040, 1
      %vm6105 = vcmp.eq.s32.totalorder %v6041, 1
      %vm6106 = vcmp.eq.s32.totalorder %v6042, 1
      %vm6107 = vcmp.eq.s32.totalorder %v6043, 1
      %vm6108 = vcmp.eq.s32.totalorder %v6044, 1
      %vm6109 = vcmp.eq.s32.totalorder %v6045, 1
      %vm6110 = vcmp.eq.s32.totalorder %v6046, 1
      %vm6111 = vcmp.eq.s32.totalorder %v6047, 1
      %vm6112 = vcmp.eq.s32.totalorder %v6048, 1
      %vm6113 = vcmp.eq.s32.totalorder %v6049, 1
      %vm6114 = vcmp.eq.s32.totalorder %v6050, 1
      %vm6115 = vcmp.eq.s32.totalorder %v6051, 1
      %vm6116 = vcmp.eq.s32.totalorder %v6052, 1
      %vm6117 = vcmp.eq.s32.totalorder %v6053, 1
      %vm6118 = vcmp.eq.s32.totalorder %v6054, 1
      %vm6119 = vcmp.eq.s32.totalorder %v6055, 1
      %vm6120 = vcmp.eq.s32.totalorder %v6056, 1
      %v6121 = vsel %vm6057, %v5032, 0.0
      %v6122 = vsel %vm6058, %v5033, 0.0
      %v6123 = vsel %vm6059, %v5034, 0.0
      %v6124 = vsel %vm6060, %v5035, 0.0
      %v6125 = vsel %vm6061, %v5036, 0.0
      %v6126 = vsel %vm6062, %v5037, 0.0
      %v6127 = vsel %vm6063, %v5038, 0.0
      %v6128 = vsel %vm6064, %v5039, 0.0
      %v6129 = vsel %vm6065, %v5040, 0.0
      %v6130 = vsel %vm6066, %v5041, 0.0
      %v6131 = vsel %vm6067, %v5042, 0.0
      %v6132 = vsel %vm6068, %v5043, 0.0
      %v6133 = vsel %vm6069, %v5044, 0.0
      %v6134 = vsel %vm6070, %v5045, 0.0
      %v6135 = vsel %vm6071, %v5046, 0.0
      %v6136 = vsel %vm6072, %v5047, 0.0
      %v6137 = vsel %vm6073, %v5048, 0.0
      %v6138 = vsel %vm6074, %v5049, 0.0
      %v6139 = vsel %vm6075, %v5050, 0.0
      %v6140 = vsel %vm6076, %v5051, 0.0
      %v6141 = vsel %vm6077, %v5052, 0.0
      %v6142 = vsel %vm6078, %v5053, 0.0
      %v6143 = vsel %vm6079, %v5054, 0.0
      %v6144 = vsel %vm6080, %v5055, 0.0
      %v6145 = vsel %vm6081, %v5056, 0.0
      %v6146 = vsel %vm6082, %v5057, 0.0
      %v6147 = vsel %vm6083, %v5058, 0.0
      %v6148 = vsel %vm6084, %v5059, 0.0
      %v6149 = vsel %vm6085, %v5060, 0.0
      %v6150 = vsel %vm6086, %v5061, 0.0
      %v6151 = vsel %vm6087, %v5062, 0.0
      %v6152 = vsel %vm6088, %v5063, 0.0
      %v6153 = vsel %vm6089, %v5064, 0.0
      %v6154 = vsel %vm6090, %v5065, 0.0
      %v6155 = vsel %vm6091, %v5066, 0.0
      %v6156 = vsel %vm6092, %v5067, 0.0
      %v6157 = vsel %vm6093, %v5068, 0.0
      %v6158 = vsel %vm6094, %v5069, 0.0
      %v6159 = vsel %vm6095, %v5070, 0.0
      %v6160 = vsel %vm6096, %v5071, 0.0
      %v6161 = vsel %vm6097, %v5072, 0.0
      %v6162 = vsel %vm6098, %v5073, 0.0
      %v6163 = vsel %vm6099, %v5074, 0.0
      %v6164 = vsel %vm6100, %v5075, 0.0
      %v6165 = vsel %vm6101, %v5076, 0.0
      %v6166 = vsel %vm6102, %v5077, 0.0
      %v6167 = vsel %vm6103, %v5078, 0.0
      %v6168 = vsel %vm6104, %v5079, 0.0
      %v6169 = vsel %vm6105, %v5080, 0.0
      %v6170 = vsel %vm6106, %v5081, 0.0
      %v6171 = vsel %vm6107, %v5082, 0.0
      %v6172 = vsel %vm6108, %v5083, 0.0
      %v6173 = vsel %vm6109, %v5084, 0.0
      %v6174 = vsel %vm6110, %v5085, 0.0
      %v6175 = vsel %vm6111, %v5086, 0.0
      %v6176 = vsel %vm6112, %v5087, 0.0
      %v6177 = vsel %vm6113, %v5088, 0.0
      %v6178 = vsel %vm6114, %v5089, 0.0
      %v6179 = vsel %vm6115, %v5090, 0.0
      %v6180 = vsel %vm6116, %v5091, 0.0
      %v6181 = vsel %vm6117, %v5092, 0.0
      %v6182 = vsel %vm6118, %v5093, 0.0
      %v6183 = vsel %vm6119, %v5094, 0.0
      %v6184 = vsel %vm6120, %v5095, 0.0
      %v6185 = vsel %vm171, %v6121, 0.0
      %v6186 = vsel %vm171, %v6122, 0.0
      %v6187 = vadd.f32 %v6185, %v6186
      %v6188 = vsel %vm171, %v6123, 0.0
      %v6189 = vadd.f32 %v6187, %v6188
      %v6190 = vsel %vm171, %v6124, 0.0
      %v6191 = vadd.f32 %v6189, %v6190
      %v6192 = vsel %vm171, %v6125, 0.0
      %v6193 = vadd.f32 %v6191, %v6192
      %v6194 = vsel %vm171, %v6126, 0.0
      %v6195 = vadd.f32 %v6193, %v6194
      %v6196 = vsel %vm171, %v6127, 0.0
      %v6197 = vadd.f32 %v6195, %v6196
      %v6198 = vsel %vm171, %v6128, 0.0
      %v6199 = vadd.f32 %v6197, %v6198
      %v6200 = vsel %vm171, %v6129, 0.0
      %v6201 = vadd.f32 %v6199, %v6200
      %v6202 = vsel %vm171, %v6130, 0.0
      %v6203 = vadd.f32 %v6201, %v6202
      %v6204 = vsel %vm171, %v6131, 0.0
      %v6205 = vadd.f32 %v6203, %v6204
      %v6206 = vsel %vm171, %v6132, 0.0
      %v6207 = vadd.f32 %v6205, %v6206
      %v6208 = vsel %vm171, %v6133, 0.0
      %v6209 = vadd.f32 %v6207, %v6208
      %v6210 = vsel %vm171, %v6134, 0.0
      %v6211 = vadd.f32 %v6209, %v6210
      %v6212 = vsel %vm171, %v6135, 0.0
      %v6213 = vadd.f32 %v6211, %v6212
      %v6214 = vsel %vm171, %v6136, 0.0
      %v6215 = vadd.f32 %v6213, %v6214
      %v6216 = vsel %vm171, %v6137, 0.0
      %v6217 = vadd.f32 %v6215, %v6216
      %v6218 = vsel %vm171, %v6138, 0.0
      %v6219 = vadd.f32 %v6217, %v6218
      %v6220 = vsel %vm171, %v6139, 0.0
      %v6221 = vadd.f32 %v6219, %v6220
      %v6222 = vsel %vm171, %v6140, 0.0
      %v6223 = vadd.f32 %v6221, %v6222
      %v6224 = vsel %vm171, %v6141, 0.0
      %v6225 = vadd.f32 %v6223, %v6224
      %v6226 = vsel %vm171, %v6142, 0.0
      %v6227 = vadd.f32 %v6225, %v6226
      %v6228 = vsel %vm171, %v6143, 0.0
      %v6229 = vadd.f32 %v6227, %v6228
      %v6230 = vsel %vm171, %v6144, 0.0
      %v6231 = vadd.f32 %v6229, %v6230
      %v6232 = vsel %vm171, %v6145, 0.0
      %v6233 = vadd.f32 %v6231, %v6232
      %v6234 = vsel %vm171, %v6146, 0.0
      %v6235 = vadd.f32 %v6233, %v6234
      %v6236 = vsel %vm171, %v6147, 0.0
      %v6237 = vadd.f32 %v6235, %v6236
      %v6238 = vsel %vm171, %v6148, 0.0
      %v6239 = vadd.f32 %v6237, %v6238
      %v6240 = vsel %vm171, %v6149, 0.0
      %v6241 = vadd.f32 %v6239, %v6240
      %v6242 = vsel %vm171, %v6150, 0.0
      %v6243 = vadd.f32 %v6241, %v6242
      %v6244 = vsel %vm171, %v6151, 0.0
      %v6245 = vadd.f32 %v6243, %v6244
      %v6246 = vsel %vm171, %v6152, 0.0
      %v6247 = vadd.f32 %v6245, %v6246
      %v6248 = vsel %vm171, %v6153, 0.0
      %v6249 = vadd.f32 %v6247, %v6248
      %v6250 = vsel %vm171, %v6154, 0.0
      %v6251 = vadd.f32 %v6249, %v6250
      %v6252 = vsel %vm171, %v6155, 0.0
      %v6253 = vadd.f32 %v6251, %v6252
      %v6254 = vsel %vm171, %v6156, 0.0
      %v6255 = vadd.f32 %v6253, %v6254
      %v6256 = vsel %vm171, %v6157, 0.0
      %v6257 = vadd.f32 %v6255, %v6256
      %v6258 = vsel %vm171, %v6158, 0.0
      %v6259 = vadd.f32 %v6257, %v6258
      %v6260 = vsel %vm171, %v6159, 0.0
      %v6261 = vadd.f32 %v6259, %v6260
      %v6262 = vsel %vm171, %v6160, 0.0
      %v6263 = vadd.f32 %v6261, %v6262
      %v6264 = vsel %vm171, %v6161, 0.0
      %v6265 = vadd.f32 %v6263, %v6264
      %v6266 = vsel %vm171, %v6162, 0.0
      %v6267 = vadd.f32 %v6265, %v6266
      %v6268 = vsel %vm171, %v6163, 0.0
      %v6269 = vadd.f32 %v6267, %v6268
      %v6270 = vsel %vm171, %v6164, 0.0
      %v6271 = vadd.f32 %v6269, %v6270
      %v6272 = vsel %vm171, %v6165, 0.0
      %v6273 = vadd.f32 %v6271, %v6272
      %v6274 = vsel %vm171, %v6166, 0.0
      %v6275 = vadd.f32 %v6273, %v6274
      %v6276 = vsel %vm171, %v6167, 0.0
      %v6277 = vadd.f32 %v6275, %v6276
      %v6278 = vsel %vm171, %v6168, 0.0
      %v6279 = vadd.f32 %v6277, %v6278
      %v6280 = vsel %vm171, %v6169, 0.0
      %v6281 = vadd.f32 %v6279, %v6280
      %v6282 = vsel %vm171, %v6170, 0.0
      %v6283 = vadd.f32 %v6281, %v6282
      %v6284 = vsel %vm171, %v6171, 0.0
      %v6285 = vadd.f32 %v6283, %v6284
      %v6286 = vsel %vm171, %v6172, 0.0
      %v6287 = vadd.f32 %v6285, %v6286
      %v6288 = vsel %vm171, %v6173, 0.0
      %v6289 = vadd.f32 %v6287, %v6288
      %v6290 = vsel %vm171, %v6174, 0.0
      %v6291 = vadd.f32 %v6289, %v6290
      %v6292 = vsel %vm171, %v6175, 0.0
      %v6293 = vadd.f32 %v6291, %v6292
      %v6294 = vsel %vm171, %v6176, 0.0
      %v6295 = vadd.f32 %v6293, %v6294
      %v6296 = vsel %vm171, %v6177, 0.0
      %v6297 = vadd.f32 %v6295, %v6296
      %v6298 = vsel %vm171, %v6178, 0.0
      %v6299 = vadd.f32 %v6297, %v6298
      %v6300 = vsel %vm171, %v6179, 0.0
      %v6301 = vadd.f32 %v6299, %v6300
      %v6302 = vsel %vm171, %v6180, 0.0
      %v6303 = vadd.f32 %v6301, %v6302
      %v6304 = vsel %vm171, %v6181, 0.0
      %v6305 = vadd.f32 %v6303, %v6304
      %v6306 = vsel %vm171, %v6182, 0.0
      %v6307 = vadd.f32 %v6305, %v6306
      %v6308 = vsel %vm171, %v6183, 0.0
      %v6309 = vadd.f32 %v6307, %v6308
      %v6310 = vsel %vm171, %v6184, 0.0
      %v6311 = vadd.f32 %v6309, %v6310
      %v6312 = vrot.slane %v6311, 4
      %v6313 = vadd.f32 %v6311, %v6312
      %v6314 = vrot.slane %v6313, 2
      %v6315 = vadd.f32 %v6313, %v6314
      %v6316 = vrot.slane %v6315, 1
      %v6317 = vadd.f32 %v6315, %v6316
      %v6318 = vadd.f32 %v6317, 0.0
      %v6319 = vmul.f32 %v5032, %v5032
      %v6320 = vmul.f32 %v5033, %v5033
      %v6321 = vmul.f32 %v5034, %v5034
      %v6322 = vmul.f32 %v5035, %v5035
      %v6323 = vmul.f32 %v5036, %v5036
      %v6324 = vmul.f32 %v5037, %v5037
      %v6325 = vmul.f32 %v5038, %v5038
      %v6326 = vmul.f32 %v5039, %v5039
      %v6327 = vmul.f32 %v5040, %v5040
      %v6328 = vmul.f32 %v5041, %v5041
      %v6329 = vmul.f32 %v5042, %v5042
      %v6330 = vmul.f32 %v5043, %v5043
      %v6331 = vmul.f32 %v5044, %v5044
      %v6332 = vmul.f32 %v5045, %v5045
      %v6333 = vmul.f32 %v5046, %v5046
      %v6334 = vmul.f32 %v5047, %v5047
      %v6335 = vmul.f32 %v5048, %v5048
      %v6336 = vmul.f32 %v5049, %v5049
      %v6337 = vmul.f32 %v5050, %v5050
      %v6338 = vmul.f32 %v5051, %v5051
      %v6339 = vmul.f32 %v5052, %v5052
      %v6340 = vmul.f32 %v5053, %v5053
      %v6341 = vmul.f32 %v5054, %v5054
      %v6342 = vmul.f32 %v5055, %v5055
      %v6343 = vmul.f32 %v5056, %v5056
      %v6344 = vmul.f32 %v5057, %v5057
      %v6345 = vmul.f32 %v5058, %v5058
      %v6346 = vmul.f32 %v5059, %v5059
      %v6347 = vmul.f32 %v5060, %v5060
      %v6348 = vmul.f32 %v5061, %v5061
      %v6349 = vmul.f32 %v5062, %v5062
      %v6350 = vmul.f32 %v5063, %v5063
      %v6351 = vmul.f32 %v5064, %v5064
      %v6352 = vmul.f32 %v5065, %v5065
      %v6353 = vmul.f32 %v5066, %v5066
      %v6354 = vmul.f32 %v5067, %v5067
      %v6355 = vmul.f32 %v5068, %v5068
      %v6356 = vmul.f32 %v5069, %v5069
      %v6357 = vmul.f32 %v5070, %v5070
      %v6358 = vmul.f32 %v5071, %v5071
      %v6359 = vmul.f32 %v5072, %v5072
      %v6360 = vmul.f32 %v5073, %v5073
      %v6361 = vmul.f32 %v5074, %v5074
      %v6362 = vmul.f32 %v5075, %v5075
      %v6363 = vmul.f32 %v5076, %v5076
      %v6364 = vmul.f32 %v5077, %v5077
      %v6365 = vmul.f32 %v5078, %v5078
      %v6366 = vmul.f32 %v5079, %v5079
      %v6367 = vmul.f32 %v5080, %v5080
      %v6368 = vmul.f32 %v5081, %v5081
      %v6369 = vmul.f32 %v5082, %v5082
      %v6370 = vmul.f32 %v5083, %v5083
      %v6371 = vmul.f32 %v5084, %v5084
      %v6372 = vmul.f32 %v5085, %v5085
      %v6373 = vmul.f32 %v5086, %v5086
      %v6374 = vmul.f32 %v5087, %v5087
      %v6375 = vmul.f32 %v5088, %v5088
      %v6376 = vmul.f32 %v5089, %v5089
      %v6377 = vmul.f32 %v5090, %v5090
      %v6378 = vmul.f32 %v5091, %v5091
      %v6379 = vmul.f32 %v5092, %v5092
      %v6380 = vmul.f32 %v5093, %v5093
      %v6381 = vmul.f32 %v5094, %v5094
      %v6382 = vmul.f32 %v5095, %v5095
      %v6383 = vsel %vm6057, %v6319, 0.0
      %v6384 = vsel %vm6058, %v6320, 0.0
      %v6385 = vsel %vm6059, %v6321, 0.0
      %v6386 = vsel %vm6060, %v6322, 0.0
      %v6387 = vsel %vm6061, %v6323, 0.0
      %v6388 = vsel %vm6062, %v6324, 0.0
      %v6389 = vsel %vm6063, %v6325, 0.0
      %v6390 = vsel %vm6064, %v6326, 0.0
      %v6391 = vsel %vm6065, %v6327, 0.0
      %v6392 = vsel %vm6066, %v6328, 0.0
      %v6393 = vsel %vm6067, %v6329, 0.0
      %v6394 = vsel %vm6068, %v6330, 0.0
      %v6395 = vsel %vm6069, %v6331, 0.0
      %v6396 = vsel %vm6070, %v6332, 0.0
      %v6397 = vsel %vm6071, %v6333, 0.0
      %v6398 = vsel %vm6072, %v6334, 0.0
      %v6399 = vsel %vm6073, %v6335, 0.0
      %v6400 = vsel %vm6074, %v6336, 0.0
      %v6401 = vsel %vm6075, %v6337, 0.0
      %v6402 = vsel %vm6076, %v6338, 0.0
      %v6403 = vsel %vm6077, %v6339, 0.0
      %v6404 = vsel %vm6078, %v6340, 0.0
      %v6405 = vsel %vm6079, %v6341, 0.0
      %v6406 = vsel %vm6080, %v6342, 0.0
      %v6407 = vsel %vm6081, %v6343, 0.0
      %v6408 = vsel %vm6082, %v6344, 0.0
      %v6409 = vsel %vm6083, %v6345, 0.0
      %v6410 = vsel %vm6084, %v6346, 0.0
      %v6411 = vsel %vm6085, %v6347, 0.0
      %v6412 = vsel %vm6086, %v6348, 0.0
      %v6413 = vsel %vm6087, %v6349, 0.0
      %v6414 = vsel %vm6088, %v6350, 0.0
      %v6415 = vsel %vm6089, %v6351, 0.0
      %v6416 = vsel %vm6090, %v6352, 0.0
      %v6417 = vsel %vm6091, %v6353, 0.0
      %v6418 = vsel %vm6092, %v6354, 0.0
      %v6419 = vsel %vm6093, %v6355, 0.0
      %v6420 = vsel %vm6094, %v6356, 0.0
      %v6421 = vsel %vm6095, %v6357, 0.0
      %v6422 = vsel %vm6096, %v6358, 0.0
      %v6423 = vsel %vm6097, %v6359, 0.0
      %v6424 = vsel %vm6098, %v6360, 0.0
      %v6425 = vsel %vm6099, %v6361, 0.0
      %v6426 = vsel %vm6100, %v6362, 0.0
      %v6427 = vsel %vm6101, %v6363, 0.0
      %v6428 = vsel %vm6102, %v6364, 0.0
      %v6429 = vsel %vm6103, %v6365, 0.0
      %v6430 = vsel %vm6104, %v6366, 0.0
      %v6431 = vsel %vm6105, %v6367, 0.0
      %v6432 = vsel %vm6106, %v6368, 0.0
      %v6433 = vsel %vm6107, %v6369, 0.0
      %v6434 = vsel %vm6108, %v6370, 0.0
      %v6435 = vsel %vm6109, %v6371, 0.0
      %v6436 = vsel %vm6110, %v6372, 0.0
      %v6437 = vsel %vm6111, %v6373, 0.0
      %v6438 = vsel %vm6112, %v6374, 0.0
      %v6439 = vsel %vm6113, %v6375, 0.0
      %v6440 = vsel %vm6114, %v6376, 0.0
      %v6441 = vsel %vm6115, %v6377, 0.0
      %v6442 = vsel %vm6116, %v6378, 0.0
      %v6443 = vsel %vm6117, %v6379, 0.0
      %v6444 = vsel %vm6118, %v6380, 0.0
      %v6445 = vsel %vm6119, %v6381, 0.0
      %v6446 = vsel %vm6120, %v6382, 0.0
      %v6447 = vsel %vm171, %v6383, 0.0
      %v6448 = vsel %vm171, %v6384, 0.0
      %v6449 = vadd.f32 %v6447, %v6448
      %v6450 = vsel %vm171, %v6385, 0.0
      %v6451 = vadd.f32 %v6449, %v6450
      %v6452 = vsel %vm171, %v6386, 0.0
      %v6453 = vadd.f32 %v6451, %v6452
      %v6454 = vsel %vm171, %v6387, 0.0
      %v6455 = vadd.f32 %v6453, %v6454
      %v6456 = vsel %vm171, %v6388, 0.0
      %v6457 = vadd.f32 %v6455, %v6456
      %v6458 = vsel %vm171, %v6389, 0.0
      %v6459 = vadd.f32 %v6457, %v6458
      %v6460 = vsel %vm171, %v6390, 0.0
      %v6461 = vadd.f32 %v6459, %v6460
      %v6462 = vsel %vm171, %v6391, 0.0
      %v6463 = vadd.f32 %v6461, %v6462
      %v6464 = vsel %vm171, %v6392, 0.0
      %v6465 = vadd.f32 %v6463, %v6464
      %v6466 = vsel %vm171, %v6393, 0.0
      %v6467 = vadd.f32 %v6465, %v6466
      %v6468 = vsel %vm171, %v6394, 0.0
      %v6469 = vadd.f32 %v6467, %v6468
      %v6470 = vsel %vm171, %v6395, 0.0
      %v6471 = vadd.f32 %v6469, %v6470
      %v6472 = vsel %vm171, %v6396, 0.0
      %v6473 = vadd.f32 %v6471, %v6472
      %v6474 = vsel %vm171, %v6397, 0.0
      %v6475 = vadd.f32 %v6473, %v6474
      %v6476 = vsel %vm171, %v6398, 0.0
      %v6477 = vadd.f32 %v6475, %v6476
      %v6478 = vsel %vm171, %v6399, 0.0
      %v6479 = vadd.f32 %v6477, %v6478
      %v6480 = vsel %vm171, %v6400, 0.0
      %v6481 = vadd.f32 %v6479, %v6480
      %v6482 = vsel %vm171, %v6401, 0.0
      %v6483 = vadd.f32 %v6481, %v6482
      %v6484 = vsel %vm171, %v6402, 0.0
      %v6485 = vadd.f32 %v6483, %v6484
      %v6486 = vsel %vm171, %v6403, 0.0
      %v6487 = vadd.f32 %v6485, %v6486
      %v6488 = vsel %vm171, %v6404, 0.0
      %v6489 = vadd.f32 %v6487, %v6488
      %v6490 = vsel %vm171, %v6405, 0.0
      %v6491 = vadd.f32 %v6489, %v6490
      %v6492 = vsel %vm171, %v6406, 0.0
      %v6493 = vadd.f32 %v6491, %v6492
      %v6494 = vsel %vm171, %v6407, 0.0
      %v6495 = vadd.f32 %v6493, %v6494
      %v6496 = vsel %vm171, %v6408, 0.0
      %v6497 = vadd.f32 %v6495, %v6496
      %v6498 = vsel %vm171, %v6409, 0.0
      %v6499 = vadd.f32 %v6497, %v6498
      %v6500 = vsel %vm171, %v6410, 0.0
      %v6501 = vadd.f32 %v6499, %v6500
      %v6502 = vsel %vm171, %v6411, 0.0
      %v6503 = vadd.f32 %v6501, %v6502
      %v6504 = vsel %vm171, %v6412, 0.0
      %v6505 = vadd.f32 %v6503, %v6504
      %v6506 = vsel %vm171, %v6413, 0.0
      %v6507 = vadd.f32 %v6505, %v6506
      %v6508 = vsel %vm171, %v6414, 0.0
      %v6509 = vadd.f32 %v6507, %v6508
      %v6510 = vsel %vm171, %v6415, 0.0
      %v6511 = vadd.f32 %v6509, %v6510
      %v6512 = vsel %vm171, %v6416, 0.0
      %v6513 = vadd.f32 %v6511, %v6512
      %v6514 = vsel %vm171, %v6417, 0.0
      %v6515 = vadd.f32 %v6513, %v6514
      %v6516 = vsel %vm171, %v6418, 0.0
      %v6517 = vadd.f32 %v6515, %v6516
      %v6518 = vsel %vm171, %v6419, 0.0
      %v6519 = vadd.f32 %v6517, %v6518
      %v6520 = vsel %vm171, %v6420, 0.0
      %v6521 = vadd.f32 %v6519, %v6520
      %v6522 = vsel %vm171, %v6421, 0.0
      %v6523 = vadd.f32 %v6521, %v6522
      %v6524 = vsel %vm171, %v6422, 0.0
      %v6525 = vadd.f32 %v6523, %v6524
      %v6526 = vsel %vm171, %v6423, 0.0
      %v6527 = vadd.f32 %v6525, %v6526
      %v6528 = vsel %vm171, %v6424, 0.0
      %v6529 = vadd.f32 %v6527, %v6528
      %v6530 = vsel %vm171, %v6425, 0.0
      %v6531 = vadd.f32 %v6529, %v6530
      %v6532 = vsel %vm171, %v6426, 0.0
      %v6533 = vadd.f32 %v6531, %v6532
      %v6534 = vsel %vm171, %v6427, 0.0
      %v6535 = vadd.f32 %v6533, %v6534
      %v6536 = vsel %vm171, %v6428, 0.0
      %v6537 = vadd.f32 %v6535, %v6536
      %v6538 = vsel %vm171, %v6429, 0.0
      %v6539 = vadd.f32 %v6537, %v6538
      %v6540 = vsel %vm171, %v6430, 0.0
      %v6541 = vadd.f32 %v6539, %v6540
      %v6542 = vsel %vm171, %v6431, 0.0
      %v6543 = vadd.f32 %v6541, %v6542
      %v6544 = vsel %vm171, %v6432, 0.0
      %v6545 = vadd.f32 %v6543, %v6544
      %v6546 = vsel %vm171, %v6433, 0.0
      %v6547 = vadd.f32 %v6545, %v6546
      %v6548 = vsel %vm171, %v6434, 0.0
      %v6549 = vadd.f32 %v6547, %v6548
      %v6550 = vsel %vm171, %v6435, 0.0
      %v6551 = vadd.f32 %v6549, %v6550
      %v6552 = vsel %vm171, %v6436, 0.0
      %v6553 = vadd.f32 %v6551, %v6552
      %v6554 = vsel %vm171, %v6437, 0.0
      %v6555 = vadd.f32 %v6553, %v6554
      %v6556 = vsel %vm171, %v6438, 0.0
      %v6557 = vadd.f32 %v6555, %v6556
      %v6558 = vsel %vm171, %v6439, 0.0
      %v6559 = vadd.f32 %v6557, %v6558
      %v6560 = vsel %vm171, %v6440, 0.0
      %v6561 = vadd.f32 %v6559, %v6560
      %v6562 = vsel %vm171, %v6441, 0.0
      %v6563 = vadd.f32 %v6561, %v6562
      %v6564 = vsel %vm171, %v6442, 0.0
      %v6565 = vadd.f32 %v6563, %v6564
      %v6566 = vsel %vm171, %v6443, 0.0
      %v6567 = vadd.f32 %v6565, %v6566
      %v6568 = vsel %vm171, %v6444, 0.0
      %v6569 = vadd.f32 %v6567, %v6568
      %v6570 = vsel %vm171, %v6445, 0.0
      %v6571 = vadd.f32 %v6569, %v6570
      %v6572 = vsel %vm171, %v6446, 0.0
      %v6573 = vadd.f32 %v6571, %v6572
      %v6574 = vrot.slane %v6573, 4
      %v6575 = vadd.f32 %v6573, %v6574
      %v6576 = vrot.slane %v6575, 2
      %v6577 = vadd.f32 %v6575, %v6576
      %v6578 = vrot.slane %v6577, 1
      %v6579 = vadd.f32 %v6577, %v6578
      %v6580 = vadd.f32 %v6579, 0.0
      %6581 = vst.msk [vmem:[#allocation3] sm:$0xff] %vm171, %v5032
      %6582 = vst.msk [vmem:[#allocation3 + $0x8] sm:$0xff] %vm171, %v5033
      %6583 = vst.msk [vmem:[#allocation3 + $0x10] sm:$0xff] %vm171, %v5034
      %6584 = vst.msk [vmem:[#allocation3 + $0x18] sm:$0xff] %vm171, %v5035
      %6585 = vst.msk [vmem:[#allocation3 + $0x20] sm:$0xff] %vm171, %v5036
      %6586 = vst.msk [vmem:[#allocation3 + $0x28] sm:$0xff] %vm171, %v5037
      %6587 = vst.msk [vmem:[#allocation3 + $0x30] sm:$0xff] %vm171, %v5038
      %6588 = vst.msk [vmem:[#allocation3 + $0x38] sm:$0xff] %vm171, %v5039
      %6589 = vst.msk [vmem:[#allocation3 + $0x40] sm:$0xff] %vm171, %v5040
      %6590 = vst.msk [vmem:[#allocation3 + $0x48] sm:$0xff] %vm171, %v5041
      %6591 = vst.msk [vmem:[#allocation3 + $0x50] sm:$0xff] %vm171, %v5042
      %6592 = vst.msk [vmem:[#allocation3 + $0x58] sm:$0xff] %vm171, %v5043
      %6593 = vst.msk [vmem:[#allocation3 + $0x60] sm:$0xff] %vm171, %v5044
      %6594 = vst.msk [vmem:[#allocation3 + $0x68] sm:$0xff] %vm171, %v5045
      %6595 = vst.msk [vmem:[#allocation3 + $0x70] sm:$0xff] %vm171, %v5046
      %6596 = vst.msk [vmem:[#allocation3 + $0x78] sm:$0xff] %vm171, %v5047
      %6597 = vst.msk [vmem:[#allocation3 + $0x80] sm:$0xff] %vm171, %v5048
      %6598 = vst.msk [vmem:[#allocation3 + $0x88] sm:$0xff] %vm171, %v5049
      %6599 = vst.msk [vmem:[#allocation3 + $0x90] sm:$0xff] %vm171, %v5050
      %6600 = vst.msk [vmem:[#allocation3 + $0x98] sm:$0xff] %vm171, %v5051
      %6601 = vst.msk [vmem:[#allocation3 + $0xa0] sm:$0xff] %vm171, %v5052
      %6602 = vst.msk [vmem:[#allocation3 + $0xa8] sm:$0xff] %vm171, %v5053
      %6603 = vst.msk [vmem:[#allocation3 + $0xb0] sm:$0xff] %vm171, %v5054
      %6604 = vst.msk [vmem:[#allocation3 + $0xb8] sm:$0xff] %vm171, %v5055
      %6605 = vst.msk [vmem:[#allocation3 + $0xc0] sm:$0xff] %vm171, %v5056
      %6606 = vst.msk [vmem:[#allocation3 + $0xc8] sm:$0xff] %vm171, %v5057
      %6607 = vst.msk [vmem:[#allocation3 + $0xd0] sm:$0xff] %vm171, %v5058
      %6608 = vst.msk [vmem:[#allocation3 + $0xd8] sm:$0xff] %vm171, %v5059
      %6609 = vst.msk [vmem:[#allocation3 + $0xe0] sm:$0xff] %vm171, %v5060
      %6610 = vst.msk [vmem:[#allocation3 + $0xe8] sm:$0xff] %vm171, %v5061
      %6611 = vst.msk [vmem:[#allocation3 + $0xf0] sm:$0xff] %vm171, %v5062
      %6612 = vst.msk [vmem:[#allocation3 + $0xf8] sm:$0xff] %vm171, %v5063
      %6613 = vst.msk [vmem:[#allocation3 + $0x100] sm:$0xff] %vm171, %v5064
      %6614 = vst.msk [vmem:[#allocation3 + $0x108] sm:$0xff] %vm171, %v5065
      %6615 = vst.msk [vmem:[#allocation3 + $0x110] sm:$0xff] %vm171, %v5066
      %6616 = vst.msk [vmem:[#allocation3 + $0x118] sm:$0xff] %vm171, %v5067
      %6617 = vst.msk [vmem:[#allocation3 + $0x120] sm:$0xff] %vm171, %v5068
      %6618 = vst.msk [vmem:[#allocation3 + $0x128] sm:$0xff] %vm171, %v5069
      %6619 = vst.msk [vmem:[#allocation3 + $0x130] sm:$0xff] %vm171, %v5070
      %6620 = vst.msk [vmem:[#allocation3 + $0x138] sm:$0xff] %vm171, %v5071
      %6621 = vst.msk [vmem:[#allocation3 + $0x140] sm:$0xff] %vm171, %v5072
      %6622 = vst.msk [vmem:[#allocation3 + $0x148] sm:$0xff] %vm171, %v5073
      %6623 = vst.msk [vmem:[#allocation3 + $0x150] sm:$0xff] %vm171, %v5074
      %6624 = vst.msk [vmem:[#allocation3 + $0x158] sm:$0xff] %vm171, %v5075
      %6625 = vst.msk [vmem:[#allocation3 + $0x160] sm:$0xff] %vm171, %v5076
      %6626 = vst.msk [vmem:[#allocation3 + $0x168] sm:$0xff] %vm171, %v5077
      %6627 = vst.msk [vmem:[#allocation3 + $0x170] sm:$0xff] %vm171, %v5078
      %6628 = vst.msk [vmem:[#allocation3 + $0x178] sm:$0xff] %vm171, %v5079
      %6629 = vst.msk [vmem:[#allocation3 + $0x180] sm:$0xff] %vm171, %v5080
      %6630 = vst.msk [vmem:[#allocation3 + $0x188] sm:$0xff] %vm171, %v5081
      %6631 = vst.msk [vmem:[#allocation3 + $0x190] sm:$0xff] %vm171, %v5082
      %6632 = vst.msk [vmem:[#allocation3 + $0x198] sm:$0xff] %vm171, %v5083
      %6633 = vst.msk [vmem:[#allocation3 + $0x1a0] sm:$0xff] %vm171, %v5084
      %6634 = vst.msk [vmem:[#allocation3 + $0x1a8] sm:$0xff] %vm171, %v5085
      %6635 = vst.msk [vmem:[#allocation3 + $0x1b0] sm:$0xff] %vm171, %v5086
      %6636 = vst.msk [vmem:[#allocation3 + $0x1b8] sm:$0xff] %vm171, %v5087
      %6637 = vst.msk [vmem:[#allocation3 + $0x1c0] sm:$0xff] %vm171, %v5088
      %6638 = vst.msk [vmem:[#allocation3 + $0x1c8] sm:$0xff] %vm171, %v5089
      %6639 = vst.msk [vmem:[#allocation3 + $0x1d0] sm:$0xff] %vm171, %v5090
      %6640 = vst.msk [vmem:[#allocation3 + $0x1d8] sm:$0xff] %vm171, %v5091
      %6641 = vst.msk [vmem:[#allocation3 + $0x1e0] sm:$0xff] %vm171, %v5092
      %6642 = vst.msk [vmem:[#allocation3 + $0x1e8] sm:$0xff] %vm171, %v5093
      %6643 = vst.msk [vmem:[#allocation3 + $0x1f0] sm:$0xff] %vm171, %v5094
      %6644 = vst.msk [vmem:[#allocation3 + $0x1f8] sm:$0xff] %vm171, %v5095
      %v6645 = vmul.f32 %v6318, 0.00390625
      %v6646 = vmul.f32 %v6580, 0.00390625
      %v6647 = vmul.f32 %v6645, %v6645
      %v6648 = vsub.f32 %v6646, %v6647
      %v6649 = vadd.f32 %v6648, 1e-05
      %v6650 = vrsqrt.pop %v6649
      %v6651 = vmul.f32 %v6650, %v6649
      %v6652 = vmul.f32 %v6651, %v6650
      %v6653 = vmul.f32 0.5, %v6652
      %v6654 = vsub.f32 1.5, %v6653
      %v6655 = vmul.f32 %v6650, %v6654
      %vm6656 = vweird.f32 %v6649
      %vm6657 = vweird.f32 %v6650
      %vm6658 = vmor %vm6656, %vm6657
      %v6659 = vsel %vm6658, %v6650, %v6655
      %v6660 = vld [vmem:[#allocation3] sm:$0xff]
      %v6661 = vld [vmem:[#allocation3 + $0x8] sm:$0xff]
      %v6662 = vld [vmem:[#allocation3 + $0x20] sm:$0xff]
      %v6663 = vld [vmem:[#allocation3 + $0x28] sm:$0xff]
      %v6664 = vld [vmem:[#allocation3 + $0x40] sm:$0xff]
      %v6665 = vld [vmem:[#allocation3 + $0x48] sm:$0xff]
      %v6666 = vld [vmem:[#allocation3 + $0x60] sm:$0xff]
      %v6667 = vld [vmem:[#allocation3 + $0x68] sm:$0xff]
      %v6668 = vld [vmem:[#allocation3 + $0x80] sm:$0xff]
      %v6669 = vld [vmem:[#allocation3 + $0x88] sm:$0xff]
      %v6670 = vld [vmem:[#allocation3 + $0xa0] sm:$0xff]
      %v6671 = vld [vmem:[#allocation3 + $0xa8] sm:$0xff]
      %v6672 = vld [vmem:[#allocation3 + $0xc0] sm:$0xff]
      %v6673 = vld [vmem:[#allocation3 + $0xc8] sm:$0xff]
      %v6674 = vld [vmem:[#allocation3 + $0xe0] sm:$0xff]
      %v6675 = vld [vmem:[#allocation3 + $0xe8] sm:$0xff]
      %v6676 = vld [vmem:[#allocation3 + $0x100] sm:$0xff]
      %v6677 = vld [vmem:[#allocation3 + $0x108] sm:$0xff]
      %v6678 = vld [vmem:[#allocation3 + $0x120] sm:$0xff]
      %v6679 = vld [vmem:[#allocation3 + $0x128] sm:$0xff]
      %v6680 = vld [vmem:[#allocation3 + $0x140] sm:$0xff]
      %v6681 = vld [vmem:[#allocation3 + $0x148] sm:$0xff]
      %v6682 = vld [vmem:[#allocation3 + $0x160] sm:$0xff]
      %v6683 = vld [vmem:[#allocation3 + $0x168] sm:$0xff]
      %v6684 = vld [vmem:[#allocation3 + $0x180] sm:$0xff]
      %v6685 = vld [vmem:[#allocation3 + $0x188] sm:$0xff]
      %v6686 = vld [vmem:[#allocation3 + $0x1a0] sm:$0xff]
      %v6687 = vld [vmem:[#allocation3 + $0x1a8] sm:$0xff]
      %v6688 = vld [vmem:[#allocation3 + $0x1c0] sm:$0xff]
      %v6689 = vld [vmem:[#allocation3 + $0x1c8] sm:$0xff]
      %v6690 = vld [vmem:[#allocation3 + $0x1e0] sm:$0xff]
      %v6691 = vld [vmem:[#allocation3 + $0x1e8] sm:$0xff]
      %v6692 = vsub.f32 %v6660, %v6645
      %v6693 = vsub.f32 %v6661, %v6645
      %v6694 = vsub.f32 %v6662, %v6645
      %v6695 = vsub.f32 %v6663, %v6645
      %v6696 = vsub.f32 %v6664, %v6645
      %v6697 = vsub.f32 %v6665, %v6645
      %v6698 = vsub.f32 %v6666, %v6645
      %v6699 = vsub.f32 %v6667, %v6645
      %v6700 = vsub.f32 %v6668, %v6645
      %v6701 = vsub.f32 %v6669, %v6645
      %v6702 = vsub.f32 %v6670, %v6645
      %v6703 = vsub.f32 %v6671, %v6645
      %v6704 = vsub.f32 %v6672, %v6645
      %v6705 = vsub.f32 %v6673, %v6645
      %v6706 = vsub.f32 %v6674, %v6645
      %v6707 = vsub.f32 %v6675, %v6645
      %v6708 = vsub.f32 %v6676, %v6645
      %v6709 = vsub.f32 %v6677, %v6645
      %v6710 = vsub.f32 %v6678, %v6645
      %v6711 = vsub.f32 %v6679, %v6645
      %v6712 = vsub.f32 %v6680, %v6645
      %v6713 = vsub.f32 %v6681, %v6645
      %v6714 = vsub.f32 %v6682, %v6645
      %v6715 = vsub.f32 %v6683, %v6645
      %v6716 = vsub.f32 %v6684, %v6645
      %v6717 = vsub.f32 %v6685, %v6645
      %v6718 = vsub.f32 %v6686, %v6645
      %v6719 = vsub.f32 %v6687, %v6645
      %v6720 = vsub.f32 %v6688, %v6645
      %v6721 = vsub.f32 %v6689, %v6645
      %v6722 = vsub.f32 %v6690, %v6645
      %v6723 = vsub.f32 %v6691, %v6645
      %v6724 = vmul.f32 %v6692, %v6659
      %v6725 = vmul.f32 %v6693, %v6659
      %v6726 = vmul.f32 %v6694, %v6659
      %v6727 = vmul.f32 %v6695, %v6659
      %v6728 = vmul.f32 %v6696, %v6659
      %v6729 = vmul.f32 %v6697, %v6659
      %v6730 = vmul.f32 %v6698, %v6659
      %v6731 = vmul.f32 %v6699, %v6659
      %v6732 = vmul.f32 %v6700, %v6659
      %v6733 = vmul.f32 %v6701, %v6659
      %v6734 = vmul.f32 %v6702, %v6659
      %v6735 = vmul.f32 %v6703, %v6659
      %v6736 = vmul.f32 %v6704, %v6659
      %v6737 = vmul.f32 %v6705, %v6659
      %v6738 = vmul.f32 %v6706, %v6659
      %v6739 = vmul.f32 %v6707, %v6659
      %v6740 = vmul.f32 %v6708, %v6659
      %v6741 = vmul.f32 %v6709, %v6659
      %v6742 = vmul.f32 %v6710, %v6659
      %v6743 = vmul.f32 %v6711, %v6659
      %v6744 = vmul.f32 %v6712, %v6659
      %v6745 = vmul.f32 %v6713, %v6659
      %v6746 = vmul.f32 %v6714, %v6659
      %v6747 = vmul.f32 %v6715, %v6659
      %v6748 = vmul.f32 %v6716, %v6659
      %v6749 = vmul.f32 %v6717, %v6659
      %v6750 = vmul.f32 %v6718, %v6659
      %v6751 = vmul.f32 %v6719, %v6659
      %v6752 = vmul.f32 %v6720, %v6659
      %v6753 = vmul.f32 %v6721, %v6659
      %v6754 = vmul.f32 %v6722, %v6659
      %v6755 = vmul.f32 %v6723, %v6659
      %v6756 = vmax.f32 %v6724, 0.0
      %v6757 = vmax.f32 %v6725, 0.0
      %v6758 = vmax.f32 %v6726, 0.0
      %v6759 = vmax.f32 %v6727, 0.0
      %v6760 = vmax.f32 %v6728, 0.0
      %v6761 = vmax.f32 %v6729, 0.0
      %v6762 = vmax.f32 %v6730, 0.0
      %v6763 = vmax.f32 %v6731, 0.0
      %v6764 = vmax.f32 %v6732, 0.0
      %v6765 = vmax.f32 %v6733, 0.0
      %v6766 = vmax.f32 %v6734, 0.0
      %v6767 = vmax.f32 %v6735, 0.0
      %v6768 = vmax.f32 %v6736, 0.0
      %v6769 = vmax.f32 %v6737, 0.0
      %v6770 = vmax.f32 %v6738, 0.0
      %v6771 = vmax.f32 %v6739, 0.0
      %v6772 = vmax.f32 %v6740, 0.0
      %v6773 = vmax.f32 %v6741, 0.0
      %v6774 = vmax.f32 %v6742, 0.0
      %v6775 = vmax.f32 %v6743, 0.0
      %v6776 = vmax.f32 %v6744, 0.0
      %v6777 = vmax.f32 %v6745, 0.0
      %v6778 = vmax.f32 %v6746, 0.0
      %v6779 = vmax.f32 %v6747, 0.0
      %v6780 = vmax.f32 %v6748, 0.0
      %v6781 = vmax.f32 %v6749, 0.0
      %v6782 = vmax.f32 %v6750, 0.0
      %v6783 = vmax.f32 %v6751, 0.0
      %v6784 = vmax.f32 %v6752, 0.0
      %v6785 = vmax.f32 %v6753, 0.0
      %v6786 = vmax.f32 %v6754, 0.0
      %v6787 = vmax.f32 %v6755, 0.0
      %v6804 = vrot.slane %v6756, 2
      %v6805 = vrot.slane %v6758, 2
      %v6806 = vrot.slane %v6760, 2
      %v6807 = vrot.slane %v6762, 2
      %v6808 = vrot.slane %v6764, 2
      %v6809 = vrot.slane %v6766, 2
      %v6810 = vrot.slane %v6768, 2
      %v6811 = vrot.slane %v6770, 2
      %v6812 = vrot.slane %v6772, 2
      %v6813 = vrot.slane %v6774, 2
      %v6814 = vrot.slane %v6776, 2
      %v6815 = vrot.slane %v6778, 2
      %v6816 = vrot.slane %v6780, 2
      %v6817 = vrot.slane %v6782, 2
      %v6818 = vrot.slane %v6784, 2
      %v6819 = vrot.slane %v6786, 2
      %v6852 = vrot.slane %v6757, 6
      %v6853 = vrot.slane %v6759, 6
      %v6854 = vrot.slane %v6761, 6
      %v6855 = vrot.slane %v6763, 6
      %v6856 = vrot.slane %v6765, 6
      %v6857 = vrot.slane %v6767, 6
      %v6858 = vrot.slane %v6769, 6
      %v6859 = vrot.slane %v6771, 6
      %v6860 = vrot.slane %v6773, 6
      %v6861 = vrot.slane %v6775, 6
      %v6862 = vrot.slane %v6777, 6
      %v6863 = vrot.slane %v6779, 6
      %v6864 = vrot.slane %v6781, 6
      %v6865 = vrot.slane %v6783, 6
      %v6866 = vrot.slane %v6785, 6
      %v6867 = vrot.slane %v6787, 6
      %v6884 = vsel %vm304, 0.0, %v6804
      %v6885 = vsel %vm304, 0.0, %v6805
      %v6886 = vsel %vm304, 0.0, %v6806
      %v6887 = vsel %vm304, 0.0, %v6807
      %v6888 = vsel %vm304, 0.0, %v6808
      %v6889 = vsel %vm304, 0.0, %v6809
      %v6890 = vsel %vm304, 0.0, %v6810
      %v6891 = vsel %vm304, 0.0, %v6811
      %v6892 = vsel %vm304, 0.0, %v6812
      %v6893 = vsel %vm304, 0.0, %v6813
      %v6894 = vsel %vm304, 0.0, %v6814
      %v6895 = vsel %vm304, 0.0, %v6815
      %v6896 = vsel %vm304, 0.0, %v6816
      %v6897 = vsel %vm304, 0.0, %v6817
      %v6898 = vsel %vm304, 0.0, %v6818
      %v6899 = vsel %vm304, 0.0, %v6819
      %v6900 = vsel %vm321, %v6852, 0.0
      %v6901 = vsel %vm321, %v6853, 0.0
      %v6902 = vsel %vm321, %v6854, 0.0
      %v6903 = vsel %vm321, %v6855, 0.0
      %v6904 = vsel %vm321, %v6856, 0.0
      %v6905 = vsel %vm321, %v6857, 0.0
      %v6906 = vsel %vm321, %v6858, 0.0
      %v6907 = vsel %vm321, %v6859, 0.0
      %v6908 = vsel %vm321, %v6860, 0.0
      %v6909 = vsel %vm321, %v6861, 0.0
      %v6910 = vsel %vm321, %v6862, 0.0
      %v6911 = vsel %vm321, %v6863, 0.0
      %v6912 = vsel %vm321, %v6864, 0.0
      %v6913 = vsel %vm321, %v6865, 0.0
      %v6914 = vsel %vm321, %v6866, 0.0
      %v6915 = vsel %vm321, %v6867, 0.0
      %6916 = vst.msk [vmem:[#allocation2 + $0x20] sm:$0xff] %vm171, %v6884
      %6917 = vst.msk [vmem:[#allocation2 + $0x28] sm:$0xff] %vm171, %v6756
      %6918 = vst.msk [vmem:[#allocation2 + $0x30] sm:$0xff] %vm171, %v6757
      %6919 = vst.msk [vmem:[#allocation2 + $0x38] sm:$0xff] %vm171, %v6900
      %6920 = vst.msk [vmem:[#allocation2 + $0x40] sm:$0xff] %vm171, %v6885
      %6921 = vst.msk [vmem:[#allocation2 + $0x48] sm:$0xff] %vm171, %v6758
      %6922 = vst.msk [vmem:[#allocation2 + $0x50] sm:$0xff] %vm171, %v6759
      %6923 = vst.msk [vmem:[#allocation2 + $0x58] sm:$0xff] %vm171, %v6901
      %6924 = vst.msk [vmem:[#allocation2 + $0x60] sm:$0xff] %vm171, %v6886
      %6925 = vst.msk [vmem:[#allocation2 + $0x68] sm:$0xff] %vm171, %v6760
      %6926 = vst.msk [vmem:[#allocation2 + $0x70] sm:$0xff] %vm171, %v6761
      %6927 = vst.msk [vmem:[#allocation2 + $0x78] sm:$0xff] %vm171, %v6902
      %6928 = vst.msk [vmem:[#allocation2 + $0x80] sm:$0xff] %vm171, %v6887
      %6929 = vst.msk [vmem:[#allocation2 + $0x88] sm:$0xff] %vm171, %v6762
      %6930 = vst.msk [vmem:[#allocation2 + $0x90] sm:$0xff] %vm171, %v6763
      %6931 = vst.msk [vmem:[#allocation2 + $0x98] sm:$0xff] %vm171, %v6903
      %6932 = vst.msk [vmem:[#allocation2 + $0xa0] sm:$0xff] %vm171, %v6888
      %6933 = vst.msk [vmem:[#allocation2 + $0xa8] sm:$0xff] %vm171, %v6764
      %6934 = vst.msk [vmem:[#allocation2 + $0xb0] sm:$0xff] %vm171, %v6765
      %6935 = vst.msk [vmem:[#allocation2 + $0xb8] sm:$0xff] %vm171, %v6904
      %6936 = vst.msk [vmem:[#allocation2 + $0xc0] sm:$0xff] %vm171, %v6889
      %6937 = vst.msk [vmem:[#allocation2 + $0xc8] sm:$0xff] %vm171, %v6766
      %6938 = vst.msk [vmem:[#allocation2 + $0xd0] sm:$0xff] %vm171, %v6767
      %6939 = vst.msk [vmem:[#allocation2 + $0xd8] sm:$0xff] %vm171, %v6905
      %6940 = vst.msk [vmem:[#allocation2 + $0xe0] sm:$0xff] %vm171, %v6890
      %6941 = vst.msk [vmem:[#allocation2 + $0xe8] sm:$0xff] %vm171, %v6768
      %6942 = vst.msk [vmem:[#allocation2 + $0xf0] sm:$0xff] %vm171, %v6769
      %6943 = vst.msk [vmem:[#allocation2 + $0xf8] sm:$0xff] %vm171, %v6906
      %6944 = vst.msk [vmem:[#allocation2 + $0x100] sm:$0xff] %vm171, %v6891
      %6945 = vst.msk [vmem:[#allocation2 + $0x108] sm:$0xff] %vm171, %v6770
      %6946 = vst.msk [vmem:[#allocation2 + $0x110] sm:$0xff] %vm171, %v6771
      %6947 = vst.msk [vmem:[#allocation2 + $0x118] sm:$0xff] %vm171, %v6907
      %6948 = vst.msk [vmem:[#allocation2 + $0x120] sm:$0xff] %vm171, %v6892
      %6949 = vst.msk [vmem:[#allocation2 + $0x128] sm:$0xff] %vm171, %v6772
      %6950 = vst.msk [vmem:[#allocation2 + $0x130] sm:$0xff] %vm171, %v6773
      %6951 = vst.msk [vmem:[#allocation2 + $0x138] sm:$0xff] %vm171, %v6908
      %6952 = vst.msk [vmem:[#allocation2 + $0x140] sm:$0xff] %vm171, %v6893
      %6953 = vst.msk [vmem:[#allocation2 + $0x148] sm:$0xff] %vm171, %v6774
      %6954 = vst.msk [vmem:[#allocation2 + $0x150] sm:$0xff] %vm171, %v6775
      %6955 = vst.msk [vmem:[#allocation2 + $0x158] sm:$0xff] %vm171, %v6909
      %6956 = vst.msk [vmem:[#allocation2 + $0x160] sm:$0xff] %vm171, %v6894
      %6957 = vst.msk [vmem:[#allocation2 + $0x168] sm:$0xff] %vm171, %v6776
      %6958 = vst.msk [vmem:[#allocation2 + $0x170] sm:$0xff] %vm171, %v6777
      %6959 = vst.msk [vmem:[#allocation2 + $0x178] sm:$0xff] %vm171, %v6910
      %6960 = vst.msk [vmem:[#allocation2 + $0x180] sm:$0xff] %vm171, %v6895
      %6961 = vst.msk [vmem:[#allocation2 + $0x188] sm:$0xff] %vm171, %v6778
      %6962 = vst.msk [vmem:[#allocation2 + $0x190] sm:$0xff] %vm171, %v6779
      %6963 = vst.msk [vmem:[#allocation2 + $0x198] sm:$0xff] %vm171, %v6911
      %6964 = vst.msk [vmem:[#allocation2 + $0x1a0] sm:$0xff] %vm171, %v6896
      %6965 = vst.msk [vmem:[#allocation2 + $0x1a8] sm:$0xff] %vm171, %v6780
      %6966 = vst.msk [vmem:[#allocation2 + $0x1b0] sm:$0xff] %vm171, %v6781
      %6967 = vst.msk [vmem:[#allocation2 + $0x1b8] sm:$0xff] %vm171, %v6912
      %6968 = vst.msk [vmem:[#allocation2 + $0x1c0] sm:$0xff] %vm171, %v6897
      %6969 = vst.msk [vmem:[#allocation2 + $0x1c8] sm:$0xff] %vm171, %v6782
      %6970 = vst.msk [vmem:[#allocation2 + $0x1d0] sm:$0xff] %vm171, %v6783
      %6971 = vst.msk [vmem:[#allocation2 + $0x1d8] sm:$0xff] %vm171, %v6913
      %6972 = vst.msk [vmem:[#allocation2 + $0x1e0] sm:$0xff] %vm171, %v6898
      %6973 = vst.msk [vmem:[#allocation2 + $0x1e8] sm:$0xff] %vm171, %v6784
      %6974 = vst.msk [vmem:[#allocation2 + $0x1f0] sm:$0xff] %vm171, %v6785
      %6975 = vst.msk [vmem:[#allocation2 + $0x1f8] sm:$0xff] %vm171, %v6914
      %6976 = vst.msk [vmem:[#allocation2 + $0x200] sm:$0xff] %vm171, %v6899
      %6977 = vst.msk [vmem:[#allocation2 + $0x208] sm:$0xff] %vm171, %v6786
      %6978 = vst.msk [vmem:[#allocation2 + $0x210] sm:$0xff] %vm171, %v6787
      %6979 = vst.msk [vmem:[#allocation2 + $0x218] sm:$0xff] %vm171, %v6915
      %v6980 = vld [vmem:[#allocation2 + $0x40] sm:$0xff]
      %v6981 = vld [vmem:[#allocation2 + $0x48] sm:$0xff]
      %v6982 = vld [vmem:[#allocation2 + $0x50] sm:$0xff]
      %v6983 = vld [vmem:[#allocation2 + $0x58] sm:$0xff]
      %6984 = vst.msk [vmem:[#allocation2] sm:$0xff] %vm171, %v6980
      %6985 = vst.msk [vmem:[#allocation2 + $0x8] sm:$0xff] %vm171, %v6981
      %6986 = vst.msk [vmem:[#allocation2 + $0x10] sm:$0xff] %vm171, %v6982
      %6987 = vst.msk [vmem:[#allocation2 + $0x18] sm:$0xff] %vm171, %v6983
      %v6988 = vld [vmem:[#allocation2 + $0x1e0] sm:$0xff]
      %v6989 = vld [vmem:[#allocation2 + $0x1e8] sm:$0xff]
      %v6990 = vld [vmem:[#allocation2 + $0x1f0] sm:$0xff]
      %v6991 = vld [vmem:[#allocation2 + $0x1f8] sm:$0xff]
      %6992 = vst.msk [vmem:[#allocation2 + $0x220] sm:$0xff] %vm171, %v6988
      %6993 = vst.msk [vmem:[#allocation2 + $0x228] sm:$0xff] %vm171, %v6989
      %6994 = vst.msk [vmem:[#allocation2 + $0x230] sm:$0xff] %vm171, %v6990
      %6995 = vst.msk [vmem:[#allocation2 + $0x238] sm:$0xff] %vm171, %v6991
      %v6996 = vld [vmem:[#allocation2 + $0x7] sm:$0xff]
      %v6997 = vld [vmem:[#allocation2 + $0xf] sm:$0xff]
      %v6998 = vld [vmem:[#allocation2 + $0x17] sm:$0xff]
      %v6999 = vld [vmem:[#allocation2 + $0x1f] sm:$0xff]
      %v7000 = vld [vmem:[#allocation2 + $0x27] sm:$0xff]
      %v7001 = vld [vmem:[#allocation2 + $0x2f] sm:$0xff]
      %v7002 = vld [vmem:[#allocation2 + $0x37] sm:$0xff]
      %v7003 = vld [vmem:[#allocation2 + $0x3f] sm:$0xff]
      %v7004 = vld [vmem:[#allocation2 + $0x47] sm:$0xff]
      %v7005 = vld [vmem:[#allocation2 + $0x4f] sm:$0xff]
      %v7006 = vld [vmem:[#allocation2 + $0x57] sm:$0xff]
      %v7007 = vld [vmem:[#allocation2 + $0x5f] sm:$0xff]
      %v7008 = vld [vmem:[#allocation2 + $0x67] sm:$0xff]
      %v7009 = vld [vmem:[#allocation2 + $0x6f] sm:$0xff]
      %v7010 = vld [vmem:[#allocation2 + $0x77] sm:$0xff]
      %v7011 = vld [vmem:[#allocation2 + $0x7f] sm:$0xff]
      %v7012 = vld [vmem:[#allocation2 + $0x87] sm:$0xff]
      %v7013 = vld [vmem:[#allocation2 + $0x8f] sm:$0xff]
      %v7014 = vld [vmem:[#allocation2 + $0x97] sm:$0xff]
      %v7015 = vld [vmem:[#allocation2 + $0x9f] sm:$0xff]
      %v7016 = vld [vmem:[#allocation2 + $0xa7] sm:$0xff]
      %v7017 = vld [vmem:[#allocation2 + $0xaf] sm:$0xff]
      %v7018 = vld [vmem:[#allocation2 + $0xb7] sm:$0xff]
      %v7019 = vld [vmem:[#allocation2 + $0xbf] sm:$0xff]
      %v7020 = vld [vmem:[#allocation2 + $0xc7] sm:$0xff]
      %v7021 = vld [vmem:[#allocation2 + $0xcf] sm:$0xff]
      %v7022 = vld [vmem:[#allocation2 + $0xd7] sm:$0xff]
      %v7023 = vld [vmem:[#allocation2 + $0xdf] sm:$0xff]
      %v7024 = vld [vmem:[#allocation2 + $0xe7] sm:$0xff]
      %v7025 = vld [vmem:[#allocation2 + $0xef] sm:$0xff]
      %v7026 = vld [vmem:[#allocation2 + $0xf7] sm:$0xff]
      %v7027 = vld [vmem:[#allocation2 + $0xff] sm:$0xff]
      %v7028 = vld [vmem:[#allocation2 + $0x107] sm:$0xff]
      %v7029 = vld [vmem:[#allocation2 + $0x10f] sm:$0xff]
      %v7030 = vld [vmem:[#allocation2 + $0x117] sm:$0xff]
      %v7031 = vld [vmem:[#allocation2 + $0x11f] sm:$0xff]
      %v7032 = vld [vmem:[#allocation2 + $0x127] sm:$0xff]
      %v7033 = vld [vmem:[#allocation2 + $0x12f] sm:$0xff]
      %v7034 = vld [vmem:[#allocation2 + $0x137] sm:$0xff]
      %v7035 = vld [vmem:[#allocation2 + $0x13f] sm:$0xff]
      %v7036 = vld [vmem:[#allocation2 + $0x147] sm:$0xff]
      %v7037 = vld [vmem:[#allocation2 + $0x14f] sm:$0xff]
      %v7038 = vld [vmem:[#allocation2 + $0x157] sm:$0xff]
      %v7039 = vld [vmem:[#allocation2 + $0x15f] sm:$0xff]
      %v7040 = vld [vmem:[#allocation2 + $0x167] sm:$0xff]
      %v7041 = vld [vmem:[#allocation2 + $0x16f] sm:$0xff]
      %v7042 = vld [vmem:[#allocation2 + $0x177] sm:$0xff]
      %v7043 = vld [vmem:[#allocation2 + $0x17f] sm:$0xff]
      %v7044 = vld [vmem:[#allocation2 + $0x187] sm:$0xff]
      %v7045 = vld [vmem:[#allocation2 + $0x18f] sm:$0xff]
      %v7046 = vld [vmem:[#allocation2 + $0x197] sm:$0xff]
      %v7047 = vld [vmem:[#allocation2 + $0x19f] sm:$0xff]
      %v7048 = vld [vmem:[#allocation2 + $0x1a7] sm:$0xff]
      %v7049 = vld [vmem:[#allocation2 + $0x1af] sm:$0xff]
      %v7050 = vld [vmem:[#allocation2 + $0x1b7] sm:$0xff]
      %v7051 = vld [vmem:[#allocation2 + $0x1bf] sm:$0xff]
      %v7052 = vld [vmem:[#allocation2 + $0x1c7] sm:$0xff]
      %v7053 = vld [vmem:[#allocation2 + $0x1cf] sm:$0xff]
      %v7054 = vld [vmem:[#allocation2 + $0x1d7] sm:$0xff]
      %v7055 = vld [vmem:[#allocation2 + $0x1df] sm:$0xff]
      %v7056 = vld [vmem:[#allocation2 + $0x1e7] sm:$0xff]
      %v7057 = vld [vmem:[#allocation2 + $0x1ef] sm:$0xff]
      %v7058 = vld [vmem:[#allocation2 + $0x1f7] sm:$0xff]
      %v7059 = vld [vmem:[#allocation2 + $0x1ff] sm:$0xff]
      %v7060 = vld [vmem:[%s2] sm:$0xf]
      %v7061 = vld [vmem:[#allocation2 + $0x8] sm:$0xff]
      %v7062 = vld [vmem:[#allocation2 + $0x10] sm:$0xff]
      %v7063 = vld [vmem:[#allocation2 + $0x18] sm:$0xff]
      %v7064 = vld [vmem:[#allocation2 + $0x20] sm:$0xff]
      %v7065 = vld [vmem:[#allocation2 + $0x28] sm:$0xff]
      %v7066 = vld [vmem:[#allocation2 + $0x30] sm:$0xff]
      %v7067 = vld [vmem:[#allocation2 + $0x38] sm:$0xff]
      %v7068 = vld [vmem:[#allocation2 + $0x40] sm:$0xff]
      %v7069 = vld [vmem:[#allocation2 + $0x48] sm:$0xff]
      %v7070 = vld [vmem:[#allocation2 + $0x50] sm:$0xff]
      %v7071 = vld [vmem:[#allocation2 + $0x58] sm:$0xff]
      %v7072 = vld [vmem:[#allocation2 + $0x60] sm:$0xff]
      %v7073 = vld [vmem:[#allocation2 + $0x68] sm:$0xff]
      %v7074 = vld [vmem:[#allocation2 + $0x70] sm:$0xff]
      %v7075 = vld [vmem:[#allocation2 + $0x78] sm:$0xff]
      %v7076 = vld [vmem:[#allocation2 + $0x80] sm:$0xff]
      %v7077 = vld [vmem:[#allocation2 + $0x88] sm:$0xff]
      %v7078 = vld [vmem:[#allocation2 + $0x90] sm:$0xff]
      %v7079 = vld [vmem:[#allocation2 + $0x98] sm:$0xff]
      %v7080 = vld [vmem:[#allocation2 + $0xa0] sm:$0xff]
      %v7081 = vld [vmem:[#allocation2 + $0xa8] sm:$0xff]
      %v7082 = vld [vmem:[#allocation2 + $0xb0] sm:$0xff]
      %v7083 = vld [vmem:[#allocation2 + $0xb8] sm:$0xff]
      %v7084 = vld [vmem:[#allocation2 + $0xc0] sm:$0xff]
      %v7085 = vld [vmem:[#allocation2 + $0xc8] sm:$0xff]
      %v7086 = vld [vmem:[#allocation2 + $0xd0] sm:$0xff]
      %v7087 = vld [vmem:[#allocation2 + $0xd8] sm:$0xff]
      %v7088 = vld [vmem:[#allocation2 + $0xe0] sm:$0xff]
      %v7089 = vld [vmem:[#allocation2 + $0xe8] sm:$0xff]
      %v7090 = vld [vmem:[#allocation2 + $0xf0] sm:$0xff]
      %v7091 = vld [vmem:[#allocation2 + $0xf8] sm:$0xff]
      %v7092 = vld [vmem:[#allocation2 + $0x100] sm:$0xff]
      %v7093 = vld [vmem:[#allocation2 + $0x108] sm:$0xff]
      %v7094 = vld [vmem:[#allocation2 + $0x110] sm:$0xff]
      %v7095 = vld [vmem:[#allocation2 + $0x118] sm:$0xff]
      %v7096 = vld [vmem:[#allocation2 + $0x120] sm:$0xff]
      %v7097 = vld [vmem:[#allocation2 + $0x128] sm:$0xff]
      %v7098 = vld [vmem:[#allocation2 + $0x130] sm:$0xff]
      %v7099 = vld [vmem:[#allocation2 + $0x138] sm:$0xff]
      %v7100 = vld [vmem:[#allocation2 + $0x140] sm:$0xff]
      %v7101 = vld [vmem:[#allocation2 + $0x148] sm:$0xff]
      %v7102 = vld [vmem:[#allocation2 + $0x150] sm:$0xff]
      %v7103 = vld [vmem:[#allocation2 + $0x158] sm:$0xff]
      %v7104 = vld [vmem:[#allocation2 + $0x160] sm:$0xff]
      %v7105 = vld [vmem:[#allocation2 + $0x168] sm:$0xff]
      %v7106 = vld [vmem:[#allocation2 + $0x170] sm:$0xff]
      %v7107 = vld [vmem:[#allocation2 + $0x178] sm:$0xff]
      %v7108 = vld [vmem:[#allocation2 + $0x180] sm:$0xff]
      %v7109 = vld [vmem:[#allocation2 + $0x188] sm:$0xff]
      %v7110 = vld [vmem:[#allocation2 + $0x190] sm:$0xff]
      %v7111 = vld [vmem:[#allocation2 + $0x198] sm:$0xff]
      %v7112 = vld [vmem:[#allocation2 + $0x1a0] sm:$0xff]
      %v7113 = vld [vmem:[#allocation2 + $0x1a8] sm:$0xff]
      %v7114 = vld [vmem:[#allocation2 + $0x1b0] sm:$0xff]
      %v7115 = vld [vmem:[#allocation2 + $0x1b8] sm:$0xff]
      %v7116 = vld [vmem:[#allocation2 + $0x1c0] sm:$0xff]
      %v7117 = vld [vmem:[#allocation2 + $0x1c8] sm:$0xff]
      %v7118 = vld [vmem:[#allocation2 + $0x1d0] sm:$0xff]
      %v7119 = vld [vmem:[#allocation2 + $0x1d8] sm:$0xff]
      %v7120 = vld [vmem:[#allocation2 + $0x1e0] sm:$0xff]
      %v7121 = vld [vmem:[#allocation2 + $0x1e8] sm:$0xff]
      %v7122 = vld [vmem:[#allocation2 + $0x1f0] sm:$0xff]
      %v7123 = vld [vmem:[#allocation2 + $0x1f8] sm:$0xff]
      %v7124 = vld [vmem:[#allocation2 + $0x200] sm:$0xff]
      %s7125 = scalar_lea.vmem %s2, 4
      %v7126 = vld [vmem:[%s7125] sm:$0xf]
      %v7128 = vsel %vm171, %v7061, 0
      %v7131 = vsel %vm171, %v7062, 0
      %v7134 = vsel %vm171, %v7063, 0
      %v7137 = vsel %vm171, %v7064, 0
      %v7140 = vsel %vm171, %v7065, 0
      %v7143 = vsel %vm171, %v7066, 0
      %v7146 = vsel %vm171, %v7067, 0
      %v7149 = vsel %vm171, %v7068, 0
      %v7152 = vsel %vm171, %v7069, 0
      %v7155 = vsel %vm171, %v7070, 0
      %v7158 = vsel %vm171, %v7071, 0
      %v7161 = vsel %vm171, %v7072, 0
      %v7164 = vsel %vm171, %v7073, 0
      %v7167 = vsel %vm171, %v7074, 0
      %v7170 = vsel %vm171, %v7075, 0
      %v7173 = vsel %vm171, %v7076, 0
      %v7176 = vsel %vm171, %v7077, 0
      %v7179 = vsel %vm171, %v7078, 0
      %v7182 = vsel %vm171, %v7079, 0
      %v7185 = vsel %vm171, %v7080, 0
      %v7188 = vsel %vm171, %v7081, 0
      %v7191 = vsel %vm171, %v7082, 0
      %v7194 = vsel %vm171, %v7083, 0
      %v7197 = vsel %vm171, %v7084, 0
      %v7200 = vsel %vm171, %v7085, 0
      %v7203 = vsel %vm171, %v7086, 0
      %v7206 = vsel %vm171, %v7087, 0
      %v7209 = vsel %vm171, %v7088, 0
      %v7212 = vsel %vm171, %v7089, 0
      %v7215 = vsel %vm171, %v7090, 0
      %v7218 = vsel %vm171, %v7091, 0
      %v7221 = vsel %vm171, %v7092, 0
      %v7224 = vsel %vm171, %v7093, 0
      %v7227 = vsel %vm171, %v7094, 0
      %v7230 = vsel %vm171, %v7095, 0
      %v7233 = vsel %vm171, %v7096, 0
      %v7236 = vsel %vm171, %v7097, 0
      %v7239 = vsel %vm171, %v7098, 0
      %v7242 = vsel %vm171, %v7099, 0
      %v7245 = vsel %vm171, %v7100, 0
      %v7248 = vsel %vm171, %v7101, 0
      %v7251 = vsel %vm171, %v7102, 0
      %v7254 = vsel %vm171, %v7103, 0
      %v7257 = vsel %vm171, %v7104, 0
      %v7260 = vsel %vm171, %v7105, 0
      %v7263 = vsel %vm171, %v7106, 0
      %v7266 = vsel %vm171, %v7107, 0
      %v7269 = vsel %vm171, %v7108, 0
      %v7272 = vsel %vm171, %v7109, 0
      %v7275 = vsel %vm171, %v7110, 0
      %v7278 = vsel %vm171, %v7111, 0
      %v7281 = vsel %vm171, %v7112, 0
      %v7284 = vsel %vm171, %v7113, 0
      %v7287 = vsel %vm171, %v7114, 0
      %v7290 = vsel %vm171, %v7115, 0
      %v7293 = vsel %vm171, %v7116, 0
      %v7296 = vsel %vm171, %v7117, 0
      %v7299 = vsel %vm171, %v7118, 0
      %v7302 = vsel %vm171, %v7119, 0
      %v7305 = vsel %vm171, %v7120, 0
      %v7308 = vsel %vm171, %v7121, 0
      %v7311 = vsel %vm171, %v7122, 0
      %v7314 = vsel %vm171, %v7123, 0
      %v7317 = vsel %vm171, %v7124, 0
      %v7320 = vsel %vm741, %v7126, 0
      %7322 = vmatpush.msra.mxu0 0.0
      %7323 = vmatpush.msra.mxu0 0.0
      %7324 = vmatpush.msra.mxu0 0.0
      %7325 = vmatpush.msra.mxu0 0.0
      %7326 = vmatpush.msra.mxu0 0.0
      %7327 = vmatpush.msra.mxu0 0.0
      %7328 = vmatpush.msra.mxu0 0.0
      %7329 = vmatpush.msra.mxu0 0.0
      %7330 = vmatpush.msra.mxu0 0.0
      %7331 = vmatpush.msra.mxu0 0.0
      %7332 = vmatpush.msra.mxu0 0.0
      %7333 = vmatpush.msra.mxu0 0.0
      %7334 = vmatpush.msra.mxu0 0.0
      %7335 = vmatpush.msra.mxu0 0.0
      %7336 = vmatpush.msra.mxu0 0.0
      %7337 = vmatpush.msra.mxu0 %v7320
      %7338 = vmatmul.f32.gmra.mxu0 %v7128
      %v7339 = vpop.f32.mrf.mxu0
      %v7340 = vadd.f32 0.0, %v7339
      %7341 = vmatmul.f32.gmra.mxu0 %v7131
      %v7342 = vpop.f32.mrf.mxu0
      %v7343 = vadd.f32 0.0, %v7342
      %7344 = vmatmul.f32.gmra.mxu0 %v7134
      %v7345 = vpop.f32.mrf.mxu0
      %v7346 = vadd.f32 0.0, %v7345
      %7347 = vmatmul.f32.gmra.mxu0 %v7137
      %v7348 = vpop.f32.mrf.mxu0
      %v7349 = vadd.f32 0.0, %v7348
      %7350 = vmatmul.f32.gmra.mxu0 %v7140
      %v7351 = vpop.f32.mrf.mxu0
      %v7352 = vadd.f32 0.0, %v7351
      %7353 = vmatmul.f32.gmra.mxu0 %v7143
      %v7354 = vpop.f32.mrf.mxu0
      %v7355 = vadd.f32 0.0, %v7354
      %7356 = vmatmul.f32.gmra.mxu0 %v7146
      %v7357 = vpop.f32.mrf.mxu0
      %v7358 = vadd.f32 0.0, %v7357
      %7359 = vmatmul.f32.gmra.mxu0 %v7149
      %v7360 = vpop.f32.mrf.mxu0
      %v7361 = vadd.f32 0.0, %v7360
      %7362 = vmatmul.f32.gmra.mxu0 %v7152
      %v7363 = vpop.f32.mrf.mxu0
      %v7364 = vadd.f32 0.0, %v7363
      %7365 = vmatmul.f32.gmra.mxu0 %v7155
      %v7366 = vpop.f32.mrf.mxu0
      %v7367 = vadd.f32 0.0, %v7366
      %7368 = vmatmul.f32.gmra.mxu0 %v7158
      %v7369 = vpop.f32.mrf.mxu0
      %v7370 = vadd.f32 0.0, %v7369
      %7371 = vmatmul.f32.gmra.mxu0 %v7161
      %v7372 = vpop.f32.mrf.mxu0
      %v7373 = vadd.f32 0.0, %v7372
      %7374 = vmatmul.f32.gmra.mxu0 %v7164
      %v7375 = vpop.f32.mrf.mxu0
      %v7376 = vadd.f32 0.0, %v7375
      %7377 = vmatmul.f32.gmra.mxu0 %v7167
      %v7378 = vpop.f32.mrf.mxu0
      %v7379 = vadd.f32 0.0, %v7378
      %7380 = vmatmul.f32.gmra.mxu0 %v7170
      %v7381 = vpop.f32.mrf.mxu0
      %v7382 = vadd.f32 0.0, %v7381
      %7383 = vmatmul.f32.gmra.mxu0 %v7173
      %v7384 = vpop.f32.mrf.mxu0
      %v7385 = vadd.f32 0.0, %v7384
      %7386 = vmatmul.f32.gmra.mxu0 %v7176
      %v7387 = vpop.f32.mrf.mxu0
      %v7388 = vadd.f32 0.0, %v7387
      %7389 = vmatmul.f32.gmra.mxu0 %v7179
      %v7390 = vpop.f32.mrf.mxu0
      %v7391 = vadd.f32 0.0, %v7390
      %7392 = vmatmul.f32.gmra.mxu0 %v7182
      %v7393 = vpop.f32.mrf.mxu0
      %v7394 = vadd.f32 0.0, %v7393
      %7395 = vmatmul.f32.gmra.mxu0 %v7185
      %v7396 = vpop.f32.mrf.mxu0
      %v7397 = vadd.f32 0.0, %v7396
      %7398 = vmatmul.f32.gmra.mxu0 %v7188
      %v7399 = vpop.f32.mrf.mxu0
      %v7400 = vadd.f32 0.0, %v7399
      %7401 = vmatmul.f32.gmra.mxu0 %v7191
      %v7402 = vpop.f32.mrf.mxu0
      %v7403 = vadd.f32 0.0, %v7402
      %7404 = vmatmul.f32.gmra.mxu0 %v7194
      %v7405 = vpop.f32.mrf.mxu0
      %v7406 = vadd.f32 0.0, %v7405
      %7407 = vmatmul.f32.gmra.mxu0 %v7197
      %v7408 = vpop.f32.mrf.mxu0
      %v7409 = vadd.f32 0.0, %v7408
      %7410 = vmatmul.f32.gmra.mxu0 %v7200
      %v7411 = vpop.f32.mrf.mxu0
      %v7412 = vadd.f32 0.0, %v7411
      %7413 = vmatmul.f32.gmra.mxu0 %v7203
      %v7414 = vpop.f32.mrf.mxu0
      %v7415 = vadd.f32 0.0, %v7414
      %7416 = vmatmul.f32.gmra.mxu0 %v7206
      %v7417 = vpop.f32.mrf.mxu0
      %v7418 = vadd.f32 0.0, %v7417
      %7419 = vmatmul.f32.gmra.mxu0 %v7209
      %v7420 = vpop.f32.mrf.mxu0
      %v7421 = vadd.f32 0.0, %v7420
      %7422 = vmatmul.f32.gmra.mxu0 %v7212
      %v7423 = vpop.f32.mrf.mxu0
      %v7424 = vadd.f32 0.0, %v7423
      %7425 = vmatmul.f32.gmra.mxu0 %v7215
      %v7426 = vpop.f32.mrf.mxu0
      %v7427 = vadd.f32 0.0, %v7426
      %7428 = vmatmul.f32.gmra.mxu0 %v7218
      %v7429 = vpop.f32.mrf.mxu0
      %v7430 = vadd.f32 0.0, %v7429
      %7431 = vmatmul.f32.gmra.mxu0 %v7221
      %v7432 = vpop.f32.mrf.mxu0
      %v7433 = vadd.f32 0.0, %v7432
      %7434 = vmatmul.f32.gmra.mxu0 %v7224
      %v7435 = vpop.f32.mrf.mxu0
      %v7436 = vadd.f32 0.0, %v7435
      %7437 = vmatmul.f32.gmra.mxu0 %v7227
      %v7438 = vpop.f32.mrf.mxu0
      %v7439 = vadd.f32 0.0, %v7438
      %7440 = vmatmul.f32.gmra.mxu0 %v7230
      %v7441 = vpop.f32.mrf.mxu0
      %v7442 = vadd.f32 0.0, %v7441
      %7443 = vmatmul.f32.gmra.mxu0 %v7233
      %v7444 = vpop.f32.mrf.mxu0
      %v7445 = vadd.f32 0.0, %v7444
      %7446 = vmatmul.f32.gmra.mxu0 %v7236
      %v7447 = vpop.f32.mrf.mxu0
      %v7448 = vadd.f32 0.0, %v7447
      %7449 = vmatmul.f32.gmra.mxu0 %v7239
      %v7450 = vpop.f32.mrf.mxu0
      %v7451 = vadd.f32 0.0, %v7450
      %7452 = vmatmul.f32.gmra.mxu0 %v7242
      %v7453 = vpop.f32.mrf.mxu0
      %v7454 = vadd.f32 0.0, %v7453
      %7455 = vmatmul.f32.gmra.mxu0 %v7245
      %v7456 = vpop.f32.mrf.mxu0
      %v7457 = vadd.f32 0.0, %v7456
      %7458 = vmatmul.f32.gmra.mxu0 %v7248
      %v7459 = vpop.f32.mrf.mxu0
      %v7460 = vadd.f32 0.0, %v7459
      %7461 = vmatmul.f32.gmra.mxu0 %v7251
      %v7462 = vpop.f32.mrf.mxu0
      %v7463 = vadd.f32 0.0, %v7462
      %7464 = vmatmul.f32.gmra.mxu0 %v7254
      %v7465 = vpop.f32.mrf.mxu0
      %v7466 = vadd.f32 0.0, %v7465
      %7467 = vmatmul.f32.gmra.mxu0 %v7257
      %v7468 = vpop.f32.mrf.mxu0
      %v7469 = vadd.f32 0.0, %v7468
      %7470 = vmatmul.f32.gmra.mxu0 %v7260
      %v7471 = vpop.f32.mrf.mxu0
      %v7472 = vadd.f32 0.0, %v7471
      %7473 = vmatmul.f32.gmra.mxu0 %v7263
      %v7474 = vpop.f32.mrf.mxu0
      %v7475 = vadd.f32 0.0, %v7474
      %7476 = vmatmul.f32.gmra.mxu0 %v7266
      %v7477 = vpop.f32.mrf.mxu0
      %v7478 = vadd.f32 0.0, %v7477
      %7479 = vmatmul.f32.gmra.mxu0 %v7269
      %v7480 = vpop.f32.mrf.mxu0
      %v7481 = vadd.f32 0.0, %v7480
      %7482 = vmatmul.f32.gmra.mxu0 %v7272
      %v7483 = vpop.f32.mrf.mxu0
      %v7484 = vadd.f32 0.0, %v7483
      %7485 = vmatmul.f32.gmra.mxu0 %v7275
      %v7486 = vpop.f32.mrf.mxu0
      %v7487 = vadd.f32 0.0, %v7486
      %7488 = vmatmul.f32.gmra.mxu0 %v7278
      %v7489 = vpop.f32.mrf.mxu0
      %v7490 = vadd.f32 0.0, %v7489
      %7491 = vmatmul.f32.gmra.mxu0 %v7281
      %v7492 = vpop.f32.mrf.mxu0
      %v7493 = vadd.f32 0.0, %v7492
      %7494 = vmatmul.f32.gmra.mxu0 %v7284
      %v7495 = vpop.f32.mrf.mxu0
      %v7496 = vadd.f32 0.0, %v7495
      %7497 = vmatmul.f32.gmra.mxu0 %v7287
      %v7498 = vpop.f32.mrf.mxu0
      %v7499 = vadd.f32 0.0, %v7498
      %7500 = vmatmul.f32.gmra.mxu0 %v7290
      %v7501 = vpop.f32.mrf.mxu0
      %v7502 = vadd.f32 0.0, %v7501
      %7503 = vmatmul.f32.gmra.mxu0 %v7293
      %v7504 = vpop.f32.mrf.mxu0
      %v7505 = vadd.f32 0.0, %v7504
      %7506 = vmatmul.f32.gmra.mxu0 %v7296
      %v7507 = vpop.f32.mrf.mxu0
      %v7508 = vadd.f32 0.0, %v7507
      %7509 = vmatmul.f32.gmra.mxu0 %v7299
      %v7510 = vpop.f32.mrf.mxu0
      %v7511 = vadd.f32 0.0, %v7510
      %7512 = vmatmul.f32.gmra.mxu0 %v7302
      %v7513 = vpop.f32.mrf.mxu0
      %v7514 = vadd.f32 0.0, %v7513
      %7515 = vmatmul.f32.gmra.mxu0 %v7305
      %v7516 = vpop.f32.mrf.mxu0
      %v7517 = vadd.f32 0.0, %v7516
      %7518 = vmatmul.f32.gmra.mxu0 %v7308
      %v7519 = vpop.f32.mrf.mxu0
      %v7520 = vadd.f32 0.0, %v7519
      %7521 = vmatmul.f32.gmra.mxu0 %v7311
      %v7522 = vpop.f32.mrf.mxu0
      %v7523 = vadd.f32 0.0, %v7522
      %7524 = vmatmul.f32.gmra.mxu0 %v7314
      %v7525 = vpop.f32.mrf.mxu0
      %v7526 = vadd.f32 0.0, %v7525
      %7527 = vmatmul.f32.gmra.mxu0 %v7317
      %v7528 = vpop.f32.mrf.mxu0
      %v7529 = vadd.f32 0.0, %v7528
      %7530 = vdwg.mxu0
      %v7532 = vsel %vm171, %v6996, 0
      %v7535 = vsel %vm171, %v6997, 0
      %v7538 = vsel %vm171, %v6998, 0
      %v7541 = vsel %vm171, %v6999, 0
      %v7544 = vsel %vm171, %v7000, 0
      %v7547 = vsel %vm171, %v7001, 0
      %v7550 = vsel %vm171, %v7002, 0
      %v7553 = vsel %vm171, %v7003, 0
      %v7556 = vsel %vm171, %v7004, 0
      %v7559 = vsel %vm171, %v7005, 0
      %v7562 = vsel %vm171, %v7006, 0
      %v7565 = vsel %vm171, %v7007, 0
      %v7568 = vsel %vm171, %v7008, 0
      %v7571 = vsel %vm171, %v7009, 0
      %v7574 = vsel %vm171, %v7010, 0
      %v7577 = vsel %vm171, %v7011, 0
      %v7580 = vsel %vm171, %v7012, 0
      %v7583 = vsel %vm171, %v7013, 0
      %v7586 = vsel %vm171, %v7014, 0
      %v7589 = vsel %vm171, %v7015, 0
      %v7592 = vsel %vm171, %v7016, 0
      %v7595 = vsel %vm171, %v7017, 0
      %v7598 = vsel %vm171, %v7018, 0
      %v7601 = vsel %vm171, %v7019, 0
      %v7604 = vsel %vm171, %v7020, 0
      %v7607 = vsel %vm171, %v7021, 0
      %v7610 = vsel %vm171, %v7022, 0
      %v7613 = vsel %vm171, %v7023, 0
      %v7616 = vsel %vm171, %v7024, 0
      %v7619 = vsel %vm171, %v7025, 0
      %v7622 = vsel %vm171, %v7026, 0
      %v7625 = vsel %vm171, %v7027, 0
      %v7628 = vsel %vm171, %v7028, 0
      %v7631 = vsel %vm171, %v7029, 0
      %v7634 = vsel %vm171, %v7030, 0
      %v7637 = vsel %vm171, %v7031, 0
      %v7640 = vsel %vm171, %v7032, 0
      %v7643 = vsel %vm171, %v7033, 0
      %v7646 = vsel %vm171, %v7034, 0
      %v7649 = vsel %vm171, %v7035, 0
      %v7652 = vsel %vm171, %v7036, 0
      %v7655 = vsel %vm171, %v7037, 0
      %v7658 = vsel %vm171, %v7038, 0
      %v7661 = vsel %vm171, %v7039, 0
      %v7664 = vsel %vm171, %v7040, 0
      %v7667 = vsel %vm171, %v7041, 0
      %v7670 = vsel %vm171, %v7042, 0
      %v7673 = vsel %vm171, %v7043, 0
      %v7676 = vsel %vm171, %v7044, 0
      %v7679 = vsel %vm171, %v7045, 0
      %v7682 = vsel %vm171, %v7046, 0
      %v7685 = vsel %vm171, %v7047, 0
      %v7688 = vsel %vm171, %v7048, 0
      %v7691 = vsel %vm171, %v7049, 0
      %v7694 = vsel %vm171, %v7050, 0
      %v7697 = vsel %vm171, %v7051, 0
      %v7700 = vsel %vm171, %v7052, 0
      %v7703 = vsel %vm171, %v7053, 0
      %v7706 = vsel %vm171, %v7054, 0
      %v7709 = vsel %vm171, %v7055, 0
      %v7712 = vsel %vm171, %v7056, 0
      %v7715 = vsel %vm171, %v7057, 0
      %v7718 = vsel %vm171, %v7058, 0
      %v7721 = vsel %vm171, %v7059, 0
      %v7724 = vsel %vm741, %v7060, 0
      %7726 = vmatpush.msra.mxu0 0.0
      %7727 = vmatpush.msra.mxu0 0.0
      %7728 = vmatpush.msra.mxu0 0.0
      %7729 = vmatpush.msra.mxu0 0.0
      %7730 = vmatpush.msra.mxu0 0.0
      %7731 = vmatpush.msra.mxu0 0.0
      %7732 = vmatpush.msra.mxu0 0.0
      %7733 = vmatpush.msra.mxu0 0.0
      %7734 = vmatpush.msra.mxu0 0.0
      %7735 = vmatpush.msra.mxu0 0.0
      %7736 = vmatpush.msra.mxu0 0.0
      %7737 = vmatpush.msra.mxu0 0.0
      %7738 = vmatpush.msra.mxu0 0.0
      %7739 = vmatpush.msra.mxu0 0.0
      %7740 = vmatpush.msra.mxu0 0.0
      %7741 = vmatpush.msra.mxu0 %v7724
      %7742 = vmatmul.f32.gmra.mxu0 %v7532
      %v7743 = vpop.f32.mrf.mxu0
      %v7744 = vadd.f32 %v7340, %v7743
      %7745 = vmatmul.f32.gmra.mxu0 %v7535
      %v7746 = vpop.f32.mrf.mxu0
      %v7747 = vadd.f32 %v7343, %v7746
      %7748 = vmatmul.f32.gmra.mxu0 %v7538
      %v7749 = vpop.f32.mrf.mxu0
      %v7750 = vadd.f32 %v7346, %v7749
      %7751 = vmatmul.f32.gmra.mxu0 %v7541
      %v7752 = vpop.f32.mrf.mxu0
      %v7753 = vadd.f32 %v7349, %v7752
      %7754 = vmatmul.f32.gmra.mxu0 %v7544
      %v7755 = vpop.f32.mrf.mxu0
      %v7756 = vadd.f32 %v7352, %v7755
      %7757 = vmatmul.f32.gmra.mxu0 %v7547
      %v7758 = vpop.f32.mrf.mxu0
      %v7759 = vadd.f32 %v7355, %v7758
      %7760 = vmatmul.f32.gmra.mxu0 %v7550
      %v7761 = vpop.f32.mrf.mxu0
      %v7762 = vadd.f32 %v7358, %v7761
      %7763 = vmatmul.f32.gmra.mxu0 %v7553
      %v7764 = vpop.f32.mrf.mxu0
      %v7765 = vadd.f32 %v7361, %v7764
      %7766 = vmatmul.f32.gmra.mxu0 %v7556
      %v7767 = vpop.f32.mrf.mxu0
      %v7768 = vadd.f32 %v7364, %v7767
      %7769 = vmatmul.f32.gmra.mxu0 %v7559
      %v7770 = vpop.f32.mrf.mxu0
      %v7771 = vadd.f32 %v7367, %v7770
      %7772 = vmatmul.f32.gmra.mxu0 %v7562
      %v7773 = vpop.f32.mrf.mxu0
      %v7774 = vadd.f32 %v7370, %v7773
      %7775 = vmatmul.f32.gmra.mxu0 %v7565
      %v7776 = vpop.f32.mrf.mxu0
      %v7777 = vadd.f32 %v7373, %v7776
      %7778 = vmatmul.f32.gmra.mxu0 %v7568
      %v7779 = vpop.f32.mrf.mxu0
      %v7780 = vadd.f32 %v7376, %v7779
      %7781 = vmatmul.f32.gmra.mxu0 %v7571
      %v7782 = vpop.f32.mrf.mxu0
      %v7783 = vadd.f32 %v7379, %v7782
      %7784 = vmatmul.f32.gmra.mxu0 %v7574
      %v7785 = vpop.f32.mrf.mxu0
      %v7786 = vadd.f32 %v7382, %v7785
      %7787 = vmatmul.f32.gmra.mxu0 %v7577
      %v7788 = vpop.f32.mrf.mxu0
      %v7789 = vadd.f32 %v7385, %v7788
      %7790 = vmatmul.f32.gmra.mxu0 %v7580
      %v7791 = vpop.f32.mrf.mxu0
      %v7792 = vadd.f32 %v7388, %v7791
      %7793 = vmatmul.f32.gmra.mxu0 %v7583
      %v7794 = vpop.f32.mrf.mxu0
      %v7795 = vadd.f32 %v7391, %v7794
      %7796 = vmatmul.f32.gmra.mxu0 %v7586
      %v7797 = vpop.f32.mrf.mxu0
      %v7798 = vadd.f32 %v7394, %v7797
      %7799 = vmatmul.f32.gmra.mxu0 %v7589
      %v7800 = vpop.f32.mrf.mxu0
      %v7801 = vadd.f32 %v7397, %v7800
      %7802 = vmatmul.f32.gmra.mxu0 %v7592
      %v7803 = vpop.f32.mrf.mxu0
      %v7804 = vadd.f32 %v7400, %v7803
      %7805 = vmatmul.f32.gmra.mxu0 %v7595
      %v7806 = vpop.f32.mrf.mxu0
      %v7807 = vadd.f32 %v7403, %v7806
      %7808 = vmatmul.f32.gmra.mxu0 %v7598
      %v7809 = vpop.f32.mrf.mxu0
      %v7810 = vadd.f32 %v7406, %v7809
      %7811 = vmatmul.f32.gmra.mxu0 %v7601
      %v7812 = vpop.f32.mrf.mxu0
      %v7813 = vadd.f32 %v7409, %v7812
      %7814 = vmatmul.f32.gmra.mxu0 %v7604
      %v7815 = vpop.f32.mrf.mxu0
      %v7816 = vadd.f32 %v7412, %v7815
      %7817 = vmatmul.f32.gmra.mxu0 %v7607
      %v7818 = vpop.f32.mrf.mxu0
      %v7819 = vadd.f32 %v7415, %v7818
      %7820 = vmatmul.f32.gmra.mxu0 %v7610
      %v7821 = vpop.f32.mrf.mxu0
      %v7822 = vadd.f32 %v7418, %v7821
      %7823 = vmatmul.f32.gmra.mxu0 %v7613
      %v7824 = vpop.f32.mrf.mxu0
      %v7825 = vadd.f32 %v7421, %v7824
      %7826 = vmatmul.f32.gmra.mxu0 %v7616
      %v7827 = vpop.f32.mrf.mxu0
      %v7828 = vadd.f32 %v7424, %v7827
      %7829 = vmatmul.f32.gmra.mxu0 %v7619
      %v7830 = vpop.f32.mrf.mxu0
      %v7831 = vadd.f32 %v7427, %v7830
      %7832 = vmatmul.f32.gmra.mxu0 %v7622
      %v7833 = vpop.f32.mrf.mxu0
      %v7834 = vadd.f32 %v7430, %v7833
      %7835 = vmatmul.f32.gmra.mxu0 %v7625
      %v7836 = vpop.f32.mrf.mxu0
      %v7837 = vadd.f32 %v7433, %v7836
      %7838 = vmatmul.f32.gmra.mxu0 %v7628
      %v7839 = vpop.f32.mrf.mxu0
      %v7840 = vadd.f32 %v7436, %v7839
      %7841 = vmatmul.f32.gmra.mxu0 %v7631
      %v7842 = vpop.f32.mrf.mxu0
      %v7843 = vadd.f32 %v7439, %v7842
      %7844 = vmatmul.f32.gmra.mxu0 %v7634
      %v7845 = vpop.f32.mrf.mxu0
      %v7846 = vadd.f32 %v7442, %v7845
      %7847 = vmatmul.f32.gmra.mxu0 %v7637
      %v7848 = vpop.f32.mrf.mxu0
      %v7849 = vadd.f32 %v7445, %v7848
      %7850 = vmatmul.f32.gmra.mxu0 %v7640
      %v7851 = vpop.f32.mrf.mxu0
      %v7852 = vadd.f32 %v7448, %v7851
      %7853 = vmatmul.f32.gmra.mxu0 %v7643
      %v7854 = vpop.f32.mrf.mxu0
      %v7855 = vadd.f32 %v7451, %v7854
      %7856 = vmatmul.f32.gmra.mxu0 %v7646
      %v7857 = vpop.f32.mrf.mxu0
      %v7858 = vadd.f32 %v7454, %v7857
      %7859 = vmatmul.f32.gmra.mxu0 %v7649
      %v7860 = vpop.f32.mrf.mxu0
      %v7861 = vadd.f32 %v7457, %v7860
      %7862 = vmatmul.f32.gmra.mxu0 %v7652
      %v7863 = vpop.f32.mrf.mxu0
      %v7864 = vadd.f32 %v7460, %v7863
      %7865 = vmatmul.f32.gmra.mxu0 %v7655
      %v7866 = vpop.f32.mrf.mxu0
      %v7867 = vadd.f32 %v7463, %v7866
      %7868 = vmatmul.f32.gmra.mxu0 %v7658
      %v7869 = vpop.f32.mrf.mxu0
      %v7870 = vadd.f32 %v7466, %v7869
      %7871 = vmatmul.f32.gmra.mxu0 %v7661
      %v7872 = vpop.f32.mrf.mxu0
      %v7873 = vadd.f32 %v7469, %v7872
      %7874 = vmatmul.f32.gmra.mxu0 %v7664
      %v7875 = vpop.f32.mrf.mxu0
      %v7876 = vadd.f32 %v7472, %v7875
      %7877 = vmatmul.f32.gmra.mxu0 %v7667
      %v7878 = vpop.f32.mrf.mxu0
      %v7879 = vadd.f32 %v7475, %v7878
      %7880 = vmatmul.f32.gmra.mxu0 %v7670
      %v7881 = vpop.f32.mrf.mxu0
      %v7882 = vadd.f32 %v7478, %v7881
      %7883 = vmatmul.f32.gmra.mxu0 %v7673
      %v7884 = vpop.f32.mrf.mxu0
      %v7885 = vadd.f32 %v7481, %v7884
      %7886 = vmatmul.f32.gmra.mxu0 %v7676
      %v7887 = vpop.f32.mrf.mxu0
      %v7888 = vadd.f32 %v7484, %v7887
      %7889 = vmatmul.f32.gmra.mxu0 %v7679
      %v7890 = vpop.f32.mrf.mxu0
      %v7891 = vadd.f32 %v7487, %v7890
      %7892 = vmatmul.f32.gmra.mxu0 %v7682
      %v7893 = vpop.f32.mrf.mxu0
      %v7894 = vadd.f32 %v7490, %v7893
      %7895 = vmatmul.f32.gmra.mxu0 %v7685
      %v7896 = vpop.f32.mrf.mxu0
      %v7897 = vadd.f32 %v7493, %v7896
      %7898 = vmatmul.f32.gmra.mxu0 %v7688
      %v7899 = vpop.f32.mrf.mxu0
      %v7900 = vadd.f32 %v7496, %v7899
      %7901 = vmatmul.f32.gmra.mxu0 %v7691
      %v7902 = vpop.f32.mrf.mxu0
      %v7903 = vadd.f32 %v7499, %v7902
      %7904 = vmatmul.f32.gmra.mxu0 %v7694
      %v7905 = vpop.f32.mrf.mxu0
      %v7906 = vadd.f32 %v7502, %v7905
      %7907 = vmatmul.f32.gmra.mxu0 %v7697
      %v7908 = vpop.f32.mrf.mxu0
      %v7909 = vadd.f32 %v7505, %v7908
      %7910 = vmatmul.f32.gmra.mxu0 %v7700
      %v7911 = vpop.f32.mrf.mxu0
      %v7912 = vadd.f32 %v7508, %v7911
      %7913 = vmatmul.f32.gmra.mxu0 %v7703
      %v7914 = vpop.f32.mrf.mxu0
      %v7915 = vadd.f32 %v7511, %v7914
      %7916 = vmatmul.f32.gmra.mxu0 %v7706
      %v7917 = vpop.f32.mrf.mxu0
      %v7918 = vadd.f32 %v7514, %v7917
      %7919 = vmatmul.f32.gmra.mxu0 %v7709
      %v7920 = vpop.f32.mrf.mxu0
      %v7921 = vadd.f32 %v7517, %v7920
      %7922 = vmatmul.f32.gmra.mxu0 %v7712
      %v7923 = vpop.f32.mrf.mxu0
      %v7924 = vadd.f32 %v7520, %v7923
      %7925 = vmatmul.f32.gmra.mxu0 %v7715
      %v7926 = vpop.f32.mrf.mxu0
      %v7927 = vadd.f32 %v7523, %v7926
      %7928 = vmatmul.f32.gmra.mxu0 %v7718
      %v7929 = vpop.f32.mrf.mxu0
      %v7930 = vadd.f32 %v7526, %v7929
      %7931 = vmatmul.f32.gmra.mxu0 %v7721
      %v7932 = vpop.f32.mrf.mxu0
      %v7933 = vadd.f32 %v7529, %v7932
      %7934 = vdwg.mxu0
      %v7935 = vld [vmem:[#allocation2 + $0x9] sm:$0xff]
      %v7936 = vld [vmem:[#allocation2 + $0x11] sm:$0xff]
      %v7937 = vld [vmem:[#allocation2 + $0x19] sm:$0xff]
      %v7938 = vld [vmem:[#allocation2 + $0x21] sm:$0xff]
      %v7939 = vld [vmem:[#allocation2 + $0x29] sm:$0xff]
      %v7940 = vld [vmem:[#allocation2 + $0x31] sm:$0xff]
      %v7941 = vld [vmem:[#allocation2 + $0x39] sm:$0xff]
      %v7942 = vld [vmem:[#allocation2 + $0x41] sm:$0xff]
      %v7943 = vld [vmem:[#allocation2 + $0x49] sm:$0xff]
      %v7944 = vld [vmem:[#allocation2 + $0x51] sm:$0xff]
      %v7945 = vld [vmem:[#allocation2 + $0x59] sm:$0xff]
      %v7946 = vld [vmem:[#allocation2 + $0x61] sm:$0xff]
      %v7947 = vld [vmem:[#allocation2 + $0x69] sm:$0xff]
      %v7948 = vld [vmem:[#allocation2 + $0x71] sm:$0xff]
      %v7949 = vld [vmem:[#allocation2 + $0x79] sm:$0xff]
      %v7950 = vld [vmem:[#allocation2 + $0x81] sm:$0xff]
      %v7951 = vld [vmem:[#allocation2 + $0x89] sm:$0xff]
      %v7952 = vld [vmem:[#allocation2 + $0x91] sm:$0xff]
      %v7953 = vld [vmem:[#allocation2 + $0x99] sm:$0xff]
      %v7954 = vld [vmem:[#allocation2 + $0xa1] sm:$0xff]
      %v7955 = vld [vmem:[#allocation2 + $0xa9] sm:$0xff]
      %v7956 = vld [vmem:[#allocation2 + $0xb1] sm:$0xff]
      %v7957 = vld [vmem:[#allocation2 + $0xb9] sm:$0xff]
      %v7958 = vld [vmem:[#allocation2 + $0xc1] sm:$0xff]
      %v7959 = vld [vmem:[#allocation2 + $0xc9] sm:$0xff]
      %v7960 = vld [vmem:[#allocation2 + $0xd1] sm:$0xff]
      %v7961 = vld [vmem:[#allocation2 + $0xd9] sm:$0xff]
      %v7962 = vld [vmem:[#allocation2 + $0xe1] sm:$0xff]
      %v7963 = vld [vmem:[#allocation2 + $0xe9] sm:$0xff]
      %v7964 = vld [vmem:[#allocation2 + $0xf1] sm:$0xff]
      %v7965 = vld [vmem:[#allocation2 + $0xf9] sm:$0xff]
      %v7966 = vld [vmem:[#allocation2 + $0x101] sm:$0xff]
      %v7967 = vld [vmem:[#allocation2 + $0x109] sm:$0xff]
      %v7968 = vld [vmem:[#allocation2 + $0x111] sm:$0xff]
      %v7969 = vld [vmem:[#allocation2 + $0x119] sm:$0xff]
      %v7970 = vld [vmem:[#allocation2 + $0x121] sm:$0xff]
      %v7971 = vld [vmem:[#allocation2 + $0x129] sm:$0xff]
      %v7972 = vld [vmem:[#allocation2 + $0x131] sm:$0xff]
      %v7973 = vld [vmem:[#allocation2 + $0x139] sm:$0xff]
      %v7974 = vld [vmem:[#allocation2 + $0x141] sm:$0xff]
      %v7975 = vld [vmem:[#allocation2 + $0x149] sm:$0xff]
      %v7976 = vld [vmem:[#allocation2 + $0x151] sm:$0xff]
      %v7977 = vld [vmem:[#allocation2 + $0x159] sm:$0xff]
      %v7978 = vld [vmem:[#allocation2 + $0x161] sm:$0xff]
      %v7979 = vld [vmem:[#allocation2 + $0x169] sm:$0xff]
      %v7980 = vld [vmem:[#allocation2 + $0x171] sm:$0xff]
      %v7981 = vld [vmem:[#allocation2 + $0x179] sm:$0xff]
      %v7982 = vld [vmem:[#allocation2 + $0x181] sm:$0xff]
      %v7983 = vld [vmem:[#allocation2 + $0x189] sm:$0xff]
      %v7984 = vld [vmem:[#allocation2 + $0x191] sm:$0xff]
      %v7985 = vld [vmem:[#allocation2 + $0x199] sm:$0xff]
      %v7986 = vld [vmem:[#allocation2 + $0x1a1] sm:$0xff]
      %v7987 = vld [vmem:[#allocation2 + $0x1a9] sm:$0xff]
      %v7988 = vld [vmem:[#allocation2 + $0x1b1] sm:$0xff]
      %v7989 = vld [vmem:[#allocation2 + $0x1b9] sm:$0xff]
      %v7990 = vld [vmem:[#allocation2 + $0x1c1] sm:$0xff]
      %v7991 = vld [vmem:[#allocation2 + $0x1c9] sm:$0xff]
      %v7992 = vld [vmem:[#allocation2 + $0x1d1] sm:$0xff]
      %v7993 = vld [vmem:[#allocation2 + $0x1d9] sm:$0xff]
      %v7994 = vld [vmem:[#allocation2 + $0x1e1] sm:$0xff]
      %v7995 = vld [vmem:[#allocation2 + $0x1e9] sm:$0xff]
      %v7996 = vld [vmem:[#allocation2 + $0x1f1] sm:$0xff]
      %v7997 = vld [vmem:[#allocation2 + $0x1f9] sm:$0xff]
      %v7998 = vld [vmem:[#allocation2 + $0x201] sm:$0xff]
      %s7999 = scalar_lea.vmem %s2, 8
      %v8000 = vld [vmem:[%s7999] sm:$0xf]
      %v8002 = vsel %vm171, %v7935, 0
      %v8005 = vsel %vm171, %v7936, 0
      %v8008 = vsel %vm171, %v7937, 0
      %v8011 = vsel %vm171, %v7938, 0
      %v8014 = vsel %vm171, %v7939, 0
      %v8017 = vsel %vm171, %v7940, 0
      %v8020 = vsel %vm171, %v7941, 0
      %v8023 = vsel %vm171, %v7942, 0
      %v8026 = vsel %vm171, %v7943, 0
      %v8029 = vsel %vm171, %v7944, 0
      %v8032 = vsel %vm171, %v7945, 0
      %v8035 = vsel %vm171, %v7946, 0
      %v8038 = vsel %vm171, %v7947, 0
      %v8041 = vsel %vm171, %v7948, 0
      %v8044 = vsel %vm171, %v7949, 0
      %v8047 = vsel %vm171, %v7950, 0
      %v8050 = vsel %vm171, %v7951, 0
      %v8053 = vsel %vm171, %v7952, 0
      %v8056 = vsel %vm171, %v7953, 0
      %v8059 = vsel %vm171, %v7954, 0
      %v8062 = vsel %vm171, %v7955, 0
      %v8065 = vsel %vm171, %v7956, 0
      %v8068 = vsel %vm171, %v7957, 0
      %v8071 = vsel %vm171, %v7958, 0
      %v8074 = vsel %vm171, %v7959, 0
      %v8077 = vsel %vm171, %v7960, 0
      %v8080 = vsel %vm171, %v7961, 0
      %v8083 = vsel %vm171, %v7962, 0
      %v8086 = vsel %vm171, %v7963, 0
      %v8089 = vsel %vm171, %v7964, 0
      %v8092 = vsel %vm171, %v7965, 0
      %v8095 = vsel %vm171, %v7966, 0
      %v8098 = vsel %vm171, %v7967, 0
      %v8101 = vsel %vm171, %v7968, 0
      %v8104 = vsel %vm171, %v7969, 0
      %v8107 = vsel %vm171, %v7970, 0
      %v8110 = vsel %vm171, %v7971, 0
      %v8113 = vsel %vm171, %v7972, 0
      %v8116 = vsel %vm171, %v7973, 0
      %v8119 = vsel %vm171, %v7974, 0
      %v8122 = vsel %vm171, %v7975, 0
      %v8125 = vsel %vm171, %v7976, 0
      %v8128 = vsel %vm171, %v7977, 0
      %v8131 = vsel %vm171, %v7978, 0
      %v8134 = vsel %vm171, %v7979, 0
      %v8137 = vsel %vm171, %v7980, 0
      %v8140 = vsel %vm171, %v7981, 0
      %v8143 = vsel %vm171, %v7982, 0
      %v8146 = vsel %vm171, %v7983, 0
      %v8149 = vsel %vm171, %v7984, 0
      %v8152 = vsel %vm171, %v7985, 0
      %v8155 = vsel %vm171, %v7986, 0
      %v8158 = vsel %vm171, %v7987, 0
      %v8161 = vsel %vm171, %v7988, 0
      %v8164 = vsel %vm171, %v7989, 0
      %v8167 = vsel %vm171, %v7990, 0
      %v8170 = vsel %vm171, %v7991, 0
      %v8173 = vsel %vm171, %v7992, 0
      %v8176 = vsel %vm171, %v7993, 0
      %v8179 = vsel %vm171, %v7994, 0
      %v8182 = vsel %vm171, %v7995, 0
      %v8185 = vsel %vm171, %v7996, 0
      %v8188 = vsel %vm171, %v7997, 0
      %v8191 = vsel %vm171, %v7998, 0
      %v8194 = vsel %vm741, %v8000, 0
      %8196 = vmatpush.msra.mxu0 0.0
      %8197 = vmatpush.msra.mxu0 0.0
      %8198 = vmatpush.msra.mxu0 0.0
      %8199 = vmatpush.msra.mxu0 0.0
      %8200 = vmatpush.msra.mxu0 0.0
      %8201 = vmatpush.msra.mxu0 0.0
      %8202 = vmatpush.msra.mxu0 0.0
      %8203 = vmatpush.msra.mxu0 0.0
      %8204 = vmatpush.msra.mxu0 0.0
      %8205 = vmatpush.msra.mxu0 0.0
      %8206 = vmatpush.msra.mxu0 0.0
      %8207 = vmatpush.msra.mxu0 0.0
      %8208 = vmatpush.msra.mxu0 0.0
      %8209 = vmatpush.msra.mxu0 0.0
      %8210 = vmatpush.msra.mxu0 0.0
      %8211 = vmatpush.msra.mxu0 %v8194
      %8212 = vmatmul.f32.gmra.mxu0 %v8002
      %v8213 = vpop.f32.mrf.mxu0
      %v8214 = vadd.f32 0.0, %v8213
      %8215 = vmatmul.f32.gmra.mxu0 %v8005
      %v8216 = vpop.f32.mrf.mxu0
      %v8217 = vadd.f32 0.0, %v8216
      %8218 = vmatmul.f32.gmra.mxu0 %v8008
      %v8219 = vpop.f32.mrf.mxu0
      %v8220 = vadd.f32 0.0, %v8219
      %8221 = vmatmul.f32.gmra.mxu0 %v8011
      %v8222 = vpop.f32.mrf.mxu0
      %v8223 = vadd.f32 0.0, %v8222
      %8224 = vmatmul.f32.gmra.mxu0 %v8014
      %v8225 = vpop.f32.mrf.mxu0
      %v8226 = vadd.f32 0.0, %v8225
      %8227 = vmatmul.f32.gmra.mxu0 %v8017
      %v8228 = vpop.f32.mrf.mxu0
      %v8229 = vadd.f32 0.0, %v8228
      %8230 = vmatmul.f32.gmra.mxu0 %v8020
      %v8231 = vpop.f32.mrf.mxu0
      %v8232 = vadd.f32 0.0, %v8231
      %8233 = vmatmul.f32.gmra.mxu0 %v8023
      %v8234 = vpop.f32.mrf.mxu0
      %v8235 = vadd.f32 0.0, %v8234
      %8236 = vmatmul.f32.gmra.mxu0 %v8026
      %v8237 = vpop.f32.mrf.mxu0
      %v8238 = vadd.f32 0.0, %v8237
      %8239 = vmatmul.f32.gmra.mxu0 %v8029
      %v8240 = vpop.f32.mrf.mxu0
      %v8241 = vadd.f32 0.0, %v8240
      %8242 = vmatmul.f32.gmra.mxu0 %v8032
      %v8243 = vpop.f32.mrf.mxu0
      %v8244 = vadd.f32 0.0, %v8243
      %8245 = vmatmul.f32.gmra.mxu0 %v8035
      %v8246 = vpop.f32.mrf.mxu0
      %v8247 = vadd.f32 0.0, %v8246
      %8248 = vmatmul.f32.gmra.mxu0 %v8038
      %v8249 = vpop.f32.mrf.mxu0
      %v8250 = vadd.f32 0.0, %v8249
      %8251 = vmatmul.f32.gmra.mxu0 %v8041
      %v8252 = vpop.f32.mrf.mxu0
      %v8253 = vadd.f32 0.0, %v8252
      %8254 = vmatmul.f32.gmra.mxu0 %v8044
      %v8255 = vpop.f32.mrf.mxu0
      %v8256 = vadd.f32 0.0, %v8255
      %8257 = vmatmul.f32.gmra.mxu0 %v8047
      %v8258 = vpop.f32.mrf.mxu0
      %v8259 = vadd.f32 0.0, %v8258
      %8260 = vmatmul.f32.gmra.mxu0 %v8050
      %v8261 = vpop.f32.mrf.mxu0
      %v8262 = vadd.f32 0.0, %v8261
      %8263 = vmatmul.f32.gmra.mxu0 %v8053
      %v8264 = vpop.f32.mrf.mxu0
      %v8265 = vadd.f32 0.0, %v8264
      %8266 = vmatmul.f32.gmra.mxu0 %v8056
      %v8267 = vpop.f32.mrf.mxu0
      %v8268 = vadd.f32 0.0, %v8267
      %8269 = vmatmul.f32.gmra.mxu0 %v8059
      %v8270 = vpop.f32.mrf.mxu0
      %v8271 = vadd.f32 0.0, %v8270
      %8272 = vmatmul.f32.gmra.mxu0 %v8062
      %v8273 = vpop.f32.mrf.mxu0
      %v8274 = vadd.f32 0.0, %v8273
      %8275 = vmatmul.f32.gmra.mxu0 %v8065
      %v8276 = vpop.f32.mrf.mxu0
      %v8277 = vadd.f32 0.0, %v8276
      %8278 = vmatmul.f32.gmra.mxu0 %v8068
      %v8279 = vpop.f32.mrf.mxu0
      %v8280 = vadd.f32 0.0, %v8279
      %8281 = vmatmul.f32.gmra.mxu0 %v8071
      %v8282 = vpop.f32.mrf.mxu0
      %v8283 = vadd.f32 0.0, %v8282
      %8284 = vmatmul.f32.gmra.mxu0 %v8074
      %v8285 = vpop.f32.mrf.mxu0
      %v8286 = vadd.f32 0.0, %v8285
      %8287 = vmatmul.f32.gmra.mxu0 %v8077
      %v8288 = vpop.f32.mrf.mxu0
      %v8289 = vadd.f32 0.0, %v8288
      %8290 = vmatmul.f32.gmra.mxu0 %v8080
      %v8291 = vpop.f32.mrf.mxu0
      %v8292 = vadd.f32 0.0, %v8291
      %8293 = vmatmul.f32.gmra.mxu0 %v8083
      %v8294 = vpop.f32.mrf.mxu0
      %v8295 = vadd.f32 0.0, %v8294
      %8296 = vmatmul.f32.gmra.mxu0 %v8086
      %v8297 = vpop.f32.mrf.mxu0
      %v8298 = vadd.f32 0.0, %v8297
      %8299 = vmatmul.f32.gmra.mxu0 %v8089
      %v8300 = vpop.f32.mrf.mxu0
      %v8301 = vadd.f32 0.0, %v8300
      %8302 = vmatmul.f32.gmra.mxu0 %v8092
      %v8303 = vpop.f32.mrf.mxu0
      %v8304 = vadd.f32 0.0, %v8303
      %8305 = vmatmul.f32.gmra.mxu0 %v8095
      %v8306 = vpop.f32.mrf.mxu0
      %v8307 = vadd.f32 0.0, %v8306
      %8308 = vmatmul.f32.gmra.mxu0 %v8098
      %v8309 = vpop.f32.mrf.mxu0
      %v8310 = vadd.f32 0.0, %v8309
      %8311 = vmatmul.f32.gmra.mxu0 %v8101
      %v8312 = vpop.f32.mrf.mxu0
      %v8313 = vadd.f32 0.0, %v8312
      %8314 = vmatmul.f32.gmra.mxu0 %v8104
      %v8315 = vpop.f32.mrf.mxu0
      %v8316 = vadd.f32 0.0, %v8315
      %8317 = vmatmul.f32.gmra.mxu0 %v8107
      %v8318 = vpop.f32.mrf.mxu0
      %v8319 = vadd.f32 0.0, %v8318
      %8320 = vmatmul.f32.gmra.mxu0 %v8110
      %v8321 = vpop.f32.mrf.mxu0
      %v8322 = vadd.f32 0.0, %v8321
      %8323 = vmatmul.f32.gmra.mxu0 %v8113
      %v8324 = vpop.f32.mrf.mxu0
      %v8325 = vadd.f32 0.0, %v8324
      %8326 = vmatmul.f32.gmra.mxu0 %v8116
      %v8327 = vpop.f32.mrf.mxu0
      %v8328 = vadd.f32 0.0, %v8327
      %8329 = vmatmul.f32.gmra.mxu0 %v8119
      %v8330 = vpop.f32.mrf.mxu0
      %v8331 = vadd.f32 0.0, %v8330
      %8332 = vmatmul.f32.gmra.mxu0 %v8122
      %v8333 = vpop.f32.mrf.mxu0
      %v8334 = vadd.f32 0.0, %v8333
      %8335 = vmatmul.f32.gmra.mxu0 %v8125
      %v8336 = vpop.f32.mrf.mxu0
      %v8337 = vadd.f32 0.0, %v8336
      %8338 = vmatmul.f32.gmra.mxu0 %v8128
      %v8339 = vpop.f32.mrf.mxu0
      %v8340 = vadd.f32 0.0, %v8339
      %8341 = vmatmul.f32.gmra.mxu0 %v8131
      %v8342 = vpop.f32.mrf.mxu0
      %v8343 = vadd.f32 0.0, %v8342
      %8344 = vmatmul.f32.gmra.mxu0 %v8134
      %v8345 = vpop.f32.mrf.mxu0
      %v8346 = vadd.f32 0.0, %v8345
      %8347 = vmatmul.f32.gmra.mxu0 %v8137
      %v8348 = vpop.f32.mrf.mxu0
      %v8349 = vadd.f32 0.0, %v8348
      %8350 = vmatmul.f32.gmra.mxu0 %v8140
      %v8351 = vpop.f32.mrf.mxu0
      %v8352 = vadd.f32 0.0, %v8351
      %8353 = vmatmul.f32.gmra.mxu0 %v8143
      %v8354 = vpop.f32.mrf.mxu0
      %v8355 = vadd.f32 0.0, %v8354
      %8356 = vmatmul.f32.gmra.mxu0 %v8146
      %v8357 = vpop.f32.mrf.mxu0
      %v8358 = vadd.f32 0.0, %v8357
      %8359 = vmatmul.f32.gmra.mxu0 %v8149
      %v8360 = vpop.f32.mrf.mxu0
      %v8361 = vadd.f32 0.0, %v8360
      %8362 = vmatmul.f32.gmra.mxu0 %v8152
      %v8363 = vpop.f32.mrf.mxu0
      %v8364 = vadd.f32 0.0, %v8363
      %8365 = vmatmul.f32.gmra.mxu0 %v8155
      %v8366 = vpop.f32.mrf.mxu0
      %v8367 = vadd.f32 0.0, %v8366
      %8368 = vmatmul.f32.gmra.mxu0 %v8158
      %v8369 = vpop.f32.mrf.mxu0
      %v8370 = vadd.f32 0.0, %v8369
      %8371 = vmatmul.f32.gmra.mxu0 %v8161
      %v8372 = vpop.f32.mrf.mxu0
      %v8373 = vadd.f32 0.0, %v8372
      %8374 = vmatmul.f32.gmra.mxu0 %v8164
      %v8375 = vpop.f32.mrf.mxu0
      %v8376 = vadd.f32 0.0, %v8375
      %8377 = vmatmul.f32.gmra.mxu0 %v8167
      %v8378 = vpop.f32.mrf.mxu0
      %v8379 = vadd.f32 0.0, %v8378
      %8380 = vmatmul.f32.gmra.mxu0 %v8170
      %v8381 = vpop.f32.mrf.mxu0
      %v8382 = vadd.f32 0.0, %v8381
      %8383 = vmatmul.f32.gmra.mxu0 %v8173
      %v8384 = vpop.f32.mrf.mxu0
      %v8385 = vadd.f32 0.0, %v8384
      %8386 = vmatmul.f32.gmra.mxu0 %v8176
      %v8387 = vpop.f32.mrf.mxu0
      %v8388 = vadd.f32 0.0, %v8387
      %8389 = vmatmul.f32.gmra.mxu0 %v8179
      %v8390 = vpop.f32.mrf.mxu0
      %v8391 = vadd.f32 0.0, %v8390
      %8392 = vmatmul.f32.gmra.mxu0 %v8182
      %v8393 = vpop.f32.mrf.mxu0
      %v8394 = vadd.f32 0.0, %v8393
      %8395 = vmatmul.f32.gmra.mxu0 %v8185
      %v8396 = vpop.f32.mrf.mxu0
      %v8397 = vadd.f32 0.0, %v8396
      %8398 = vmatmul.f32.gmra.mxu0 %v8188
      %v8399 = vpop.f32.mrf.mxu0
      %v8400 = vadd.f32 0.0, %v8399
      %8401 = vmatmul.f32.gmra.mxu0 %v8191
      %v8402 = vpop.f32.mrf.mxu0
      %v8403 = vadd.f32 0.0, %v8402
      %8404 = vdwg.mxu0
      %v8405 = vadd.f32 %v7744, %v8214
      %v8406 = vadd.f32 %v7747, %v8217
      %v8407 = vadd.f32 %v7750, %v8220
      %v8408 = vadd.f32 %v7753, %v8223
      %v8409 = vadd.f32 %v7756, %v8226
      %v8410 = vadd.f32 %v7759, %v8229
      %v8411 = vadd.f32 %v7762, %v8232
      %v8412 = vadd.f32 %v7765, %v8235
      %v8413 = vadd.f32 %v7768, %v8238
      %v8414 = vadd.f32 %v7771, %v8241
      %v8415 = vadd.f32 %v7774, %v8244
      %v8416 = vadd.f32 %v7777, %v8247
      %v8417 = vadd.f32 %v7780, %v8250
      %v8418 = vadd.f32 %v7783, %v8253
      %v8419 = vadd.f32 %v7786, %v8256
      %v8420 = vadd.f32 %v7789, %v8259
      %v8421 = vadd.f32 %v7792, %v8262
      %v8422 = vadd.f32 %v7795, %v8265
      %v8423 = vadd.f32 %v7798, %v8268
      %v8424 = vadd.f32 %v7801, %v8271
      %v8425 = vadd.f32 %v7804, %v8274
      %v8426 = vadd.f32 %v7807, %v8277
      %v8427 = vadd.f32 %v7810, %v8280
      %v8428 = vadd.f32 %v7813, %v8283
      %v8429 = vadd.f32 %v7816, %v8286
      %v8430 = vadd.f32 %v7819, %v8289
      %v8431 = vadd.f32 %v7822, %v8292
      %v8432 = vadd.f32 %v7825, %v8295
      %v8433 = vadd.f32 %v7828, %v8298
      %v8434 = vadd.f32 %v7831, %v8301
      %v8435 = vadd.f32 %v7834, %v8304
      %v8436 = vadd.f32 %v7837, %v8307
      %v8437 = vadd.f32 %v7840, %v8310
      %v8438 = vadd.f32 %v7843, %v8313
      %v8439 = vadd.f32 %v7846, %v8316
      %v8440 = vadd.f32 %v7849, %v8319
      %v8441 = vadd.f32 %v7852, %v8322
      %v8442 = vadd.f32 %v7855, %v8325
      %v8443 = vadd.f32 %v7858, %v8328
      %v8444 = vadd.f32 %v7861, %v8331
      %v8445 = vadd.f32 %v7864, %v8334
      %v8446 = vadd.f32 %v7867, %v8337
      %v8447 = vadd.f32 %v7870, %v8340
      %v8448 = vadd.f32 %v7873, %v8343
      %v8449 = vadd.f32 %v7876, %v8346
      %v8450 = vadd.f32 %v7879, %v8349
      %v8451 = vadd.f32 %v7882, %v8352
      %v8452 = vadd.f32 %v7885, %v8355
      %v8453 = vadd.f32 %v7888, %v8358
      %v8454 = vadd.f32 %v7891, %v8361
      %v8455 = vadd.f32 %v7894, %v8364
      %v8456 = vadd.f32 %v7897, %v8367
      %v8457 = vadd.f32 %v7900, %v8370
      %v8458 = vadd.f32 %v7903, %v8373
      %v8459 = vadd.f32 %v7906, %v8376
      %v8460 = vadd.f32 %v7909, %v8379
      %v8461 = vadd.f32 %v7912, %v8382
      %v8462 = vadd.f32 %v7915, %v8385
      %v8463 = vadd.f32 %v7918, %v8388
      %v8464 = vadd.f32 %v7921, %v8391
      %v8465 = vadd.f32 %v7924, %v8394
      %v8466 = vadd.f32 %v7927, %v8397
      %v8467 = vadd.f32 %v7930, %v8400
      %v8468 = vadd.f32 %v7933, %v8403
      %v8469 = vld [vmem:[#allocation2 + $0x27] sm:$0xff]
      %v8470 = vld [vmem:[#allocation2 + $0x2f] sm:$0xff]
      %v8471 = vld [vmem:[#allocation2 + $0x37] sm:$0xff]
      %v8472 = vld [vmem:[#allocation2 + $0x3f] sm:$0xff]
      %v8473 = vld [vmem:[#allocation2 + $0x47] sm:$0xff]
      %v8474 = vld [vmem:[#allocation2 + $0x4f] sm:$0xff]
      %v8475 = vld [vmem:[#allocation2 + $0x57] sm:$0xff]
      %v8476 = vld [vmem:[#allocation2 + $0x5f] sm:$0xff]
      %v8477 = vld [vmem:[#allocation2 + $0x67] sm:$0xff]
      %v8478 = vld [vmem:[#allocation2 + $0x6f] sm:$0xff]
      %v8479 = vld [vmem:[#allocation2 + $0x77] sm:$0xff]
      %v8480 = vld [vmem:[#allocation2 + $0x7f] sm:$0xff]
      %v8481 = vld [vmem:[#allocation2 + $0x87] sm:$0xff]
      %v8482 = vld [vmem:[#allocation2 + $0x8f] sm:$0xff]
      %v8483 = vld [vmem:[#allocation2 + $0x97] sm:$0xff]
      %v8484 = vld [vmem:[#allocation2 + $0x9f] sm:$0xff]
      %v8485 = vld [vmem:[#allocation2 + $0xa7] sm:$0xff]
      %v8486 = vld [vmem:[#allocation2 + $0xaf] sm:$0xff]
      %v8487 = vld [vmem:[#allocation2 + $0xb7] sm:$0xff]
      %v8488 = vld [vmem:[#allocation2 + $0xbf] sm:$0xff]
      %v8489 = vld [vmem:[#allocation2 + $0xc7] sm:$0xff]
      %v8490 = vld [vmem:[#allocation2 + $0xcf] sm:$0xff]
      %v8491 = vld [vmem:[#allocation2 + $0xd7] sm:$0xff]
      %v8492 = vld [vmem:[#allocation2 + $0xdf] sm:$0xff]
      %v8493 = vld [vmem:[#allocation2 + $0xe7] sm:$0xff]
      %v8494 = vld [vmem:[#allocation2 + $0xef] sm:$0xff]
      %v8495 = vld [vmem:[#allocation2 + $0xf7] sm:$0xff]
      %v8496 = vld [vmem:[#allocation2 + $0xff] sm:$0xff]
      %v8497 = vld [vmem:[#allocation2 + $0x107] sm:$0xff]
      %v8498 = vld [vmem:[#allocation2 + $0x10f] sm:$0xff]
      %v8499 = vld [vmem:[#allocation2 + $0x117] sm:$0xff]
      %v8500 = vld [vmem:[#allocation2 + $0x11f] sm:$0xff]
      %v8501 = vld [vmem:[#allocation2 + $0x127] sm:$0xff]
      %v8502 = vld [vmem:[#allocation2 + $0x12f] sm:$0xff]
      %v8503 = vld [vmem:[#allocation2 + $0x137] sm:$0xff]
      %v8504 = vld [vmem:[#allocation2 + $0x13f] sm:$0xff]
      %v8505 = vld [vmem:[#allocation2 + $0x147] sm:$0xff]
      %v8506 = vld [vmem:[#allocation2 + $0x14f] sm:$0xff]
      %v8507 = vld [vmem:[#allocation2 + $0x157] sm:$0xff]
      %v8508 = vld [vmem:[#allocation2 + $0x15f] sm:$0xff]
      %v8509 = vld [vmem:[#allocation2 + $0x167] sm:$0xff]
      %v8510 = vld [vmem:[#allocation2 + $0x16f] sm:$0xff]
      %v8511 = vld [vmem:[#allocation2 + $0x177] sm:$0xff]
      %v8512 = vld [vmem:[#allocation2 + $0x17f] sm:$0xff]
      %v8513 = vld [vmem:[#allocation2 + $0x187] sm:$0xff]
      %v8514 = vld [vmem:[#allocation2 + $0x18f] sm:$0xff]
      %v8515 = vld [vmem:[#allocation2 + $0x197] sm:$0xff]
      %v8516 = vld [vmem:[#allocation2 + $0x19f] sm:$0xff]
      %v8517 = vld [vmem:[#allocation2 + $0x1a7] sm:$0xff]
      %v8518 = vld [vmem:[#allocation2 + $0x1af] sm:$0xff]
      %v8519 = vld [vmem:[#allocation2 + $0x1b7] sm:$0xff]
      %v8520 = vld [vmem:[#allocation2 + $0x1bf] sm:$0xff]
      %v8521 = vld [vmem:[#allocation2 + $0x1c7] sm:$0xff]
      %v8522 = vld [vmem:[#allocation2 + $0x1cf] sm:$0xff]
      %v8523 = vld [vmem:[#allocation2 + $0x1d7] sm:$0xff]
      %v8524 = vld [vmem:[#allocation2 + $0x1df] sm:$0xff]
      %v8525 = vld [vmem:[#allocation2 + $0x1e7] sm:$0xff]
      %v8526 = vld [vmem:[#allocation2 + $0x1ef] sm:$0xff]
      %v8527 = vld [vmem:[#allocation2 + $0x1f7] sm:$0xff]
      %v8528 = vld [vmem:[#allocation2 + $0x1ff] sm:$0xff]
      %v8529 = vld [vmem:[#allocation2 + $0x207] sm:$0xff]
      %v8530 = vld [vmem:[#allocation2 + $0x20f] sm:$0xff]
      %v8531 = vld [vmem:[#allocation2 + $0x217] sm:$0xff]
      %v8532 = vld [vmem:[#allocation2 + $0x21f] sm:$0xff]
      %s8533 = scalar_lea.vmem %s2, 12
      %v8534 = vld [vmem:[%s8533] sm:$0xf]
      %v8536 = vsel %vm171, %v8469, 0
      %v8539 = vsel %vm171, %v8470, 0
      %v8542 = vsel %vm171, %v8471, 0
      %v8545 = vsel %vm171, %v8472, 0
      %v8548 = vsel %vm171, %v8473, 0
      %v8551 = vsel %vm171, %v8474, 0
      %v8554 = vsel %vm171, %v8475, 0
      %v8557 = vsel %vm171, %v8476, 0
      %v8560 = vsel %vm171, %v8477, 0
      %v8563 = vsel %vm171, %v8478, 0
      %v8566 = vsel %vm171, %v8479, 0
      %v8569 = vsel %vm171, %v8480, 0
      %v8572 = vsel %vm171, %v8481, 0
      %v8575 = vsel %vm171, %v8482, 0
      %v8578 = vsel %vm171, %v8483, 0
      %v8581 = vsel %vm171, %v8484, 0
      %v8584 = vsel %vm171, %v8485, 0
      %v8587 = vsel %vm171, %v8486, 0
      %v8590 = vsel %vm171, %v8487, 0
      %v8593 = vsel %vm171, %v8488, 0
      %v8596 = vsel %vm171, %v8489, 0
      %v8599 = vsel %vm171, %v8490, 0
      %v8602 = vsel %vm171, %v8491, 0
      %v8605 = vsel %vm171, %v8492, 0
      %v8608 = vsel %vm171, %v8493, 0
      %v8611 = vsel %vm171, %v8494, 0
      %v8614 = vsel %vm171, %v8495, 0
      %v8617 = vsel %vm171, %v8496, 0
      %v8620 = vsel %vm171, %v8497, 0
      %v8623 = vsel %vm171, %v8498, 0
      %v8626 = vsel %vm171, %v8499, 0
      %v8629 = vsel %vm171, %v8500, 0
      %v8632 = vsel %vm171, %v8501, 0
      %v8635 = vsel %vm171, %v8502, 0
      %v8638 = vsel %vm171, %v8503, 0
      %v8641 = vsel %vm171, %v8504, 0
      %v8644 = vsel %vm171, %v8505, 0
      %v8647 = vsel %vm171, %v8506, 0
      %v8650 = vsel %vm171, %v8507, 0
      %v8653 = vsel %vm171, %v8508, 0
      %v8656 = vsel %vm171, %v8509, 0
      %v8659 = vsel %vm171, %v8510, 0
      %v8662 = vsel %vm171, %v8511, 0
      %v8665 = vsel %vm171, %v8512, 0
      %v8668 = vsel %vm171, %v8513, 0
      %v8671 = vsel %vm171, %v8514, 0
      %v8674 = vsel %vm171, %v8515, 0
      %v8677 = vsel %vm171, %v8516, 0
      %v8680 = vsel %vm171, %v8517, 0
      %v8683 = vsel %vm171, %v8518, 0
      %v8686 = vsel %vm171, %v8519, 0
      %v8689 = vsel %vm171, %v8520, 0
      %v8692 = vsel %vm171, %v8521, 0
      %v8695 = vsel %vm171, %v8522, 0
      %v8698 = vsel %vm171, %v8523, 0
      %v8701 = vsel %vm171, %v8524, 0
      %v8704 = vsel %vm171, %v8525, 0
      %v8707 = vsel %vm171, %v8526, 0
      %v8710 = vsel %vm171, %v8527, 0
      %v8713 = vsel %vm171, %v8528, 0
      %v8716 = vsel %vm171, %v8529, 0
      %v8719 = vsel %vm171, %v8530, 0
      %v8722 = vsel %vm171, %v8531, 0
      %v8725 = vsel %vm171, %v8532, 0
      %v8728 = vsel %vm741, %v8534, 0
      %8730 = vmatpush.msra.mxu0 0.0
      %8731 = vmatpush.msra.mxu0 0.0
      %8732 = vmatpush.msra.mxu0 0.0
      %8733 = vmatpush.msra.mxu0 0.0
      %8734 = vmatpush.msra.mxu0 0.0
      %8735 = vmatpush.msra.mxu0 0.0
      %8736 = vmatpush.msra.mxu0 0.0
      %8737 = vmatpush.msra.mxu0 0.0
      %8738 = vmatpush.msra.mxu0 0.0
      %8739 = vmatpush.msra.mxu0 0.0
      %8740 = vmatpush.msra.mxu0 0.0
      %8741 = vmatpush.msra.mxu0 0.0
      %8742 = vmatpush.msra.mxu0 0.0
      %8743 = vmatpush.msra.mxu0 0.0
      %8744 = vmatpush.msra.mxu0 0.0
      %8745 = vmatpush.msra.mxu0 %v8728
      %8746 = vmatmul.f32.gmra.mxu0 %v8536
      %v8747 = vpop.f32.mrf.mxu0
      %v8748 = vadd.f32 0.0, %v8747
      %8749 = vmatmul.f32.gmra.mxu0 %v8539
      %v8750 = vpop.f32.mrf.mxu0
      %v8751 = vadd.f32 0.0, %v8750
      %8752 = vmatmul.f32.gmra.mxu0 %v8542
      %v8753 = vpop.f32.mrf.mxu0
      %v8754 = vadd.f32 0.0, %v8753
      %8755 = vmatmul.f32.gmra.mxu0 %v8545
      %v8756 = vpop.f32.mrf.mxu0
      %v8757 = vadd.f32 0.0, %v8756
      %8758 = vmatmul.f32.gmra.mxu0 %v8548
      %v8759 = vpop.f32.mrf.mxu0
      %v8760 = vadd.f32 0.0, %v8759
      %8761 = vmatmul.f32.gmra.mxu0 %v8551
      %v8762 = vpop.f32.mrf.mxu0
      %v8763 = vadd.f32 0.0, %v8762
      %8764 = vmatmul.f32.gmra.mxu0 %v8554
      %v8765 = vpop.f32.mrf.mxu0
      %v8766 = vadd.f32 0.0, %v8765
      %8767 = vmatmul.f32.gmra.mxu0 %v8557
      %v8768 = vpop.f32.mrf.mxu0
      %v8769 = vadd.f32 0.0, %v8768
      %8770 = vmatmul.f32.gmra.mxu0 %v8560
      %v8771 = vpop.f32.mrf.mxu0
      %v8772 = vadd.f32 0.0, %v8771
      %8773 = vmatmul.f32.gmra.mxu0 %v8563
      %v8774 = vpop.f32.mrf.mxu0
      %v8775 = vadd.f32 0.0, %v8774
      %8776 = vmatmul.f32.gmra.mxu0 %v8566
      %v8777 = vpop.f32.mrf.mxu0
      %v8778 = vadd.f32 0.0, %v8777
      %8779 = vmatmul.f32.gmra.mxu0 %v8569
      %v8780 = vpop.f32.mrf.mxu0
      %v8781 = vadd.f32 0.0, %v8780
      %8782 = vmatmul.f32.gmra.mxu0 %v8572
      %v8783 = vpop.f32.mrf.mxu0
      %v8784 = vadd.f32 0.0, %v8783
      %8785 = vmatmul.f32.gmra.mxu0 %v8575
      %v8786 = vpop.f32.mrf.mxu0
      %v8787 = vadd.f32 0.0, %v8786
      %8788 = vmatmul.f32.gmra.mxu0 %v8578
      %v8789 = vpop.f32.mrf.mxu0
      %v8790 = vadd.f32 0.0, %v8789
      %8791 = vmatmul.f32.gmra.mxu0 %v8581
      %v8792 = vpop.f32.mrf.mxu0
      %v8793 = vadd.f32 0.0, %v8792
      %8794 = vmatmul.f32.gmra.mxu0 %v8584
      %v8795 = vpop.f32.mrf.mxu0
      %v8796 = vadd.f32 0.0, %v8795
      %8797 = vmatmul.f32.gmra.mxu0 %v8587
      %v8798 = vpop.f32.mrf.mxu0
      %v8799 = vadd.f32 0.0, %v8798
      %8800 = vmatmul.f32.gmra.mxu0 %v8590
      %v8801 = vpop.f32.mrf.mxu0
      %v8802 = vadd.f32 0.0, %v8801
      %8803 = vmatmul.f32.gmra.mxu0 %v8593
      %v8804 = vpop.f32.mrf.mxu0
      %v8805 = vadd.f32 0.0, %v8804
      %8806 = vmatmul.f32.gmra.mxu0 %v8596
      %v8807 = vpop.f32.mrf.mxu0
      %v8808 = vadd.f32 0.0, %v8807
      %8809 = vmatmul.f32.gmra.mxu0 %v8599
      %v8810 = vpop.f32.mrf.mxu0
      %v8811 = vadd.f32 0.0, %v8810
      %8812 = vmatmul.f32.gmra.mxu0 %v8602
      %v8813 = vpop.f32.mrf.mxu0
      %v8814 = vadd.f32 0.0, %v8813
      %8815 = vmatmul.f32.gmra.mxu0 %v8605
      %v8816 = vpop.f32.mrf.mxu0
      %v8817 = vadd.f32 0.0, %v8816
      %8818 = vmatmul.f32.gmra.mxu0 %v8608
      %v8819 = vpop.f32.mrf.mxu0
      %v8820 = vadd.f32 0.0, %v8819
      %8821 = vmatmul.f32.gmra.mxu0 %v8611
      %v8822 = vpop.f32.mrf.mxu0
      %v8823 = vadd.f32 0.0, %v8822
      %8824 = vmatmul.f32.gmra.mxu0 %v8614
      %v8825 = vpop.f32.mrf.mxu0
      %v8826 = vadd.f32 0.0, %v8825
      %8827 = vmatmul.f32.gmra.mxu0 %v8617
      %v8828 = vpop.f32.mrf.mxu0
      %v8829 = vadd.f32 0.0, %v8828
      %8830 = vmatmul.f32.gmra.mxu0 %v8620
      %v8831 = vpop.f32.mrf.mxu0
      %v8832 = vadd.f32 0.0, %v8831
      %8833 = vmatmul.f32.gmra.mxu0 %v8623
      %v8834 = vpop.f32.mrf.mxu0
      %v8835 = vadd.f32 0.0, %v8834
      %8836 = vmatmul.f32.gmra.mxu0 %v8626
      %v8837 = vpop.f32.mrf.mxu0
      %v8838 = vadd.f32 0.0, %v8837
      %8839 = vmatmul.f32.gmra.mxu0 %v8629
      %v8840 = vpop.f32.mrf.mxu0
      %v8841 = vadd.f32 0.0, %v8840
      %8842 = vmatmul.f32.gmra.mxu0 %v8632
      %v8843 = vpop.f32.mrf.mxu0
      %v8844 = vadd.f32 0.0, %v8843
      %8845 = vmatmul.f32.gmra.mxu0 %v8635
      %v8846 = vpop.f32.mrf.mxu0
      %v8847 = vadd.f32 0.0, %v8846
      %8848 = vmatmul.f32.gmra.mxu0 %v8638
      %v8849 = vpop.f32.mrf.mxu0
      %v8850 = vadd.f32 0.0, %v8849
      %8851 = vmatmul.f32.gmra.mxu0 %v8641
      %v8852 = vpop.f32.mrf.mxu0
      %v8853 = vadd.f32 0.0, %v8852
      %8854 = vmatmul.f32.gmra.mxu0 %v8644
      %v8855 = vpop.f32.mrf.mxu0
      %v8856 = vadd.f32 0.0, %v8855
      %8857 = vmatmul.f32.gmra.mxu0 %v8647
      %v8858 = vpop.f32.mrf.mxu0
      %v8859 = vadd.f32 0.0, %v8858
      %8860 = vmatmul.f32.gmra.mxu0 %v8650
      %v8861 = vpop.f32.mrf.mxu0
      %v8862 = vadd.f32 0.0, %v8861
      %8863 = vmatmul.f32.gmra.mxu0 %v8653
      %v8864 = vpop.f32.mrf.mxu0
      %v8865 = vadd.f32 0.0, %v8864
      %8866 = vmatmul.f32.gmra.mxu0 %v8656
      %v8867 = vpop.f32.mrf.mxu0
      %v8868 = vadd.f32 0.0, %v8867
      %8869 = vmatmul.f32.gmra.mxu0 %v8659
      %v8870 = vpop.f32.mrf.mxu0
      %v8871 = vadd.f32 0.0, %v8870
      %8872 = vmatmul.f32.gmra.mxu0 %v8662
      %v8873 = vpop.f32.mrf.mxu0
      %v8874 = vadd.f32 0.0, %v8873
      %8875 = vmatmul.f32.gmra.mxu0 %v8665
      %v8876 = vpop.f32.mrf.mxu0
      %v8877 = vadd.f32 0.0, %v8876
      %8878 = vmatmul.f32.gmra.mxu0 %v8668
      %v8879 = vpop.f32.mrf.mxu0
      %v8880 = vadd.f32 0.0, %v8879
      %8881 = vmatmul.f32.gmra.mxu0 %v8671
      %v8882 = vpop.f32.mrf.mxu0
      %v8883 = vadd.f32 0.0, %v8882
      %8884 = vmatmul.f32.gmra.mxu0 %v8674
      %v8885 = vpop.f32.mrf.mxu0
      %v8886 = vadd.f32 0.0, %v8885
      %8887 = vmatmul.f32.gmra.mxu0 %v8677
      %v8888 = vpop.f32.mrf.mxu0
      %v8889 = vadd.f32 0.0, %v8888
      %8890 = vmatmul.f32.gmra.mxu0 %v8680
      %v8891 = vpop.f32.mrf.mxu0
      %v8892 = vadd.f32 0.0, %v8891
      %8893 = vmatmul.f32.gmra.mxu0 %v8683
      %v8894 = vpop.f32.mrf.mxu0
      %v8895 = vadd.f32 0.0, %v8894
      %8896 = vmatmul.f32.gmra.mxu0 %v8686
      %v8897 = vpop.f32.mrf.mxu0
      %v8898 = vadd.f32 0.0, %v8897
      %8899 = vmatmul.f32.gmra.mxu0 %v8689
      %v8900 = vpop.f32.mrf.mxu0
      %v8901 = vadd.f32 0.0, %v8900
      %8902 = vmatmul.f32.gmra.mxu0 %v8692
      %v8903 = vpop.f32.mrf.mxu0
      %v8904 = vadd.f32 0.0, %v8903
      %8905 = vmatmul.f32.gmra.mxu0 %v8695
      %v8906 = vpop.f32.mrf.mxu0
      %v8907 = vadd.f32 0.0, %v8906
      %8908 = vmatmul.f32.gmra.mxu0 %v8698
      %v8909 = vpop.f32.mrf.mxu0
      %v8910 = vadd.f32 0.0, %v8909
      %8911 = vmatmul.f32.gmra.mxu0 %v8701
      %v8912 = vpop.f32.mrf.mxu0
      %v8913 = vadd.f32 0.0, %v8912
      %8914 = vmatmul.f32.gmra.mxu0 %v8704
      %v8915 = vpop.f32.mrf.mxu0
      %v8916 = vadd.f32 0.0, %v8915
      %8917 = vmatmul.f32.gmra.mxu0 %v8707
      %v8918 = vpop.f32.mrf.mxu0
      %v8919 = vadd.f32 0.0, %v8918
      %8920 = vmatmul.f32.gmra.mxu0 %v8710
      %v8921 = vpop.f32.mrf.mxu0
      %v8922 = vadd.f32 0.0, %v8921
      %8923 = vmatmul.f32.gmra.mxu0 %v8713
      %v8924 = vpop.f32.mrf.mxu0
      %v8925 = vadd.f32 0.0, %v8924
      %8926 = vmatmul.f32.gmra.mxu0 %v8716
      %v8927 = vpop.f32.mrf.mxu0
      %v8928 = vadd.f32 0.0, %v8927
      %8929 = vmatmul.f32.gmra.mxu0 %v8719
      %v8930 = vpop.f32.mrf.mxu0
      %v8931 = vadd.f32 0.0, %v8930
      %8932 = vmatmul.f32.gmra.mxu0 %v8722
      %v8933 = vpop.f32.mrf.mxu0
      %v8934 = vadd.f32 0.0, %v8933
      %8935 = vmatmul.f32.gmra.mxu0 %v8725
      %v8936 = vpop.f32.mrf.mxu0
      %v8937 = vadd.f32 0.0, %v8936
      %8938 = vdwg.mxu0
      %v8939 = vadd.f32 %v8405, %v8748
      %v8940 = vadd.f32 %v8406, %v8751
      %v8941 = vadd.f32 %v8407, %v8754
      %v8942 = vadd.f32 %v8408, %v8757
      %v8943 = vadd.f32 %v8409, %v8760
      %v8944 = vadd.f32 %v8410, %v8763
      %v8945 = vadd.f32 %v8411, %v8766
      %v8946 = vadd.f32 %v8412, %v8769
      %v8947 = vadd.f32 %v8413, %v8772
      %v8948 = vadd.f32 %v8414, %v8775
      %v8949 = vadd.f32 %v8415, %v8778
      %v8950 = vadd.f32 %v8416, %v8781
      %v8951 = vadd.f32 %v8417, %v8784
      %v8952 = vadd.f32 %v8418, %v8787
      %v8953 = vadd.f32 %v8419, %v8790
      %v8954 = vadd.f32 %v8420, %v8793
      %v8955 = vadd.f32 %v8421, %v8796
      %v8956 = vadd.f32 %v8422, %v8799
      %v8957 = vadd.f32 %v8423, %v8802
      %v8958 = vadd.f32 %v8424, %v8805
      %v8959 = vadd.f32 %v8425, %v8808
      %v8960 = vadd.f32 %v8426, %v8811
      %v8961 = vadd.f32 %v8427, %v8814
      %v8962 = vadd.f32 %v8428, %v8817
      %v8963 = vadd.f32 %v8429, %v8820
      %v8964 = vadd.f32 %v8430, %v8823
      %v8965 = vadd.f32 %v8431, %v8826
      %v8966 = vadd.f32 %v8432, %v8829
      %v8967 = vadd.f32 %v8433, %v8832
      %v8968 = vadd.f32 %v8434, %v8835
      %v8969 = vadd.f32 %v8435, %v8838
      %v8970 = vadd.f32 %v8436, %v8841
      %v8971 = vadd.f32 %v8437, %v8844
      %v8972 = vadd.f32 %v8438, %v8847
      %v8973 = vadd.f32 %v8439, %v8850
      %v8974 = vadd.f32 %v8440, %v8853
      %v8975 = vadd.f32 %v8441, %v8856
      %v8976 = vadd.f32 %v8442, %v8859
      %v8977 = vadd.f32 %v8443, %v8862
      %v8978 = vadd.f32 %v8444, %v8865
      %v8979 = vadd.f32 %v8445, %v8868
      %v8980 = vadd.f32 %v8446, %v8871
      %v8981 = vadd.f32 %v8447, %v8874
      %v8982 = vadd.f32 %v8448, %v8877
      %v8983 = vadd.f32 %v8449, %v8880
      %v8984 = vadd.f32 %v8450, %v8883
      %v8985 = vadd.f32 %v8451, %v8886
      %v8986 = vadd.f32 %v8452, %v8889
      %v8987 = vadd.f32 %v8453, %v8892
      %v8988 = vadd.f32 %v8454, %v8895
      %v8989 = vadd.f32 %v8455, %v8898
      %v8990 = vadd.f32 %v8456, %v8901
      %v8991 = vadd.f32 %v8457, %v8904
      %v8992 = vadd.f32 %v8458, %v8907
      %v8993 = vadd.f32 %v8459, %v8910
      %v8994 = vadd.f32 %v8460, %v8913
      %v8995 = vadd.f32 %v8461, %v8916
      %v8996 = vadd.f32 %v8462, %v8919
      %v8997 = vadd.f32 %v8463, %v8922
      %v8998 = vadd.f32 %v8464, %v8925
      %v8999 = vadd.f32 %v8465, %v8928
      %v9000 = vadd.f32 %v8466, %v8931
      %v9001 = vadd.f32 %v8467, %v8934
      %v9002 = vadd.f32 %v8468, %v8937
      %v9003 = vld [vmem:[#allocation2 + $0x28] sm:$0xff]
      %v9004 = vld [vmem:[#allocation2 + $0x30] sm:$0xff]
      %v9005 = vld [vmem:[#allocation2 + $0x38] sm:$0xff]
      %v9006 = vld [vmem:[#allocation2 + $0x40] sm:$0xff]
      %v9007 = vld [vmem:[#allocation2 + $0x48] sm:$0xff]
      %v9008 = vld [vmem:[#allocation2 + $0x50] sm:$0xff]
      %v9009 = vld [vmem:[#allocation2 + $0x58] sm:$0xff]
      %v9010 = vld [vmem:[#allocation2 + $0x60] sm:$0xff]
      %v9011 = vld [vmem:[#allocation2 + $0x68] sm:$0xff]
      %v9012 = vld [vmem:[#allocation2 + $0x70] sm:$0xff]
      %v9013 = vld [vmem:[#allocation2 + $0x78] sm:$0xff]
      %v9014 = vld [vmem:[#allocation2 + $0x80] sm:$0xff]
      %v9015 = vld [vmem:[#allocation2 + $0x88] sm:$0xff]
      %v9016 = vld [vmem:[#allocation2 + $0x90] sm:$0xff]
      %v9017 = vld [vmem:[#allocation2 + $0x98] sm:$0xff]
      %v9018 = vld [vmem:[#allocation2 + $0xa0] sm:$0xff]
      %v9019 = vld [vmem:[#allocation2 + $0xa8] sm:$0xff]
      %v9020 = vld [vmem:[#allocation2 + $0xb0] sm:$0xff]
      %v9021 = vld [vmem:[#allocation2 + $0xb8] sm:$0xff]
      %v9022 = vld [vmem:[#allocation2 + $0xc0] sm:$0xff]
      %v9023 = vld [vmem:[#allocation2 + $0xc8] sm:$0xff]
      %v9024 = vld [vmem:[#allocation2 + $0xd0] sm:$0xff]
      %v9025 = vld [vmem:[#allocation2 + $0xd8] sm:$0xff]
      %v9026 = vld [vmem:[#allocation2 + $0xe0] sm:$0xff]
      %v9027 = vld [vmem:[#allocation2 + $0xe8] sm:$0xff]
      %v9028 = vld [vmem:[#allocation2 + $0xf0] sm:$0xff]
      %v9029 = vld [vmem:[#allocation2 + $0xf8] sm:$0xff]
      %v9030 = vld [vmem:[#allocation2 + $0x100] sm:$0xff]
      %v9031 = vld [vmem:[#allocation2 + $0x108] sm:$0xff]
      %v9032 = vld [vmem:[#allocation2 + $0x110] sm:$0xff]
      %v9033 = vld [vmem:[#allocation2 + $0x118] sm:$0xff]
      %v9034 = vld [vmem:[#allocation2 + $0x120] sm:$0xff]
      %v9035 = vld [vmem:[#allocation2 + $0x128] sm:$0xff]
      %v9036 = vld [vmem:[#allocation2 + $0x130] sm:$0xff]
      %v9037 = vld [vmem:[#allocation2 + $0x138] sm:$0xff]
      %v9038 = vld [vmem:[#allocation2 + $0x140] sm:$0xff]
      %v9039 = vld [vmem:[#allocation2 + $0x148] sm:$0xff]
      %v9040 = vld [vmem:[#allocation2 + $0x150] sm:$0xff]
      %v9041 = vld [vmem:[#allocation2 + $0x158] sm:$0xff]
      %v9042 = vld [vmem:[#allocation2 + $0x160] sm:$0xff]
      %v9043 = vld [vmem:[#allocation2 + $0x168] sm:$0xff]
      %v9044 = vld [vmem:[#allocation2 + $0x170] sm:$0xff]
      %v9045 = vld [vmem:[#allocation2 + $0x178] sm:$0xff]
      %v9046 = vld [vmem:[#allocation2 + $0x180] sm:$0xff]
      %v9047 = vld [vmem:[#allocation2 + $0x188] sm:$0xff]
      %v9048 = vld [vmem:[#allocation2 + $0x190] sm:$0xff]
      %v9049 = vld [vmem:[#allocation2 + $0x198] sm:$0xff]
      %v9050 = vld [vmem:[#allocation2 + $0x1a0] sm:$0xff]
      %v9051 = vld [vmem:[#allocation2 + $0x1a8] sm:$0xff]
      %v9052 = vld [vmem:[#allocation2 + $0x1b0] sm:$0xff]
      %v9053 = vld [vmem:[#allocation2 + $0x1b8] sm:$0xff]
      %v9054 = vld [vmem:[#allocation2 + $0x1c0] sm:$0xff]
      %v9055 = vld [vmem:[#allocation2 + $0x1c8] sm:$0xff]
      %v9056 = vld [vmem:[#allocation2 + $0x1d0] sm:$0xff]
      %v9057 = vld [vmem:[#allocation2 + $0x1d8] sm:$0xff]
      %v9058 = vld [vmem:[#allocation2 + $0x1e0] sm:$0xff]
      %v9059 = vld [vmem:[#allocation2 + $0x1e8] sm:$0xff]
      %v9060 = vld [vmem:[#allocation2 + $0x1f0] sm:$0xff]
      %v9061 = vld [vmem:[#allocation2 + $0x1f8] sm:$0xff]
      %v9062 = vld [vmem:[#allocation2 + $0x200] sm:$0xff]
      %v9063 = vld [vmem:[#allocation2 + $0x208] sm:$0xff]
      %v9064 = vld [vmem:[#allocation2 + $0x210] sm:$0xff]
      %v9065 = vld [vmem:[#allocation2 + $0x218] sm:$0xff]
      %v9066 = vld [vmem:[#allocation2 + $0x220] sm:$0xff]
      %s9067 = scalar_lea.vmem %s2, 16
      %v9068 = vld [vmem:[%s9067] sm:$0xf]
      %v9070 = vsel %vm171, %v9003, 0
      %v9073 = vsel %vm171, %v9004, 0
      %v9076 = vsel %vm171, %v9005, 0
      %v9079 = vsel %vm171, %v9006, 0
      %v9082 = vsel %vm171, %v9007, 0
      %v9085 = vsel %vm171, %v9008, 0
      %v9088 = vsel %vm171, %v9009, 0
      %v9091 = vsel %vm171, %v9010, 0
      %v9094 = vsel %vm171, %v9011, 0
      %v9097 = vsel %vm171, %v9012, 0
      %v9100 = vsel %vm171, %v9013, 0
      %v9103 = vsel %vm171, %v9014, 0
      %v9106 = vsel %vm171, %v9015, 0
      %v9109 = vsel %vm171, %v9016, 0
      %v9112 = vsel %vm171, %v9017, 0
      %v9115 = vsel %vm171, %v9018, 0
      %v9118 = vsel %vm171, %v9019, 0
      %v9121 = vsel %vm171, %v9020, 0
      %v9124 = vsel %vm171, %v9021, 0
      %v9127 = vsel %vm171, %v9022, 0
      %v9130 = vsel %vm171, %v9023, 0
      %v9133 = vsel %vm171, %v9024, 0
      %v9136 = vsel %vm171, %v9025, 0
      %v9139 = vsel %vm171, %v9026, 0
      %v9142 = vsel %vm171, %v9027, 0
      %v9145 = vsel %vm171, %v9028, 0
      %v9148 = vsel %vm171, %v9029, 0
      %v9151 = vsel %vm171, %v9030, 0
      %v9154 = vsel %vm171, %v9031, 0
      %v9157 = vsel %vm171, %v9032, 0
      %v9160 = vsel %vm171, %v9033, 0
      %v9163 = vsel %vm171, %v9034, 0
      %v9166 = vsel %vm171, %v9035, 0
      %v9169 = vsel %vm171, %v9036, 0
      %v9172 = vsel %vm171, %v9037, 0
      %v9175 = vsel %vm171, %v9038, 0
      %v9178 = vsel %vm171, %v9039, 0
      %v9181 = vsel %vm171, %v9040, 0
      %v9184 = vsel %vm171, %v9041, 0
      %v9187 = vsel %vm171, %v9042, 0
      %v9190 = vsel %vm171, %v9043, 0
      %v9193 = vsel %vm171, %v9044, 0
      %v9196 = vsel %vm171, %v9045, 0
      %v9199 = vsel %vm171, %v9046, 0
      %v9202 = vsel %vm171, %v9047, 0
      %v9205 = vsel %vm171, %v9048, 0
      %v9208 = vsel %vm171, %v9049, 0
      %v9211 = vsel %vm171, %v9050, 0
      %v9214 = vsel %vm171, %v9051, 0
      %v9217 = vsel %vm171, %v9052, 0
      %v9220 = vsel %vm171, %v9053, 0
      %v9223 = vsel %vm171, %v9054, 0
      %v9226 = vsel %vm171, %v9055, 0
      %v9229 = vsel %vm171, %v9056, 0
      %v9232 = vsel %vm171, %v9057, 0
      %v9235 = vsel %vm171, %v9058, 0
      %v9238 = vsel %vm171, %v9059, 0
      %v9241 = vsel %vm171, %v9060, 0
      %v9244 = vsel %vm171, %v9061, 0
      %v9247 = vsel %vm171, %v9062, 0
      %v9250 = vsel %vm171, %v9063, 0
      %v9253 = vsel %vm171, %v9064, 0
      %v9256 = vsel %vm171, %v9065, 0
      %v9259 = vsel %vm171, %v9066, 0
      %v9262 = vsel %vm741, %v9068, 0
      %9264 = vmatpush.msra.mxu0 0.0
      %9265 = vmatpush.msra.mxu0 0.0
      %9266 = vmatpush.msra.mxu0 0.0
      %9267 = vmatpush.msra.mxu0 0.0
      %9268 = vmatpush.msra.mxu0 0.0
      %9269 = vmatpush.msra.mxu0 0.0
      %9270 = vmatpush.msra.mxu0 0.0
      %9271 = vmatpush.msra.mxu0 0.0
      %9272 = vmatpush.msra.mxu0 0.0
      %9273 = vmatpush.msra.mxu0 0.0
      %9274 = vmatpush.msra.mxu0 0.0
      %9275 = vmatpush.msra.mxu0 0.0
      %9276 = vmatpush.msra.mxu0 0.0
      %9277 = vmatpush.msra.mxu0 0.0
      %9278 = vmatpush.msra.mxu0 0.0
      %9279 = vmatpush.msra.mxu0 %v9262
      %9280 = vmatmul.f32.gmra.mxu0 %v9070
      %v9281 = vpop.f32.mrf.mxu0
      %v9282 = vadd.f32 0.0, %v9281
      %9283 = vmatmul.f32.gmra.mxu0 %v9073
      %v9284 = vpop.f32.mrf.mxu0
      %v9285 = vadd.f32 0.0, %v9284
      %9286 = vmatmul.f32.gmra.mxu0 %v9076
      %v9287 = vpop.f32.mrf.mxu0
      %v9288 = vadd.f32 0.0, %v9287
      %9289 = vmatmul.f32.gmra.mxu0 %v9079
      %v9290 = vpop.f32.mrf.mxu0
      %v9291 = vadd.f32 0.0, %v9290
      %9292 = vmatmul.f32.gmra.mxu0 %v9082
      %v9293 = vpop.f32.mrf.mxu0
      %v9294 = vadd.f32 0.0, %v9293
      %9295 = vmatmul.f32.gmra.mxu0 %v9085
      %v9296 = vpop.f32.mrf.mxu0
      %v9297 = vadd.f32 0.0, %v9296
      %9298 = vmatmul.f32.gmra.mxu0 %v9088
      %v9299 = vpop.f32.mrf.mxu0
      %v9300 = vadd.f32 0.0, %v9299
      %9301 = vmatmul.f32.gmra.mxu0 %v9091
      %v9302 = vpop.f32.mrf.mxu0
      %v9303 = vadd.f32 0.0, %v9302
      %9304 = vmatmul.f32.gmra.mxu0 %v9094
      %v9305 = vpop.f32.mrf.mxu0
      %v9306 = vadd.f32 0.0, %v9305
      %9307 = vmatmul.f32.gmra.mxu0 %v9097
      %v9308 = vpop.f32.mrf.mxu0
      %v9309 = vadd.f32 0.0, %v9308
      %9310 = vmatmul.f32.gmra.mxu0 %v9100
      %v9311 = vpop.f32.mrf.mxu0
      %v9312 = vadd.f32 0.0, %v9311
      %9313 = vmatmul.f32.gmra.mxu0 %v9103
      %v9314 = vpop.f32.mrf.mxu0
      %v9315 = vadd.f32 0.0, %v9314
      %9316 = vmatmul.f32.gmra.mxu0 %v9106
      %v9317 = vpop.f32.mrf.mxu0
      %v9318 = vadd.f32 0.0, %v9317
      %9319 = vmatmul.f32.gmra.mxu0 %v9109
      %v9320 = vpop.f32.mrf.mxu0
      %v9321 = vadd.f32 0.0, %v9320
      %9322 = vmatmul.f32.gmra.mxu0 %v9112
      %v9323 = vpop.f32.mrf.mxu0
      %v9324 = vadd.f32 0.0, %v9323
      %9325 = vmatmul.f32.gmra.mxu0 %v9115
      %v9326 = vpop.f32.mrf.mxu0
      %v9327 = vadd.f32 0.0, %v9326
      %9328 = vmatmul.f32.gmra.mxu0 %v9118
      %v9329 = vpop.f32.mrf.mxu0
      %v9330 = vadd.f32 0.0, %v9329
      %9331 = vmatmul.f32.gmra.mxu0 %v9121
      %v9332 = vpop.f32.mrf.mxu0
      %v9333 = vadd.f32 0.0, %v9332
      %9334 = vmatmul.f32.gmra.mxu0 %v9124
      %v9335 = vpop.f32.mrf.mxu0
      %v9336 = vadd.f32 0.0, %v9335
      %9337 = vmatmul.f32.gmra.mxu0 %v9127
      %v9338 = vpop.f32.mrf.mxu0
      %v9339 = vadd.f32 0.0, %v9338
      %9340 = vmatmul.f32.gmra.mxu0 %v9130
      %v9341 = vpop.f32.mrf.mxu0
      %v9342 = vadd.f32 0.0, %v9341
      %9343 = vmatmul.f32.gmra.mxu0 %v9133
      %v9344 = vpop.f32.mrf.mxu0
      %v9345 = vadd.f32 0.0, %v9344
      %9346 = vmatmul.f32.gmra.mxu0 %v9136
      %v9347 = vpop.f32.mrf.mxu0
      %v9348 = vadd.f32 0.0, %v9347
      %9349 = vmatmul.f32.gmra.mxu0 %v9139
      %v9350 = vpop.f32.mrf.mxu0
      %v9351 = vadd.f32 0.0, %v9350
      %9352 = vmatmul.f32.gmra.mxu0 %v9142
      %v9353 = vpop.f32.mrf.mxu0
      %v9354 = vadd.f32 0.0, %v9353
      %9355 = vmatmul.f32.gmra.mxu0 %v9145
      %v9356 = vpop.f32.mrf.mxu0
      %v9357 = vadd.f32 0.0, %v9356
      %9358 = vmatmul.f32.gmra.mxu0 %v9148
      %v9359 = vpop.f32.mrf.mxu0
      %v9360 = vadd.f32 0.0, %v9359
      %9361 = vmatmul.f32.gmra.mxu0 %v9151
      %v9362 = vpop.f32.mrf.mxu0
      %v9363 = vadd.f32 0.0, %v9362
      %9364 = vmatmul.f32.gmra.mxu0 %v9154
      %v9365 = vpop.f32.mrf.mxu0
      %v9366 = vadd.f32 0.0, %v9365
      %9367 = vmatmul.f32.gmra.mxu0 %v9157
      %v9368 = vpop.f32.mrf.mxu0
      %v9369 = vadd.f32 0.0, %v9368
      %9370 = vmatmul.f32.gmra.mxu0 %v9160
      %v9371 = vpop.f32.mrf.mxu0
      %v9372 = vadd.f32 0.0, %v9371
      %9373 = vmatmul.f32.gmra.mxu0 %v9163
      %v9374 = vpop.f32.mrf.mxu0
      %v9375 = vadd.f32 0.0, %v9374
      %9376 = vmatmul.f32.gmra.mxu0 %v9166
      %v9377 = vpop.f32.mrf.mxu0
      %v9378 = vadd.f32 0.0, %v9377
      %9379 = vmatmul.f32.gmra.mxu0 %v9169
      %v9380 = vpop.f32.mrf.mxu0
      %v9381 = vadd.f32 0.0, %v9380
      %9382 = vmatmul.f32.gmra.mxu0 %v9172
      %v9383 = vpop.f32.mrf.mxu0
      %v9384 = vadd.f32 0.0, %v9383
      %9385 = vmatmul.f32.gmra.mxu0 %v9175
      %v9386 = vpop.f32.mrf.mxu0
      %v9387 = vadd.f32 0.0, %v9386
      %9388 = vmatmul.f32.gmra.mxu0 %v9178
      %v9389 = vpop.f32.mrf.mxu0
      %v9390 = vadd.f32 0.0, %v9389
      %9391 = vmatmul.f32.gmra.mxu0 %v9181
      %v9392 = vpop.f32.mrf.mxu0
      %v9393 = vadd.f32 0.0, %v9392
      %9394 = vmatmul.f32.gmra.mxu0 %v9184
      %v9395 = vpop.f32.mrf.mxu0
      %v9396 = vadd.f32 0.0, %v9395
      %9397 = vmatmul.f32.gmra.mxu0 %v9187
      %v9398 = vpop.f32.mrf.mxu0
      %v9399 = vadd.f32 0.0, %v9398
      %9400 = vmatmul.f32.gmra.mxu0 %v9190
      %v9401 = vpop.f32.mrf.mxu0
      %v9402 = vadd.f32 0.0, %v9401
      %9403 = vmatmul.f32.gmra.mxu0 %v9193
      %v9404 = vpop.f32.mrf.mxu0
      %v9405 = vadd.f32 0.0, %v9404
      %9406 = vmatmul.f32.gmra.mxu0 %v9196
      %v9407 = vpop.f32.mrf.mxu0
      %v9408 = vadd.f32 0.0, %v9407
      %9409 = vmatmul.f32.gmra.mxu0 %v9199
      %v9410 = vpop.f32.mrf.mxu0
      %v9411 = vadd.f32 0.0, %v9410
      %9412 = vmatmul.f32.gmra.mxu0 %v9202
      %v9413 = vpop.f32.mrf.mxu0
      %v9414 = vadd.f32 0.0, %v9413
      %9415 = vmatmul.f32.gmra.mxu0 %v9205
      %v9416 = vpop.f32.mrf.mxu0
      %v9417 = vadd.f32 0.0, %v9416
      %9418 = vmatmul.f32.gmra.mxu0 %v9208
      %v9419 = vpop.f32.mrf.mxu0
      %v9420 = vadd.f32 0.0, %v9419
      %9421 = vmatmul.f32.gmra.mxu0 %v9211
      %v9422 = vpop.f32.mrf.mxu0
      %v9423 = vadd.f32 0.0, %v9422
      %9424 = vmatmul.f32.gmra.mxu0 %v9214
      %v9425 = vpop.f32.mrf.mxu0
      %v9426 = vadd.f32 0.0, %v9425
      %9427 = vmatmul.f32.gmra.mxu0 %v9217
      %v9428 = vpop.f32.mrf.mxu0
      %v9429 = vadd.f32 0.0, %v9428
      %9430 = vmatmul.f32.gmra.mxu0 %v9220
      %v9431 = vpop.f32.mrf.mxu0
      %v9432 = vadd.f32 0.0, %v9431
      %9433 = vmatmul.f32.gmra.mxu0 %v9223
      %v9434 = vpop.f32.mrf.mxu0
      %v9435 = vadd.f32 0.0, %v9434
      %9436 = vmatmul.f32.gmra.mxu0 %v9226
      %v9437 = vpop.f32.mrf.mxu0
      %v9438 = vadd.f32 0.0, %v9437
      %9439 = vmatmul.f32.gmra.mxu0 %v9229
      %v9440 = vpop.f32.mrf.mxu0
      %v9441 = vadd.f32 0.0, %v9440
      %9442 = vmatmul.f32.gmra.mxu0 %v9232
      %v9443 = vpop.f32.mrf.mxu0
      %v9444 = vadd.f32 0.0, %v9443
      %9445 = vmatmul.f32.gmra.mxu0 %v9235
      %v9446 = vpop.f32.mrf.mxu0
      %v9447 = vadd.f32 0.0, %v9446
      %9448 = vmatmul.f32.gmra.mxu0 %v9238
      %v9449 = vpop.f32.mrf.mxu0
      %v9450 = vadd.f32 0.0, %v9449
      %9451 = vmatmul.f32.gmra.mxu0 %v9241
      %v9452 = vpop.f32.mrf.mxu0
      %v9453 = vadd.f32 0.0, %v9452
      %9454 = vmatmul.f32.gmra.mxu0 %v9244
      %v9455 = vpop.f32.mrf.mxu0
      %v9456 = vadd.f32 0.0, %v9455
      %9457 = vmatmul.f32.gmra.mxu0 %v9247
      %v9458 = vpop.f32.mrf.mxu0
      %v9459 = vadd.f32 0.0, %v9458
      %9460 = vmatmul.f32.gmra.mxu0 %v9250
      %v9461 = vpop.f32.mrf.mxu0
      %v9462 = vadd.f32 0.0, %v9461
      %9463 = vmatmul.f32.gmra.mxu0 %v9253
      %v9464 = vpop.f32.mrf.mxu0
      %v9465 = vadd.f32 0.0, %v9464
      %9466 = vmatmul.f32.gmra.mxu0 %v9256
      %v9467 = vpop.f32.mrf.mxu0
      %v9468 = vadd.f32 0.0, %v9467
      %9469 = vmatmul.f32.gmra.mxu0 %v9259
      %v9470 = vpop.f32.mrf.mxu0
      %v9471 = vadd.f32 0.0, %v9470
      %9472 = vdwg.mxu0
      %v9473 = vadd.f32 %v8939, %v9282
      %v9474 = vadd.f32 %v8940, %v9285
      %v9475 = vadd.f32 %v8941, %v9288
      %v9476 = vadd.f32 %v8942, %v9291
      %v9477 = vadd.f32 %v8943, %v9294
      %v9478 = vadd.f32 %v8944, %v9297
      %v9479 = vadd.f32 %v8945, %v9300
      %v9480 = vadd.f32 %v8946, %v9303
      %v9481 = vadd.f32 %v8947, %v9306
      %v9482 = vadd.f32 %v8948, %v9309
      %v9483 = vadd.f32 %v8949, %v9312
      %v9484 = vadd.f32 %v8950, %v9315
      %v9485 = vadd.f32 %v8951, %v9318
      %v9486 = vadd.f32 %v8952, %v9321
      %v9487 = vadd.f32 %v8953, %v9324
      %v9488 = vadd.f32 %v8954, %v9327
      %v9489 = vadd.f32 %v8955, %v9330
      %v9490 = vadd.f32 %v8956, %v9333
      %v9491 = vadd.f32 %v8957, %v9336
      %v9492 = vadd.f32 %v8958, %v9339
      %v9493 = vadd.f32 %v8959, %v9342
      %v9494 = vadd.f32 %v8960, %v9345
      %v9495 = vadd.f32 %v8961, %v9348
      %v9496 = vadd.f32 %v8962, %v9351
      %v9497 = vadd.f32 %v8963, %v9354
      %v9498 = vadd.f32 %v8964, %v9357
      %v9499 = vadd.f32 %v8965, %v9360
      %v9500 = vadd.f32 %v8966, %v9363
      %v9501 = vadd.f32 %v8967, %v9366
      %v9502 = vadd.f32 %v8968, %v9369
      %v9503 = vadd.f32 %v8969, %v9372
      %v9504 = vadd.f32 %v8970, %v9375
      %v9505 = vadd.f32 %v8971, %v9378
      %v9506 = vadd.f32 %v8972, %v9381
      %v9507 = vadd.f32 %v8973, %v9384
      %v9508 = vadd.f32 %v8974, %v9387
      %v9509 = vadd.f32 %v8975, %v9390
      %v9510 = vadd.f32 %v8976, %v9393
      %v9511 = vadd.f32 %v8977, %v9396
      %v9512 = vadd.f32 %v8978, %v9399
      %v9513 = vadd.f32 %v8979, %v9402
      %v9514 = vadd.f32 %v8980, %v9405
      %v9515 = vadd.f32 %v8981, %v9408
      %v9516 = vadd.f32 %v8982, %v9411
      %v9517 = vadd.f32 %v8983, %v9414
      %v9518 = vadd.f32 %v8984, %v9417
      %v9519 = vadd.f32 %v8985, %v9420
      %v9520 = vadd.f32 %v8986, %v9423
      %v9521 = vadd.f32 %v8987, %v9426
      %v9522 = vadd.f32 %v8988, %v9429
      %v9523 = vadd.f32 %v8989, %v9432
      %v9524 = vadd.f32 %v8990, %v9435
      %v9525 = vadd.f32 %v8991, %v9438
      %v9526 = vadd.f32 %v8992, %v9441
      %v9527 = vadd.f32 %v8993, %v9444
      %v9528 = vadd.f32 %v8994, %v9447
      %v9529 = vadd.f32 %v8995, %v9450
      %v9530 = vadd.f32 %v8996, %v9453
      %v9531 = vadd.f32 %v8997, %v9456
      %v9532 = vadd.f32 %v8998, %v9459
      %v9533 = vadd.f32 %v8999, %v9462
      %v9534 = vadd.f32 %v9000, %v9465
      %v9535 = vadd.f32 %v9001, %v9468
      %v9536 = vadd.f32 %v9002, %v9471
      %v9537 = vld [vmem:[#allocation2 + $0x29] sm:$0xff]
      %v9538 = vld [vmem:[#allocation2 + $0x31] sm:$0xff]
      %v9539 = vld [vmem:[#allocation2 + $0x39] sm:$0xff]
      %v9540 = vld [vmem:[#allocation2 + $0x41] sm:$0xff]
      %v9541 = vld [vmem:[#allocation2 + $0x49] sm:$0xff]
      %v9542 = vld [vmem:[#allocation2 + $0x51] sm:$0xff]
      %v9543 = vld [vmem:[#allocation2 + $0x59] sm:$0xff]
      %v9544 = vld [vmem:[#allocation2 + $0x61] sm:$0xff]
      %v9545 = vld [vmem:[#allocation2 + $0x69] sm:$0xff]
      %v9546 = vld [vmem:[#allocation2 + $0x71] sm:$0xff]
      %v9547 = vld [vmem:[#allocation2 + $0x79] sm:$0xff]
      %v9548 = vld [vmem:[#allocation2 + $0x81] sm:$0xff]
      %v9549 = vld [vmem:[#allocation2 + $0x89] sm:$0xff]
      %v9550 = vld [vmem:[#allocation2 + $0x91] sm:$0xff]
      %v9551 = vld [vmem:[#allocation2 + $0x99] sm:$0xff]
      %v9552 = vld [vmem:[#allocation2 + $0xa1] sm:$0xff]
      %v9553 = vld [vmem:[#allocation2 + $0xa9] sm:$0xff]
      %v9554 = vld [vmem:[#allocation2 + $0xb1] sm:$0xff]
      %v9555 = vld [vmem:[#allocation2 + $0xb9] sm:$0xff]
      %v9556 = vld [vmem:[#allocation2 + $0xc1] sm:$0xff]
      %v9557 = vld [vmem:[#allocation2 + $0xc9] sm:$0xff]
      %v9558 = vld [vmem:[#allocation2 + $0xd1] sm:$0xff]
      %v9559 = vld [vmem:[#allocation2 + $0xd9] sm:$0xff]
      %v9560 = vld [vmem:[#allocation2 + $0xe1] sm:$0xff]
      %v9561 = vld [vmem:[#allocation2 + $0xe9] sm:$0xff]
      %v9562 = vld [vmem:[#allocation2 + $0xf1] sm:$0xff]
      %v9563 = vld [vmem:[#allocation2 + $0xf9] sm:$0xff]
      %v9564 = vld [vmem:[#allocation2 + $0x101] sm:$0xff]
      %v9565 = vld [vmem:[#allocation2 + $0x109] sm:$0xff]
      %v9566 = vld [vmem:[#allocation2 + $0x111] sm:$0xff]
      %v9567 = vld [vmem:[#allocation2 + $0x119] sm:$0xff]
      %v9568 = vld [vmem:[#allocation2 + $0x121] sm:$0xff]
      %v9569 = vld [vmem:[#allocation2 + $0x129] sm:$0xff]
      %v9570 = vld [vmem:[#allocation2 + $0x131] sm:$0xff]
      %v9571 = vld [vmem:[#allocation2 + $0x139] sm:$0xff]
      %v9572 = vld [vmem:[#allocation2 + $0x141] sm:$0xff]
      %v9573 = vld [vmem:[#allocation2 + $0x149] sm:$0xff]
      %v9574 = vld [vmem:[#allocation2 + $0x151] sm:$0xff]
      %v9575 = vld [vmem:[#allocation2 + $0x159] sm:$0xff]
      %v9576 = vld [vmem:[#allocation2 + $0x161] sm:$0xff]
      %v9577 = vld [vmem:[#allocation2 + $0x169] sm:$0xff]
      %v9578 = vld [vmem:[#allocation2 + $0x171] sm:$0xff]
      %v9579 = vld [vmem:[#allocation2 + $0x179] sm:$0xff]
      %v9580 = vld [vmem:[#allocation2 + $0x181] sm:$0xff]
      %v9581 = vld [vmem:[#allocation2 + $0x189] sm:$0xff]
      %v9582 = vld [vmem:[#allocation2 + $0x191] sm:$0xff]
      %v9583 = vld [vmem:[#allocation2 + $0x199] sm:$0xff]
      %v9584 = vld [vmem:[#allocation2 + $0x1a1] sm:$0xff]
      %v9585 = vld [vmem:[#allocation2 + $0x1a9] sm:$0xff]
      %v9586 = vld [vmem:[#allocation2 + $0x1b1] sm:$0xff]
      %v9587 = vld [vmem:[#allocation2 + $0x1b9] sm:$0xff]
      %v9588 = vld [vmem:[#allocation2 + $0x1c1] sm:$0xff]
      %v9589 = vld [vmem:[#allocation2 + $0x1c9] sm:$0xff]
      %v9590 = vld [vmem:[#allocation2 + $0x1d1] sm:$0xff]
      %v9591 = vld [vmem:[#allocation2 + $0x1d9] sm:$0xff]
      %v9592 = vld [vmem:[#allocation2 + $0x1e1] sm:$0xff]
      %v9593 = vld [vmem:[#allocation2 + $0x1e9] sm:$0xff]
      %v9594 = vld [vmem:[#allocation2 + $0x1f1] sm:$0xff]
      %v9595 = vld [vmem:[#allocation2 + $0x1f9] sm:$0xff]
      %v9596 = vld [vmem:[#allocation2 + $0x201] sm:$0xff]
      %v9597 = vld [vmem:[#allocation2 + $0x209] sm:$0xff]
      %v9598 = vld [vmem:[#allocation2 + $0x211] sm:$0xff]
      %v9599 = vld [vmem:[#allocation2 + $0x219] sm:$0xff]
      %v9600 = vld [vmem:[#allocation2 + $0x221] sm:$0xff]
      %s9601 = scalar_lea.vmem %s2, 20
      %v9602 = vld [vmem:[%s9601] sm:$0xf]
      %v9604 = vsel %vm171, %v9537, 0
      %v9607 = vsel %vm171, %v9538, 0
      %v9610 = vsel %vm171, %v9539, 0
      %v9613 = vsel %vm171, %v9540, 0
      %v9616 = vsel %vm171, %v9541, 0
      %v9619 = vsel %vm171, %v9542, 0
      %v9622 = vsel %vm171, %v9543, 0
      %v9625 = vsel %vm171, %v9544, 0
      %v9628 = vsel %vm171, %v9545, 0
      %v9631 = vsel %vm171, %v9546, 0
      %v9634 = vsel %vm171, %v9547, 0
      %v9637 = vsel %vm171, %v9548, 0
      %v9640 = vsel %vm171, %v9549, 0
      %v9643 = vsel %vm171, %v9550, 0
      %v9646 = vsel %vm171, %v9551, 0
      %v9649 = vsel %vm171, %v9552, 0
      %v9652 = vsel %vm171, %v9553, 0
      %v9655 = vsel %vm171, %v9554, 0
      %v9658 = vsel %vm171, %v9555, 0
      %v9661 = vsel %vm171, %v9556, 0
      %v9664 = vsel %vm171, %v9557, 0
      %v9667 = vsel %vm171, %v9558, 0
      %v9670 = vsel %vm171, %v9559, 0
      %v9673 = vsel %vm171, %v9560, 0
      %v9676 = vsel %vm171, %v9561, 0
      %v9679 = vsel %vm171, %v9562, 0
      %v9682 = vsel %vm171, %v9563, 0
      %v9685 = vsel %vm171, %v9564, 0
      %v9688 = vsel %vm171, %v9565, 0
      %v9691 = vsel %vm171, %v9566, 0
      %v9694 = vsel %vm171, %v9567, 0
      %v9697 = vsel %vm171, %v9568, 0
      %v9700 = vsel %vm171, %v9569, 0
      %v9703 = vsel %vm171, %v9570, 0
      %v9706 = vsel %vm171, %v9571, 0
      %v9709 = vsel %vm171, %v9572, 0
      %v9712 = vsel %vm171, %v9573, 0
      %v9715 = vsel %vm171, %v9574, 0
      %v9718 = vsel %vm171, %v9575, 0
      %v9721 = vsel %vm171, %v9576, 0
      %v9724 = vsel %vm171, %v9577, 0
      %v9727 = vsel %vm171, %v9578, 0
      %v9730 = vsel %vm171, %v9579, 0
      %v9733 = vsel %vm171, %v9580, 0
      %v9736 = vsel %vm171, %v9581, 0
      %v9739 = vsel %vm171, %v9582, 0
      %v9742 = vsel %vm171, %v9583, 0
      %v9745 = vsel %vm171, %v9584, 0
      %v9748 = vsel %vm171, %v9585, 0
      %v9751 = vsel %vm171, %v9586, 0
      %v9754 = vsel %vm171, %v9587, 0
      %v9757 = vsel %vm171, %v9588, 0
      %v9760 = vsel %vm171, %v9589, 0
      %v9763 = vsel %vm171, %v9590, 0
      %v9766 = vsel %vm171, %v9591, 0
      %v9769 = vsel %vm171, %v9592, 0
      %v9772 = vsel %vm171, %v9593, 0
      %v9775 = vsel %vm171, %v9594, 0
      %v9778 = vsel %vm171, %v9595, 0
      %v9781 = vsel %vm171, %v9596, 0
      %v9784 = vsel %vm171, %v9597, 0
      %v9787 = vsel %vm171, %v9598, 0
      %v9790 = vsel %vm171, %v9599, 0
      %v9793 = vsel %vm171, %v9600, 0
      %v9796 = vsel %vm741, %v9602, 0
      %9798 = vmatpush.msra.mxu0 0.0
      %9799 = vmatpush.msra.mxu0 0.0
      %9800 = vmatpush.msra.mxu0 0.0
      %9801 = vmatpush.msra.mxu0 0.0
      %9802 = vmatpush.msra.mxu0 0.0
      %9803 = vmatpush.msra.mxu0 0.0
      %9804 = vmatpush.msra.mxu0 0.0
      %9805 = vmatpush.msra.mxu0 0.0
      %9806 = vmatpush.msra.mxu0 0.0
      %9807 = vmatpush.msra.mxu0 0.0
      %9808 = vmatpush.msra.mxu0 0.0
      %9809 = vmatpush.msra.mxu0 0.0
      %9810 = vmatpush.msra.mxu0 0.0
      %9811 = vmatpush.msra.mxu0 0.0
      %9812 = vmatpush.msra.mxu0 0.0
      %9813 = vmatpush.msra.mxu0 %v9796
      %9814 = vmatmul.f32.gmra.mxu0 %v9604
      %v9815 = vpop.f32.mrf.mxu0
      %v9816 = vadd.f32 0.0, %v9815
      %9817 = vmatmul.f32.gmra.mxu0 %v9607
      %v9818 = vpop.f32.mrf.mxu0
      %v9819 = vadd.f32 0.0, %v9818
      %9820 = vmatmul.f32.gmra.mxu0 %v9610
      %v9821 = vpop.f32.mrf.mxu0
      %v9822 = vadd.f32 0.0, %v9821
      %9823 = vmatmul.f32.gmra.mxu0 %v9613
      %v9824 = vpop.f32.mrf.mxu0
      %v9825 = vadd.f32 0.0, %v9824
      %9826 = vmatmul.f32.gmra.mxu0 %v9616
      %v9827 = vpop.f32.mrf.mxu0
      %v9828 = vadd.f32 0.0, %v9827
      %9829 = vmatmul.f32.gmra.mxu0 %v9619
      %v9830 = vpop.f32.mrf.mxu0
      %v9831 = vadd.f32 0.0, %v9830
      %9832 = vmatmul.f32.gmra.mxu0 %v9622
      %v9833 = vpop.f32.mrf.mxu0
      %v9834 = vadd.f32 0.0, %v9833
      %9835 = vmatmul.f32.gmra.mxu0 %v9625
      %v9836 = vpop.f32.mrf.mxu0
      %v9837 = vadd.f32 0.0, %v9836
      %9838 = vmatmul.f32.gmra.mxu0 %v9628
      %v9839 = vpop.f32.mrf.mxu0
      %v9840 = vadd.f32 0.0, %v9839
      %9841 = vmatmul.f32.gmra.mxu0 %v9631
      %v9842 = vpop.f32.mrf.mxu0
      %v9843 = vadd.f32 0.0, %v9842
      %9844 = vmatmul.f32.gmra.mxu0 %v9634
      %v9845 = vpop.f32.mrf.mxu0
      %v9846 = vadd.f32 0.0, %v9845
      %9847 = vmatmul.f32.gmra.mxu0 %v9637
      %v9848 = vpop.f32.mrf.mxu0
      %v9849 = vadd.f32 0.0, %v9848
      %9850 = vmatmul.f32.gmra.mxu0 %v9640
      %v9851 = vpop.f32.mrf.mxu0
      %v9852 = vadd.f32 0.0, %v9851
      %9853 = vmatmul.f32.gmra.mxu0 %v9643
      %v9854 = vpop.f32.mrf.mxu0
      %v9855 = vadd.f32 0.0, %v9854
      %9856 = vmatmul.f32.gmra.mxu0 %v9646
      %v9857 = vpop.f32.mrf.mxu0
      %v9858 = vadd.f32 0.0, %v9857
      %9859 = vmatmul.f32.gmra.mxu0 %v9649
      %v9860 = vpop.f32.mrf.mxu0
      %v9861 = vadd.f32 0.0, %v9860
      %9862 = vmatmul.f32.gmra.mxu0 %v9652
      %v9863 = vpop.f32.mrf.mxu0
      %v9864 = vadd.f32 0.0, %v9863
      %9865 = vmatmul.f32.gmra.mxu0 %v9655
      %v9866 = vpop.f32.mrf.mxu0
      %v9867 = vadd.f32 0.0, %v9866
      %9868 = vmatmul.f32.gmra.mxu0 %v9658
      %v9869 = vpop.f32.mrf.mxu0
      %v9870 = vadd.f32 0.0, %v9869
      %9871 = vmatmul.f32.gmra.mxu0 %v9661
      %v9872 = vpop.f32.mrf.mxu0
      %v9873 = vadd.f32 0.0, %v9872
      %9874 = vmatmul.f32.gmra.mxu0 %v9664
      %v9875 = vpop.f32.mrf.mxu0
      %v9876 = vadd.f32 0.0, %v9875
      %9877 = vmatmul.f32.gmra.mxu0 %v9667
      %v9878 = vpop.f32.mrf.mxu0
      %v9879 = vadd.f32 0.0, %v9878
      %9880 = vmatmul.f32.gmra.mxu0 %v9670
      %v9881 = vpop.f32.mrf.mxu0
      %v9882 = vadd.f32 0.0, %v9881
      %9883 = vmatmul.f32.gmra.mxu0 %v9673
      %v9884 = vpop.f32.mrf.mxu0
      %v9885 = vadd.f32 0.0, %v9884
      %9886 = vmatmul.f32.gmra.mxu0 %v9676
      %v9887 = vpop.f32.mrf.mxu0
      %v9888 = vadd.f32 0.0, %v9887
      %9889 = vmatmul.f32.gmra.mxu0 %v9679
      %v9890 = vpop.f32.mrf.mxu0
      %v9891 = vadd.f32 0.0, %v9890
      %9892 = vmatmul.f32.gmra.mxu0 %v9682
      %v9893 = vpop.f32.mrf.mxu0
      %v9894 = vadd.f32 0.0, %v9893
      %9895 = vmatmul.f32.gmra.mxu0 %v9685
      %v9896 = vpop.f32.mrf.mxu0
      %v9897 = vadd.f32 0.0, %v9896
      %9898 = vmatmul.f32.gmra.mxu0 %v9688
      %v9899 = vpop.f32.mrf.mxu0
      %v9900 = vadd.f32 0.0, %v9899
      %9901 = vmatmul.f32.gmra.mxu0 %v9691
      %v9902 = vpop.f32.mrf.mxu0
      %v9903 = vadd.f32 0.0, %v9902
      %9904 = vmatmul.f32.gmra.mxu0 %v9694
      %v9905 = vpop.f32.mrf.mxu0
      %v9906 = vadd.f32 0.0, %v9905
      %9907 = vmatmul.f32.gmra.mxu0 %v9697
      %v9908 = vpop.f32.mrf.mxu0
      %v9909 = vadd.f32 0.0, %v9908
      %9910 = vmatmul.f32.gmra.mxu0 %v9700
      %v9911 = vpop.f32.mrf.mxu0
      %v9912 = vadd.f32 0.0, %v9911
      %9913 = vmatmul.f32.gmra.mxu0 %v9703
      %v9914 = vpop.f32.mrf.mxu0
      %v9915 = vadd.f32 0.0, %v9914
      %9916 = vmatmul.f32.gmra.mxu0 %v9706
      %v9917 = vpop.f32.mrf.mxu0
      %v9918 = vadd.f32 0.0, %v9917
      %9919 = vmatmul.f32.gmra.mxu0 %v9709
      %v9920 = vpop.f32.mrf.mxu0
      %v9921 = vadd.f32 0.0, %v9920
      %9922 = vmatmul.f32.gmra.mxu0 %v9712
      %v9923 = vpop.f32.mrf.mxu0
      %v9924 = vadd.f32 0.0, %v9923
      %9925 = vmatmul.f32.gmra.mxu0 %v9715
      %v9926 = vpop.f32.mrf.mxu0
      %v9927 = vadd.f32 0.0, %v9926
      %9928 = vmatmul.f32.gmra.mxu0 %v9718
      %v9929 = vpop.f32.mrf.mxu0
      %v9930 = vadd.f32 0.0, %v9929
      %9931 = vmatmul.f32.gmra.mxu0 %v9721
      %v9932 = vpop.f32.mrf.mxu0
      %v9933 = vadd.f32 0.0, %v9932
      %9934 = vmatmul.f32.gmra.mxu0 %v9724
      %v9935 = vpop.f32.mrf.mxu0
      %v9936 = vadd.f32 0.0, %v9935
      %9937 = vmatmul.f32.gmra.mxu0 %v9727
      %v9938 = vpop.f32.mrf.mxu0
      %v9939 = vadd.f32 0.0, %v9938
      %9940 = vmatmul.f32.gmra.mxu0 %v9730
      %v9941 = vpop.f32.mrf.mxu0
      %v9942 = vadd.f32 0.0, %v9941
      %9943 = vmatmul.f32.gmra.mxu0 %v9733
      %v9944 = vpop.f32.mrf.mxu0
      %v9945 = vadd.f32 0.0, %v9944
      %9946 = vmatmul.f32.gmra.mxu0 %v9736
      %v9947 = vpop.f32.mrf.mxu0
      %v9948 = vadd.f32 0.0, %v9947
      %9949 = vmatmul.f32.gmra.mxu0 %v9739
      %v9950 = vpop.f32.mrf.mxu0
      %v9951 = vadd.f32 0.0, %v9950
      %9952 = vmatmul.f32.gmra.mxu0 %v9742
      %v9953 = vpop.f32.mrf.mxu0
      %v9954 = vadd.f32 0.0, %v9953
      %9955 = vmatmul.f32.gmra.mxu0 %v9745
      %v9956 = vpop.f32.mrf.mxu0
      %v9957 = vadd.f32 0.0, %v9956
      %9958 = vmatmul.f32.gmra.mxu0 %v9748
      %v9959 = vpop.f32.mrf.mxu0
      %v9960 = vadd.f32 0.0, %v9959
      %9961 = vmatmul.f32.gmra.mxu0 %v9751
      %v9962 = vpop.f32.mrf.mxu0
      %v9963 = vadd.f32 0.0, %v9962
      %9964 = vmatmul.f32.gmra.mxu0 %v9754
      %v9965 = vpop.f32.mrf.mxu0
      %v9966 = vadd.f32 0.0, %v9965
      %9967 = vmatmul.f32.gmra.mxu0 %v9757
      %v9968 = vpop.f32.mrf.mxu0
      %v9969 = vadd.f32 0.0, %v9968
      %9970 = vmatmul.f32.gmra.mxu0 %v9760
      %v9971 = vpop.f32.mrf.mxu0
      %v9972 = vadd.f32 0.0, %v9971
      %9973 = vmatmul.f32.gmra.mxu0 %v9763
      %v9974 = vpop.f32.mrf.mxu0
      %v9975 = vadd.f32 0.0, %v9974
      %9976 = vmatmul.f32.gmra.mxu0 %v9766
      %v9977 = vpop.f32.mrf.mxu0
      %v9978 = vadd.f32 0.0, %v9977
      %9979 = vmatmul.f32.gmra.mxu0 %v9769
      %v9980 = vpop.f32.mrf.mxu0
      %v9981 = vadd.f32 0.0, %v9980
      %9982 = vmatmul.f32.gmra.mxu0 %v9772
      %v9983 = vpop.f32.mrf.mxu0
      %v9984 = vadd.f32 0.0, %v9983
      %9985 = vmatmul.f32.gmra.mxu0 %v9775
      %v9986 = vpop.f32.mrf.mxu0
      %v9987 = vadd.f32 0.0, %v9986
      %9988 = vmatmul.f32.gmra.mxu0 %v9778
      %v9989 = vpop.f32.mrf.mxu0
      %v9990 = vadd.f32 0.0, %v9989
      %9991 = vmatmul.f32.gmra.mxu0 %v9781
      %v9992 = vpop.f32.mrf.mxu0
      %v9993 = vadd.f32 0.0, %v9992
      %9994 = vmatmul.f32.gmra.mxu0 %v9784
      %v9995 = vpop.f32.mrf.mxu0
      %v9996 = vadd.f32 0.0, %v9995
      %9997 = vmatmul.f32.gmra.mxu0 %v9787
      %v9998 = vpop.f32.mrf.mxu0
      %v9999 = vadd.f32 0.0, %v9998
      %10000 = vmatmul.f32.gmra.mxu0 %v9790
      %v10001 = vpop.f32.mrf.mxu0
      %v10002 = vadd.f32 0.0, %v10001
      %10003 = vmatmul.f32.gmra.mxu0 %v9793
      %v10004 = vpop.f32.mrf.mxu0
      %v10005 = vadd.f32 0.0, %v10004
      %10006 = vdwg.mxu0
      %v10007 = vadd.f32 %v9473, %v9816
      %v10008 = vadd.f32 %v9474, %v9819
      %v10009 = vadd.f32 %v9475, %v9822
      %v10010 = vadd.f32 %v9476, %v9825
      %v10011 = vadd.f32 %v9477, %v9828
      %v10012 = vadd.f32 %v9478, %v9831
      %v10013 = vadd.f32 %v9479, %v9834
      %v10014 = vadd.f32 %v9480, %v9837
      %v10015 = vadd.f32 %v9481, %v9840
      %v10016 = vadd.f32 %v9482, %v9843
      %v10017 = vadd.f32 %v9483, %v9846
      %v10018 = vadd.f32 %v9484, %v9849
      %v10019 = vadd.f32 %v9485, %v9852
      %v10020 = vadd.f32 %v9486, %v9855
      %v10021 = vadd.f32 %v9487, %v9858
      %v10022 = vadd.f32 %v9488, %v9861
      %v10023 = vadd.f32 %v9489, %v9864
      %v10024 = vadd.f32 %v9490, %v9867
      %v10025 = vadd.f32 %v9491, %v9870
      %v10026 = vadd.f32 %v9492, %v9873
      %v10027 = vadd.f32 %v9493, %v9876
      %v10028 = vadd.f32 %v9494, %v9879
      %v10029 = vadd.f32 %v9495, %v9882
      %v10030 = vadd.f32 %v9496, %v9885
      %v10031 = vadd.f32 %v9497, %v9888
      %v10032 = vadd.f32 %v9498, %v9891
      %v10033 = vadd.f32 %v9499, %v9894
      %v10034 = vadd.f32 %v9500, %v9897
      %v10035 = vadd.f32 %v9501, %v9900
      %v10036 = vadd.f32 %v9502, %v9903
      %v10037 = vadd.f32 %v9503, %v9906
      %v10038 = vadd.f32 %v9504, %v9909
      %v10039 = vadd.f32 %v9505, %v9912
      %v10040 = vadd.f32 %v9506, %v9915
      %v10041 = vadd.f32 %v9507, %v9918
      %v10042 = vadd.f32 %v9508, %v9921
      %v10043 = vadd.f32 %v9509, %v9924
      %v10044 = vadd.f32 %v9510, %v9927
      %v10045 = vadd.f32 %v9511, %v9930
      %v10046 = vadd.f32 %v9512, %v9933
      %v10047 = vadd.f32 %v9513, %v9936
      %v10048 = vadd.f32 %v9514, %v9939
      %v10049 = vadd.f32 %v9515, %v9942
      %v10050 = vadd.f32 %v9516, %v9945
      %v10051 = vadd.f32 %v9517, %v9948
      %v10052 = vadd.f32 %v9518, %v9951
      %v10053 = vadd.f32 %v9519, %v9954
      %v10054 = vadd.f32 %v9520, %v9957
      %v10055 = vadd.f32 %v9521, %v9960
      %v10056 = vadd.f32 %v9522, %v9963
      %v10057 = vadd.f32 %v9523, %v9966
      %v10058 = vadd.f32 %v9524, %v9969
      %v10059 = vadd.f32 %v9525, %v9972
      %v10060 = vadd.f32 %v9526, %v9975
      %v10061 = vadd.f32 %v9527, %v9978
      %v10062 = vadd.f32 %v9528, %v9981
      %v10063 = vadd.f32 %v9529, %v9984
      %v10064 = vadd.f32 %v9530, %v9987
      %v10065 = vadd.f32 %v9531, %v9990
      %v10066 = vadd.f32 %v9532, %v9993
      %v10067 = vadd.f32 %v9533, %v9996
      %v10068 = vadd.f32 %v9534, %v9999
      %v10069 = vadd.f32 %v9535, %v10002
      %v10070 = vadd.f32 %v9536, %v10005
      %v10071 = vld [vmem:[#allocation2 + $0x47] sm:$0xff]
      %v10072 = vld [vmem:[#allocation2 + $0x4f] sm:$0xff]
      %v10073 = vld [vmem:[#allocation2 + $0x57] sm:$0xff]
      %v10074 = vld [vmem:[#allocation2 + $0x5f] sm:$0xff]
      %v10075 = vld [vmem:[#allocation2 + $0x67] sm:$0xff]
      %v10076 = vld [vmem:[#allocation2 + $0x6f] sm:$0xff]
      %v10077 = vld [vmem:[#allocation2 + $0x77] sm:$0xff]
      %v10078 = vld [vmem:[#allocation2 + $0x7f] sm:$0xff]
      %v10079 = vld [vmem:[#allocation2 + $0x87] sm:$0xff]
      %v10080 = vld [vmem:[#allocation2 + $0x8f] sm:$0xff]
      %v10081 = vld [vmem:[#allocation2 + $0x97] sm:$0xff]
      %v10082 = vld [vmem:[#allocation2 + $0x9f] sm:$0xff]
      %v10083 = vld [vmem:[#allocation2 + $0xa7] sm:$0xff]
      %v10084 = vld [vmem:[#allocation2 + $0xaf] sm:$0xff]
      %v10085 = vld [vmem:[#allocation2 + $0xb7] sm:$0xff]
      %v10086 = vld [vmem:[#allocation2 + $0xbf] sm:$0xff]
      %v10087 = vld [vmem:[#allocation2 + $0xc7] sm:$0xff]
      %v10088 = vld [vmem:[#allocation2 + $0xcf] sm:$0xff]
      %v10089 = vld [vmem:[#allocation2 + $0xd7] sm:$0xff]
      %v10090 = vld [vmem:[#allocation2 + $0xdf] sm:$0xff]
      %v10091 = vld [vmem:[#allocation2 + $0xe7] sm:$0xff]
      %v10092 = vld [vmem:[#allocation2 + $0xef] sm:$0xff]
      %v10093 = vld [vmem:[#allocation2 + $0xf7] sm:$0xff]
      %v10094 = vld [vmem:[#allocation2 + $0xff] sm:$0xff]
      %v10095 = vld [vmem:[#allocation2 + $0x107] sm:$0xff]
      %v10096 = vld [vmem:[#allocation2 + $0x10f] sm:$0xff]
      %v10097 = vld [vmem:[#allocation2 + $0x117] sm:$0xff]
      %v10098 = vld [vmem:[#allocation2 + $0x11f] sm:$0xff]
      %v10099 = vld [vmem:[#allocation2 + $0x127] sm:$0xff]
      %v10100 = vld [vmem:[#allocation2 + $0x12f] sm:$0xff]
      %v10101 = vld [vmem:[#allocation2 + $0x137] sm:$0xff]
      %v10102 = vld [vmem:[#allocation2 + $0x13f] sm:$0xff]
      %v10103 = vld [vmem:[#allocation2 + $0x147] sm:$0xff]
      %v10104 = vld [vmem:[#allocation2 + $0x14f] sm:$0xff]
      %v10105 = vld [vmem:[#allocation2 + $0x157] sm:$0xff]
      %v10106 = vld [vmem:[#allocation2 + $0x15f] sm:$0xff]
      %v10107 = vld [vmem:[#allocation2 + $0x167] sm:$0xff]
      %v10108 = vld [vmem:[#allocation2 + $0x16f] sm:$0xff]
      %v10109 = vld [vmem:[#allocation2 + $0x177] sm:$0xff]
      %v10110 = vld [vmem:[#allocation2 + $0x17f] sm:$0xff]
      %v10111 = vld [vmem:[#allocation2 + $0x187] sm:$0xff]
      %v10112 = vld [vmem:[#allocation2 + $0x18f] sm:$0xff]
      %v10113 = vld [vmem:[#allocation2 + $0x197] sm:$0xff]
      %v10114 = vld [vmem:[#allocation2 + $0x19f] sm:$0xff]
      %v10115 = vld [vmem:[#allocation2 + $0x1a7] sm:$0xff]
      %v10116 = vld [vmem:[#allocation2 + $0x1af] sm:$0xff]
      %v10117 = vld [vmem:[#allocation2 + $0x1b7] sm:$0xff]
      %v10118 = vld [vmem:[#allocation2 + $0x1bf] sm:$0xff]
      %v10119 = vld [vmem:[#allocation2 + $0x1c7] sm:$0xff]
      %v10120 = vld [vmem:[#allocation2 + $0x1cf] sm:$0xff]
      %v10121 = vld [vmem:[#allocation2 + $0x1d7] sm:$0xff]
      %v10122 = vld [vmem:[#allocation2 + $0x1df] sm:$0xff]
      %v10123 = vld [vmem:[#allocation2 + $0x1e7] sm:$0xff]
      %v10124 = vld [vmem:[#allocation2 + $0x1ef] sm:$0xff]
      %v10125 = vld [vmem:[#allocation2 + $0x1f7] sm:$0xff]
      %v10126 = vld [vmem:[#allocation2 + $0x1ff] sm:$0xff]
      %v10127 = vld [vmem:[#allocation2 + $0x207] sm:$0xff]
      %v10128 = vld [vmem:[#allocation2 + $0x20f] sm:$0xff]
      %v10129 = vld [vmem:[#allocation2 + $0x217] sm:$0xff]
      %v10130 = vld [vmem:[#allocation2 + $0x21f] sm:$0xff]
      %v10131 = vld [vmem:[#allocation2 + $0x227] sm:$0xff]
      %v10132 = vld [vmem:[#allocation2 + $0x22f] sm:$0xff]
      %v10133 = vld [vmem:[#allocation2 + $0x237] sm:$0xff]
      %v10134 = vld [vmem:[#allocation2 + $0x23f] sm:$0xff]
      %s10135 = scalar_lea.vmem %s2, 24
      %v10136 = vld [vmem:[%s10135] sm:$0xf]
      %v10138 = vsel %vm171, %v10071, 0
      %v10141 = vsel %vm171, %v10072, 0
      %v10144 = vsel %vm171, %v10073, 0
      %v10147 = vsel %vm171, %v10074, 0
      %v10150 = vsel %vm171, %v10075, 0
      %v10153 = vsel %vm171, %v10076, 0
      %v10156 = vsel %vm171, %v10077, 0
      %v10159 = vsel %vm171, %v10078, 0
      %v10162 = vsel %vm171, %v10079, 0
      %v10165 = vsel %vm171, %v10080, 0
      %v10168 = vsel %vm171, %v10081, 0
      %v10171 = vsel %vm171, %v10082, 0
      %v10174 = vsel %vm171, %v10083, 0
      %v10177 = vsel %vm171, %v10084, 0
      %v10180 = vsel %vm171, %v10085, 0
      %v10183 = vsel %vm171, %v10086, 0
      %v10186 = vsel %vm171, %v10087, 0
      %v10189 = vsel %vm171, %v10088, 0
      %v10192 = vsel %vm171, %v10089, 0
      %v10195 = vsel %vm171, %v10090, 0
      %v10198 = vsel %vm171, %v10091, 0
      %v10201 = vsel %vm171, %v10092, 0
      %v10204 = vsel %vm171, %v10093, 0
      %v10207 = vsel %vm171, %v10094, 0
      %v10210 = vsel %vm171, %v10095, 0
      %v10213 = vsel %vm171, %v10096, 0
      %v10216 = vsel %vm171, %v10097, 0
      %v10219 = vsel %vm171, %v10098, 0
      %v10222 = vsel %vm171, %v10099, 0
      %v10225 = vsel %vm171, %v10100, 0
      %v10228 = vsel %vm171, %v10101, 0
      %v10231 = vsel %vm171, %v10102, 0
      %v10234 = vsel %vm171, %v10103, 0
      %v10237 = vsel %vm171, %v10104, 0
      %v10240 = vsel %vm171, %v10105, 0
      %v10243 = vsel %vm171, %v10106, 0
      %v10246 = vsel %vm171, %v10107, 0
      %v10249 = vsel %vm171, %v10108, 0
      %v10252 = vsel %vm171, %v10109, 0
      %v10255 = vsel %vm171, %v10110, 0
      %v10258 = vsel %vm171, %v10111, 0
      %v10261 = vsel %vm171, %v10112, 0
      %v10264 = vsel %vm171, %v10113, 0
      %v10267 = vsel %vm171, %v10114, 0
      %v10270 = vsel %vm171, %v10115, 0
      %v10273 = vsel %vm171, %v10116, 0
      %v10276 = vsel %vm171, %v10117, 0
      %v10279 = vsel %vm171, %v10118, 0
      %v10282 = vsel %vm171, %v10119, 0
      %v10285 = vsel %vm171, %v10120, 0
      %v10288 = vsel %vm171, %v10121, 0
      %v10291 = vsel %vm171, %v10122, 0
      %v10294 = vsel %vm171, %v10123, 0
      %v10297 = vsel %vm171, %v10124, 0
      %v10300 = vsel %vm171, %v10125, 0
      %v10303 = vsel %vm171, %v10126, 0
      %v10306 = vsel %vm171, %v10127, 0
      %v10309 = vsel %vm171, %v10128, 0
      %v10312 = vsel %vm171, %v10129, 0
      %v10315 = vsel %vm171, %v10130, 0
      %v10318 = vsel %vm171, %v10131, 0
      %v10321 = vsel %vm171, %v10132, 0
      %v10324 = vsel %vm171, %v10133, 0
      %v10327 = vsel %vm171, %v10134, 0
      %v10330 = vsel %vm741, %v10136, 0
      %10332 = vmatpush.msra.mxu0 0.0
      %10333 = vmatpush.msra.mxu0 0.0
      %10334 = vmatpush.msra.mxu0 0.0
      %10335 = vmatpush.msra.mxu0 0.0
      %10336 = vmatpush.msra.mxu0 0.0
      %10337 = vmatpush.msra.mxu0 0.0
      %10338 = vmatpush.msra.mxu0 0.0
      %10339 = vmatpush.msra.mxu0 0.0
      %10340 = vmatpush.msra.mxu0 0.0
      %10341 = vmatpush.msra.mxu0 0.0
      %10342 = vmatpush.msra.mxu0 0.0
      %10343 = vmatpush.msra.mxu0 0.0
      %10344 = vmatpush.msra.mxu0 0.0
      %10345 = vmatpush.msra.mxu0 0.0
      %10346 = vmatpush.msra.mxu0 0.0
      %10347 = vmatpush.msra.mxu0 %v10330
      %10348 = vmatmul.f32.gmra.mxu0 %v10138
      %v10349 = vpop.f32.mrf.mxu0
      %v10350 = vadd.f32 0.0, %v10349
      %10351 = vmatmul.f32.gmra.mxu0 %v10141
      %v10352 = vpop.f32.mrf.mxu0
      %v10353 = vadd.f32 0.0, %v10352
      %10354 = vmatmul.f32.gmra.mxu0 %v10144
      %v10355 = vpop.f32.mrf.mxu0
      %v10356 = vadd.f32 0.0, %v10355
      %10357 = vmatmul.f32.gmra.mxu0 %v10147
      %v10358 = vpop.f32.mrf.mxu0
      %v10359 = vadd.f32 0.0, %v10358
      %10360 = vmatmul.f32.gmra.mxu0 %v10150
      %v10361 = vpop.f32.mrf.mxu0
      %v10362 = vadd.f32 0.0, %v10361
      %10363 = vmatmul.f32.gmra.mxu0 %v10153
      %v10364 = vpop.f32.mrf.mxu0
      %v10365 = vadd.f32 0.0, %v10364
      %10366 = vmatmul.f32.gmra.mxu0 %v10156
      %v10367 = vpop.f32.mrf.mxu0
      %v10368 = vadd.f32 0.0, %v10367
      %10369 = vmatmul.f32.gmra.mxu0 %v10159
      %v10370 = vpop.f32.mrf.mxu0
      %v10371 = vadd.f32 0.0, %v10370
      %10372 = vmatmul.f32.gmra.mxu0 %v10162
      %v10373 = vpop.f32.mrf.mxu0
      %v10374 = vadd.f32 0.0, %v10373
      %10375 = vmatmul.f32.gmra.mxu0 %v10165
      %v10376 = vpop.f32.mrf.mxu0
      %v10377 = vadd.f32 0.0, %v10376
      %10378 = vmatmul.f32.gmra.mxu0 %v10168
      %v10379 = vpop.f32.mrf.mxu0
      %v10380 = vadd.f32 0.0, %v10379
      %10381 = vmatmul.f32.gmra.mxu0 %v10171
      %v10382 = vpop.f32.mrf.mxu0
      %v10383 = vadd.f32 0.0, %v10382
      %10384 = vmatmul.f32.gmra.mxu0 %v10174
      %v10385 = vpop.f32.mrf.mxu0
      %v10386 = vadd.f32 0.0, %v10385
      %10387 = vmatmul.f32.gmra.mxu0 %v10177
      %v10388 = vpop.f32.mrf.mxu0
      %v10389 = vadd.f32 0.0, %v10388
      %10390 = vmatmul.f32.gmra.mxu0 %v10180
      %v10391 = vpop.f32.mrf.mxu0
      %v10392 = vadd.f32 0.0, %v10391
      %10393 = vmatmul.f32.gmra.mxu0 %v10183
      %v10394 = vpop.f32.mrf.mxu0
      %v10395 = vadd.f32 0.0, %v10394
      %10396 = vmatmul.f32.gmra.mxu0 %v10186
      %v10397 = vpop.f32.mrf.mxu0
      %v10398 = vadd.f32 0.0, %v10397
      %10399 = vmatmul.f32.gmra.mxu0 %v10189
      %v10400 = vpop.f32.mrf.mxu0
      %v10401 = vadd.f32 0.0, %v10400
      %10402 = vmatmul.f32.gmra.mxu0 %v10192
      %v10403 = vpop.f32.mrf.mxu0
      %v10404 = vadd.f32 0.0, %v10403
      %10405 = vmatmul.f32.gmra.mxu0 %v10195
      %v10406 = vpop.f32.mrf.mxu0
      %v10407 = vadd.f32 0.0, %v10406
      %10408 = vmatmul.f32.gmra.mxu0 %v10198
      %v10409 = vpop.f32.mrf.mxu0
      %v10410 = vadd.f32 0.0, %v10409
      %10411 = vmatmul.f32.gmra.mxu0 %v10201
      %v10412 = vpop.f32.mrf.mxu0
      %v10413 = vadd.f32 0.0, %v10412
      %10414 = vmatmul.f32.gmra.mxu0 %v10204
      %v10415 = vpop.f32.mrf.mxu0
      %v10416 = vadd.f32 0.0, %v10415
      %10417 = vmatmul.f32.gmra.mxu0 %v10207
      %v10418 = vpop.f32.mrf.mxu0
      %v10419 = vadd.f32 0.0, %v10418
      %10420 = vmatmul.f32.gmra.mxu0 %v10210
      %v10421 = vpop.f32.mrf.mxu0
      %v10422 = vadd.f32 0.0, %v10421
      %10423 = vmatmul.f32.gmra.mxu0 %v10213
      %v10424 = vpop.f32.mrf.mxu0
      %v10425 = vadd.f32 0.0, %v10424
      %10426 = vmatmul.f32.gmra.mxu0 %v10216
      %v10427 = vpop.f32.mrf.mxu0
      %v10428 = vadd.f32 0.0, %v10427
      %10429 = vmatmul.f32.gmra.mxu0 %v10219
      %v10430 = vpop.f32.mrf.mxu0
      %v10431 = vadd.f32 0.0, %v10430
      %10432 = vmatmul.f32.gmra.mxu0 %v10222
      %v10433 = vpop.f32.mrf.mxu0
      %v10434 = vadd.f32 0.0, %v10433
      %10435 = vmatmul.f32.gmra.mxu0 %v10225
      %v10436 = vpop.f32.mrf.mxu0
      %v10437 = vadd.f32 0.0, %v10436
      %10438 = vmatmul.f32.gmra.mxu0 %v10228
      %v10439 = vpop.f32.mrf.mxu0
      %v10440 = vadd.f32 0.0, %v10439
      %10441 = vmatmul.f32.gmra.mxu0 %v10231
      %v10442 = vpop.f32.mrf.mxu0
      %v10443 = vadd.f32 0.0, %v10442
      %10444 = vmatmul.f32.gmra.mxu0 %v10234
      %v10445 = vpop.f32.mrf.mxu0
      %v10446 = vadd.f32 0.0, %v10445
      %10447 = vmatmul.f32.gmra.mxu0 %v10237
      %v10448 = vpop.f32.mrf.mxu0
      %v10449 = vadd.f32 0.0, %v10448
      %10450 = vmatmul.f32.gmra.mxu0 %v10240
      %v10451 = vpop.f32.mrf.mxu0
      %v10452 = vadd.f32 0.0, %v10451
      %10453 = vmatmul.f32.gmra.mxu0 %v10243
      %v10454 = vpop.f32.mrf.mxu0
      %v10455 = vadd.f32 0.0, %v10454
      %10456 = vmatmul.f32.gmra.mxu0 %v10246
      %v10457 = vpop.f32.mrf.mxu0
      %v10458 = vadd.f32 0.0, %v10457
      %10459 = vmatmul.f32.gmra.mxu0 %v10249
      %v10460 = vpop.f32.mrf.mxu0
      %v10461 = vadd.f32 0.0, %v10460
      %10462 = vmatmul.f32.gmra.mxu0 %v10252
      %v10463 = vpop.f32.mrf.mxu0
      %v10464 = vadd.f32 0.0, %v10463
      %10465 = vmatmul.f32.gmra.mxu0 %v10255
      %v10466 = vpop.f32.mrf.mxu0
      %v10467 = vadd.f32 0.0, %v10466
      %10468 = vmatmul.f32.gmra.mxu0 %v10258
      %v10469 = vpop.f32.mrf.mxu0
      %v10470 = vadd.f32 0.0, %v10469
      %10471 = vmatmul.f32.gmra.mxu0 %v10261
      %v10472 = vpop.f32.mrf.mxu0
      %v10473 = vadd.f32 0.0, %v10472
      %10474 = vmatmul.f32.gmra.mxu0 %v10264
      %v10475 = vpop.f32.mrf.mxu0
      %v10476 = vadd.f32 0.0, %v10475
      %10477 = vmatmul.f32.gmra.mxu0 %v10267
      %v10478 = vpop.f32.mrf.mxu0
      %v10479 = vadd.f32 0.0, %v10478
      %10480 = vmatmul.f32.gmra.mxu0 %v10270
      %v10481 = vpop.f32.mrf.mxu0
      %v10482 = vadd.f32 0.0, %v10481
      %10483 = vmatmul.f32.gmra.mxu0 %v10273
      %v10484 = vpop.f32.mrf.mxu0
      %v10485 = vadd.f32 0.0, %v10484
      %10486 = vmatmul.f32.gmra.mxu0 %v10276
      %v10487 = vpop.f32.mrf.mxu0
      %v10488 = vadd.f32 0.0, %v10487
      %10489 = vmatmul.f32.gmra.mxu0 %v10279
      %v10490 = vpop.f32.mrf.mxu0
      %v10491 = vadd.f32 0.0, %v10490
      %10492 = vmatmul.f32.gmra.mxu0 %v10282
      %v10493 = vpop.f32.mrf.mxu0
      %v10494 = vadd.f32 0.0, %v10493
      %10495 = vmatmul.f32.gmra.mxu0 %v10285
      %v10496 = vpop.f32.mrf.mxu0
      %v10497 = vadd.f32 0.0, %v10496
      %10498 = vmatmul.f32.gmra.mxu0 %v10288
      %v10499 = vpop.f32.mrf.mxu0
      %v10500 = vadd.f32 0.0, %v10499
      %10501 = vmatmul.f32.gmra.mxu0 %v10291
      %v10502 = vpop.f32.mrf.mxu0
      %v10503 = vadd.f32 0.0, %v10502
      %10504 = vmatmul.f32.gmra.mxu0 %v10294
      %v10505 = vpop.f32.mrf.mxu0
      %v10506 = vadd.f32 0.0, %v10505
      %10507 = vmatmul.f32.gmra.mxu0 %v10297
      %v10508 = vpop.f32.mrf.mxu0
      %v10509 = vadd.f32 0.0, %v10508
      %10510 = vmatmul.f32.gmra.mxu0 %v10300
      %v10511 = vpop.f32.mrf.mxu0
      %v10512 = vadd.f32 0.0, %v10511
      %10513 = vmatmul.f32.gmra.mxu0 %v10303
      %v10514 = vpop.f32.mrf.mxu0
      %v10515 = vadd.f32 0.0, %v10514
      %10516 = vmatmul.f32.gmra.mxu0 %v10306
      %v10517 = vpop.f32.mrf.mxu0
      %v10518 = vadd.f32 0.0, %v10517
      %10519 = vmatmul.f32.gmra.mxu0 %v10309
      %v10520 = vpop.f32.mrf.mxu0
      %v10521 = vadd.f32 0.0, %v10520
      %10522 = vmatmul.f32.gmra.mxu0 %v10312
      %v10523 = vpop.f32.mrf.mxu0
      %v10524 = vadd.f32 0.0, %v10523
      %10525 = vmatmul.f32.gmra.mxu0 %v10315
      %v10526 = vpop.f32.mrf.mxu0
      %v10527 = vadd.f32 0.0, %v10526
      %10528 = vmatmul.f32.gmra.mxu0 %v10318
      %v10529 = vpop.f32.mrf.mxu0
      %v10530 = vadd.f32 0.0, %v10529
      %10531 = vmatmul.f32.gmra.mxu0 %v10321
      %v10532 = vpop.f32.mrf.mxu0
      %v10533 = vadd.f32 0.0, %v10532
      %10534 = vmatmul.f32.gmra.mxu0 %v10324
      %v10535 = vpop.f32.mrf.mxu0
      %v10536 = vadd.f32 0.0, %v10535
      %10537 = vmatmul.f32.gmra.mxu0 %v10327
      %v10538 = vpop.f32.mrf.mxu0
      %v10539 = vadd.f32 0.0, %v10538
      %10540 = vdwg.mxu0
      %v10541 = vadd.f32 %v10007, %v10350
      %v10542 = vadd.f32 %v10008, %v10353
      %v10543 = vadd.f32 %v10009, %v10356
      %v10544 = vadd.f32 %v10010, %v10359
      %v10545 = vadd.f32 %v10011, %v10362
      %v10546 = vadd.f32 %v10012, %v10365
      %v10547 = vadd.f32 %v10013, %v10368
      %v10548 = vadd.f32 %v10014, %v10371
      %v10549 = vadd.f32 %v10015, %v10374
      %v10550 = vadd.f32 %v10016, %v10377
      %v10551 = vadd.f32 %v10017, %v10380
      %v10552 = vadd.f32 %v10018, %v10383
      %v10553 = vadd.f32 %v10019, %v10386
      %v10554 = vadd.f32 %v10020, %v10389
      %v10555 = vadd.f32 %v10021, %v10392
      %v10556 = vadd.f32 %v10022, %v10395
      %v10557 = vadd.f32 %v10023, %v10398
      %v10558 = vadd.f32 %v10024, %v10401
      %v10559 = vadd.f32 %v10025, %v10404
      %v10560 = vadd.f32 %v10026, %v10407
      %v10561 = vadd.f32 %v10027, %v10410
      %v10562 = vadd.f32 %v10028, %v10413
      %v10563 = vadd.f32 %v10029, %v10416
      %v10564 = vadd.f32 %v10030, %v10419
      %v10565 = vadd.f32 %v10031, %v10422
      %v10566 = vadd.f32 %v10032, %v10425
      %v10567 = vadd.f32 %v10033, %v10428
      %v10568 = vadd.f32 %v10034, %v10431
      %v10569 = vadd.f32 %v10035, %v10434
      %v10570 = vadd.f32 %v10036, %v10437
      %v10571 = vadd.f32 %v10037, %v10440
      %v10572 = vadd.f32 %v10038, %v10443
      %v10573 = vadd.f32 %v10039, %v10446
      %v10574 = vadd.f32 %v10040, %v10449
      %v10575 = vadd.f32 %v10041, %v10452
      %v10576 = vadd.f32 %v10042, %v10455
      %v10577 = vadd.f32 %v10043, %v10458
      %v10578 = vadd.f32 %v10044, %v10461
      %v10579 = vadd.f32 %v10045, %v10464
      %v10580 = vadd.f32 %v10046, %v10467
      %v10581 = vadd.f32 %v10047, %v10470
      %v10582 = vadd.f32 %v10048, %v10473
      %v10583 = vadd.f32 %v10049, %v10476
      %v10584 = vadd.f32 %v10050, %v10479
      %v10585 = vadd.f32 %v10051, %v10482
      %v10586 = vadd.f32 %v10052, %v10485
      %v10587 = vadd.f32 %v10053, %v10488
      %v10588 = vadd.f32 %v10054, %v10491
      %v10589 = vadd.f32 %v10055, %v10494
      %v10590 = vadd.f32 %v10056, %v10497
      %v10591 = vadd.f32 %v10057, %v10500
      %v10592 = vadd.f32 %v10058, %v10503
      %v10593 = vadd.f32 %v10059, %v10506
      %v10594 = vadd.f32 %v10060, %v10509
      %v10595 = vadd.f32 %v10061, %v10512
      %v10596 = vadd.f32 %v10062, %v10515
      %v10597 = vadd.f32 %v10063, %v10518
      %v10598 = vadd.f32 %v10064, %v10521
      %v10599 = vadd.f32 %v10065, %v10524
      %v10600 = vadd.f32 %v10066, %v10527
      %v10601 = vadd.f32 %v10067, %v10530
      %v10602 = vadd.f32 %v10068, %v10533
      %v10603 = vadd.f32 %v10069, %v10536
      %v10604 = vadd.f32 %v10070, %v10539
      %v10605 = vld [vmem:[#allocation2 + $0x48] sm:$0xff]
      %v10606 = vld [vmem:[#allocation2 + $0x50] sm:$0xff]
      %v10607 = vld [vmem:[#allocation2 + $0x58] sm:$0xff]
      %v10608 = vld [vmem:[#allocation2 + $0x60] sm:$0xff]
      %v10609 = vld [vmem:[#allocation2 + $0x68] sm:$0xff]
      %v10610 = vld [vmem:[#allocation2 + $0x70] sm:$0xff]
      %v10611 = vld [vmem:[#allocation2 + $0x78] sm:$0xff]
      %v10612 = vld [vmem:[#allocation2 + $0x80] sm:$0xff]
      %v10613 = vld [vmem:[#allocation2 + $0x88] sm:$0xff]
      %v10614 = vld [vmem:[#allocation2 + $0x90] sm:$0xff]
      %v10615 = vld [vmem:[#allocation2 + $0x98] sm:$0xff]
      %v10616 = vld [vmem:[#allocation2 + $0xa0] sm:$0xff]
      %v10617 = vld [vmem:[#allocation2 + $0xa8] sm:$0xff]
      %v10618 = vld [vmem:[#allocation2 + $0xb0] sm:$0xff]
      %v10619 = vld [vmem:[#allocation2 + $0xb8] sm:$0xff]
      %v10620 = vld [vmem:[#allocation2 + $0xc0] sm:$0xff]
      %v10621 = vld [vmem:[#allocation2 + $0xc8] sm:$0xff]
      %v10622 = vld [vmem:[#allocation2 + $0xd0] sm:$0xff]
      %v10623 = vld [vmem:[#allocation2 + $0xd8] sm:$0xff]
      %v10624 = vld [vmem:[#allocation2 + $0xe0] sm:$0xff]
      %v10625 = vld [vmem:[#allocation2 + $0xe8] sm:$0xff]
      %v10626 = vld [vmem:[#allocation2 + $0xf0] sm:$0xff]
      %v10627 = vld [vmem:[#allocation2 + $0xf8] sm:$0xff]
      %v10628 = vld [vmem:[#allocation2 + $0x100] sm:$0xff]
      %v10629 = vld [vmem:[#allocation2 + $0x108] sm:$0xff]
      %v10630 = vld [vmem:[#allocation2 + $0x110] sm:$0xff]
      %v10631 = vld [vmem:[#allocation2 + $0x118] sm:$0xff]
      %v10632 = vld [vmem:[#allocation2 + $0x120] sm:$0xff]
      %v10633 = vld [vmem:[#allocation2 + $0x128] sm:$0xff]
      %v10634 = vld [vmem:[#allocation2 + $0x130] sm:$0xff]
      %v10635 = vld [vmem:[#allocation2 + $0x138] sm:$0xff]
      %v10636 = vld [vmem:[#allocation2 + $0x140] sm:$0xff]
      %v10637 = vld [vmem:[#allocation2 + $0x148] sm:$0xff]
      %v10638 = vld [vmem:[#allocation2 + $0x150] sm:$0xff]
      %v10639 = vld [vmem:[#allocation2 + $0x158] sm:$0xff]
      %v10640 = vld [vmem:[#allocation2 + $0x160] sm:$0xff]
      %v10641 = vld [vmem:[#allocation2 + $0x168] sm:$0xff]
      %v10642 = vld [vmem:[#allocation2 + $0x170] sm:$0xff]
      %v10643 = vld [vmem:[#allocation2 + $0x178] sm:$0xff]
      %v10644 = vld [vmem:[#allocation2 + $0x180] sm:$0xff]
      %v10645 = vld [vmem:[#allocation2 + $0x188] sm:$0xff]
      %v10646 = vld [vmem:[#allocation2 + $0x190] sm:$0xff]
      %v10647 = vld [vmem:[#allocation2 + $0x198] sm:$0xff]
      %v10648 = vld [vmem:[#allocation2 + $0x1a0] sm:$0xff]
      %v10649 = vld [vmem:[#allocation2 + $0x1a8] sm:$0xff]
      %v10650 = vld [vmem:[#allocation2 + $0x1b0] sm:$0xff]
      %v10651 = vld [vmem:[#allocation2 + $0x1b8] sm:$0xff]
      %v10652 = vld [vmem:[#allocation2 + $0x1c0] sm:$0xff]
      %v10653 = vld [vmem:[#allocation2 + $0x1c8] sm:$0xff]
      %v10654 = vld [vmem:[#allocation2 + $0x1d0] sm:$0xff]
      %v10655 = vld [vmem:[#allocation2 + $0x1d8] sm:$0xff]
      %v10656 = vld [vmem:[#allocation2 + $0x1e0] sm:$0xff]
      %v10657 = vld [vmem:[#allocation2 + $0x1e8] sm:$0xff]
      %v10658 = vld [vmem:[#allocation2 + $0x1f0] sm:$0xff]
      %v10659 = vld [vmem:[#allocation2 + $0x1f8] sm:$0xff]
      %v10660 = vld [vmem:[#allocation2 + $0x200] sm:$0xff]
      %v10661 = vld [vmem:[#allocation2 + $0x208] sm:$0xff]
      %v10662 = vld [vmem:[#allocation2 + $0x210] sm:$0xff]
      %v10663 = vld [vmem:[#allocation2 + $0x218] sm:$0xff]
      %v10664 = vld [vmem:[#allocation2 + $0x220] sm:$0xff]
      %v10665 = vld [vmem:[#allocation2 + $0x228] sm:$0xff]
      %v10666 = vld [vmem:[#allocation2 + $0x230] sm:$0xff]
      %v10667 = vld [vmem:[#allocation2 + $0x238] sm:$0xff]
      %v10668 = vld [vmem:[#allocation2 + $0x240] sm:$0xff]
      %s10669 = scalar_lea.vmem %s2, 28
      %v10670 = vld [vmem:[%s10669] sm:$0xf]
      %v10672 = vsel %vm171, %v10605, 0
      %v10675 = vsel %vm171, %v10606, 0
      %v10678 = vsel %vm171, %v10607, 0
      %v10681 = vsel %vm171, %v10608, 0
      %v10684 = vsel %vm171, %v10609, 0
      %v10687 = vsel %vm171, %v10610, 0
      %v10690 = vsel %vm171, %v10611, 0
      %v10693 = vsel %vm171, %v10612, 0
      %v10696 = vsel %vm171, %v10613, 0
      %v10699 = vsel %vm171, %v10614, 0
      %v10702 = vsel %vm171, %v10615, 0
      %v10705 = vsel %vm171, %v10616, 0
      %v10708 = vsel %vm171, %v10617, 0
      %v10711 = vsel %vm171, %v10618, 0
      %v10714 = vsel %vm171, %v10619, 0
      %v10717 = vsel %vm171, %v10620, 0
      %v10720 = vsel %vm171, %v10621, 0
      %v10723 = vsel %vm171, %v10622, 0
      %v10726 = vsel %vm171, %v10623, 0
      %v10729 = vsel %vm171, %v10624, 0
      %v10732 = vsel %vm171, %v10625, 0
      %v10735 = vsel %vm171, %v10626, 0
      %v10738 = vsel %vm171, %v10627, 0
      %v10741 = vsel %vm171, %v10628, 0
      %v10744 = vsel %vm171, %v10629, 0
      %v10747 = vsel %vm171, %v10630, 0
      %v10750 = vsel %vm171, %v10631, 0
      %v10753 = vsel %vm171, %v10632, 0
      %v10756 = vsel %vm171, %v10633, 0
      %v10759 = vsel %vm171, %v10634, 0
      %v10762 = vsel %vm171, %v10635, 0
      %v10765 = vsel %vm171, %v10636, 0
      %v10768 = vsel %vm171, %v10637, 0
      %v10771 = vsel %vm171, %v10638, 0
      %v10774 = vsel %vm171, %v10639, 0
      %v10777 = vsel %vm171, %v10640, 0
      %v10780 = vsel %vm171, %v10641, 0
      %v10783 = vsel %vm171, %v10642, 0
      %v10786 = vsel %vm171, %v10643, 0
      %v10789 = vsel %vm171, %v10644, 0
      %v10792 = vsel %vm171, %v10645, 0
      %v10795 = vsel %vm171, %v10646, 0
      %v10798 = vsel %vm171, %v10647, 0
      %v10801 = vsel %vm171, %v10648, 0
      %v10804 = vsel %vm171, %v10649, 0
      %v10807 = vsel %vm171, %v10650, 0
      %v10810 = vsel %vm171, %v10651, 0
      %v10813 = vsel %vm171, %v10652, 0
      %v10816 = vsel %vm171, %v10653, 0
      %v10819 = vsel %vm171, %v10654, 0
      %v10822 = vsel %vm171, %v10655, 0
      %v10825 = vsel %vm171, %v10656, 0
      %v10828 = vsel %vm171, %v10657, 0
      %v10831 = vsel %vm171, %v10658, 0
      %v10834 = vsel %vm171, %v10659, 0
      %v10837 = vsel %vm171, %v10660, 0
      %v10840 = vsel %vm171, %v10661, 0
      %v10843 = vsel %vm171, %v10662, 0
      %v10846 = vsel %vm171, %v10663, 0
      %v10849 = vsel %vm171, %v10664, 0
      %v10852 = vsel %vm171, %v10665, 0
      %v10855 = vsel %vm171, %v10666, 0
      %v10858 = vsel %vm171, %v10667, 0
      %v10861 = vsel %vm171, %v10668, 0
      %v10864 = vsel %vm741, %v10670, 0
      %10866 = vmatpush.msra.mxu0 0.0
      %10867 = vmatpush.msra.mxu0 0.0
      %10868 = vmatpush.msra.mxu0 0.0
      %10869 = vmatpush.msra.mxu0 0.0
      %10870 = vmatpush.msra.mxu0 0.0
      %10871 = vmatpush.msra.mxu0 0.0
      %10872 = vmatpush.msra.mxu0 0.0
      %10873 = vmatpush.msra.mxu0 0.0
      %10874 = vmatpush.msra.mxu0 0.0
      %10875 = vmatpush.msra.mxu0 0.0
      %10876 = vmatpush.msra.mxu0 0.0
      %10877 = vmatpush.msra.mxu0 0.0
      %10878 = vmatpush.msra.mxu0 0.0
      %10879 = vmatpush.msra.mxu0 0.0
      %10880 = vmatpush.msra.mxu0 0.0
      %10881 = vmatpush.msra.mxu0 %v10864
      %10882 = vmatmul.f32.gmra.mxu0 %v10672
      %v10883 = vpop.f32.mrf.mxu0
      %v10884 = vadd.f32 0.0, %v10883
      %10885 = vmatmul.f32.gmra.mxu0 %v10675
      %v10886 = vpop.f32.mrf.mxu0
      %v10887 = vadd.f32 0.0, %v10886
      %10888 = vmatmul.f32.gmra.mxu0 %v10678
      %v10889 = vpop.f32.mrf.mxu0
      %v10890 = vadd.f32 0.0, %v10889
      %10891 = vmatmul.f32.gmra.mxu0 %v10681
      %v10892 = vpop.f32.mrf.mxu0
      %v10893 = vadd.f32 0.0, %v10892
      %10894 = vmatmul.f32.gmra.mxu0 %v10684
      %v10895 = vpop.f32.mrf.mxu0
      %v10896 = vadd.f32 0.0, %v10895
      %10897 = vmatmul.f32.gmra.mxu0 %v10687
      %v10898 = vpop.f32.mrf.mxu0
      %v10899 = vadd.f32 0.0, %v10898
      %10900 = vmatmul.f32.gmra.mxu0 %v10690
      %v10901 = vpop.f32.mrf.mxu0
      %v10902 = vadd.f32 0.0, %v10901
      %10903 = vmatmul.f32.gmra.mxu0 %v10693
      %v10904 = vpop.f32.mrf.mxu0
      %v10905 = vadd.f32 0.0, %v10904
      %10906 = vmatmul.f32.gmra.mxu0 %v10696
      %v10907 = vpop.f32.mrf.mxu0
      %v10908 = vadd.f32 0.0, %v10907
      %10909 = vmatmul.f32.gmra.mxu0 %v10699
      %v10910 = vpop.f32.mrf.mxu0
      %v10911 = vadd.f32 0.0, %v10910
      %10912 = vmatmul.f32.gmra.mxu0 %v10702
      %v10913 = vpop.f32.mrf.mxu0
      %v10914 = vadd.f32 0.0, %v10913
      %10915 = vmatmul.f32.gmra.mxu0 %v10705
      %v10916 = vpop.f32.mrf.mxu0
      %v10917 = vadd.f32 0.0, %v10916
      %10918 = vmatmul.f32.gmra.mxu0 %v10708
      %v10919 = vpop.f32.mrf.mxu0
      %v10920 = vadd.f32 0.0, %v10919
      %10921 = vmatmul.f32.gmra.mxu0 %v10711
      %v10922 = vpop.f32.mrf.mxu0
      %v10923 = vadd.f32 0.0, %v10922
      %10924 = vmatmul.f32.gmra.mxu0 %v10714
      %v10925 = vpop.f32.mrf.mxu0
      %v10926 = vadd.f32 0.0, %v10925
      %10927 = vmatmul.f32.gmra.mxu0 %v10717
      %v10928 = vpop.f32.mrf.mxu0
      %v10929 = vadd.f32 0.0, %v10928
      %10930 = vmatmul.f32.gmra.mxu0 %v10720
      %v10931 = vpop.f32.mrf.mxu0
      %v10932 = vadd.f32 0.0, %v10931
      %10933 = vmatmul.f32.gmra.mxu0 %v10723
      %v10934 = vpop.f32.mrf.mxu0
      %v10935 = vadd.f32 0.0, %v10934
      %10936 = vmatmul.f32.gmra.mxu0 %v10726
      %v10937 = vpop.f32.mrf.mxu0
      %v10938 = vadd.f32 0.0, %v10937
      %10939 = vmatmul.f32.gmra.mxu0 %v10729
      %v10940 = vpop.f32.mrf.mxu0
      %v10941 = vadd.f32 0.0, %v10940
      %10942 = vmatmul.f32.gmra.mxu0 %v10732
      %v10943 = vpop.f32.mrf.mxu0
      %v10944 = vadd.f32 0.0, %v10943
      %10945 = vmatmul.f32.gmra.mxu0 %v10735
      %v10946 = vpop.f32.mrf.mxu0
      %v10947 = vadd.f32 0.0, %v10946
      %10948 = vmatmul.f32.gmra.mxu0 %v10738
      %v10949 = vpop.f32.mrf.mxu0
      %v10950 = vadd.f32 0.0, %v10949
      %10951 = vmatmul.f32.gmra.mxu0 %v10741
      %v10952 = vpop.f32.mrf.mxu0
      %v10953 = vadd.f32 0.0, %v10952
      %10954 = vmatmul.f32.gmra.mxu0 %v10744
      %v10955 = vpop.f32.mrf.mxu0
      %v10956 = vadd.f32 0.0, %v10955
      %10957 = vmatmul.f32.gmra.mxu0 %v10747
      %v10958 = vpop.f32.mrf.mxu0
      %v10959 = vadd.f32 0.0, %v10958
      %10960 = vmatmul.f32.gmra.mxu0 %v10750
      %v10961 = vpop.f32.mrf.mxu0
      %v10962 = vadd.f32 0.0, %v10961
      %10963 = vmatmul.f32.gmra.mxu0 %v10753
      %v10964 = vpop.f32.mrf.mxu0
      %v10965 = vadd.f32 0.0, %v10964
      %10966 = vmatmul.f32.gmra.mxu0 %v10756
      %v10967 = vpop.f32.mrf.mxu0
      %v10968 = vadd.f32 0.0, %v10967
      %10969 = vmatmul.f32.gmra.mxu0 %v10759
      %v10970 = vpop.f32.mrf.mxu0
      %v10971 = vadd.f32 0.0, %v10970
      %10972 = vmatmul.f32.gmra.mxu0 %v10762
      %v10973 = vpop.f32.mrf.mxu0
      %v10974 = vadd.f32 0.0, %v10973
      %10975 = vmatmul.f32.gmra.mxu0 %v10765
      %v10976 = vpop.f32.mrf.mxu0
      %v10977 = vadd.f32 0.0, %v10976
      %10978 = vmatmul.f32.gmra.mxu0 %v10768
      %v10979 = vpop.f32.mrf.mxu0
      %v10980 = vadd.f32 0.0, %v10979
      %10981 = vmatmul.f32.gmra.mxu0 %v10771
      %v10982 = vpop.f32.mrf.mxu0
      %v10983 = vadd.f32 0.0, %v10982
      %10984 = vmatmul.f32.gmra.mxu0 %v10774
      %v10985 = vpop.f32.mrf.mxu0
      %v10986 = vadd.f32 0.0, %v10985
      %10987 = vmatmul.f32.gmra.mxu0 %v10777
      %v10988 = vpop.f32.mrf.mxu0
      %v10989 = vadd.f32 0.0, %v10988
      %10990 = vmatmul.f32.gmra.mxu0 %v10780
      %v10991 = vpop.f32.mrf.mxu0
      %v10992 = vadd.f32 0.0, %v10991
      %10993 = vmatmul.f32.gmra.mxu0 %v10783
      %v10994 = vpop.f32.mrf.mxu0
      %v10995 = vadd.f32 0.0, %v10994
      %10996 = vmatmul.f32.gmra.mxu0 %v10786
      %v10997 = vpop.f32.mrf.mxu0
      %v10998 = vadd.f32 0.0, %v10997
      %10999 = vmatmul.f32.gmra.mxu0 %v10789
      %v11000 = vpop.f32.mrf.mxu0
      %v11001 = vadd.f32 0.0, %v11000
      %11002 = vmatmul.f32.gmra.mxu0 %v10792
      %v11003 = vpop.f32.mrf.mxu0
      %v11004 = vadd.f32 0.0, %v11003
      %11005 = vmatmul.f32.gmra.mxu0 %v10795
      %v11006 = vpop.f32.mrf.mxu0
      %v11007 = vadd.f32 0.0, %v11006
      %11008 = vmatmul.f32.gmra.mxu0 %v10798
      %v11009 = vpop.f32.mrf.mxu0
      %v11010 = vadd.f32 0.0, %v11009
      %11011 = vmatmul.f32.gmra.mxu0 %v10801
      %v11012 = vpop.f32.mrf.mxu0
      %v11013 = vadd.f32 0.0, %v11012
      %11014 = vmatmul.f32.gmra.mxu0 %v10804
      %v11015 = vpop.f32.mrf.mxu0
      %v11016 = vadd.f32 0.0, %v11015
      %11017 = vmatmul.f32.gmra.mxu0 %v10807
      %v11018 = vpop.f32.mrf.mxu0
      %v11019 = vadd.f32 0.0, %v11018
      %11020 = vmatmul.f32.gmra.mxu0 %v10810
      %v11021 = vpop.f32.mrf.mxu0
      %v11022 = vadd.f32 0.0, %v11021
      %11023 = vmatmul.f32.gmra.mxu0 %v10813
      %v11024 = vpop.f32.mrf.mxu0
      %v11025 = vadd.f32 0.0, %v11024
      %11026 = vmatmul.f32.gmra.mxu0 %v10816
      %v11027 = vpop.f32.mrf.mxu0
      %v11028 = vadd.f32 0.0, %v11027
      %11029 = vmatmul.f32.gmra.mxu0 %v10819
      %v11030 = vpop.f32.mrf.mxu0
      %v11031 = vadd.f32 0.0, %v11030
      %11032 = vmatmul.f32.gmra.mxu0 %v10822
      %v11033 = vpop.f32.mrf.mxu0
      %v11034 = vadd.f32 0.0, %v11033
      %11035 = vmatmul.f32.gmra.mxu0 %v10825
      %v11036 = vpop.f32.mrf.mxu0
      %v11037 = vadd.f32 0.0, %v11036
      %11038 = vmatmul.f32.gmra.mxu0 %v10828
      %v11039 = vpop.f32.mrf.mxu0
      %v11040 = vadd.f32 0.0, %v11039
      %11041 = vmatmul.f32.gmra.mxu0 %v10831
      %v11042 = vpop.f32.mrf.mxu0
      %v11043 = vadd.f32 0.0, %v11042
      %11044 = vmatmul.f32.gmra.mxu0 %v10834
      %v11045 = vpop.f32.mrf.mxu0
      %v11046 = vadd.f32 0.0, %v11045
      %11047 = vmatmul.f32.gmra.mxu0 %v10837
      %v11048 = vpop.f32.mrf.mxu0
      %v11049 = vadd.f32 0.0, %v11048
      %11050 = vmatmul.f32.gmra.mxu0 %v10840
      %v11051 = vpop.f32.mrf.mxu0
      %v11052 = vadd.f32 0.0, %v11051
      %11053 = vmatmul.f32.gmra.mxu0 %v10843
      %v11054 = vpop.f32.mrf.mxu0
      %v11055 = vadd.f32 0.0, %v11054
      %11056 = vmatmul.f32.gmra.mxu0 %v10846
      %v11057 = vpop.f32.mrf.mxu0
      %v11058 = vadd.f32 0.0, %v11057
      %11059 = vmatmul.f32.gmra.mxu0 %v10849
      %v11060 = vpop.f32.mrf.mxu0
      %v11061 = vadd.f32 0.0, %v11060
      %11062 = vmatmul.f32.gmra.mxu0 %v10852
      %v11063 = vpop.f32.mrf.mxu0
      %v11064 = vadd.f32 0.0, %v11063
      %11065 = vmatmul.f32.gmra.mxu0 %v10855
      %v11066 = vpop.f32.mrf.mxu0
      %v11067 = vadd.f32 0.0, %v11066
      %11068 = vmatmul.f32.gmra.mxu0 %v10858
      %v11069 = vpop.f32.mrf.mxu0
      %v11070 = vadd.f32 0.0, %v11069
      %11071 = vmatmul.f32.gmra.mxu0 %v10861
      %v11072 = vpop.f32.mrf.mxu0
      %v11073 = vadd.f32 0.0, %v11072
      %11074 = vdwg.mxu0
      %v11075 = vadd.f32 %v10541, %v10884
      %v11076 = vadd.f32 %v10542, %v10887
      %v11077 = vadd.f32 %v10543, %v10890
      %v11078 = vadd.f32 %v10544, %v10893
      %v11079 = vadd.f32 %v10545, %v10896
      %v11080 = vadd.f32 %v10546, %v10899
      %v11081 = vadd.f32 %v10547, %v10902
      %v11082 = vadd.f32 %v10548, %v10905
      %v11083 = vadd.f32 %v10549, %v10908
      %v11084 = vadd.f32 %v10550, %v10911
      %v11085 = vadd.f32 %v10551, %v10914
      %v11086 = vadd.f32 %v10552, %v10917
      %v11087 = vadd.f32 %v10553, %v10920
      %v11088 = vadd.f32 %v10554, %v10923
      %v11089 = vadd.f32 %v10555, %v10926
      %v11090 = vadd.f32 %v10556, %v10929
      %v11091 = vadd.f32 %v10557, %v10932
      %v11092 = vadd.f32 %v10558, %v10935
      %v11093 = vadd.f32 %v10559, %v10938
      %v11094 = vadd.f32 %v10560, %v10941
      %v11095 = vadd.f32 %v10561, %v10944
      %v11096 = vadd.f32 %v10562, %v10947
      %v11097 = vadd.f32 %v10563, %v10950
      %v11098 = vadd.f32 %v10564, %v10953
      %v11099 = vadd.f32 %v10565, %v10956
      %v11100 = vadd.f32 %v10566, %v10959
      %v11101 = vadd.f32 %v10567, %v10962
      %v11102 = vadd.f32 %v10568, %v10965
      %v11103 = vadd.f32 %v10569, %v10968
      %v11104 = vadd.f32 %v10570, %v10971
      %v11105 = vadd.f32 %v10571, %v10974
      %v11106 = vadd.f32 %v10572, %v10977
      %v11107 = vadd.f32 %v10573, %v10980
      %v11108 = vadd.f32 %v10574, %v10983
      %v11109 = vadd.f32 %v10575, %v10986
      %v11110 = vadd.f32 %v10576, %v10989
      %v11111 = vadd.f32 %v10577, %v10992
      %v11112 = vadd.f32 %v10578, %v10995
      %v11113 = vadd.f32 %v10579, %v10998
      %v11114 = vadd.f32 %v10580, %v11001
      %v11115 = vadd.f32 %v10581, %v11004
      %v11116 = vadd.f32 %v10582, %v11007
      %v11117 = vadd.f32 %v10583, %v11010
      %v11118 = vadd.f32 %v10584, %v11013
      %v11119 = vadd.f32 %v10585, %v11016
      %v11120 = vadd.f32 %v10586, %v11019
      %v11121 = vadd.f32 %v10587, %v11022
      %v11122 = vadd.f32 %v10588, %v11025
      %v11123 = vadd.f32 %v10589, %v11028
      %v11124 = vadd.f32 %v10590, %v11031
      %v11125 = vadd.f32 %v10591, %v11034
      %v11126 = vadd.f32 %v10592, %v11037
      %v11127 = vadd.f32 %v10593, %v11040
      %v11128 = vadd.f32 %v10594, %v11043
      %v11129 = vadd.f32 %v10595, %v11046
      %v11130 = vadd.f32 %v10596, %v11049
      %v11131 = vadd.f32 %v10597, %v11052
      %v11132 = vadd.f32 %v10598, %v11055
      %v11133 = vadd.f32 %v10599, %v11058
      %v11134 = vadd.f32 %v10600, %v11061
      %v11135 = vadd.f32 %v10601, %v11064
      %v11136 = vadd.f32 %v10602, %v11067
      %v11137 = vadd.f32 %v10603, %v11070
      %v11138 = vadd.f32 %v10604, %v11073
      %v11139 = vld [vmem:[#allocation2 + $0x49] sm:$0xff]
      %v11140 = vld [vmem:[#allocation2 + $0x51] sm:$0xff]
      %v11141 = vld [vmem:[#allocation2 + $0x59] sm:$0xff]
      %v11142 = vld [vmem:[#allocation2 + $0x61] sm:$0xff]
      %v11143 = vld [vmem:[#allocation2 + $0x69] sm:$0xff]
      %v11144 = vld [vmem:[#allocation2 + $0x71] sm:$0xff]
      %v11145 = vld [vmem:[#allocation2 + $0x79] sm:$0xff]
      %v11146 = vld [vmem:[#allocation2 + $0x81] sm:$0xff]
      %v11147 = vld [vmem:[#allocation2 + $0x89] sm:$0xff]
      %v11148 = vld [vmem:[#allocation2 + $0x91] sm:$0xff]
      %v11149 = vld [vmem:[#allocation2 + $0x99] sm:$0xff]
      %v11150 = vld [vmem:[#allocation2 + $0xa1] sm:$0xff]
      %v11151 = vld [vmem:[#allocation2 + $0xa9] sm:$0xff]
      %v11152 = vld [vmem:[#allocation2 + $0xb1] sm:$0xff]
      %v11153 = vld [vmem:[#allocation2 + $0xb9] sm:$0xff]
      %v11154 = vld [vmem:[#allocation2 + $0xc1] sm:$0xff]
      %v11155 = vld [vmem:[#allocation2 + $0xc9] sm:$0xff]
      %v11156 = vld [vmem:[#allocation2 + $0xd1] sm:$0xff]
      %v11157 = vld [vmem:[#allocation2 + $0xd9] sm:$0xff]
      %v11158 = vld [vmem:[#allocation2 + $0xe1] sm:$0xff]
      %v11159 = vld [vmem:[#allocation2 + $0xe9] sm:$0xff]
      %v11160 = vld [vmem:[#allocation2 + $0xf1] sm:$0xff]
      %v11161 = vld [vmem:[#allocation2 + $0xf9] sm:$0xff]
      %v11162 = vld [vmem:[#allocation2 + $0x101] sm:$0xff]
      %v11163 = vld [vmem:[#allocation2 + $0x109] sm:$0xff]
      %v11164 = vld [vmem:[#allocation2 + $0x111] sm:$0xff]
      %v11165 = vld [vmem:[#allocation2 + $0x119] sm:$0xff]
      %v11166 = vld [vmem:[#allocation2 + $0x121] sm:$0xff]
      %v11167 = vld [vmem:[#allocation2 + $0x129] sm:$0xff]
      %v11168 = vld [vmem:[#allocation2 + $0x131] sm:$0xff]
      %v11169 = vld [vmem:[#allocation2 + $0x139] sm:$0xff]
      %v11170 = vld [vmem:[#allocation2 + $0x141] sm:$0xff]
      %v11171 = vld [vmem:[#allocation2 + $0x149] sm:$0xff]
      %v11172 = vld [vmem:[#allocation2 + $0x151] sm:$0xff]
      %v11173 = vld [vmem:[#allocation2 + $0x159] sm:$0xff]
      %v11174 = vld [vmem:[#allocation2 + $0x161] sm:$0xff]
      %v11175 = vld [vmem:[#allocation2 + $0x169] sm:$0xff]
      %v11176 = vld [vmem:[#allocation2 + $0x171] sm:$0xff]
      %v11177 = vld [vmem:[#allocation2 + $0x179] sm:$0xff]
      %v11178 = vld [vmem:[#allocation2 + $0x181] sm:$0xff]
      %v11179 = vld [vmem:[#allocation2 + $0x189] sm:$0xff]
      %v11180 = vld [vmem:[#allocation2 + $0x191] sm:$0xff]
      %v11181 = vld [vmem:[#allocation2 + $0x199] sm:$0xff]
      %v11182 = vld [vmem:[#allocation2 + $0x1a1] sm:$0xff]
      %v11183 = vld [vmem:[#allocation2 + $0x1a9] sm:$0xff]
      %v11184 = vld [vmem:[#allocation2 + $0x1b1] sm:$0xff]
      %v11185 = vld [vmem:[#allocation2 + $0x1b9] sm:$0xff]
      %v11186 = vld [vmem:[#allocation2 + $0x1c1] sm:$0xff]
      %v11187 = vld [vmem:[#allocation2 + $0x1c9] sm:$0xff]
      %v11188 = vld [vmem:[#allocation2 + $0x1d1] sm:$0xff]
      %v11189 = vld [vmem:[#allocation2 + $0x1d9] sm:$0xff]
      %v11190 = vld [vmem:[#allocation2 + $0x1e1] sm:$0xff]
      %v11191 = vld [vmem:[#allocation2 + $0x1e9] sm:$0xff]
      %v11192 = vld [vmem:[#allocation2 + $0x1f1] sm:$0xff]
      %v11193 = vld [vmem:[#allocation2 + $0x1f9] sm:$0xff]
      %v11194 = vld [vmem:[#allocation2 + $0x201] sm:$0xff]
      %v11195 = vld [vmem:[#allocation2 + $0x209] sm:$0xff]
      %v11196 = vld [vmem:[#allocation2 + $0x211] sm:$0xff]
      %v11197 = vld [vmem:[#allocation2 + $0x219] sm:$0xff]
      %v11198 = vld [vmem:[#allocation2 + $0x221] sm:$0xff]
      %v11199 = vld [vmem:[#allocation2 + $0x229] sm:$0xff]
      %v11200 = vld [vmem:[#allocation2 + $0x231] sm:$0xff]
      %v11201 = vld [vmem:[#allocation2 + $0x239] sm:$0xff]
      %v11202 = vld [vmem:[#allocation2 + $0x241] sm:$0xff]
      %s11203 = scalar_lea.vmem %s2, 32
      %v11204 = vld [vmem:[%s11203] sm:$0xf]
      %v11206 = vsel %vm171, %v11139, 0
      %v11209 = vsel %vm171, %v11140, 0
      %v11212 = vsel %vm171, %v11141, 0
      %v11215 = vsel %vm171, %v11142, 0
      %v11218 = vsel %vm171, %v11143, 0
      %v11221 = vsel %vm171, %v11144, 0
      %v11224 = vsel %vm171, %v11145, 0
      %v11227 = vsel %vm171, %v11146, 0
      %v11230 = vsel %vm171, %v11147, 0
      %v11233 = vsel %vm171, %v11148, 0
      %v11236 = vsel %vm171, %v11149, 0
      %v11239 = vsel %vm171, %v11150, 0
      %v11242 = vsel %vm171, %v11151, 0
      %v11245 = vsel %vm171, %v11152, 0
      %v11248 = vsel %vm171, %v11153, 0
      %v11251 = vsel %vm171, %v11154, 0
      %v11254 = vsel %vm171, %v11155, 0
      %v11257 = vsel %vm171, %v11156, 0
      %v11260 = vsel %vm171, %v11157, 0
      %v11263 = vsel %vm171, %v11158, 0
      %v11266 = vsel %vm171, %v11159, 0
      %v11269 = vsel %vm171, %v11160, 0
      %v11272 = vsel %vm171, %v11161, 0
      %v11275 = vsel %vm171, %v11162, 0
      %v11278 = vsel %vm171, %v11163, 0
      %v11281 = vsel %vm171, %v11164, 0
      %v11284 = vsel %vm171, %v11165, 0
      %v11287 = vsel %vm171, %v11166, 0
      %v11290 = vsel %vm171, %v11167, 0
      %v11293 = vsel %vm171, %v11168, 0
      %v11296 = vsel %vm171, %v11169, 0
      %v11299 = vsel %vm171, %v11170, 0
      %v11302 = vsel %vm171, %v11171, 0
      %v11305 = vsel %vm171, %v11172, 0
      %v11308 = vsel %vm171, %v11173, 0
      %v11311 = vsel %vm171, %v11174, 0
      %v11314 = vsel %vm171, %v11175, 0
      %v11317 = vsel %vm171, %v11176, 0
      %v11320 = vsel %vm171, %v11177, 0
      %v11323 = vsel %vm171, %v11178, 0
      %v11326 = vsel %vm171, %v11179, 0
      %v11329 = vsel %vm171, %v11180, 0
      %v11332 = vsel %vm171, %v11181, 0
      %v11335 = vsel %vm171, %v11182, 0
      %v11338 = vsel %vm171, %v11183, 0
      %v11341 = vsel %vm171, %v11184, 0
      %v11344 = vsel %vm171, %v11185, 0
      %v11347 = vsel %vm171, %v11186, 0
      %v11350 = vsel %vm171, %v11187, 0
      %v11353 = vsel %vm171, %v11188, 0
      %v11356 = vsel %vm171, %v11189, 0
      %v11359 = vsel %vm171, %v11190, 0
      %v11362 = vsel %vm171, %v11191, 0
      %v11365 = vsel %vm171, %v11192, 0
      %v11368 = vsel %vm171, %v11193, 0
      %v11371 = vsel %vm171, %v11194, 0
      %v11374 = vsel %vm171, %v11195, 0
      %v11377 = vsel %vm171, %v11196, 0
      %v11380 = vsel %vm171, %v11197, 0
      %v11383 = vsel %vm171, %v11198, 0
      %v11386 = vsel %vm171, %v11199, 0
      %v11389 = vsel %vm171, %v11200, 0
      %v11392 = vsel %vm171, %v11201, 0
      %v11395 = vsel %vm171, %v11202, 0
      %v11398 = vsel %vm741, %v11204, 0
      %11400 = vmatpush.msra.mxu0 0.0
      %11401 = vmatpush.msra.mxu0 0.0
      %11402 = vmatpush.msra.mxu0 0.0
      %11403 = vmatpush.msra.mxu0 0.0
      %11404 = vmatpush.msra.mxu0 0.0
      %11405 = vmatpush.msra.mxu0 0.0
      %11406 = vmatpush.msra.mxu0 0.0
      %11407 = vmatpush.msra.mxu0 0.0
      %11408 = vmatpush.msra.mxu0 0.0
      %11409 = vmatpush.msra.mxu0 0.0
      %11410 = vmatpush.msra.mxu0 0.0
      %11411 = vmatpush.msra.mxu0 0.0
      %11412 = vmatpush.msra.mxu0 0.0
      %11413 = vmatpush.msra.mxu0 0.0
      %11414 = vmatpush.msra.mxu0 0.0
      %11415 = vmatpush.msra.mxu0 %v11398
      %11416 = vmatmul.f32.gmra.mxu0 %v11206
      %v11417 = vpop.f32.mrf.mxu0
      %v11418 = vadd.f32 0.0, %v11417
      %11419 = vmatmul.f32.gmra.mxu0 %v11209
      %v11420 = vpop.f32.mrf.mxu0
      %v11421 = vadd.f32 0.0, %v11420
      %11422 = vmatmul.f32.gmra.mxu0 %v11212
      %v11423 = vpop.f32.mrf.mxu0
      %v11424 = vadd.f32 0.0, %v11423
      %11425 = vmatmul.f32.gmra.mxu0 %v11215
      %v11426 = vpop.f32.mrf.mxu0
      %v11427 = vadd.f32 0.0, %v11426
      %11428 = vmatmul.f32.gmra.mxu0 %v11218
      %v11429 = vpop.f32.mrf.mxu0
      %v11430 = vadd.f32 0.0, %v11429
      %11431 = vmatmul.f32.gmra.mxu0 %v11221
      %v11432 = vpop.f32.mrf.mxu0
      %v11433 = vadd.f32 0.0, %v11432
      %11434 = vmatmul.f32.gmra.mxu0 %v11224
      %v11435 = vpop.f32.mrf.mxu0
      %v11436 = vadd.f32 0.0, %v11435
      %11437 = vmatmul.f32.gmra.mxu0 %v11227
      %v11438 = vpop.f32.mrf.mxu0
      %v11439 = vadd.f32 0.0, %v11438
      %11440 = vmatmul.f32.gmra.mxu0 %v11230
      %v11441 = vpop.f32.mrf.mxu0
      %v11442 = vadd.f32 0.0, %v11441
      %11443 = vmatmul.f32.gmra.mxu0 %v11233
      %v11444 = vpop.f32.mrf.mxu0
      %v11445 = vadd.f32 0.0, %v11444
      %11446 = vmatmul.f32.gmra.mxu0 %v11236
      %v11447 = vpop.f32.mrf.mxu0
      %v11448 = vadd.f32 0.0, %v11447
      %11449 = vmatmul.f32.gmra.mxu0 %v11239
      %v11450 = vpop.f32.mrf.mxu0
      %v11451 = vadd.f32 0.0, %v11450
      %11452 = vmatmul.f32.gmra.mxu0 %v11242
      %v11453 = vpop.f32.mrf.mxu0
      %v11454 = vadd.f32 0.0, %v11453
      %11455 = vmatmul.f32.gmra.mxu0 %v11245
      %v11456 = vpop.f32.mrf.mxu0
      %v11457 = vadd.f32 0.0, %v11456
      %11458 = vmatmul.f32.gmra.mxu0 %v11248
      %v11459 = vpop.f32.mrf.mxu0
      %v11460 = vadd.f32 0.0, %v11459
      %11461 = vmatmul.f32.gmra.mxu0 %v11251
      %v11462 = vpop.f32.mrf.mxu0
      %v11463 = vadd.f32 0.0, %v11462
      %11464 = vmatmul.f32.gmra.mxu0 %v11254
      %v11465 = vpop.f32.mrf.mxu0
      %v11466 = vadd.f32 0.0, %v11465
      %11467 = vmatmul.f32.gmra.mxu0 %v11257
      %v11468 = vpop.f32.mrf.mxu0
      %v11469 = vadd.f32 0.0, %v11468
      %11470 = vmatmul.f32.gmra.mxu0 %v11260
      %v11471 = vpop.f32.mrf.mxu0
      %v11472 = vadd.f32 0.0, %v11471
      %11473 = vmatmul.f32.gmra.mxu0 %v11263
      %v11474 = vpop.f32.mrf.mxu0
      %v11475 = vadd.f32 0.0, %v11474
      %11476 = vmatmul.f32.gmra.mxu0 %v11266
      %v11477 = vpop.f32.mrf.mxu0
      %v11478 = vadd.f32 0.0, %v11477
      %11479 = vmatmul.f32.gmra.mxu0 %v11269
      %v11480 = vpop.f32.mrf.mxu0
      %v11481 = vadd.f32 0.0, %v11480
      %11482 = vmatmul.f32.gmra.mxu0 %v11272
      %v11483 = vpop.f32.mrf.mxu0
      %v11484 = vadd.f32 0.0, %v11483
      %11485 = vmatmul.f32.gmra.mxu0 %v11275
      %v11486 = vpop.f32.mrf.mxu0
      %v11487 = vadd.f32 0.0, %v11486
      %11488 = vmatmul.f32.gmra.mxu0 %v11278
      %v11489 = vpop.f32.mrf.mxu0
      %v11490 = vadd.f32 0.0, %v11489
      %11491 = vmatmul.f32.gmra.mxu0 %v11281
      %v11492 = vpop.f32.mrf.mxu0
      %v11493 = vadd.f32 0.0, %v11492
      %11494 = vmatmul.f32.gmra.mxu0 %v11284
      %v11495 = vpop.f32.mrf.mxu0
      %v11496 = vadd.f32 0.0, %v11495
      %11497 = vmatmul.f32.gmra.mxu0 %v11287
      %v11498 = vpop.f32.mrf.mxu0
      %v11499 = vadd.f32 0.0, %v11498
      %11500 = vmatmul.f32.gmra.mxu0 %v11290
      %v11501 = vpop.f32.mrf.mxu0
      %v11502 = vadd.f32 0.0, %v11501
      %11503 = vmatmul.f32.gmra.mxu0 %v11293
      %v11504 = vpop.f32.mrf.mxu0
      %v11505 = vadd.f32 0.0, %v11504
      %11506 = vmatmul.f32.gmra.mxu0 %v11296
      %v11507 = vpop.f32.mrf.mxu0
      %v11508 = vadd.f32 0.0, %v11507
      %11509 = vmatmul.f32.gmra.mxu0 %v11299
      %v11510 = vpop.f32.mrf.mxu0
      %v11511 = vadd.f32 0.0, %v11510
      %11512 = vmatmul.f32.gmra.mxu0 %v11302
      %v11513 = vpop.f32.mrf.mxu0
      %v11514 = vadd.f32 0.0, %v11513
      %11515 = vmatmul.f32.gmra.mxu0 %v11305
      %v11516 = vpop.f32.mrf.mxu0
      %v11517 = vadd.f32 0.0, %v11516
      %11518 = vmatmul.f32.gmra.mxu0 %v11308
      %v11519 = vpop.f32.mrf.mxu0
      %v11520 = vadd.f32 0.0, %v11519
      %11521 = vmatmul.f32.gmra.mxu0 %v11311
      %v11522 = vpop.f32.mrf.mxu0
      %v11523 = vadd.f32 0.0, %v11522
      %11524 = vmatmul.f32.gmra.mxu0 %v11314
      %v11525 = vpop.f32.mrf.mxu0
      %v11526 = vadd.f32 0.0, %v11525
      %11527 = vmatmul.f32.gmra.mxu0 %v11317
      %v11528 = vpop.f32.mrf.mxu0
      %v11529 = vadd.f32 0.0, %v11528
      %11530 = vmatmul.f32.gmra.mxu0 %v11320
      %v11531 = vpop.f32.mrf.mxu0
      %v11532 = vadd.f32 0.0, %v11531
      %11533 = vmatmul.f32.gmra.mxu0 %v11323
      %v11534 = vpop.f32.mrf.mxu0
      %v11535 = vadd.f32 0.0, %v11534
      %11536 = vmatmul.f32.gmra.mxu0 %v11326
      %v11537 = vpop.f32.mrf.mxu0
      %v11538 = vadd.f32 0.0, %v11537
      %11539 = vmatmul.f32.gmra.mxu0 %v11329
      %v11540 = vpop.f32.mrf.mxu0
      %v11541 = vadd.f32 0.0, %v11540
      %11542 = vmatmul.f32.gmra.mxu0 %v11332
      %v11543 = vpop.f32.mrf.mxu0
      %v11544 = vadd.f32 0.0, %v11543
      %11545 = vmatmul.f32.gmra.mxu0 %v11335
      %v11546 = vpop.f32.mrf.mxu0
      %v11547 = vadd.f32 0.0, %v11546
      %11548 = vmatmul.f32.gmra.mxu0 %v11338
      %v11549 = vpop.f32.mrf.mxu0
      %v11550 = vadd.f32 0.0, %v11549
      %11551 = vmatmul.f32.gmra.mxu0 %v11341
      %v11552 = vpop.f32.mrf.mxu0
      %v11553 = vadd.f32 0.0, %v11552
      %11554 = vmatmul.f32.gmra.mxu0 %v11344
      %v11555 = vpop.f32.mrf.mxu0
      %v11556 = vadd.f32 0.0, %v11555
      %11557 = vmatmul.f32.gmra.mxu0 %v11347
      %v11558 = vpop.f32.mrf.mxu0
      %v11559 = vadd.f32 0.0, %v11558
      %11560 = vmatmul.f32.gmra.mxu0 %v11350
      %v11561 = vpop.f32.mrf.mxu0
      %v11562 = vadd.f32 0.0, %v11561
      %11563 = vmatmul.f32.gmra.mxu0 %v11353
      %v11564 = vpop.f32.mrf.mxu0
      %v11565 = vadd.f32 0.0, %v11564
      %11566 = vmatmul.f32.gmra.mxu0 %v11356
      %v11567 = vpop.f32.mrf.mxu0
      %v11568 = vadd.f32 0.0, %v11567
      %11569 = vmatmul.f32.gmra.mxu0 %v11359
      %v11570 = vpop.f32.mrf.mxu0
      %v11571 = vadd.f32 0.0, %v11570
      %11572 = vmatmul.f32.gmra.mxu0 %v11362
      %v11573 = vpop.f32.mrf.mxu0
      %v11574 = vadd.f32 0.0, %v11573
      %11575 = vmatmul.f32.gmra.mxu0 %v11365
      %v11576 = vpop.f32.mrf.mxu0
      %v11577 = vadd.f32 0.0, %v11576
      %11578 = vmatmul.f32.gmra.mxu0 %v11368
      %v11579 = vpop.f32.mrf.mxu0
      %v11580 = vadd.f32 0.0, %v11579
      %11581 = vmatmul.f32.gmra.mxu0 %v11371
      %v11582 = vpop.f32.mrf.mxu0
      %v11583 = vadd.f32 0.0, %v11582
      %11584 = vmatmul.f32.gmra.mxu0 %v11374
      %v11585 = vpop.f32.mrf.mxu0
      %v11586 = vadd.f32 0.0, %v11585
      %11587 = vmatmul.f32.gmra.mxu0 %v11377
      %v11588 = vpop.f32.mrf.mxu0
      %v11589 = vadd.f32 0.0, %v11588
      %11590 = vmatmul.f32.gmra.mxu0 %v11380
      %v11591 = vpop.f32.mrf.mxu0
      %v11592 = vadd.f32 0.0, %v11591
      %11593 = vmatmul.f32.gmra.mxu0 %v11383
      %v11594 = vpop.f32.mrf.mxu0
      %v11595 = vadd.f32 0.0, %v11594
      %11596 = vmatmul.f32.gmra.mxu0 %v11386
      %v11597 = vpop.f32.mrf.mxu0
      %v11598 = vadd.f32 0.0, %v11597
      %11599 = vmatmul.f32.gmra.mxu0 %v11389
      %v11600 = vpop.f32.mrf.mxu0
      %v11601 = vadd.f32 0.0, %v11600
      %11602 = vmatmul.f32.gmra.mxu0 %v11392
      %v11603 = vpop.f32.mrf.mxu0
      %v11604 = vadd.f32 0.0, %v11603
      %11605 = vmatmul.f32.gmra.mxu0 %v11395
      %v11606 = vpop.f32.mrf.mxu0
      %v11607 = vadd.f32 0.0, %v11606
      %11608 = vdwg.mxu0
      %v11609 = vadd.f32 %v11075, %v11418
      %v11610 = vadd.f32 %v11076, %v11421
      %v11611 = vadd.f32 %v11077, %v11424
      %v11612 = vadd.f32 %v11078, %v11427
      %v11613 = vadd.f32 %v11079, %v11430
      %v11614 = vadd.f32 %v11080, %v11433
      %v11615 = vadd.f32 %v11081, %v11436
      %v11616 = vadd.f32 %v11082, %v11439
      %v11617 = vadd.f32 %v11083, %v11442
      %v11618 = vadd.f32 %v11084, %v11445
      %v11619 = vadd.f32 %v11085, %v11448
      %v11620 = vadd.f32 %v11086, %v11451
      %v11621 = vadd.f32 %v11087, %v11454
      %v11622 = vadd.f32 %v11088, %v11457
      %v11623 = vadd.f32 %v11089, %v11460
      %v11624 = vadd.f32 %v11090, %v11463
      %v11625 = vadd.f32 %v11091, %v11466
      %v11626 = vadd.f32 %v11092, %v11469
      %v11627 = vadd.f32 %v11093, %v11472
      %v11628 = vadd.f32 %v11094, %v11475
      %v11629 = vadd.f32 %v11095, %v11478
      %v11630 = vadd.f32 %v11096, %v11481
      %v11631 = vadd.f32 %v11097, %v11484
      %v11632 = vadd.f32 %v11098, %v11487
      %v11633 = vadd.f32 %v11099, %v11490
      %v11634 = vadd.f32 %v11100, %v11493
      %v11635 = vadd.f32 %v11101, %v11496
      %v11636 = vadd.f32 %v11102, %v11499
      %v11637 = vadd.f32 %v11103, %v11502
      %v11638 = vadd.f32 %v11104, %v11505
      %v11639 = vadd.f32 %v11105, %v11508
      %v11640 = vadd.f32 %v11106, %v11511
      %v11641 = vadd.f32 %v11107, %v11514
      %v11642 = vadd.f32 %v11108, %v11517
      %v11643 = vadd.f32 %v11109, %v11520
      %v11644 = vadd.f32 %v11110, %v11523
      %v11645 = vadd.f32 %v11111, %v11526
      %v11646 = vadd.f32 %v11112, %v11529
      %v11647 = vadd.f32 %v11113, %v11532
      %v11648 = vadd.f32 %v11114, %v11535
      %v11649 = vadd.f32 %v11115, %v11538
      %v11650 = vadd.f32 %v11116, %v11541
      %v11651 = vadd.f32 %v11117, %v11544
      %v11652 = vadd.f32 %v11118, %v11547
      %v11653 = vadd.f32 %v11119, %v11550
      %v11654 = vadd.f32 %v11120, %v11553
      %v11655 = vadd.f32 %v11121, %v11556
      %v11656 = vadd.f32 %v11122, %v11559
      %v11657 = vadd.f32 %v11123, %v11562
      %v11658 = vadd.f32 %v11124, %v11565
      %v11659 = vadd.f32 %v11125, %v11568
      %v11660 = vadd.f32 %v11126, %v11571
      %v11661 = vadd.f32 %v11127, %v11574
      %v11662 = vadd.f32 %v11128, %v11577
      %v11663 = vadd.f32 %v11129, %v11580
      %v11664 = vadd.f32 %v11130, %v11583
      %v11665 = vadd.f32 %v11131, %v11586
      %v11666 = vadd.f32 %v11132, %v11589
      %v11667 = vadd.f32 %v11133, %v11592
      %v11668 = vadd.f32 %v11134, %v11595
      %v11669 = vadd.f32 %v11135, %v11598
      %v11670 = vadd.f32 %v11136, %v11601
      %v11671 = vadd.f32 %v11137, %v11604
      %v11672 = vadd.f32 %v11138, %v11607
      %v11673 = vsel %vm6057, %v11609, 0.0
      %v11674 = vsel %vm6058, %v11610, 0.0
      %v11675 = vsel %vm6059, %v11611, 0.0
      %v11676 = vsel %vm6060, %v11612, 0.0
      %v11677 = vsel %vm6061, %v11613, 0.0
      %v11678 = vsel %vm6062, %v11614, 0.0
      %v11679 = vsel %vm6063, %v11615, 0.0
      %v11680 = vsel %vm6064, %v11616, 0.0
      %v11681 = vsel %vm6065, %v11617, 0.0
      %v11682 = vsel %vm6066, %v11618, 0.0
      %v11683 = vsel %vm6067, %v11619, 0.0
      %v11684 = vsel %vm6068, %v11620, 0.0
      %v11685 = vsel %vm6069, %v11621, 0.0
      %v11686 = vsel %vm6070, %v11622, 0.0
      %v11687 = vsel %vm6071, %v11623, 0.0
      %v11688 = vsel %vm6072, %v11624, 0.0
      %v11689 = vsel %vm6073, %v11625, 0.0
      %v11690 = vsel %vm6074, %v11626, 0.0
      %v11691 = vsel %vm6075, %v11627, 0.0
      %v11692 = vsel %vm6076, %v11628, 0.0
      %v11693 = vsel %vm6077, %v11629, 0.0
      %v11694 = vsel %vm6078, %v11630, 0.0
      %v11695 = vsel %vm6079, %v11631, 0.0
      %v11696 = vsel %vm6080, %v11632, 0.0
      %v11697 = vsel %vm6081, %v11633, 0.0
      %v11698 = vsel %vm6082, %v11634, 0.0
      %v11699 = vsel %vm6083, %v11635, 0.0
      %v11700 = vsel %vm6084, %v11636, 0.0
      %v11701 = vsel %vm6085, %v11637, 0.0
      %v11702 = vsel %vm6086, %v11638, 0.0
      %v11703 = vsel %vm6087, %v11639, 0.0
      %v11704 = vsel %vm6088, %v11640, 0.0
      %v11705 = vsel %vm6089, %v11641, 0.0
      %v11706 = vsel %vm6090, %v11642, 0.0
      %v11707 = vsel %vm6091, %v11643, 0.0
      %v11708 = vsel %vm6092, %v11644, 0.0
      %v11709 = vsel %vm6093, %v11645, 0.0
      %v11710 = vsel %vm6094, %v11646, 0.0
      %v11711 = vsel %vm6095, %v11647, 0.0
      %v11712 = vsel %vm6096, %v11648, 0.0
      %v11713 = vsel %vm6097, %v11649, 0.0
      %v11714 = vsel %vm6098, %v11650, 0.0
      %v11715 = vsel %vm6099, %v11651, 0.0
      %v11716 = vsel %vm6100, %v11652, 0.0
      %v11717 = vsel %vm6101, %v11653, 0.0
      %v11718 = vsel %vm6102, %v11654, 0.0
      %v11719 = vsel %vm6103, %v11655, 0.0
      %v11720 = vsel %vm6104, %v11656, 0.0
      %v11721 = vsel %vm6105, %v11657, 0.0
      %v11722 = vsel %vm6106, %v11658, 0.0
      %v11723 = vsel %vm6107, %v11659, 0.0
      %v11724 = vsel %vm6108, %v11660, 0.0
      %v11725 = vsel %vm6109, %v11661, 0.0
      %v11726 = vsel %vm6110, %v11662, 0.0
      %v11727 = vsel %vm6111, %v11663, 0.0
      %v11728 = vsel %vm6112, %v11664, 0.0
      %v11729 = vsel %vm6113, %v11665, 0.0
      %v11730 = vsel %vm6114, %v11666, 0.0
      %v11731 = vsel %vm6115, %v11667, 0.0
      %v11732 = vsel %vm6116, %v11668, 0.0
      %v11733 = vsel %vm6117, %v11669, 0.0
      %v11734 = vsel %vm6118, %v11670, 0.0
      %v11735 = vsel %vm6119, %v11671, 0.0
      %v11736 = vsel %vm6120, %v11672, 0.0
      %v11737 = vsel %vm171, %v11673, 0.0
      %v11738 = vsel %vm171, %v11674, 0.0
      %v11739 = vadd.f32 %v11737, %v11738
      %v11740 = vsel %vm171, %v11675, 0.0
      %v11741 = vadd.f32 %v11739, %v11740
      %v11742 = vsel %vm171, %v11676, 0.0
      %v11743 = vadd.f32 %v11741, %v11742
      %v11744 = vsel %vm171, %v11677, 0.0
      %v11745 = vadd.f32 %v11743, %v11744
      %v11746 = vsel %vm171, %v11678, 0.0
      %v11747 = vadd.f32 %v11745, %v11746
      %v11748 = vsel %vm171, %v11679, 0.0
      %v11749 = vadd.f32 %v11747, %v11748
      %v11750 = vsel %vm171, %v11680, 0.0
      %v11751 = vadd.f32 %v11749, %v11750
      %v11752 = vsel %vm171, %v11681, 0.0
      %v11753 = vadd.f32 %v11751, %v11752
      %v11754 = vsel %vm171, %v11682, 0.0
      %v11755 = vadd.f32 %v11753, %v11754
      %v11756 = vsel %vm171, %v11683, 0.0
      %v11757 = vadd.f32 %v11755, %v11756
      %v11758 = vsel %vm171, %v11684, 0.0
      %v11759 = vadd.f32 %v11757, %v11758
      %v11760 = vsel %vm171, %v11685, 0.0
      %v11761 = vadd.f32 %v11759, %v11760
      %v11762 = vsel %vm171, %v11686, 0.0
      %v11763 = vadd.f32 %v11761, %v11762
      %v11764 = vsel %vm171, %v11687, 0.0
      %v11765 = vadd.f32 %v11763, %v11764
      %v11766 = vsel %vm171, %v11688, 0.0
      %v11767 = vadd.f32 %v11765, %v11766
      %v11768 = vsel %vm171, %v11689, 0.0
      %v11769 = vadd.f32 %v11767, %v11768
      %v11770 = vsel %vm171, %v11690, 0.0
      %v11771 = vadd.f32 %v11769, %v11770
      %v11772 = vsel %vm171, %v11691, 0.0
      %v11773 = vadd.f32 %v11771, %v11772
      %v11774 = vsel %vm171, %v11692, 0.0
      %v11775 = vadd.f32 %v11773, %v11774
      %v11776 = vsel %vm171, %v11693, 0.0
      %v11777 = vadd.f32 %v11775, %v11776
      %v11778 = vsel %vm171, %v11694, 0.0
      %v11779 = vadd.f32 %v11777, %v11778
      %v11780 = vsel %vm171, %v11695, 0.0
      %v11781 = vadd.f32 %v11779, %v11780
      %v11782 = vsel %vm171, %v11696, 0.0
      %v11783 = vadd.f32 %v11781, %v11782
      %v11784 = vsel %vm171, %v11697, 0.0
      %v11785 = vadd.f32 %v11783, %v11784
      %v11786 = vsel %vm171, %v11698, 0.0
      %v11787 = vadd.f32 %v11785, %v11786
      %v11788 = vsel %vm171, %v11699, 0.0
      %v11789 = vadd.f32 %v11787, %v11788
      %v11790 = vsel %vm171, %v11700, 0.0
      %v11791 = vadd.f32 %v11789, %v11790
      %v11792 = vsel %vm171, %v11701, 0.0
      %v11793 = vadd.f32 %v11791, %v11792
      %v11794 = vsel %vm171, %v11702, 0.0
      %v11795 = vadd.f32 %v11793, %v11794
      %v11796 = vsel %vm171, %v11703, 0.0
      %v11797 = vadd.f32 %v11795, %v11796
      %v11798 = vsel %vm171, %v11704, 0.0
      %v11799 = vadd.f32 %v11797, %v11798
      %v11800 = vsel %vm171, %v11705, 0.0
      %v11801 = vadd.f32 %v11799, %v11800
      %v11802 = vsel %vm171, %v11706, 0.0
      %v11803 = vadd.f32 %v11801, %v11802
      %v11804 = vsel %vm171, %v11707, 0.0
      %v11805 = vadd.f32 %v11803, %v11804
      %v11806 = vsel %vm171, %v11708, 0.0
      %v11807 = vadd.f32 %v11805, %v11806
      %v11808 = vsel %vm171, %v11709, 0.0
      %v11809 = vadd.f32 %v11807, %v11808
      %v11810 = vsel %vm171, %v11710, 0.0
      %v11811 = vadd.f32 %v11809, %v11810
      %v11812 = vsel %vm171, %v11711, 0.0
      %v11813 = vadd.f32 %v11811, %v11812
      %v11814 = vsel %vm171, %v11712, 0.0
      %v11815 = vadd.f32 %v11813, %v11814
      %v11816 = vsel %vm171, %v11713, 0.0
      %v11817 = vadd.f32 %v11815, %v11816
      %v11818 = vsel %vm171, %v11714, 0.0
      %v11819 = vadd.f32 %v11817, %v11818
      %v11820 = vsel %vm171, %v11715, 0.0
      %v11821 = vadd.f32 %v11819, %v11820
      %v11822 = vsel %vm171, %v11716, 0.0
      %v11823 = vadd.f32 %v11821, %v11822
      %v11824 = vsel %vm171, %v11717, 0.0
      %v11825 = vadd.f32 %v11823, %v11824
      %v11826 = vsel %vm171, %v11718, 0.0
      %v11827 = vadd.f32 %v11825, %v11826
      %v11828 = vsel %vm171, %v11719, 0.0
      %v11829 = vadd.f32 %v11827, %v11828
      %v11830 = vsel %vm171, %v11720, 0.0
      %v11831 = vadd.f32 %v11829, %v11830
      %v11832 = vsel %vm171, %v11721, 0.0
      %v11833 = vadd.f32 %v11831, %v11832
      %v11834 = vsel %vm171, %v11722, 0.0
      %v11835 = vadd.f32 %v11833, %v11834
      %v11836 = vsel %vm171, %v11723, 0.0
      %v11837 = vadd.f32 %v11835, %v11836
      %v11838 = vsel %vm171, %v11724, 0.0
      %v11839 = vadd.f32 %v11837, %v11838
      %v11840 = vsel %vm171, %v11725, 0.0
      %v11841 = vadd.f32 %v11839, %v11840
      %v11842 = vsel %vm171, %v11726, 0.0
      %v11843 = vadd.f32 %v11841, %v11842
      %v11844 = vsel %vm171, %v11727, 0.0
      %v11845 = vadd.f32 %v11843, %v11844
      %v11846 = vsel %vm171, %v11728, 0.0
      %v11847 = vadd.f32 %v11845, %v11846
      %v11848 = vsel %vm171, %v11729, 0.0
      %v11849 = vadd.f32 %v11847, %v11848
      %v11850 = vsel %vm171, %v11730, 0.0
      %v11851 = vadd.f32 %v11849, %v11850
      %v11852 = vsel %vm171, %v11731, 0.0
      %v11853 = vadd.f32 %v11851, %v11852
      %v11854 = vsel %vm171, %v11732, 0.0
      %v11855 = vadd.f32 %v11853, %v11854
      %v11856 = vsel %vm171, %v11733, 0.0
      %v11857 = vadd.f32 %v11855, %v11856
      %v11858 = vsel %vm171, %v11734, 0.0
      %v11859 = vadd.f32 %v11857, %v11858
      %v11860 = vsel %vm171, %v11735, 0.0
      %v11861 = vadd.f32 %v11859, %v11860
      %v11862 = vsel %vm171, %v11736, 0.0
      %v11863 = vadd.f32 %v11861, %v11862
      %v11864 = vrot.slane %v11863, 4
      %v11865 = vadd.f32 %v11863, %v11864
      %v11866 = vrot.slane %v11865, 2
      %v11867 = vadd.f32 %v11865, %v11866
      %v11868 = vrot.slane %v11867, 1
      %v11869 = vadd.f32 %v11867, %v11868
      %v11870 = vadd.f32 %v11869, 0.0
      %v11871 = vmul.f32 %v11609, %v11609
      %v11872 = vmul.f32 %v11610, %v11610
      %v11873 = vmul.f32 %v11611, %v11611
      %v11874 = vmul.f32 %v11612, %v11612
      %v11875 = vmul.f32 %v11613, %v11613
      %v11876 = vmul.f32 %v11614, %v11614
      %v11877 = vmul.f32 %v11615, %v11615
      %v11878 = vmul.f32 %v11616, %v11616
      %v11879 = vmul.f32 %v11617, %v11617
      %v11880 = vmul.f32 %v11618, %v11618
      %v11881 = vmul.f32 %v11619, %v11619
      %v11882 = vmul.f32 %v11620, %v11620
      %v11883 = vmul.f32 %v11621, %v11621
      %v11884 = vmul.f32 %v11622, %v11622
      %v11885 = vmul.f32 %v11623, %v11623
      %v11886 = vmul.f32 %v11624, %v11624
      %v11887 = vmul.f32 %v11625, %v11625
      %v11888 = vmul.f32 %v11626, %v11626
      %v11889 = vmul.f32 %v11627, %v11627
      %v11890 = vmul.f32 %v11628, %v11628
      %v11891 = vmul.f32 %v11629, %v11629
      %v11892 = vmul.f32 %v11630, %v11630
      %v11893 = vmul.f32 %v11631, %v11631
      %v11894 = vmul.f32 %v11632, %v11632
      %v11895 = vmul.f32 %v11633, %v11633
      %v11896 = vmul.f32 %v11634, %v11634
      %v11897 = vmul.f32 %v11635, %v11635
      %v11898 = vmul.f32 %v11636, %v11636
      %v11899 = vmul.f32 %v11637, %v11637
      %v11900 = vmul.f32 %v11638, %v11638
      %v11901 = vmul.f32 %v11639, %v11639
      %v11902 = vmul.f32 %v11640, %v11640
      %v11903 = vmul.f32 %v11641, %v11641
      %v11904 = vmul.f32 %v11642, %v11642
      %v11905 = vmul.f32 %v11643, %v11643
      %v11906 = vmul.f32 %v11644, %v11644
      %v11907 = vmul.f32 %v11645, %v11645
      %v11908 = vmul.f32 %v11646, %v11646
      %v11909 = vmul.f32 %v11647, %v11647
      %v11910 = vmul.f32 %v11648, %v11648
      %v11911 = vmul.f32 %v11649, %v11649
      %v11912 = vmul.f32 %v11650, %v11650
      %v11913 = vmul.f32 %v11651, %v11651
      %v11914 = vmul.f32 %v11652, %v11652
      %v11915 = vmul.f32 %v11653, %v11653
      %v11916 = vmul.f32 %v11654, %v11654
      %v11917 = vmul.f32 %v11655, %v11655
      %v11918 = vmul.f32 %v11656, %v11656
      %v11919 = vmul.f32 %v11657, %v11657
      %v11920 = vmul.f32 %v11658, %v11658
      %v11921 = vmul.f32 %v11659, %v11659
      %v11922 = vmul.f32 %v11660, %v11660
      %v11923 = vmul.f32 %v11661, %v11661
      %v11924 = vmul.f32 %v11662, %v11662
      %v11925 = vmul.f32 %v11663, %v11663
      %v11926 = vmul.f32 %v11664, %v11664
      %v11927 = vmul.f32 %v11665, %v11665
      %v11928 = vmul.f32 %v11666, %v11666
      %v11929 = vmul.f32 %v11667, %v11667
      %v11930 = vmul.f32 %v11668, %v11668
      %v11931 = vmul.f32 %v11669, %v11669
      %v11932 = vmul.f32 %v11670, %v11670
      %v11933 = vmul.f32 %v11671, %v11671
      %v11934 = vmul.f32 %v11672, %v11672
      %v11935 = vsel %vm6057, %v11871, 0.0
      %v11936 = vsel %vm6058, %v11872, 0.0
      %v11937 = vsel %vm6059, %v11873, 0.0
      %v11938 = vsel %vm6060, %v11874, 0.0
      %v11939 = vsel %vm6061, %v11875, 0.0
      %v11940 = vsel %vm6062, %v11876, 0.0
      %v11941 = vsel %vm6063, %v11877, 0.0
      %v11942 = vsel %vm6064, %v11878, 0.0
      %v11943 = vsel %vm6065, %v11879, 0.0
      %v11944 = vsel %vm6066, %v11880, 0.0
      %v11945 = vsel %vm6067, %v11881, 0.0
      %v11946 = vsel %vm6068, %v11882, 0.0
      %v11947 = vsel %vm6069, %v11883, 0.0
      %v11948 = vsel %vm6070, %v11884, 0.0
      %v11949 = vsel %vm6071, %v11885, 0.0
      %v11950 = vsel %vm6072, %v11886, 0.0
      %v11951 = vsel %vm6073, %v11887, 0.0
      %v11952 = vsel %vm6074, %v11888, 0.0
      %v11953 = vsel %vm6075, %v11889, 0.0
      %v11954 = vsel %vm6076, %v11890, 0.0
      %v11955 = vsel %vm6077, %v11891, 0.0
      %v11956 = vsel %vm6078, %v11892, 0.0
      %v11957 = vsel %vm6079, %v11893, 0.0
      %v11958 = vsel %vm6080, %v11894, 0.0
      %v11959 = vsel %vm6081, %v11895, 0.0
      %v11960 = vsel %vm6082, %v11896, 0.0
      %v11961 = vsel %vm6083, %v11897, 0.0
      %v11962 = vsel %vm6084, %v11898, 0.0
      %v11963 = vsel %vm6085, %v11899, 0.0
      %v11964 = vsel %vm6086, %v11900, 0.0
      %v11965 = vsel %vm6087, %v11901, 0.0
      %v11966 = vsel %vm6088, %v11902, 0.0
      %v11967 = vsel %vm6089, %v11903, 0.0
      %v11968 = vsel %vm6090, %v11904, 0.0
      %v11969 = vsel %vm6091, %v11905, 0.0
      %v11970 = vsel %vm6092, %v11906, 0.0
      %v11971 = vsel %vm6093, %v11907, 0.0
      %v11972 = vsel %vm6094, %v11908, 0.0
      %v11973 = vsel %vm6095, %v11909, 0.0
      %v11974 = vsel %vm6096, %v11910, 0.0
      %v11975 = vsel %vm6097, %v11911, 0.0
      %v11976 = vsel %vm6098, %v11912, 0.0
      %v11977 = vsel %vm6099, %v11913, 0.0
      %v11978 = vsel %vm6100, %v11914, 0.0
      %v11979 = vsel %vm6101, %v11915, 0.0
      %v11980 = vsel %vm6102, %v11916, 0.0
      %v11981 = vsel %vm6103, %v11917, 0.0
      %v11982 = vsel %vm6104, %v11918, 0.0
      %v11983 = vsel %vm6105, %v11919, 0.0
      %v11984 = vsel %vm6106, %v11920, 0.0
      %v11985 = vsel %vm6107, %v11921, 0.0
      %v11986 = vsel %vm6108, %v11922, 0.0
      %v11987 = vsel %vm6109, %v11923, 0.0
      %v11988 = vsel %vm6110, %v11924, 0.0
      %v11989 = vsel %vm6111, %v11925, 0.0
      %v11990 = vsel %vm6112, %v11926, 0.0
      %v11991 = vsel %vm6113, %v11927, 0.0
      %v11992 = vsel %vm6114, %v11928, 0.0
      %v11993 = vsel %vm6115, %v11929, 0.0
      %v11994 = vsel %vm6116, %v11930, 0.0
      %v11995 = vsel %vm6117, %v11931, 0.0
      %v11996 = vsel %vm6118, %v11932, 0.0
      %v11997 = vsel %vm6119, %v11933, 0.0
      %v11998 = vsel %vm6120, %v11934, 0.0
      %v11999 = vsel %vm171, %v11935, 0.0
      %v12000 = vsel %vm171, %v11936, 0.0
      %v12001 = vadd.f32 %v11999, %v12000
      %v12002 = vsel %vm171, %v11937, 0.0
      %v12003 = vadd.f32 %v12001, %v12002
      %v12004 = vsel %vm171, %v11938, 0.0
      %v12005 = vadd.f32 %v12003, %v12004
      %v12006 = vsel %vm171, %v11939, 0.0
      %v12007 = vadd.f32 %v12005, %v12006
      %v12008 = vsel %vm171, %v11940, 0.0
      %v12009 = vadd.f32 %v12007, %v12008
      %v12010 = vsel %vm171, %v11941, 0.0
      %v12011 = vadd.f32 %v12009, %v12010
      %v12012 = vsel %vm171, %v11942, 0.0
      %v12013 = vadd.f32 %v12011, %v12012
      %v12014 = vsel %vm171, %v11943, 0.0
      %v12015 = vadd.f32 %v12013, %v12014
      %v12016 = vsel %vm171, %v11944, 0.0
      %v12017 = vadd.f32 %v12015, %v12016
      %v12018 = vsel %vm171, %v11945, 0.0
      %v12019 = vadd.f32 %v12017, %v12018
      %v12020 = vsel %vm171, %v11946, 0.0
      %v12021 = vadd.f32 %v12019, %v12020
      %v12022 = vsel %vm171, %v11947, 0.0
      %v12023 = vadd.f32 %v12021, %v12022
      %v12024 = vsel %vm171, %v11948, 0.0
      %v12025 = vadd.f32 %v12023, %v12024
      %v12026 = vsel %vm171, %v11949, 0.0
      %v12027 = vadd.f32 %v12025, %v12026
      %v12028 = vsel %vm171, %v11950, 0.0
      %v12029 = vadd.f32 %v12027, %v12028
      %v12030 = vsel %vm171, %v11951, 0.0
      %v12031 = vadd.f32 %v12029, %v12030
      %v12032 = vsel %vm171, %v11952, 0.0
      %v12033 = vadd.f32 %v12031, %v12032
      %v12034 = vsel %vm171, %v11953, 0.0
      %v12035 = vadd.f32 %v12033, %v12034
      %v12036 = vsel %vm171, %v11954, 0.0
      %v12037 = vadd.f32 %v12035, %v12036
      %v12038 = vsel %vm171, %v11955, 0.0
      %v12039 = vadd.f32 %v12037, %v12038
      %v12040 = vsel %vm171, %v11956, 0.0
      %v12041 = vadd.f32 %v12039, %v12040
      %v12042 = vsel %vm171, %v11957, 0.0
      %v12043 = vadd.f32 %v12041, %v12042
      %v12044 = vsel %vm171, %v11958, 0.0
      %v12045 = vadd.f32 %v12043, %v12044
      %v12046 = vsel %vm171, %v11959, 0.0
      %v12047 = vadd.f32 %v12045, %v12046
      %v12048 = vsel %vm171, %v11960, 0.0
      %v12049 = vadd.f32 %v12047, %v12048
      %v12050 = vsel %vm171, %v11961, 0.0
      %v12051 = vadd.f32 %v12049, %v12050
      %v12052 = vsel %vm171, %v11962, 0.0
      %v12053 = vadd.f32 %v12051, %v12052
      %v12054 = vsel %vm171, %v11963, 0.0
      %v12055 = vadd.f32 %v12053, %v12054
      %v12056 = vsel %vm171, %v11964, 0.0
      %v12057 = vadd.f32 %v12055, %v12056
      %v12058 = vsel %vm171, %v11965, 0.0
      %v12059 = vadd.f32 %v12057, %v12058
      %v12060 = vsel %vm171, %v11966, 0.0
      %v12061 = vadd.f32 %v12059, %v12060
      %v12062 = vsel %vm171, %v11967, 0.0
      %v12063 = vadd.f32 %v12061, %v12062
      %v12064 = vsel %vm171, %v11968, 0.0
      %v12065 = vadd.f32 %v12063, %v12064
      %v12066 = vsel %vm171, %v11969, 0.0
      %v12067 = vadd.f32 %v12065, %v12066
      %v12068 = vsel %vm171, %v11970, 0.0
      %v12069 = vadd.f32 %v12067, %v12068
      %v12070 = vsel %vm171, %v11971, 0.0
      %v12071 = vadd.f32 %v12069, %v12070
      %v12072 = vsel %vm171, %v11972, 0.0
      %v12073 = vadd.f32 %v12071, %v12072
      %v12074 = vsel %vm171, %v11973, 0.0
      %v12075 = vadd.f32 %v12073, %v12074
      %v12076 = vsel %vm171, %v11974, 0.0
      %v12077 = vadd.f32 %v12075, %v12076
      %v12078 = vsel %vm171, %v11975, 0.0
      %v12079 = vadd.f32 %v12077, %v12078
      %v12080 = vsel %vm171, %v11976, 0.0
      %v12081 = vadd.f32 %v12079, %v12080
      %v12082 = vsel %vm171, %v11977, 0.0
      %v12083 = vadd.f32 %v12081, %v12082
      %v12084 = vsel %vm171, %v11978, 0.0
      %v12085 = vadd.f32 %v12083, %v12084
      %v12086 = vsel %vm171, %v11979, 0.0
      %v12087 = vadd.f32 %v12085, %v12086
      %v12088 = vsel %vm171, %v11980, 0.0
      %v12089 = vadd.f32 %v12087, %v12088
      %v12090 = vsel %vm171, %v11981, 0.0
      %v12091 = vadd.f32 %v12089, %v12090
      %v12092 = vsel %vm171, %v11982, 0.0
      %v12093 = vadd.f32 %v12091, %v12092
      %v12094 = vsel %vm171, %v11983, 0.0
      %v12095 = vadd.f32 %v12093, %v12094
      %v12096 = vsel %vm171, %v11984, 0.0
      %v12097 = vadd.f32 %v12095, %v12096
      %v12098 = vsel %vm171, %v11985, 0.0
      %v12099 = vadd.f32 %v12097, %v12098
      %v12100 = vsel %vm171, %v11986, 0.0
      %v12101 = vadd.f32 %v12099, %v12100
      %v12102 = vsel %vm171, %v11987, 0.0
      %v12103 = vadd.f32 %v12101, %v12102
      %v12104 = vsel %vm171, %v11988, 0.0
      %v12105 = vadd.f32 %v12103, %v12104
      %v12106 = vsel %vm171, %v11989, 0.0
      %v12107 = vadd.f32 %v12105, %v12106
      %v12108 = vsel %vm171, %v11990, 0.0
      %v12109 = vadd.f32 %v12107, %v12108
      %v12110 = vsel %vm171, %v11991, 0.0
      %v12111 = vadd.f32 %v12109, %v12110
      %v12112 = vsel %vm171, %v11992, 0.0
      %v12113 = vadd.f32 %v12111, %v12112
      %v12114 = vsel %vm171, %v11993, 0.0
      %v12115 = vadd.f32 %v12113, %v12114
      %v12116 = vsel %vm171, %v11994, 0.0
      %v12117 = vadd.f32 %v12115, %v12116
      %v12118 = vsel %vm171, %v11995, 0.0
      %v12119 = vadd.f32 %v12117, %v12118
      %v12120 = vsel %vm171, %v11996, 0.0
      %v12121 = vadd.f32 %v12119, %v12120
      %v12122 = vsel %vm171, %v11997, 0.0
      %v12123 = vadd.f32 %v12121, %v12122
      %v12124 = vsel %vm171, %v11998, 0.0
      %v12125 = vadd.f32 %v12123, %v12124
      %v12126 = vrot.slane %v12125, 4
      %v12127 = vadd.f32 %v12125, %v12126
      %v12128 = vrot.slane %v12127, 2
      %v12129 = vadd.f32 %v12127, %v12128
      %v12130 = vrot.slane %v12129, 1
      %v12131 = vadd.f32 %v12129, %v12130
      %v12132 = vadd.f32 %v12131, 0.0
      %12133 = vst.msk [vmem:[#allocation3] sm:$0xff] %vm171, %v11609
      %12134 = vst.msk [vmem:[#allocation3 + $0x8] sm:$0xff] %vm171, %v11610
      %12135 = vst.msk [vmem:[#allocation3 + $0x10] sm:$0xff] %vm171, %v11611
      %12136 = vst.msk [vmem:[#allocation3 + $0x18] sm:$0xff] %vm171, %v11612
      %12137 = vst.msk [vmem:[#allocation3 + $0x20] sm:$0xff] %vm171, %v11613
      %12138 = vst.msk [vmem:[#allocation3 + $0x28] sm:$0xff] %vm171, %v11614
      %12139 = vst.msk [vmem:[#allocation3 + $0x30] sm:$0xff] %vm171, %v11615
      %12140 = vst.msk [vmem:[#allocation3 + $0x38] sm:$0xff] %vm171, %v11616
      %12141 = vst.msk [vmem:[#allocation3 + $0x40] sm:$0xff] %vm171, %v11617
      %12142 = vst.msk [vmem:[#allocation3 + $0x48] sm:$0xff] %vm171, %v11618
      %12143 = vst.msk [vmem:[#allocation3 + $0x50] sm:$0xff] %vm171, %v11619
      %12144 = vst.msk [vmem:[#allocation3 + $0x58] sm:$0xff] %vm171, %v11620
      %12145 = vst.msk [vmem:[#allocation3 + $0x60] sm:$0xff] %vm171, %v11621
      %12146 = vst.msk [vmem:[#allocation3 + $0x68] sm:$0xff] %vm171, %v11622
      %12147 = vst.msk [vmem:[#allocation3 + $0x70] sm:$0xff] %vm171, %v11623
      %12148 = vst.msk [vmem:[#allocation3 + $0x78] sm:$0xff] %vm171, %v11624
      %12149 = vst.msk [vmem:[#allocation3 + $0x80] sm:$0xff] %vm171, %v11625
      %12150 = vst.msk [vmem:[#allocation3 + $0x88] sm:$0xff] %vm171, %v11626
      %12151 = vst.msk [vmem:[#allocation3 + $0x90] sm:$0xff] %vm171, %v11627
      %12152 = vst.msk [vmem:[#allocation3 + $0x98] sm:$0xff] %vm171, %v11628
      %12153 = vst.msk [vmem:[#allocation3 + $0xa0] sm:$0xff] %vm171, %v11629
      %12154 = vst.msk [vmem:[#allocation3 + $0xa8] sm:$0xff] %vm171, %v11630
      %12155 = vst.msk [vmem:[#allocation3 + $0xb0] sm:$0xff] %vm171, %v11631
      %12156 = vst.msk [vmem:[#allocation3 + $0xb8] sm:$0xff] %vm171, %v11632
      %12157 = vst.msk [vmem:[#allocation3 + $0xc0] sm:$0xff] %vm171, %v11633
      %12158 = vst.msk [vmem:[#allocation3 + $0xc8] sm:$0xff] %vm171, %v11634
      %12159 = vst.msk [vmem:[#allocation3 + $0xd0] sm:$0xff] %vm171, %v11635
      %12160 = vst.msk [vmem:[#allocation3 + $0xd8] sm:$0xff] %vm171, %v11636
      %12161 = vst.msk [vmem:[#allocation3 + $0xe0] sm:$0xff] %vm171, %v11637
      %12162 = vst.msk [vmem:[#allocation3 + $0xe8] sm:$0xff] %vm171, %v11638
      %12163 = vst.msk [vmem:[#allocation3 + $0xf0] sm:$0xff] %vm171, %v11639
      %12164 = vst.msk [vmem:[#allocation3 + $0xf8] sm:$0xff] %vm171, %v11640
      %12165 = vst.msk [vmem:[#allocation3 + $0x100] sm:$0xff] %vm171, %v11641
      %12166 = vst.msk [vmem:[#allocation3 + $0x108] sm:$0xff] %vm171, %v11642
      %12167 = vst.msk [vmem:[#allocation3 + $0x110] sm:$0xff] %vm171, %v11643
      %12168 = vst.msk [vmem:[#allocation3 + $0x118] sm:$0xff] %vm171, %v11644
      %12169 = vst.msk [vmem:[#allocation3 + $0x120] sm:$0xff] %vm171, %v11645
      %12170 = vst.msk [vmem:[#allocation3 + $0x128] sm:$0xff] %vm171, %v11646
      %12171 = vst.msk [vmem:[#allocation3 + $0x130] sm:$0xff] %vm171, %v11647
      %12172 = vst.msk [vmem:[#allocation3 + $0x138] sm:$0xff] %vm171, %v11648
      %12173 = vst.msk [vmem:[#allocation3 + $0x140] sm:$0xff] %vm171, %v11649
      %12174 = vst.msk [vmem:[#allocation3 + $0x148] sm:$0xff] %vm171, %v11650
      %12175 = vst.msk [vmem:[#allocation3 + $0x150] sm:$0xff] %vm171, %v11651
      %12176 = vst.msk [vmem:[#allocation3 + $0x158] sm:$0xff] %vm171, %v11652
      %12177 = vst.msk [vmem:[#allocation3 + $0x160] sm:$0xff] %vm171, %v11653
      %12178 = vst.msk [vmem:[#allocation3 + $0x168] sm:$0xff] %vm171, %v11654
      %12179 = vst.msk [vmem:[#allocation3 + $0x170] sm:$0xff] %vm171, %v11655
      %12180 = vst.msk [vmem:[#allocation3 + $0x178] sm:$0xff] %vm171, %v11656
      %12181 = vst.msk [vmem:[#allocation3 + $0x180] sm:$0xff] %vm171, %v11657
      %12182 = vst.msk [vmem:[#allocation3 + $0x188] sm:$0xff] %vm171, %v11658
      %12183 = vst.msk [vmem:[#allocation3 + $0x190] sm:$0xff] %vm171, %v11659
      %12184 = vst.msk [vmem:[#allocation3 + $0x198] sm:$0xff] %vm171, %v11660
      %12185 = vst.msk [vmem:[#allocation3 + $0x1a0] sm:$0xff] %vm171, %v11661
      %12186 = vst.msk [vmem:[#allocation3 + $0x1a8] sm:$0xff] %vm171, %v11662
      %12187 = vst.msk [vmem:[#allocation3 + $0x1b0] sm:$0xff] %vm171, %v11663
      %12188 = vst.msk [vmem:[#allocation3 + $0x1b8] sm:$0xff] %vm171, %v11664
      %12189 = vst.msk [vmem:[#allocation3 + $0x1c0] sm:$0xff] %vm171, %v11665
      %12190 = vst.msk [vmem:[#allocation3 + $0x1c8] sm:$0xff] %vm171, %v11666
      %12191 = vst.msk [vmem:[#allocation3 + $0x1d0] sm:$0xff] %vm171, %v11667
      %12192 = vst.msk [vmem:[#allocation3 + $0x1d8] sm:$0xff] %vm171, %v11668
      %12193 = vst.msk [vmem:[#allocation3 + $0x1e0] sm:$0xff] %vm171, %v11669
      %12194 = vst.msk [vmem:[#allocation3 + $0x1e8] sm:$0xff] %vm171, %v11670
      %12195 = vst.msk [vmem:[#allocation3 + $0x1f0] sm:$0xff] %vm171, %v11671
      %12196 = vst.msk [vmem:[#allocation3 + $0x1f8] sm:$0xff] %vm171, %v11672
      %v12197 = vmul.f32 %v11870, 0.00390625
      %v12198 = vmul.f32 %v12132, 0.00390625
      %v12199 = vmul.f32 %v12197, %v12197
      %v12200 = vsub.f32 %v12198, %v12199
      %v12201 = vadd.f32 %v12200, 1e-05
      %v12202 = vrsqrt.pop %v12201
      %v12203 = vmul.f32 %v12202, %v12201
      %v12204 = vmul.f32 %v12203, %v12202
      %v12205 = vmul.f32 0.5, %v12204
      %v12206 = vsub.f32 1.5, %v12205
      %v12207 = vmul.f32 %v12202, %v12206
      %vm12208 = vweird.f32 %v12201
      %vm12209 = vweird.f32 %v12202
      %vm12210 = vmor %vm12208, %vm12209
      %v12211 = vsel %vm12210, %v12202, %v12207
      %v12212 = vld [vmem:[#allocation3] sm:$0xff]
      %v12213 = vld [vmem:[#allocation3 + $0x8] sm:$0xff]
      %v12214 = vld [vmem:[#allocation3 + $0x20] sm:$0xff]
      %v12215 = vld [vmem:[#allocation3 + $0x28] sm:$0xff]
      %v12216 = vld [vmem:[#allocation3 + $0x40] sm:$0xff]
      %v12217 = vld [vmem:[#allocation3 + $0x48] sm:$0xff]
      %v12218 = vld [vmem:[#allocation3 + $0x60] sm:$0xff]
      %v12219 = vld [vmem:[#allocation3 + $0x68] sm:$0xff]
      %v12220 = vld [vmem:[#allocation3 + $0x80] sm:$0xff]
      %v12221 = vld [vmem:[#allocation3 + $0x88] sm:$0xff]
      %v12222 = vld [vmem:[#allocation3 + $0xa0] sm:$0xff]
      %v12223 = vld [vmem:[#allocation3 + $0xa8] sm:$0xff]
      %v12224 = vld [vmem:[#allocation3 + $0xc0] sm:$0xff]
      %v12225 = vld [vmem:[#allocation3 + $0xc8] sm:$0xff]
      %v12226 = vld [vmem:[#allocation3 + $0xe0] sm:$0xff]
      %v12227 = vld [vmem:[#allocation3 + $0xe8] sm:$0xff]
      %v12228 = vld [vmem:[#allocation3 + $0x100] sm:$0xff]
      %v12229 = vld [vmem:[#allocation3 + $0x108] sm:$0xff]
      %v12230 = vld [vmem:[#allocation3 + $0x120] sm:$0xff]
      %v12231 = vld [vmem:[#allocation3 + $0x128] sm:$0xff]
      %v12232 = vld [vmem:[#allocation3 + $0x140] sm:$0xff]
      %v12233 = vld [vmem:[#allocation3 + $0x148] sm:$0xff]
      %v12234 = vld [vmem:[#allocation3 + $0x160] sm:$0xff]
      %v12235 = vld [vmem:[#allocation3 + $0x168] sm:$0xff]
      %v12236 = vld [vmem:[#allocation3 + $0x180] sm:$0xff]
      %v12237 = vld [vmem:[#allocation3 + $0x188] sm:$0xff]
      %v12238 = vld [vmem:[#allocation3 + $0x1a0] sm:$0xff]
      %v12239 = vld [vmem:[#allocation3 + $0x1a8] sm:$0xff]
      %v12240 = vld [vmem:[#allocation3 + $0x1c0] sm:$0xff]
      %v12241 = vld [vmem:[#allocation3 + $0x1c8] sm:$0xff]
      %v12242 = vld [vmem:[#allocation3 + $0x1e0] sm:$0xff]
      %v12243 = vld [vmem:[#allocation3 + $0x1e8] sm:$0xff]
      %v12244 = vsub.f32 %v12212, %v12197
      %v12245 = vsub.f32 %v12213, %v12197
      %v12246 = vsub.f32 %v12214, %v12197
      %v12247 = vsub.f32 %v12215, %v12197
      %v12248 = vsub.f32 %v12216, %v12197
      %v12249 = vsub.f32 %v12217, %v12197
      %v12250 = vsub.f32 %v12218, %v12197
      %v12251 = vsub.f32 %v12219, %v12197
      %v12252 = vsub.f32 %v12220, %v12197
      %v12253 = vsub.f32 %v12221, %v12197
      %v12254 = vsub.f32 %v12222, %v12197
      %v12255 = vsub.f32 %v12223, %v12197
      %v12256 = vsub.f32 %v12224, %v12197
      %v12257 = vsub.f32 %v12225, %v12197
      %v12258 = vsub.f32 %v12226, %v12197
      %v12259 = vsub.f32 %v12227, %v12197
      %v12260 = vsub.f32 %v12228, %v12197
      %v12261 = vsub.f32 %v12229, %v12197
      %v12262 = vsub.f32 %v12230, %v12197
      %v12263 = vsub.f32 %v12231, %v12197
      %v12264 = vsub.f32 %v12232, %v12197
      %v12265 = vsub.f32 %v12233, %v12197
      %v12266 = vsub.f32 %v12234, %v12197
      %v12267 = vsub.f32 %v12235, %v12197
      %v12268 = vsub.f32 %v12236, %v12197
      %v12269 = vsub.f32 %v12237, %v12197
      %v12270 = vsub.f32 %v12238, %v12197
      %v12271 = vsub.f32 %v12239, %v12197
      %v12272 = vsub.f32 %v12240, %v12197
      %v12273 = vsub.f32 %v12241, %v12197
      %v12274 = vsub.f32 %v12242, %v12197
      %v12275 = vsub.f32 %v12243, %v12197
      %v12276 = vmul.f32 %v12244, %v12211
      %v12277 = vmul.f32 %v12245, %v12211
      %v12278 = vmul.f32 %v12246, %v12211
      %v12279 = vmul.f32 %v12247, %v12211
      %v12280 = vmul.f32 %v12248, %v12211
      %v12281 = vmul.f32 %v12249, %v12211
      %v12282 = vmul.f32 %v12250, %v12211
      %v12283 = vmul.f32 %v12251, %v12211
      %v12284 = vmul.f32 %v12252, %v12211
      %v12285 = vmul.f32 %v12253, %v12211
      %v12286 = vmul.f32 %v12254, %v12211
      %v12287 = vmul.f32 %v12255, %v12211
      %v12288 = vmul.f32 %v12256, %v12211
      %v12289 = vmul.f32 %v12257, %v12211
      %v12290 = vmul.f32 %v12258, %v12211
      %v12291 = vmul.f32 %v12259, %v12211
      %v12292 = vmul.f32 %v12260, %v12211
      %v12293 = vmul.f32 %v12261, %v12211
      %v12294 = vmul.f32 %v12262, %v12211
      %v12295 = vmul.f32 %v12263, %v12211
      %v12296 = vmul.f32 %v12264, %v12211
      %v12297 = vmul.f32 %v12265, %v12211
      %v12298 = vmul.f32 %v12266, %v12211
      %v12299 = vmul.f32 %v12267, %v12211
      %v12300 = vmul.f32 %v12268, %v12211
      %v12301 = vmul.f32 %v12269, %v12211
      %v12302 = vmul.f32 %v12270, %v12211
      %v12303 = vmul.f32 %v12271, %v12211
      %v12304 = vmul.f32 %v12272, %v12211
      %v12305 = vmul.f32 %v12273, %v12211
      %v12306 = vmul.f32 %v12274, %v12211
      %v12307 = vmul.f32 %v12275, %v12211
      %v12308 = vadd.f32 %v12276, %v176
      %v12309 = vadd.f32 %v12277, %v177
      %v12310 = vadd.f32 %v12278, %v178
      %v12311 = vadd.f32 %v12279, %v179
      %v12312 = vadd.f32 %v12280, %v180
      %v12313 = vadd.f32 %v12281, %v181
      %v12314 = vadd.f32 %v12282, %v182
      %v12315 = vadd.f32 %v12283, %v183
      %v12316 = vadd.f32 %v12284, %v184
      %v12317 = vadd.f32 %v12285, %v185
      %v12318 = vadd.f32 %v12286, %v186
      %v12319 = vadd.f32 %v12287, %v187
      %v12320 = vadd.f32 %v12288, %v188
      %v12321 = vadd.f32 %v12289, %v189
      %v12322 = vadd.f32 %v12290, %v190
      %v12323 = vadd.f32 %v12291, %v191
      %v12324 = vadd.f32 %v12292, %v192
      %v12325 = vadd.f32 %v12293, %v193
      %v12326 = vadd.f32 %v12294, %v194
      %v12327 = vadd.f32 %v12295, %v195
      %v12328 = vadd.f32 %v12296, %v196
      %v12329 = vadd.f32 %v12297, %v197
      %v12330 = vadd.f32 %v12298, %v198
      %v12331 = vadd.f32 %v12299, %v199
      %v12332 = vadd.f32 %v12300, %v200
      %v12333 = vadd.f32 %v12301, %v201
      %v12334 = vadd.f32 %v12302, %v202
      %v12335 = vadd.f32 %v12303, %v203
      %v12336 = vadd.f32 %v12304, %v204
      %v12337 = vadd.f32 %v12305, %v205
      %v12338 = vadd.f32 %v12306, %v206
      %v12339 = vadd.f32 %v12307, %v207
      %12340 = vst.msk [vmem:[%s170] sm:$0xff] %vm171, %v12308
      %12341 = vst.msk [vmem:[%s170 + $0x8] sm:$0xff] %vm171, %v12309
      %12342 = vst.msk [vmem:[%s170 + $0x10] sm:$0xff] %vm171, %v12310
      %12343 = vst.msk [vmem:[%s170 + $0x18] sm:$0xff] %vm171, %v12311
      %12344 = vst.msk [vmem:[%s170 + $0x20] sm:$0xff] %vm171, %v12312
      %12345 = vst.msk [vmem:[%s170 + $0x28] sm:$0xff] %vm171, %v12313
      %12346 = vst.msk [vmem:[%s170 + $0x30] sm:$0xff] %vm171, %v12314
      %12347 = vst.msk [vmem:[%s170 + $0x38] sm:$0xff] %vm171, %v12315
      %12348 = vst.msk [vmem:[%s170 + $0x40] sm:$0xff] %vm171, %v12316
      %12349 = vst.msk [vmem:[%s170 + $0x48] sm:$0xff] %vm171, %v12317
      %12350 = vst.msk [vmem:[%s170 + $0x50] sm:$0xff] %vm171, %v12318
      %12351 = vst.msk [vmem:[%s170 + $0x58] sm:$0xff] %vm171, %v12319
      %12352 = vst.msk [vmem:[%s170 + $0x60] sm:$0xff] %vm171, %v12320
      %12353 = vst.msk [vmem:[%s170 + $0x68] sm:$0xff] %vm171, %v12321
      %12354 = vst.msk [vmem:[%s170 + $0x70] sm:$0xff] %vm171, %v12322
      %12355 = vst.msk [vmem:[%s170 + $0x78] sm:$0xff] %vm171, %v12323
      %12356 = vst.msk [vmem:[%s170 + $0x80] sm:$0xff] %vm171, %v12324
      %12357 = vst.msk [vmem:[%s170 + $0x88] sm:$0xff] %vm171, %v12325
      %12358 = vst.msk [vmem:[%s170 + $0x90] sm:$0xff] %vm171, %v12326
      %12359 = vst.msk [vmem:[%s170 + $0x98] sm:$0xff] %vm171, %v12327
      %12360 = vst.msk [vmem:[%s170 + $0xa0] sm:$0xff] %vm171, %v12328
      %12361 = vst.msk [vmem:[%s170 + $0xa8] sm:$0xff] %vm171, %v12329
      %12362 = vst.msk [vmem:[%s170 + $0xb0] sm:$0xff] %vm171, %v12330
      %12363 = vst.msk [vmem:[%s170 + $0xb8] sm:$0xff] %vm171, %v12331
      %12364 = vst.msk [vmem:[%s170 + $0xc0] sm:$0xff] %vm171, %v12332
      %12365 = vst.msk [vmem:[%s170 + $0xc8] sm:$0xff] %vm171, %v12333
      %12366 = vst.msk [vmem:[%s170 + $0xd0] sm:$0xff] %vm171, %v12334
      %12367 = vst.msk [vmem:[%s170 + $0xd8] sm:$0xff] %vm171, %v12335
      %12368 = vst.msk [vmem:[%s170 + $0xe0] sm:$0xff] %vm171, %v12336
      %12369 = vst.msk [vmem:[%s170 + $0xe8] sm:$0xff] %vm171, %v12337
      %12370 = vst.msk [vmem:[%s170 + $0xf0] sm:$0xff] %vm171, %v12338
      %12371 = vst.msk [vmem:[%s170 + $0xf8] sm:$0xff] %vm171, %v12339
      %p12372 = scmp.lt.s32.totalorder %s14, 1
      %s12373 = scalar_select %p12372, %s14, 1
      %s12374 = smul.addr %s12373, 32
      %s12375 = smul.addr %s12374, 8
      %s12376 = scalar_lea.vmem %s3, %s12375
      // Predicated region
      $region33: #{tpu_custom_call.1} parent=31 // pred_check
        %p12377 = pneg %p100
      $region34: #{tpu_custom_call.1} parent=31 // pred_check_branch
        %12379 = sbr.rel (%p12377) target = $region36
      $region35: #{tpu_custom_call.1} parent=31 // pred_region
        _
      $region36: #{tpu_custom_call.1} parent=31 // pred_fallthru
        _
    $region32: #{tpu_custom_call.1} parent=5 // pred_fallthru
      _
    %p12380 = scmp.le.s32.totalorder 2, %s9
    // Predicated region
    $region37: #{tpu_custom_call.1} parent=5 // pred_check
      %p12381 = pneg %p12380
    $region38: #{tpu_custom_call.1} parent=5 // pred_check_branch
      %12383 = sbr.rel (%p12381) target = $region40
    $region39: #{tpu_custom_call.1} parent=5 // pred_region
      %s12384 = ssub.s32 %s9, 2
      // Predicated region
      $region41: #{tpu_custom_call.1} parent=39 // pred_check
        %p12385 = pneg %p106
      $region42: #{tpu_custom_call.1} parent=39 // pred_check_branch
        %12387 = sbr.rel (%p12385) target = $region44
      $region43: #{tpu_custom_call.1} parent=39 // pred_region
        %p12388 = scmp.lt.s32.totalorder %s15, 1
        %s12389 = scalar_select %p12388, %s15, 1
        %s12390 = smul.addr %s12389, 32
        %s12391 = smul.addr %s12390, 8
        %s12392 = scalar_lea.vmem %s3, %s12391
      $region44: #{tpu_custom_call.1} parent=39 // pred_fallthru
        _
    $region40: #{tpu_custom_call.1} parent=5 // pred_fallthru
      _
  $region6: #{tpu_custom_call.1} parent=0 // loop_footer
    %s13 = sadd.s32 1, %s9
  $region7: #{tpu_custom_call.1} parent=0 // loop_footer_branch
    %8 = sbr.rel target = $region3
  $region8: #{tpu_custom_call.1} parent=0 // loop_exit
    _

</llo_original>
